<compile_context>
chip_gen: v5e
topology: v5e:2x2
jax: 0.10.0
libtpu: 0.0.40
codegen_flags: <defaults>
</compile_context>

<pallas_src>
import functools

import jax
import jax.numpy as jnp
from jax.experimental import pallas as pl
from jax.experimental.pallas import tpu as pltpu

MXU_DTYPE = jnp.bfloat16          # cast at the MXU boundary only (f32 accumulation)
EPS = 1e-5

_VMEM = pl.BlockSpec(memory_space=pltpu.MemorySpace.VMEM)


# ----------------------------------------------------------------------------
# Static model structure
# ----------------------------------------------------------------------------
def compute_dilations(blocks, layers, kernel_size):
    dilations = []
    receptive_field = 1
    for _ in range(blocks):
        additional_scope = kernel_size - 1
        new_dilation = 1
        for _ in range(layers):
            dilations.append(new_dilation)
            new_dilation *= 2
            receptive_field += additional_scope
            additional_scope *= 2
    return dilations, receptive_field


# ----------------------------------------------------------------------------
# The single fused kernel: whole network, activations resident in VMEM.
#   Activations: 2D (T*B, N*C), rows ordered (time, batch), lanes = node*C + c.
# ----------------------------------------------------------------------------
def _stnorm_fused_kernel(
    x0_ref,                     # (T*B, N*D)  f32   folded, left-padded input
    ws_ref, bs_ref,             # (N*D, N*C) bf16, (1, N*C) f32     start conv
    amean_ref,                  # (N*C, N*C) f32   node-mean matrix (SNorm)
    tng_ref, tnb_ref,           # (L, 1, N*C) f32  TNorm gamma/beta (per node,chan)
    sng_ref, snb_ref,           # (L, 1, N*C) f32  SNorm gamma/beta (per chan, tiled)
    wfg0_ref, wfg1_ref,         # (L, num*N*C, 2*N*C) bf16  fused filter||gate taps
    bfg_ref,                    # (L, 1, 2*N*C) f32
    wrs_ref, brs_ref,           # (L, N*C, 2*N*C) bf16, (L, 1, 2*N*C) f32  resid||skip
    we1_ref, be1_ref,           # (N*C, N*C) bf16, (1, N*C) f32      end_conv_1
    we2_ref, be2_ref,           # (N*C, N*O) bf16, (1, N*O) f32      end_conv_2
    out_ref,                    # (B, N*O) f32
    *, batch, dilations, num_nodes, nc, tnorm, snorm):
    B = batch
    NC = nc

    def mm(a, w):
        # bf16 on the MXU, f32 accumulation.
        return jnp.dot(a.astype(w.dtype), w, preferred_element_type=jnp.float32)

    # ---- start_conv (1x1), node-block-diagonal form ----
    x = mm(x0_ref[...], ws_ref[...]) + bs_ref[...]            # (T*B, N*C)

    if snorm:
        amean = amean_ref[...]                                # (N*C, N*C)
        s_scale = float(num_nodes) / float(num_nodes - 1)     # unbiased var (N >= 2)

    skip = None
    T = x.shape[0] // B
    # Layer loop is unrolled at trace time (shapes shrink every layer).
    for i, d in enumerate(dilations):
        Tout = T - d
        feats = [x]

        if tnorm:
            # TNorm (training-mode batch stats): mean / biased var over
            # (batch, time) == over all rows, per (node, channel) lane.
            t_mean = jnp.mean(x, axis=0, keepdims=True)
            t_dev = x - t_mean
            t_var = jnp.mean(t_dev * t_dev, axis=0, keepdims=True)
            xt = t_dev * jax.lax.rsqrt(t_var + EPS) * tng_ref[i] + tnb_ref[i]
            feats.append(xt)

        if snorm:
            # SNorm: mean / unbiased var over nodes, per (batch, time, channel).
            # The grouped cross-node lane reduction (and its broadcast back) is a
            # matmul with a constant node-mean matrix -> stays lane-dense.
            s_mean = jnp.dot(x, amean, preferred_element_type=jnp.float32)
            s_dev = x - s_mean
            s_var = jnp.dot(s_dev * s_dev, amean,
                            preferred_element_type=jnp.float32) * s_scale
            xs = s_dev * jax.lax.rsqrt(s_var + EPS) * sng_ref[i] + snb_ref[i]
            feats.append(xs)

        cat = feats[0] if len(feats) == 1 else jnp.concatenate(feats, axis=-1)

        # Dilated (1,2) temporal conv: the two taps are contiguous row windows of
        # `cat` (rows are (time, batch) ordered).  filter||gate fused per tap.
        c0 = cat[: Tout * B, :]
        c1 = cat[d * B:, :]
        fg = mm(c0, wfg0_ref[i]) + mm(c1, wfg1_ref[i]) + bfg_ref[i]   # (Tout*B, 2NC)
        xg = jnp.tanh(fg[:, :NC]) * jax.nn.sigmoid(fg[:, NC:])        # (Tout*B, NC)

        # residual-conv || skip-conv fused into one matmul.
        rs = mm(xg, wrs_ref[i]) + brs_ref[i]                          # (Tout*B, 2NC)
        x = rs[:, :NC] + x[d * B:, :]
        if skip is None:
            skip = rs[:, NC:]                       # first layer: skip = 0 + s
        else:
            skip = rs[:, NC:] + skip[skip.shape[0] - Tout * B:, :]
        T = Tout

    # End head: relu -> 1x1 -> relu -> 1x1.  torch keeps only time index 0 of the
    # final tensor; the 1x1 convs are pointwise, so we slice rows t==0 (the first
    # B rows in (time, batch) ordering) before the convs -- identical result.
    h = jnp.maximum(skip[:B, :], 0.0)
    h = jnp.maximum(mm(h, we1_ref[...]) + be1_ref[...], 0.0)
    out_ref[...] = mm(h, we2_ref[...]) + be2_ref[...]                 # (B, N*O)


# ----------------------------------------------------------------------------
# Parameters (torch-like), and packing into kernel-ready lane-dense form.
# ----------------------------------------------------------------------------
def init_params(key, cfg):
    C, D, O, N = cfg["channels"], cfg["in_dim"], cfg["out_dim"], cfg["num_nodes"]
    num = 1 + int(cfg["tnorm_bool"]) + int(cfg["snorm_bool"])
    n_layers = cfg["blocks"] * cfg["layers"]
    keys = iter(jax.random.split(key, 8 + 12 * n_layers))

    def w(shape):
        fan_in = shape[0]
        return jax.random.normal(next(keys), shape, jnp.float32) / jnp.sqrt(float(fan_in))

    def b(n):
        return jax.random.normal(next(keys), (n,), jnp.float32) * 0.01

    params = {
        "start_w": w((D, C)), "start_b": b(C),
        "end1_w": w((C, C)), "end1_b": b(C),
        "end2_w": w((C, O)), "end2_b": b(O),
        "layers": [], "tn_gamma": [], "tn_beta": [], "sn_gamma": [], "sn_beta": [],
    }
    for _ in range(n_layers):
        params["layers"].append({
            "wf0": w((num * C, C)), "wf1": w((num * C, C)), "bf": b(C),
            "wg0": w((num * C, C)), "wg1": w((num * C, C)), "bg": b(C),
            "wr": w((C, C)), "br": b(C),
            "ws": w((C, C)), "bs": b(C),
        })
        # Module __init__ initializes the norm affine params to ones / zeros.
        params["tn_gamma"].append(jnp.ones((N, C), jnp.float32))
        params["tn_beta"].append(jnp.zeros((N, C), jnp.float32))
        params["sn_gamma"].append(jnp.ones((C,), jnp.float32))
        params["sn_beta"].append(jnp.zeros((C,), jnp.float32))
    return params


def _expand_nodes(w, n):
    """Per-node (cin, cout) 1x1-conv weight -> (n*cin, n*cout) block-diagonal."""
    cin, cout = w.shape
    eye = jnp.eye(n, dtype=w.dtype)
    big = eye[:, None, :, None] * w[None, :, None, :]      # (n, cin, n, cout)
    return big.reshape(n * cin, n * cout)


def _expand_feat_blocks(w, num, c, n):
    """(num*c, cout) -> (num*n*c, n*cout), feature blocks stay lane-block-major."""
    blocks = [_expand_nodes(w[f * c:(f + 1) * c, :], n) for f in range(num)]
    return jnp.concatenate(blocks, axis=0)


def _tile_nodes(v, n):
    """Per-channel (c,) vector -> (1, n*c) per-lane row (tiled over nodes)."""
    return jnp.tile(v, n)[None, :]


def pack_params(params, cfg):
    C, D, O, N = cfg["channels"], cfg["in_dim"], cfg["out_dim"], cfg["num_nodes"]
    num = 1 + int(cfg["tnorm_bool"]) + int(cfg["snorm_bool"])
    NC = N * C
    n_layers = cfg["blocks"] * cfg["layers"]

    packed = {
        "ws": _expand_nodes(params["start_w"], N).astype(MXU_DTYPE),
        "bs": _tile_nodes(params["start_b"], N),
        # node-mean matrix: [n*C+c, n'*C+c'] = (c == c') / N
        "amean": jnp.tile(jnp.eye(C, dtype=jnp.float32), (N, N)) / float(N),
        "we1": _expand_nodes(params["end1_w"], N).astype(MXU_DTYPE),
        "be1": _tile_nodes(params["end1_b"], N),
        "we2": _expand_nodes(params["end2_w"], N).astype(MXU_DTYPE),
        "be2": _tile_nodes(params["end2_b"], N),
    }
    wfg0, wfg1, bfg, wrs, brs = [], [], [], [], []
    tng, tnb, sng, snb = [], [], [], []
    for i in range(n_layers):
        lp = params["layers"][i]
        wfg0.append(jnp.concatenate(
            [_expand_feat_blocks(lp["wf0"], num, C, N),
             _expand_feat_blocks(lp["wg0"], num, C, N)], axis=1))
        wfg1.append(jnp.concatenate(
            [_expand_feat_blocks(lp["wf1"], num, C, N),
             _expand_feat_blocks(lp["wg1"], num, C, N)], axis=1))
        bfg.append(jnp.concatenate(
            [_tile_nodes(lp["bf"], N), _tile_nodes(lp["bg"], N)], axis=1))
        wrs.append(jnp.concatenate(
            [_expand_nodes(lp["wr"], N), _expand_nodes(lp["ws"], N)], axis=1))
        brs.append(jnp.concatenate(
            [_tile_nodes(lp["br"], N), _tile_nodes(lp["bs"], N)], axis=1))
        tng.append(params["tn_gamma"][i].reshape(1, NC))
        tnb.append(params["tn_beta"][i].reshape(1, NC))
        sng.append(_tile_nodes(params["sn_gamma"][i], N))
        snb.append(_tile_nodes(params["sn_beta"][i], N))

    packed["wfg0"] = jnp.stack(wfg0).astype(MXU_DTYPE)     # (L, num*NC, 2*NC)
    packed["wfg1"] = jnp.stack(wfg1).astype(MXU_DTYPE)
    packed["bfg"] = jnp.stack(bfg)                         # (L, 1, 2*NC)
    packed["wrs"] = jnp.stack(wrs).astype(MXU_DTYPE)       # (L, NC, 2*NC)
    packed["brs"] = jnp.stack(brs)
    packed["tng"] = jnp.stack(tng)                         # (L, 1, NC)
    packed["tnb"] = jnp.stack(tnb)
    packed["sng"] = jnp.stack(sng)
    packed["snb"] = jnp.stack(snb)
    return packed


# ----------------------------------------------------------------------------
# Forward wrapper: fold layout, one pallas_call, unfold output.
# ----------------------------------------------------------------------------
def stnorm_point_forward(packed, x_in, cfg):
    """x_in: (B, T_in, N, in_dim), matching the PyTorch module's input."""
    B, T_in, N, D = x_in.shape
    C, O = cfg["channels"], cfg["out_dim"]
    NC = N * C
    dilations, receptive_field = compute_dilations(
        cfg["blocks"], cfg["layers"], cfg["kernel_size"])

    # (B, T, N, D) -> (T, B, N*D); left-pad time to the receptive field.  Rows are
    # (time, batch) ordered so dilation taps are contiguous row windows in-kernel.
    x = jnp.transpose(x_in, (1, 0, 2, 3)).astype(jnp.float32).reshape(T_in, B, N * D)
    if T_in < receptive_field:
        x = jnp.pad(x, ((receptive_field - T_in, 0), (0, 0), (0, 0)))
    T = x.shape[0]
    x0 = x.reshape(T * B, N * D)

    kern = functools.partial(
        _stnorm_fused_kernel,
        batch=B, dilations=tuple(dilations), num_nodes=N, nc=NC,
        tnorm=bool(cfg["tnorm_bool"]), snorm=bool(cfg["snorm_bool"]))

    out = pl.pallas_call(
        kern,
        out_shape=jax.ShapeDtypeStruct((B, N * O), jnp.float32),
        in_specs=[_VMEM] * 17,
        out_specs=_VMEM,
    )(x0, packed["ws"], packed["bs"], packed["amean"],
      packed["tng"], packed["tnb"], packed["sng"], packed["snb"],
      packed["wfg0"], packed["wfg1"], packed["bfg"],
      packed["wrs"], packed["brs"],
      packed["we1"], packed["be1"], packed["we2"], packed["be2"])

    # out[b, n*O + o] == torch_out[b, o, n, 0]
    out = out.reshape(B, N, O)
    return jnp.transpose(out, (0, 2, 1))[..., None]        # (B, O, N, 1)


# ----------------------------------------------------------------------------
# Pure-JAX reference (transcription of the torch forward, same bf16-at-MXU rule)
# ----------------------------------------------------------------------------
def reference_forward(params, x_in, cfg):
    B, T_in, N, D = x_in.shape
    C, O = cfg["channels"], cfg["out_dim"]
    tnorm, snorm = bool(cfg["tnorm_bool"]), bool(cfg["snorm_bool"])
    num = 1 + int(tnorm) + int(snorm)
    dilations, receptive_field = compute_dilations(
        cfg["blocks"], cfg["layers"], cfg["kernel_size"])

    def mm(a, w):
        return jnp.dot(a.astype(MXU_DTYPE), w.astype(MXU_DTYPE),
                       preferred_element_type=jnp.float32)

    x = jnp.transpose(x_in, (0, 2, 1, 3)).astype(jnp.float32)   # (B, N, T, D)
    if T_in < receptive_field:
        x = jnp.pad(x, ((0, 0), (0, 0), (receptive_field - T_in, 0), (0, 0)))
    T = x.shape[2]
    x = (mm(x.reshape(-1, D), params["start_w"]) + params["start_b"]
         ).reshape(B, N, T, C)

    skip = None
    for i, d in enumerate(dilations):
        Tout = T - d
        lp = params["layers"][i]
        feats = [x]
        if tnorm:
            m = jnp.mean(x, axis=(0, 2), keepdims=True)
            v = jnp.mean((x - m) ** 2, axis=(0, 2), keepdims=True)
            xt = ((x - m) * jax.lax.rsqrt(v + EPS)
                  * params["tn_gamma"][i][None, :, None, :]
                  + params["tn_beta"][i][None, :, None, :])
            feats.append(xt)
        if snorm:
            m = jnp.mean(x, axis=1, keepdims=True)
            v = jnp.sum((x - m) ** 2, axis=1, keepdims=True) / (N - 1)
            xs = ((x - m) * jax.lax.rsqrt(v + EPS)
                  * params["sn_gamma"][i] + params["sn_beta"][i])
            feats.append(xs)
        cat = jnp.concatenate(feats, axis=-1) if len(feats) > 1 else x
        c0 = cat[:, :, :Tout, :].reshape(-1, num * C)
        c1 = cat[:, :, d:, :].reshape(-1, num * C)
        filt = mm(c0, lp["wf0"]) + mm(c1, lp["wf1"]) + lp["bf"]
        gate = mm(c0, lp["wg0"]) + mm(c1, lp["wg1"]) + lp["bg"]
        xg = jnp.tanh(filt) * jax.nn.sigmoid(gate)
        r = (mm(xg, lp["wr"]) + lp["br"]).reshape(B, N, Tout, C)
        s = (mm(xg, lp["ws"]) + lp["bs"]).reshape(B, N, Tout, C)
        x = r + x[:, :, d:, :]
        skip = s if skip is None else s + skip[:, :, -Tout:, :]
        T = Tout

    h = jnp.maximum(skip, 0.0)
    rep = jnp.maximum(mm(h.reshape(-1, C), params["end1_w"]) + params["end1_b"], 0.0)
    out = (mm(rep, params["end2_w"]) + params["end2_b"]).reshape(B, N, T, O)
    out = out[:, :, 0, :]                                   # time index 0
    return jnp.transpose(out, (0, 2, 1))[..., None]         # (B, O, N, 1)


if __name__ == "__main__":
    cfg = dict(num_nodes=8, in_dim=1, out_dim=12, channels=16,
               kernel_size=2, blocks=4, layers=2,
               tnorm_bool=True, snorm_bool=True)
    _, receptive_field = compute_dilations(cfg["blocks"], cfg["layers"],
                                           cfg["kernel_size"])

    B, T_in, N, D = 2, receptive_field, cfg["num_nodes"], cfg["in_dim"]   # T_in = 13

    key = jax.random.PRNGKey(0)
    k_in, k_par = jax.random.split(key)
    x_in = jax.random.normal(k_in, (B, T_in, N, D), jnp.float32)
    params = init_params(k_par, cfg)
    packed = pack_params(params, cfg)

    out = stnorm_point_forward(packed, x_in, cfg)
    out = jax.block_until_ready(out)

    assert out.shape == (B, cfg["out_dim"], N, 1), out.shape
    assert bool(jnp.all(jnp.isfinite(out)))

    ref = reference_forward(params, x_in, cfg)
    assert jnp.allclose(out, ref, rtol=2e-2, atol=2e-2), \
        float(jnp.max(jnp.abs(out - ref)))

    print("KERNEL_OK")
</pallas_src>

<mosaic_0001>
module attributes {stable_mosaic.version = 11 : i64} {
  func.func @_stnorm_fused_kernel(%arg0: memref<26x8xf32, #tpu.memory_space<vmem>>, %arg1: memref<8x128xbf16, #tpu.memory_space<vmem>>, %arg2: memref<1x128xf32, #tpu.memory_space<vmem>>, %arg3: memref<128x128xf32, #tpu.memory_space<vmem>>, %arg4: memref<8x1x128xf32, #tpu.memory_space<vmem>>, %arg5: memref<8x1x128xf32, #tpu.memory_space<vmem>>, %arg6: memref<8x1x128xf32, #tpu.memory_space<vmem>>, %arg7: memref<8x1x128xf32, #tpu.memory_space<vmem>>, %arg8: memref<8x384x256xbf16, #tpu.memory_space<vmem>>, %arg9: memref<8x384x256xbf16, #tpu.memory_space<vmem>>, %arg10: memref<8x1x256xf32, #tpu.memory_space<vmem>>, %arg11: memref<8x128x256xbf16, #tpu.memory_space<vmem>>, %arg12: memref<8x1x256xf32, #tpu.memory_space<vmem>>, %arg13: memref<128x128xbf16, #tpu.memory_space<vmem>>, %arg14: memref<1x128xf32, #tpu.memory_space<vmem>>, %arg15: memref<128x96xbf16, #tpu.memory_space<vmem>>, %arg16: memref<1x96xf32, #tpu.memory_space<vmem>>, %arg17: memref<2x96xf32, #tpu.memory_space<vmem>>) attributes {dimension_semantics = [], scalar_prefetch = 0 : i64, scratch_operands = 0 : i64, tpu.core_type = #tpu.core_type<tc>} {
    %c0 = arith.constant 0 : index
    %c0_0 = arith.constant 0 : index
    %0 = vector.load %arg0[%c0, %c0_0] : memref<26x8xf32, #tpu.memory_space<vmem>>, vector<26x8xf32>
    %c0_1 = arith.constant 0 : index
    %c0_2 = arith.constant 0 : index
    %1 = vector.load %arg1[%c0_1, %c0_2] : memref<8x128xbf16, #tpu.memory_space<vmem>>, vector<8x128xbf16>
    %2 = arith.truncf %0 : vector<26x8xf32> to vector<26x8xbf16>
    %cst = arith.constant dense<0.000000e+00> : vector<26x128xf32>
    %3 = tpu.matmul %2, %1, %cst {dimension_numbers = #tpu.dot_dimension_numbers<[1], [0], [0], [1], [0, 0, 1, 1], [], []>} : vector<26x8xbf16>, vector<8x128xbf16>, vector<26x128xf32> -> vector<26x128xf32>
    %c0_3 = arith.constant 0 : index
    %c0_4 = arith.constant 0 : index
    %4 = vector.load %arg2[%c0_3, %c0_4] : memref<1x128xf32, #tpu.memory_space<vmem>>, vector<1x128xf32>
    %5 = vector.broadcast %4 : vector<1x128xf32> to vector<26x128xf32>
    %6 = arith.addf %3, %5 : vector<26x128xf32>
    %c0_5 = arith.constant 0 : index
    %c0_6 = arith.constant 0 : index
    %7 = vector.load %arg3[%c0_5, %c0_6] : memref<128x128xf32, #tpu.memory_space<vmem>>, vector<128x128xf32>
    %cst_7 = arith.constant dense<0.000000e+00> : vector<128xf32>
    %8 = vector.multi_reduction <add>, %6, %cst_7 [0] : vector<26x128xf32> to vector<128xf32>
    %9 = vector.shape_cast %8 : vector<128xf32> to vector<1x128xf32>
    %cst_8 = arith.constant 2.600000e+01 : f32
    %10 = vector.broadcast %cst_8 : f32 to vector<1x128xf32>
    %11 = arith.divf %9, %10 : vector<1x128xf32>
    %12 = vector.broadcast %11 : vector<1x128xf32> to vector<26x128xf32>
    %13 = arith.subf %6, %12 : vector<26x128xf32>
    %14 = arith.mulf %13, %13 : vector<26x128xf32>
    %cst_9 = arith.constant dense<0.000000e+00> : vector<128xf32>
    %15 = vector.multi_reduction <add>, %14, %cst_9 [0] : vector<26x128xf32> to vector<128xf32>
    %16 = vector.shape_cast %15 : vector<128xf32> to vector<1x128xf32>
    %cst_10 = arith.constant 2.600000e+01 : f32
    %17 = vector.broadcast %cst_10 : f32 to vector<1x128xf32>
    %18 = arith.divf %16, %17 : vector<1x128xf32>
    %cst_11 = arith.constant 9.99999974E-6 : f32
    %19 = vector.broadcast %cst_11 : f32 to vector<1x128xf32>
    %20 = arith.addf %18, %19 : vector<1x128xf32>
    %21 = math.rsqrt %20 : vector<1x128xf32>
    %22 = vector.broadcast %21 : vector<1x128xf32> to vector<26x128xf32>
    %23 = arith.mulf %13, %22 : vector<26x128xf32>
    %c0_12 = arith.constant 0 : index
    %c0_13 = arith.constant 0 : index
    %c0_14 = arith.constant 0 : index
    %24 = vector.load %arg4[%c0_12, %c0_13, %c0_14] : memref<8x1x128xf32, #tpu.memory_space<vmem>>, vector<1x1x128xf32>
    %25 = vector.shape_cast %24 : vector<1x1x128xf32> to vector<1x128xf32>
    %26 = vector.broadcast %25 : vector<1x128xf32> to vector<26x128xf32>
    %27 = arith.mulf %23, %26 : vector<26x128xf32>
    %c0_15 = arith.constant 0 : index
    %c0_16 = arith.constant 0 : index
    %c0_17 = arith.constant 0 : index
    %28 = vector.load %arg5[%c0_15, %c0_16, %c0_17] : memref<8x1x128xf32, #tpu.memory_space<vmem>>, vector<1x1x128xf32>
    %29 = vector.shape_cast %28 : vector<1x1x128xf32> to vector<1x128xf32>
    %30 = vector.broadcast %29 : vector<1x128xf32> to vector<26x128xf32>
    %31 = arith.addf %27, %30 : vector<26x128xf32>
    %cst_18 = arith.constant dense<0.000000e+00> : vector<26x128xf32>
    %32 = tpu.matmul %6, %7, %cst_18 {dimension_numbers = #tpu.dot_dimension_numbers<[1], [0], [0], [1], [0, 0, 1, 1], [], []>} : vector<26x128xf32>, vector<128x128xf32>, vector<26x128xf32> -> vector<26x128xf32>
    %33 = arith.subf %6, %32 : vector<26x128xf32>
    %34 = arith.mulf %33, %33 : vector<26x128xf32>
    %cst_19 = arith.constant dense<0.000000e+00> : vector<26x128xf32>
    %35 = tpu.matmul %34, %7, %cst_19 {dimension_numbers = #tpu.dot_dimension_numbers<[1], [0], [0], [1], [0, 0, 1, 1], [], []>} : vector<26x128xf32>, vector<128x128xf32>, vector<26x128xf32> -> vector<26x128xf32>
    %cst_20 = arith.constant 1.14285719 : f32
    %36 = vector.broadcast %cst_20 : f32 to vector<26x128xf32>
    %37 = arith.mulf %35, %36 : vector<26x128xf32>
    %cst_21 = arith.constant 9.99999974E-6 : f32
    %38 = vector.broadcast %cst_21 : f32 to vector<26x128xf32>
    %39 = arith.addf %37, %38 : vector<26x128xf32>
    %40 = math.rsqrt %39 : vector<26x128xf32>
    %41 = arith.mulf %33, %40 : vector<26x128xf32>
    %c0_22 = arith.constant 0 : index
    %c0_23 = arith.constant 0 : index
    %c0_24 = arith.constant 0 : index
    %42 = vector.load %arg6[%c0_22, %c0_23, %c0_24] : memref<8x1x128xf32, #tpu.memory_space<vmem>>, vector<1x1x128xf32>
    %43 = vector.shape_cast %42 : vector<1x1x128xf32> to vector<1x128xf32>
    %44 = vector.broadcast %43 : vector<1x128xf32> to vector<26x128xf32>
    %45 = arith.mulf %41, %44 : vector<26x128xf32>
    %c0_25 = arith.constant 0 : index
    %c0_26 = arith.constant 0 : index
    %c0_27 = arith.constant 0 : index
    %46 = vector.load %arg7[%c0_25, %c0_26, %c0_27] : memref<8x1x128xf32, #tpu.memory_space<vmem>>, vector<1x1x128xf32>
    %47 = vector.shape_cast %46 : vector<1x1x128xf32> to vector<1x128xf32>
    %48 = vector.broadcast %47 : vector<1x128xf32> to vector<26x128xf32>
    %49 = arith.addf %45, %48 : vector<26x128xf32>
    %50 = tpu.concatenate %6, %31, %49 in 1 : vector<26x128xf32>, vector<26x128xf32>, vector<26x128xf32> -> vector<26x384xf32>
    %51 = vector.extract_strided_slice %50 {offsets = [0, 0], sizes = [24, 384], strides = [1, 1]} : vector<26x384xf32> to vector<24x384xf32>
    %52 = vector.extract_strided_slice %50 {offsets = [2, 0], sizes = [24, 384], strides = [1, 1]} : vector<26x384xf32> to vector<24x384xf32>
    %c0_28 = arith.constant 0 : index
    %c0_29 = arith.constant 0 : index
    %c0_30 = arith.constant 0 : index
    %53 = vector.load %arg8[%c0_28, %c0_29, %c0_30] : memref<8x384x256xbf16, #tpu.memory_space<vmem>>, vector<1x384x256xbf16>
    %54 = vector.shape_cast %53 : vector<1x384x256xbf16> to vector<384x256xbf16>
    %55 = arith.truncf %51 : vector<24x384xf32> to vector<24x384xbf16>
    %cst_31 = arith.constant dense<0.000000e+00> : vector<24x256xf32>
    %56 = tpu.matmul %55, %54, %cst_31 {dimension_numbers = #tpu.dot_dimension_numbers<[1], [0], [0], [1], [0, 0, 1, 1], [], []>} : vector<24x384xbf16>, vector<384x256xbf16>, vector<24x256xf32> -> vector<24x256xf32>
    %c0_32 = arith.constant 0 : index
    %c0_33 = arith.constant 0 : index
    %c0_34 = arith.constant 0 : index
    %57 = vector.load %arg9[%c0_32, %c0_33, %c0_34] : memref<8x384x256xbf16, #tpu.memory_space<vmem>>, vector<1x384x256xbf16>
    %58 = vector.shape_cast %57 : vector<1x384x256xbf16> to vector<384x256xbf16>
    %59 = arith.truncf %52 : vector<24x384xf32> to vector<24x384xbf16>
    %cst_35 = arith.constant dense<0.000000e+00> : vector<24x256xf32>
    %60 = tpu.matmul %59, %58, %cst_35 {dimension_numbers = #tpu.dot_dimension_numbers<[1], [0], [0], [1], [0, 0, 1, 1], [], []>} : vector<24x384xbf16>, vector<384x256xbf16>, vector<24x256xf32> -> vector<24x256xf32>
    %61 = arith.addf %56, %60 : vector<24x256xf32>
    %c0_36 = arith.constant 0 : index
    %c0_37 = arith.constant 0 : index
    %c0_38 = arith.constant 0 : index
    %62 = vector.load %arg10[%c0_36, %c0_37, %c0_38] : memref<8x1x256xf32, #tpu.memory_space<vmem>>, vector<1x1x256xf32>
    %63 = vector.shape_cast %62 : vector<1x1x256xf32> to vector<1x256xf32>
    %64 = vector.broadcast %63 : vector<1x256xf32> to vector<24x256xf32>
    %65 = arith.addf %61, %64 : vector<24x256xf32>
    %66 = vector.extract_strided_slice %65 {offsets = [0, 0], sizes = [24, 128], strides = [1, 1]} : vector<24x256xf32> to vector<24x128xf32>
    %67 = math.tanh %66 : vector<24x128xf32>
    %68 = vector.extract_strided_slice %65 {offsets = [0, 128], sizes = [24, 128], strides = [1, 1]} : vector<24x256xf32> to vector<24x128xf32>
    %69 = arith.negf %68 : vector<24x128xf32>
    %70 = math.exp %69 : vector<24x128xf32>
    %cst_39 = arith.constant 1.000000e+00 : f32
    %71 = vector.broadcast %cst_39 : f32 to vector<24x128xf32>
    %72 = arith.addf %71, %70 : vector<24x128xf32>
    %73 = arith.divf %71, %72 : vector<24x128xf32>
    %74 = arith.mulf %67, %73 : vector<24x128xf32>
    %c0_40 = arith.constant 0 : index
    %c0_41 = arith.constant 0 : index
    %c0_42 = arith.constant 0 : index
    %75 = vector.load %arg11[%c0_40, %c0_41, %c0_42] : memref<8x128x256xbf16, #tpu.memory_space<vmem>>, vector<1x128x256xbf16>
    %76 = vector.shape_cast %75 : vector<1x128x256xbf16> to vector<128x256xbf16>
    %77 = arith.truncf %74 : vector<24x128xf32> to vector<24x128xbf16>
    %cst_43 = arith.constant dense<0.000000e+00> : vector<24x256xf32>
    %78 = tpu.matmul %77, %76, %cst_43 {dimension_numbers = #tpu.dot_dimension_numbers<[1], [0], [0], [1], [0, 0, 1, 1], [], []>} : vector<24x128xbf16>, vector<128x256xbf16>, vector<24x256xf32> -> vector<24x256xf32>
    %c0_44 = arith.constant 0 : index
    %c0_45 = arith.constant 0 : index
    %c0_46 = arith.constant 0 : index
    %79 = vector.load %arg12[%c0_44, %c0_45, %c0_46] : memref<8x1x256xf32, #tpu.memory_space<vmem>>, vector<1x1x256xf32>
    %80 = vector.shape_cast %79 : vector<1x1x256xf32> to vector<1x256xf32>
    %81 = vector.broadcast %80 : vector<1x256xf32> to vector<24x256xf32>
    %82 = arith.addf %78, %81 : vector<24x256xf32>
    %83 = vector.extract_strided_slice %82 {offsets = [0, 0], sizes = [24, 128], strides = [1, 1]} : vector<24x256xf32> to vector<24x128xf32>
    %84 = vector.extract_strided_slice %6 {offsets = [2, 0], sizes = [24, 128], strides = [1, 1]} : vector<26x128xf32> to vector<24x128xf32>
    %85 = arith.addf %83, %84 : vector<24x128xf32>
    %86 = vector.extract_strided_slice %82 {offsets = [0, 128], sizes = [24, 128], strides = [1, 1]} : vector<24x256xf32> to vector<24x128xf32>
    %cst_47 = arith.constant dense<0.000000e+00> : vector<128xf32>
    %87 = vector.multi_reduction <add>, %85, %cst_47 [0] : vector<24x128xf32> to vector<128xf32>
    %88 = vector.shape_cast %87 : vector<128xf32> to vector<1x128xf32>
    %cst_48 = arith.constant 2.400000e+01 : f32
    %89 = vector.broadcast %cst_48 : f32 to vector<1x128xf32>
    %90 = arith.divf %88, %89 : vector<1x128xf32>
    %91 = vector.broadcast %90 : vector<1x128xf32> to vector<24x128xf32>
    %92 = arith.subf %85, %91 : vector<24x128xf32>
    %93 = arith.mulf %92, %92 : vector<24x128xf32>
    %cst_49 = arith.constant dense<0.000000e+00> : vector<128xf32>
    %94 = vector.multi_reduction <add>, %93, %cst_49 [0] : vector<24x128xf32> to vector<128xf32>
    %95 = vector.shape_cast %94 : vector<128xf32> to vector<1x128xf32>
    %cst_50 = arith.constant 2.400000e+01 : f32
    %96 = vector.broadcast %cst_50 : f32 to vector<1x128xf32>
    %97 = arith.divf %95, %96 : vector<1x128xf32>
    %cst_51 = arith.constant 9.99999974E-6 : f32
    %98 = vector.broadcast %cst_51 : f32 to vector<1x128xf32>
    %99 = arith.addf %97, %98 : vector<1x128xf32>
    %100 = math.rsqrt %99 : vector<1x128xf32>
    %101 = vector.broadcast %100 : vector<1x128xf32> to vector<24x128xf32>
    %102 = arith.mulf %92, %101 : vector<24x128xf32>
    %c1 = arith.constant 1 : index
    %c0_52 = arith.constant 0 : index
    %c0_53 = arith.constant 0 : index
    %103 = vector.load %arg4[%c1, %c0_52, %c0_53] : memref<8x1x128xf32, #tpu.memory_space<vmem>>, vector<1x1x128xf32>
    %104 = vector.shape_cast %103 : vector<1x1x128xf32> to vector<1x128xf32>
    %105 = vector.broadcast %104 : vector<1x128xf32> to vector<24x128xf32>
    %106 = arith.mulf %102, %105 : vector<24x128xf32>
    %c1_54 = arith.constant 1 : index
    %c0_55 = arith.constant 0 : index
    %c0_56 = arith.constant 0 : index
    %107 = vector.load %arg5[%c1_54, %c0_55, %c0_56] : memref<8x1x128xf32, #tpu.memory_space<vmem>>, vector<1x1x128xf32>
    %108 = vector.shape_cast %107 : vector<1x1x128xf32> to vector<1x128xf32>
    %109 = vector.broadcast %108 : vector<1x128xf32> to vector<24x128xf32>
    %110 = arith.addf %106, %109 : vector<24x128xf32>
    %cst_57 = arith.constant dense<0.000000e+00> : vector<24x128xf32>
    %111 = tpu.matmul %85, %7, %cst_57 {dimension_numbers = #tpu.dot_dimension_numbers<[1], [0], [0], [1], [0, 0, 1, 1], [], []>} : vector<24x128xf32>, vector<128x128xf32>, vector<24x128xf32> -> vector<24x128xf32>
    %112 = arith.subf %85, %111 : vector<24x128xf32>
    %113 = arith.mulf %112, %112 : vector<24x128xf32>
    %cst_58 = arith.constant dense<0.000000e+00> : vector<24x128xf32>
    %114 = tpu.matmul %113, %7, %cst_58 {dimension_numbers = #tpu.dot_dimension_numbers<[1], [0], [0], [1], [0, 0, 1, 1], [], []>} : vector<24x128xf32>, vector<128x128xf32>, vector<24x128xf32> -> vector<24x128xf32>
    %cst_59 = arith.constant 1.14285719 : f32
    %115 = vector.broadcast %cst_59 : f32 to vector<24x128xf32>
    %116 = arith.mulf %114, %115 : vector<24x128xf32>
    %cst_60 = arith.constant 9.99999974E-6 : f32
    %117 = vector.broadcast %cst_60 : f32 to vector<24x128xf32>
    %118 = arith.addf %116, %117 : vector<24x128xf32>
    %119 = math.rsqrt %118 : vector<24x128xf32>
    %120 = arith.mulf %112, %119 : vector<24x128xf32>
    %c1_61 = arith.constant 1 : index
    %c0_62 = arith.constant 0 : index
    %c0_63 = arith.constant 0 : index
    %121 = vector.load %arg6[%c1_61, %c0_62, %c0_63] : memref<8x1x128xf32, #tpu.memory_space<vmem>>, vector<1x1x128xf32>
    %122 = vector.shape_cast %121 : vector<1x1x128xf32> to vector<1x128xf32>
    %123 = vector.broadcast %122 : vector<1x128xf32> to vector<24x128xf32>
    %124 = arith.mulf %120, %123 : vector<24x128xf32>
    %c1_64 = arith.constant 1 : index
    %c0_65 = arith.constant 0 : index
    %c0_66 = arith.constant 0 : index
    %125 = vector.load %arg7[%c1_64, %c0_65, %c0_66] : memref<8x1x128xf32, #tpu.memory_space<vmem>>, vector<1x1x128xf32>
    %126 = vector.shape_cast %125 : vector<1x1x128xf32> to vector<1x128xf32>
    %127 = vector.broadcast %126 : vector<1x128xf32> to vector<24x128xf32>
    %128 = arith.addf %124, %127 : vector<24x128xf32>
    %129 = tpu.concatenate %85, %110, %128 in 1 : vector<24x128xf32>, vector<24x128xf32>, vector<24x128xf32> -> vector<24x384xf32>
    %130 = vector.extract_strided_slice %129 {offsets = [0, 0], sizes = [20, 384], strides = [1, 1]} : vector<24x384xf32> to vector<20x384xf32>
    %131 = vector.extract_strided_slice %129 {offsets = [4, 0], sizes = [20, 384], strides = [1, 1]} : vector<24x384xf32> to vector<20x384xf32>
    %c1_67 = arith.constant 1 : index
    %c0_68 = arith.constant 0 : index
    %c0_69 = arith.constant 0 : index
    %132 = vector.load %arg8[%c1_67, %c0_68, %c0_69] : memref<8x384x256xbf16, #tpu.memory_space<vmem>>, vector<1x384x256xbf16>
    %133 = vector.shape_cast %132 : vector<1x384x256xbf16> to vector<384x256xbf16>
    %134 = arith.truncf %130 : vector<20x384xf32> to vector<20x384xbf16>
    %cst_70 = arith.constant dense<0.000000e+00> : vector<20x256xf32>
    %135 = tpu.matmul %134, %133, %cst_70 {dimension_numbers = #tpu.dot_dimension_numbers<[1], [0], [0], [1], [0, 0, 1, 1], [], []>} : vector<20x384xbf16>, vector<384x256xbf16>, vector<20x256xf32> -> vector<20x256xf32>
    %c1_71 = arith.constant 1 : index
    %c0_72 = arith.constant 0 : index
    %c0_73 = arith.constant 0 : index
    %136 = vector.load %arg9[%c1_71, %c0_72, %c0_73] : memref<8x384x256xbf16, #tpu.memory_space<vmem>>, vector<1x384x256xbf16>
    %137 = vector.shape_cast %136 : vector<1x384x256xbf16> to vector<384x256xbf16>
    %138 = arith.truncf %131 : vector<20x384xf32> to vector<20x384xbf16>
    %cst_74 = arith.constant dense<0.000000e+00> : vector<20x256xf32>
    %139 = tpu.matmul %138, %137, %cst_74 {dimension_numbers = #tpu.dot_dimension_numbers<[1], [0], [0], [1], [0, 0, 1, 1], [], []>} : vector<20x384xbf16>, vector<384x256xbf16>, vector<20x256xf32> -> vector<20x256xf32>
    %140 = arith.addf %135, %139 : vector<20x256xf32>
    %c1_75 = arith.constant 1 : index
    %c0_76 = arith.constant 0 : index
    %c0_77 = arith.constant 0 : index
    %141 = vector.load %arg10[%c1_75, %c0_76, %c0_77] : memref<8x1x256xf32, #tpu.memory_space<vmem>>, vector<1x1x256xf32>
    %142 = vector.shape_cast %141 : vector<1x1x256xf32> to vector<1x256xf32>
    %143 = vector.broadcast %142 : vector<1x256xf32> to vector<20x256xf32>
    %144 = arith.addf %140, %143 : vector<20x256xf32>
    %145 = vector.extract_strided_slice %144 {offsets = [0, 0], sizes = [20, 128], strides = [1, 1]} : vector<20x256xf32> to vector<20x128xf32>
    %146 = math.tanh %145 : vector<20x128xf32>
    %147 = vector.extract_strided_slice %144 {offsets = [0, 128], sizes = [20, 128], strides = [1, 1]} : vector<20x256xf32> to vector<20x128xf32>
    %148 = arith.negf %147 : vector<20x128xf32>
    %149 = math.exp %148 : vector<20x128xf32>
    %cst_78 = arith.constant 1.000000e+00 : f32
    %150 = vector.broadcast %cst_78 : f32 to vector<20x128xf32>
    %151 = arith.addf %150, %149 : vector<20x128xf32>
    %152 = arith.divf %150, %151 : vector<20x128xf32>
    %153 = arith.mulf %146, %152 : vector<20x128xf32>
    %c1_79 = arith.constant 1 : index
    %c0_80 = arith.constant 0 : index
    %c0_81 = arith.constant 0 : index
    %154 = vector.load %arg11[%c1_79, %c0_80, %c0_81] : memref<8x128x256xbf16, #tpu.memory_space<vmem>>, vector<1x128x256xbf16>
    %155 = vector.shape_cast %154 : vector<1x128x256xbf16> to vector<128x256xbf16>
    %156 = arith.truncf %153 : vector<20x128xf32> to vector<20x128xbf16>
    %cst_82 = arith.constant dense<0.000000e+00> : vector<20x256xf32>
    %157 = tpu.matmul %156, %155, %cst_82 {dimension_numbers = #tpu.dot_dimension_numbers<[1], [0], [0], [1], [0, 0, 1, 1], [], []>} : vector<20x128xbf16>, vector<128x256xbf16>, vector<20x256xf32> -> vector<20x256xf32>
    %c1_83 = arith.constant 1 : index
    %c0_84 = arith.constant 0 : index
    %c0_85 = arith.constant 0 : index
    %158 = vector.load %arg12[%c1_83, %c0_84, %c0_85] : memref<8x1x256xf32, #tpu.memory_space<vmem>>, vector<1x1x256xf32>
    %159 = vector.shape_cast %158 : vector<1x1x256xf32> to vector<1x256xf32>
    %160 = vector.broadcast %159 : vector<1x256xf32> to vector<20x256xf32>
    %161 = arith.addf %157, %160 : vector<20x256xf32>
    %162 = vector.extract_strided_slice %161 {offsets = [0, 0], sizes = [20, 128], strides = [1, 1]} : vector<20x256xf32> to vector<20x128xf32>
    %163 = vector.extract_strided_slice %85 {offsets = [4, 0], sizes = [20, 128], strides = [1, 1]} : vector<24x128xf32> to vector<20x128xf32>
    %164 = arith.addf %162, %163 : vector<20x128xf32>
    %165 = vector.extract_strided_slice %161 {offsets = [0, 128], sizes = [20, 128], strides = [1, 1]} : vector<20x256xf32> to vector<20x128xf32>
    %166 = vector.extract_strided_slice %86 {offsets = [4, 0], sizes = [20, 128], strides = [1, 1]} : vector<24x128xf32> to vector<20x128xf32>
    %167 = arith.addf %165, %166 : vector<20x128xf32>
    %cst_86 = arith.constant dense<0.000000e+00> : vector<128xf32>
    %168 = vector.multi_reduction <add>, %164, %cst_86 [0] : vector<20x128xf32> to vector<128xf32>
    %169 = vector.shape_cast %168 : vector<128xf32> to vector<1x128xf32>
    %cst_87 = arith.constant 2.000000e+01 : f32
    %170 = vector.broadcast %cst_87 : f32 to vector<1x128xf32>
    %171 = arith.divf %169, %170 : vector<1x128xf32>
    %172 = vector.broadcast %171 : vector<1x128xf32> to vector<20x128xf32>
    %173 = arith.subf %164, %172 : vector<20x128xf32>
    %174 = arith.mulf %173, %173 : vector<20x128xf32>
    %cst_88 = arith.constant dense<0.000000e+00> : vector<128xf32>
    %175 = vector.multi_reduction <add>, %174, %cst_88 [0] : vector<20x128xf32> to vector<128xf32>
    %176 = vector.shape_cast %175 : vector<128xf32> to vector<1x128xf32>
    %cst_89 = arith.constant 2.000000e+01 : f32
    %177 = vector.broadcast %cst_89 : f32 to vector<1x128xf32>
    %178 = arith.divf %176, %177 : vector<1x128xf32>
    %cst_90 = arith.constant 9.99999974E-6 : f32
    %179 = vector.broadcast %cst_90 : f32 to vector<1x128xf32>
    %180 = arith.addf %178, %179 : vector<1x128xf32>
    %181 = math.rsqrt %180 : vector<1x128xf32>
    %182 = vector.broadcast %181 : vector<1x128xf32> to vector<20x128xf32>
    %183 = arith.mulf %173, %182 : vector<20x128xf32>
    %c2 = arith.constant 2 : index
    %c0_91 = arith.constant 0 : index
    %c0_92 = arith.constant 0 : index
    %184 = vector.load %arg4[%c2, %c0_91, %c0_92] : memref<8x1x128xf32, #tpu.memory_space<vmem>>, vector<1x1x128xf32>
    %185 = vector.shape_cast %184 : vector<1x1x128xf32> to vector<1x128xf32>
    %186 = vector.broadcast %185 : vector<1x128xf32> to vector<20x128xf32>
    %187 = arith.mulf %183, %186 : vector<20x128xf32>
    %c2_93 = arith.constant 2 : index
    %c0_94 = arith.constant 0 : index
    %c0_95 = arith.constant 0 : index
    %188 = vector.load %arg5[%c2_93, %c0_94, %c0_95] : memref<8x1x128xf32, #tpu.memory_space<vmem>>, vector<1x1x128xf32>
    %189 = vector.shape_cast %188 : vector<1x1x128xf32> to vector<1x128xf32>
    %190 = vector.broadcast %189 : vector<1x128xf32> to vector<20x128xf32>
    %191 = arith.addf %187, %190 : vector<20x128xf32>
    %cst_96 = arith.constant dense<0.000000e+00> : vector<20x128xf32>
    %192 = tpu.matmul %164, %7, %cst_96 {dimension_numbers = #tpu.dot_dimension_numbers<[1], [0], [0], [1], [0, 0, 1, 1], [], []>} : vector<20x128xf32>, vector<128x128xf32>, vector<20x128xf32> -> vector<20x128xf32>
    %193 = arith.subf %164, %192 : vector<20x128xf32>
    %194 = arith.mulf %193, %193 : vector<20x128xf32>
    %cst_97 = arith.constant dense<0.000000e+00> : vector<20x128xf32>
    %195 = tpu.matmul %194, %7, %cst_97 {dimension_numbers = #tpu.dot_dimension_numbers<[1], [0], [0], [1], [0, 0, 1, 1], [], []>} : vector<20x128xf32>, vector<128x128xf32>, vector<20x128xf32> -> vector<20x128xf32>
    %cst_98 = arith.constant 1.14285719 : f32
    %196 = vector.broadcast %cst_98 : f32 to vector<20x128xf32>
    %197 = arith.mulf %195, %196 : vector<20x128xf32>
    %cst_99 = arith.constant 9.99999974E-6 : f32
    %198 = vector.broadcast %cst_99 : f32 to vector<20x128xf32>
    %199 = arith.addf %197, %198 : vector<20x128xf32>
    %200 = math.rsqrt %199 : vector<20x128xf32>
    %201 = arith.mulf %193, %200 : vector<20x128xf32>
    %c2_100 = arith.constant 2 : index
    %c0_101 = arith.constant 0 : index
    %c0_102 = arith.constant 0 : index
    %202 = vector.load %arg6[%c2_100, %c0_101, %c0_102] : memref<8x1x128xf32, #tpu.memory_space<vmem>>, vector<1x1x128xf32>
    %203 = vector.shape_cast %202 : vector<1x1x128xf32> to vector<1x128xf32>
    %204 = vector.broadcast %203 : vector<1x128xf32> to vector<20x128xf32>
    %205 = arith.mulf %201, %204 : vector<20x128xf32>
    %c2_103 = arith.constant 2 : index
    %c0_104 = arith.constant 0 : index
    %c0_105 = arith.constant 0 : index
    %206 = vector.load %arg7[%c2_103, %c0_104, %c0_105] : memref<8x1x128xf32, #tpu.memory_space<vmem>>, vector<1x1x128xf32>
    %207 = vector.shape_cast %206 : vector<1x1x128xf32> to vector<1x128xf32>
    %208 = vector.broadcast %207 : vector<1x128xf32> to vector<20x128xf32>
    %209 = arith.addf %205, %208 : vector<20x128xf32>
    %210 = tpu.concatenate %164, %191, %209 in 1 : vector<20x128xf32>, vector<20x128xf32>, vector<20x128xf32> -> vector<20x384xf32>
    %211 = vector.extract_strided_slice %210 {offsets = [0, 0], sizes = [18, 384], strides = [1, 1]} : vector<20x384xf32> to vector<18x384xf32>
    %212 = vector.extract_strided_slice %210 {offsets = [2, 0], sizes = [18, 384], strides = [1, 1]} : vector<20x384xf32> to vector<18x384xf32>
    %c2_106 = arith.constant 2 : index
    %c0_107 = arith.constant 0 : index
    %c0_108 = arith.constant 0 : index
    %213 = vector.load %arg8[%c2_106, %c0_107, %c0_108] : memref<8x384x256xbf16, #tpu.memory_space<vmem>>, vector<1x384x256xbf16>
    %214 = vector.shape_cast %213 : vector<1x384x256xbf16> to vector<384x256xbf16>
    %215 = arith.truncf %211 : vector<18x384xf32> to vector<18x384xbf16>
    %cst_109 = arith.constant dense<0.000000e+00> : vector<18x256xf32>
    %216 = tpu.matmul %215, %214, %cst_109 {dimension_numbers = #tpu.dot_dimension_numbers<[1], [0], [0], [1], [0, 0, 1, 1], [], []>} : vector<18x384xbf16>, vector<384x256xbf16>, vector<18x256xf32> -> vector<18x256xf32>
    %c2_110 = arith.constant 2 : index
    %c0_111 = arith.constant 0 : index
    %c0_112 = arith.constant 0 : index
    %217 = vector.load %arg9[%c2_110, %c0_111, %c0_112] : memref<8x384x256xbf16, #tpu.memory_space<vmem>>, vector<1x384x256xbf16>
    %218 = vector.shape_cast %217 : vector<1x384x256xbf16> to vector<384x256xbf16>
    %219 = arith.truncf %212 : vector<18x384xf32> to vector<18x384xbf16>
    %cst_113 = arith.constant dense<0.000000e+00> : vector<18x256xf32>
    %220 = tpu.matmul %219, %218, %cst_113 {dimension_numbers = #tpu.dot_dimension_numbers<[1], [0], [0], [1], [0, 0, 1, 1], [], []>} : vector<18x384xbf16>, vector<384x256xbf16>, vector<18x256xf32> -> vector<18x256xf32>
    %221 = arith.addf %216, %220 : vector<18x256xf32>
    %c2_114 = arith.constant 2 : index
    %c0_115 = arith.constant 0 : index
    %c0_116 = arith.constant 0 : index
    %222 = vector.load %arg10[%c2_114, %c0_115, %c0_116] : memref<8x1x256xf32, #tpu.memory_space<vmem>>, vector<1x1x256xf32>
    %223 = vector.shape_cast %222 : vector<1x1x256xf32> to vector<1x256xf32>
    %224 = vector.broadcast %223 : vector<1x256xf32> to vector<18x256xf32>
    %225 = arith.addf %221, %224 : vector<18x256xf32>
    %226 = vector.extract_strided_slice %225 {offsets = [0, 0], sizes = [18, 128], strides = [1, 1]} : vector<18x256xf32> to vector<18x128xf32>
    %227 = math.tanh %226 : vector<18x128xf32>
    %228 = vector.extract_strided_slice %225 {offsets = [0, 128], sizes = [18, 128], strides = [1, 1]} : vector<18x256xf32> to vector<18x128xf32>
    %229 = arith.negf %228 : vector<18x128xf32>
    %230 = math.exp %229 : vector<18x128xf32>
    %cst_117 = arith.constant 1.000000e+00 : f32
    %231 = vector.broadcast %cst_117 : f32 to vector<18x128xf32>
    %232 = arith.addf %231, %230 : vector<18x128xf32>
    %233 = arith.divf %231, %232 : vector<18x128xf32>
    %234 = arith.mulf %227, %233 : vector<18x128xf32>
    %c2_118 = arith.constant 2 : index
    %c0_119 = arith.constant 0 : index
    %c0_120 = arith.constant 0 : index
    %235 = vector.load %arg11[%c2_118, %c0_119, %c0_120] : memref<8x128x256xbf16, #tpu.memory_space<vmem>>, vector<1x128x256xbf16>
    %236 = vector.shape_cast %235 : vector<1x128x256xbf16> to vector<128x256xbf16>
    %237 = arith.truncf %234 : vector<18x128xf32> to vector<18x128xbf16>
    %cst_121 = arith.constant dense<0.000000e+00> : vector<18x256xf32>
    %238 = tpu.matmul %237, %236, %cst_121 {dimension_numbers = #tpu.dot_dimension_numbers<[1], [0], [0], [1], [0, 0, 1, 1], [], []>} : vector<18x128xbf16>, vector<128x256xbf16>, vector<18x256xf32> -> vector<18x256xf32>
    %c2_122 = arith.constant 2 : index
    %c0_123 = arith.constant 0 : index
    %c0_124 = arith.constant 0 : index
    %239 = vector.load %arg12[%c2_122, %c0_123, %c0_124] : memref<8x1x256xf32, #tpu.memory_space<vmem>>, vector<1x1x256xf32>
    %240 = vector.shape_cast %239 : vector<1x1x256xf32> to vector<1x256xf32>
    %241 = vector.broadcast %240 : vector<1x256xf32> to vector<18x256xf32>
    %242 = arith.addf %238, %241 : vector<18x256xf32>
    %243 = vector.extract_strided_slice %242 {offsets = [0, 0], sizes = [18, 128], strides = [1, 1]} : vector<18x256xf32> to vector<18x128xf32>
    %244 = vector.extract_strided_slice %164 {offsets = [2, 0], sizes = [18, 128], strides = [1, 1]} : vector<20x128xf32> to vector<18x128xf32>
    %245 = arith.addf %243, %244 : vector<18x128xf32>
    %246 = vector.extract_strided_slice %242 {offsets = [0, 128], sizes = [18, 128], strides = [1, 1]} : vector<18x256xf32> to vector<18x128xf32>
    %247 = vector.extract_strided_slice %167 {offsets = [2, 0], sizes = [18, 128], strides = [1, 1]} : vector<20x128xf32> to vector<18x128xf32>
    %248 = arith.addf %246, %247 : vector<18x128xf32>
    %cst_125 = arith.constant dense<0.000000e+00> : vector<128xf32>
    %249 = vector.multi_reduction <add>, %245, %cst_125 [0] : vector<18x128xf32> to vector<128xf32>
    %250 = vector.shape_cast %249 : vector<128xf32> to vector<1x128xf32>
    %cst_126 = arith.constant 1.800000e+01 : f32
    %251 = vector.broadcast %cst_126 : f32 to vector<1x128xf32>
    %252 = arith.divf %250, %251 : vector<1x128xf32>
    %253 = vector.broadcast %252 : vector<1x128xf32> to vector<18x128xf32>
    %254 = arith.subf %245, %253 : vector<18x128xf32>
    %255 = arith.mulf %254, %254 : vector<18x128xf32>
    %cst_127 = arith.constant dense<0.000000e+00> : vector<128xf32>
    %256 = vector.multi_reduction <add>, %255, %cst_127 [0] : vector<18x128xf32> to vector<128xf32>
    %257 = vector.shape_cast %256 : vector<128xf32> to vector<1x128xf32>
    %cst_128 = arith.constant 1.800000e+01 : f32
    %258 = vector.broadcast %cst_128 : f32 to vector<1x128xf32>
    %259 = arith.divf %257, %258 : vector<1x128xf32>
    %cst_129 = arith.constant 9.99999974E-6 : f32
    %260 = vector.broadcast %cst_129 : f32 to vector<1x128xf32>
    %261 = arith.addf %259, %260 : vector<1x128xf32>
    %262 = math.rsqrt %261 : vector<1x128xf32>
    %263 = vector.broadcast %262 : vector<1x128xf32> to vector<18x128xf32>
    %264 = arith.mulf %254, %263 : vector<18x128xf32>
    %c3 = arith.constant 3 : index
    %c0_130 = arith.constant 0 : index
    %c0_131 = arith.constant 0 : index
    %265 = vector.load %arg4[%c3, %c0_130, %c0_131] : memref<8x1x128xf32, #tpu.memory_space<vmem>>, vector<1x1x128xf32>
    %266 = vector.shape_cast %265 : vector<1x1x128xf32> to vector<1x128xf32>
    %267 = vector.broadcast %266 : vector<1x128xf32> to vector<18x128xf32>
    %268 = arith.mulf %264, %267 : vector<18x128xf32>
    %c3_132 = arith.constant 3 : index
    %c0_133 = arith.constant 0 : index
    %c0_134 = arith.constant 0 : index
    %269 = vector.load %arg5[%c3_132, %c0_133, %c0_134] : memref<8x1x128xf32, #tpu.memory_space<vmem>>, vector<1x1x128xf32>
    %270 = vector.shape_cast %269 : vector<1x1x128xf32> to vector<1x128xf32>
    %271 = vector.broadcast %270 : vector<1x128xf32> to vector<18x128xf32>
    %272 = arith.addf %268, %271 : vector<18x128xf32>
    %cst_135 = arith.constant dense<0.000000e+00> : vector<18x128xf32>
    %273 = tpu.matmul %245, %7, %cst_135 {dimension_numbers = #tpu.dot_dimension_numbers<[1], [0], [0], [1], [0, 0, 1, 1], [], []>} : vector<18x128xf32>, vector<128x128xf32>, vector<18x128xf32> -> vector<18x128xf32>
    %274 = arith.subf %245, %273 : vector<18x128xf32>
    %275 = arith.mulf %274, %274 : vector<18x128xf32>
    %cst_136 = arith.constant dense<0.000000e+00> : vector<18x128xf32>
    %276 = tpu.matmul %275, %7, %cst_136 {dimension_numbers = #tpu.dot_dimension_numbers<[1], [0], [0], [1], [0, 0, 1, 1], [], []>} : vector<18x128xf32>, vector<128x128xf32>, vector<18x128xf32> -> vector<18x128xf32>
    %cst_137 = arith.constant 1.14285719 : f32
    %277 = vector.broadcast %cst_137 : f32 to vector<18x128xf32>
    %278 = arith.mulf %276, %277 : vector<18x128xf32>
    %cst_138 = arith.constant 9.99999974E-6 : f32
    %279 = vector.broadcast %cst_138 : f32 to vector<18x128xf32>
    %280 = arith.addf %278, %279 : vector<18x128xf32>
    %281 = math.rsqrt %280 : vector<18x128xf32>
    %282 = arith.mulf %274, %281 : vector<18x128xf32>
    %c3_139 = arith.constant 3 : index
    %c0_140 = arith.constant 0 : index
    %c0_141 = arith.constant 0 : index
    %283 = vector.load %arg6[%c3_139, %c0_140, %c0_141] : memref<8x1x128xf32, #tpu.memory_space<vmem>>, vector<1x1x128xf32>
    %284 = vector.shape_cast %283 : vector<1x1x128xf32> to vector<1x128xf32>
    %285 = vector.broadcast %284 : vector<1x128xf32> to vector<18x128xf32>
    %286 = arith.mulf %282, %285 : vector<18x128xf32>
    %c3_142 = arith.constant 3 : index
    %c0_143 = arith.constant 0 : index
    %c0_144 = arith.constant 0 : index
    %287 = vector.load %arg7[%c3_142, %c0_143, %c0_144] : memref<8x1x128xf32, #tpu.memory_space<vmem>>, vector<1x1x128xf32>
    %288 = vector.shape_cast %287 : vector<1x1x128xf32> to vector<1x128xf32>
    %289 = vector.broadcast %288 : vector<1x128xf32> to vector<18x128xf32>
    %290 = arith.addf %286, %289 : vector<18x128xf32>
    %291 = tpu.concatenate %245, %272, %290 in 1 : vector<18x128xf32>, vector<18x128xf32>, vector<18x128xf32> -> vector<18x384xf32>
    %292 = vector.extract_strided_slice %291 {offsets = [0, 0], sizes = [14, 384], strides = [1, 1]} : vector<18x384xf32> to vector<14x384xf32>
    %293 = vector.extract_strided_slice %291 {offsets = [4, 0], sizes = [14, 384], strides = [1, 1]} : vector<18x384xf32> to vector<14x384xf32>
    %c3_145 = arith.constant 3 : index
    %c0_146 = arith.constant 0 : index
    %c0_147 = arith.constant 0 : index
    %294 = vector.load %arg8[%c3_145, %c0_146, %c0_147] : memref<8x384x256xbf16, #tpu.memory_space<vmem>>, vector<1x384x256xbf16>
    %295 = vector.shape_cast %294 : vector<1x384x256xbf16> to vector<384x256xbf16>
    %296 = arith.truncf %292 : vector<14x384xf32> to vector<14x384xbf16>
    %cst_148 = arith.constant dense<0.000000e+00> : vector<14x256xf32>
    %297 = tpu.matmul %296, %295, %cst_148 {dimension_numbers = #tpu.dot_dimension_numbers<[1], [0], [0], [1], [0, 0, 1, 1], [], []>} : vector<14x384xbf16>, vector<384x256xbf16>, vector<14x256xf32> -> vector<14x256xf32>
    %c3_149 = arith.constant 3 : index
    %c0_150 = arith.constant 0 : index
    %c0_151 = arith.constant 0 : index
    %298 = vector.load %arg9[%c3_149, %c0_150, %c0_151] : memref<8x384x256xbf16, #tpu.memory_space<vmem>>, vector<1x384x256xbf16>
    %299 = vector.shape_cast %298 : vector<1x384x256xbf16> to vector<384x256xbf16>
    %300 = arith.truncf %293 : vector<14x384xf32> to vector<14x384xbf16>
    %cst_152 = arith.constant dense<0.000000e+00> : vector<14x256xf32>
    %301 = tpu.matmul %300, %299, %cst_152 {dimension_numbers = #tpu.dot_dimension_numbers<[1], [0], [0], [1], [0, 0, 1, 1], [], []>} : vector<14x384xbf16>, vector<384x256xbf16>, vector<14x256xf32> -> vector<14x256xf32>
    %302 = arith.addf %297, %301 : vector<14x256xf32>
    %c3_153 = arith.constant 3 : index
    %c0_154 = arith.constant 0 : index
    %c0_155 = arith.constant 0 : index
    %303 = vector.load %arg10[%c3_153, %c0_154, %c0_155] : memref<8x1x256xf32, #tpu.memory_space<vmem>>, vector<1x1x256xf32>
    %304 = vector.shape_cast %303 : vector<1x1x256xf32> to vector<1x256xf32>
    %305 = vector.broadcast %304 : vector<1x256xf32> to vector<14x256xf32>
    %306 = arith.addf %302, %305 : vector<14x256xf32>
    %307 = vector.extract_strided_slice %306 {offsets = [0, 0], sizes = [14, 128], strides = [1, 1]} : vector<14x256xf32> to vector<14x128xf32>
    %308 = math.tanh %307 : vector<14x128xf32>
    %309 = vector.extract_strided_slice %306 {offsets = [0, 128], sizes = [14, 128], strides = [1, 1]} : vector<14x256xf32> to vector<14x128xf32>
    %310 = arith.negf %309 : vector<14x128xf32>
    %311 = math.exp %310 : vector<14x128xf32>
    %cst_156 = arith.constant 1.000000e+00 : f32
    %312 = vector.broadcast %cst_156 : f32 to vector<14x128xf32>
    %313 = arith.addf %312, %311 : vector<14x128xf32>
    %314 = arith.divf %312, %313 : vector<14x128xf32>
    %315 = arith.mulf %308, %314 : vector<14x128xf32>
    %c3_157 = arith.constant 3 : index
    %c0_158 = arith.constant 0 : index
    %c0_159 = arith.constant 0 : index
    %316 = vector.load %arg11[%c3_157, %c0_158, %c0_159] : memref<8x128x256xbf16, #tpu.memory_space<vmem>>, vector<1x128x256xbf16>
    %317 = vector.shape_cast %316 : vector<1x128x256xbf16> to vector<128x256xbf16>
    %318 = arith.truncf %315 : vector<14x128xf32> to vector<14x128xbf16>
    %cst_160 = arith.constant dense<0.000000e+00> : vector<14x256xf32>
    %319 = tpu.matmul %318, %317, %cst_160 {dimension_numbers = #tpu.dot_dimension_numbers<[1], [0], [0], [1], [0, 0, 1, 1], [], []>} : vector<14x128xbf16>, vector<128x256xbf16>, vector<14x256xf32> -> vector<14x256xf32>
    %c3_161 = arith.constant 3 : index
    %c0_162 = arith.constant 0 : index
    %c0_163 = arith.constant 0 : index
    %320 = vector.load %arg12[%c3_161, %c0_162, %c0_163] : memref<8x1x256xf32, #tpu.memory_space<vmem>>, vector<1x1x256xf32>
    %321 = vector.shape_cast %320 : vector<1x1x256xf32> to vector<1x256xf32>
    %322 = vector.broadcast %321 : vector<1x256xf32> to vector<14x256xf32>
    %323 = arith.addf %319, %322 : vector<14x256xf32>
    %324 = vector.extract_strided_slice %323 {offsets = [0, 0], sizes = [14, 128], strides = [1, 1]} : vector<14x256xf32> to vector<14x128xf32>
    %325 = vector.extract_strided_slice %245 {offsets = [4, 0], sizes = [14, 128], strides = [1, 1]} : vector<18x128xf32> to vector<14x128xf32>
    %326 = arith.addf %324, %325 : vector<14x128xf32>
    %327 = vector.extract_strided_slice %323 {offsets = [0, 128], sizes = [14, 128], strides = [1, 1]} : vector<14x256xf32> to vector<14x128xf32>
    %328 = vector.extract_strided_slice %248 {offsets = [4, 0], sizes = [14, 128], strides = [1, 1]} : vector<18x128xf32> to vector<14x128xf32>
    %329 = arith.addf %327, %328 : vector<14x128xf32>
    %cst_164 = arith.constant dense<0.000000e+00> : vector<128xf32>
    %330 = vector.multi_reduction <add>, %326, %cst_164 [0] : vector<14x128xf32> to vector<128xf32>
    %331 = vector.shape_cast %330 : vector<128xf32> to vector<1x128xf32>
    %cst_165 = arith.constant 1.400000e+01 : f32
    %332 = vector.broadcast %cst_165 : f32 to vector<1x128xf32>
    %333 = arith.divf %331, %332 : vector<1x128xf32>
    %334 = vector.broadcast %333 : vector<1x128xf32> to vector<14x128xf32>
    %335 = arith.subf %326, %334 : vector<14x128xf32>
    %336 = arith.mulf %335, %335 : vector<14x128xf32>
    %cst_166 = arith.constant dense<0.000000e+00> : vector<128xf32>
    %337 = vector.multi_reduction <add>, %336, %cst_166 [0] : vector<14x128xf32> to vector<128xf32>
    %338 = vector.shape_cast %337 : vector<128xf32> to vector<1x128xf32>
    %cst_167 = arith.constant 1.400000e+01 : f32
    %339 = vector.broadcast %cst_167 : f32 to vector<1x128xf32>
    %340 = arith.divf %338, %339 : vector<1x128xf32>
    %cst_168 = arith.constant 9.99999974E-6 : f32
    %341 = vector.broadcast %cst_168 : f32 to vector<1x128xf32>
    %342 = arith.addf %340, %341 : vector<1x128xf32>
    %343 = math.rsqrt %342 : vector<1x128xf32>
    %344 = vector.broadcast %343 : vector<1x128xf32> to vector<14x128xf32>
    %345 = arith.mulf %335, %344 : vector<14x128xf32>
    %c4 = arith.constant 4 : index
    %c0_169 = arith.constant 0 : index
    %c0_170 = arith.constant 0 : index
    %346 = vector.load %arg4[%c4, %c0_169, %c0_170] : memref<8x1x128xf32, #tpu.memory_space<vmem>>, vector<1x1x128xf32>
    %347 = vector.shape_cast %346 : vector<1x1x128xf32> to vector<1x128xf32>
    %348 = vector.broadcast %347 : vector<1x128xf32> to vector<14x128xf32>
    %349 = arith.mulf %345, %348 : vector<14x128xf32>
    %c4_171 = arith.constant 4 : index
    %c0_172 = arith.constant 0 : index
    %c0_173 = arith.constant 0 : index
    %350 = vector.load %arg5[%c4_171, %c0_172, %c0_173] : memref<8x1x128xf32, #tpu.memory_space<vmem>>, vector<1x1x128xf32>
    %351 = vector.shape_cast %350 : vector<1x1x128xf32> to vector<1x128xf32>
    %352 = vector.broadcast %351 : vector<1x128xf32> to vector<14x128xf32>
    %353 = arith.addf %349, %352 : vector<14x128xf32>
    %cst_174 = arith.constant dense<0.000000e+00> : vector<14x128xf32>
    %354 = tpu.matmul %326, %7, %cst_174 {dimension_numbers = #tpu.dot_dimension_numbers<[1], [0], [0], [1], [0, 0, 1, 1], [], []>} : vector<14x128xf32>, vector<128x128xf32>, vector<14x128xf32> -> vector<14x128xf32>
    %355 = arith.subf %326, %354 : vector<14x128xf32>
    %356 = arith.mulf %355, %355 : vector<14x128xf32>
    %cst_175 = arith.constant dense<0.000000e+00> : vector<14x128xf32>
    %357 = tpu.matmul %356, %7, %cst_175 {dimension_numbers = #tpu.dot_dimension_numbers<[1], [0], [0], [1], [0, 0, 1, 1], [], []>} : vector<14x128xf32>, vector<128x128xf32>, vector<14x128xf32> -> vector<14x128xf32>
    %cst_176 = arith.constant 1.14285719 : f32
    %358 = vector.broadcast %cst_176 : f32 to vector<14x128xf32>
    %359 = arith.mulf %357, %358 : vector<14x128xf32>
    %cst_177 = arith.constant 9.99999974E-6 : f32
    %360 = vector.broadcast %cst_177 : f32 to vector<14x128xf32>
    %361 = arith.addf %359, %360 : vector<14x128xf32>
    %362 = math.rsqrt %361 : vector<14x128xf32>
    %363 = arith.mulf %355, %362 : vector<14x128xf32>
    %c4_178 = arith.constant 4 : index
    %c0_179 = arith.constant 0 : index
    %c0_180 = arith.constant 0 : index
    %364 = vector.load %arg6[%c4_178, %c0_179, %c0_180] : memref<8x1x128xf32, #tpu.memory_space<vmem>>, vector<1x1x128xf32>
    %365 = vector.shape_cast %364 : vector<1x1x128xf32> to vector<1x128xf32>
    %366 = vector.broadcast %365 : vector<1x128xf32> to vector<14x128xf32>
    %367 = arith.mulf %363, %366 : vector<14x128xf32>
    %c4_181 = arith.constant 4 : index
    %c0_182 = arith.constant 0 : index
    %c0_183 = arith.constant 0 : index
    %368 = vector.load %arg7[%c4_181, %c0_182, %c0_183] : memref<8x1x128xf32, #tpu.memory_space<vmem>>, vector<1x1x128xf32>
    %369 = vector.shape_cast %368 : vector<1x1x128xf32> to vector<1x128xf32>
    %370 = vector.broadcast %369 : vector<1x128xf32> to vector<14x128xf32>
    %371 = arith.addf %367, %370 : vector<14x128xf32>
    %372 = tpu.concatenate %326, %353, %371 in 1 : vector<14x128xf32>, vector<14x128xf32>, vector<14x128xf32> -> vector<14x384xf32>
    %373 = vector.extract_strided_slice %372 {offsets = [0, 0], sizes = [12, 384], strides = [1, 1]} : vector<14x384xf32> to vector<12x384xf32>
    %374 = vector.extract_strided_slice %372 {offsets = [2, 0], sizes = [12, 384], strides = [1, 1]} : vector<14x384xf32> to vector<12x384xf32>
    %c4_184 = arith.constant 4 : index
    %c0_185 = arith.constant 0 : index
    %c0_186 = arith.constant 0 : index
    %375 = vector.load %arg8[%c4_184, %c0_185, %c0_186] : memref<8x384x256xbf16, #tpu.memory_space<vmem>>, vector<1x384x256xbf16>
    %376 = vector.shape_cast %375 : vector<1x384x256xbf16> to vector<384x256xbf16>
    %377 = arith.truncf %373 : vector<12x384xf32> to vector<12x384xbf16>
    %cst_187 = arith.constant dense<0.000000e+00> : vector<12x256xf32>
    %378 = tpu.matmul %377, %376, %cst_187 {dimension_numbers = #tpu.dot_dimension_numbers<[1], [0], [0], [1], [0, 0, 1, 1], [], []>} : vector<12x384xbf16>, vector<384x256xbf16>, vector<12x256xf32> -> vector<12x256xf32>
    %c4_188 = arith.constant 4 : index
    %c0_189 = arith.constant 0 : index
    %c0_190 = arith.constant 0 : index
    %379 = vector.load %arg9[%c4_188, %c0_189, %c0_190] : memref<8x384x256xbf16, #tpu.memory_space<vmem>>, vector<1x384x256xbf16>
    %380 = vector.shape_cast %379 : vector<1x384x256xbf16> to vector<384x256xbf16>
    %381 = arith.truncf %374 : vector<12x384xf32> to vector<12x384xbf16>
    %cst_191 = arith.constant dense<0.000000e+00> : vector<12x256xf32>
    %382 = tpu.matmul %381, %380, %cst_191 {dimension_numbers = #tpu.dot_dimension_numbers<[1], [0], [0], [1], [0, 0, 1, 1], [], []>} : vector<12x384xbf16>, vector<384x256xbf16>, vector<12x256xf32> -> vector<12x256xf32>
    %383 = arith.addf %378, %382 : vector<12x256xf32>
    %c4_192 = arith.constant 4 : index
    %c0_193 = arith.constant 0 : index
    %c0_194 = arith.constant 0 : index
    %384 = vector.load %arg10[%c4_192, %c0_193, %c0_194] : memref<8x1x256xf32, #tpu.memory_space<vmem>>, vector<1x1x256xf32>
    %385 = vector.shape_cast %384 : vector<1x1x256xf32> to vector<1x256xf32>
    %386 = vector.broadcast %385 : vector<1x256xf32> to vector<12x256xf32>
    %387 = arith.addf %383, %386 : vector<12x256xf32>
    %388 = vector.extract_strided_slice %387 {offsets = [0, 0], sizes = [12, 128], strides = [1, 1]} : vector<12x256xf32> to vector<12x128xf32>
    %389 = math.tanh %388 : vector<12x128xf32>
    %390 = vector.extract_strided_slice %387 {offsets = [0, 128], sizes = [12, 128], strides = [1, 1]} : vector<12x256xf32> to vector<12x128xf32>
    %391 = arith.negf %390 : vector<12x128xf32>
    %392 = math.exp %391 : vector<12x128xf32>
    %cst_195 = arith.constant 1.000000e+00 : f32
    %393 = vector.broadcast %cst_195 : f32 to vector<12x128xf32>
    %394 = arith.addf %393, %392 : vector<12x128xf32>
    %395 = arith.divf %393, %394 : vector<12x128xf32>
    %396 = arith.mulf %389, %395 : vector<12x128xf32>
    %c4_196 = arith.constant 4 : index
    %c0_197 = arith.constant 0 : index
    %c0_198 = arith.constant 0 : index
    %397 = vector.load %arg11[%c4_196, %c0_197, %c0_198] : memref<8x128x256xbf16, #tpu.memory_space<vmem>>, vector<1x128x256xbf16>
    %398 = vector.shape_cast %397 : vector<1x128x256xbf16> to vector<128x256xbf16>
    %399 = arith.truncf %396 : vector<12x128xf32> to vector<12x128xbf16>
    %cst_199 = arith.constant dense<0.000000e+00> : vector<12x256xf32>
    %400 = tpu.matmul %399, %398, %cst_199 {dimension_numbers = #tpu.dot_dimension_numbers<[1], [0], [0], [1], [0, 0, 1, 1], [], []>} : vector<12x128xbf16>, vector<128x256xbf16>, vector<12x256xf32> -> vector<12x256xf32>
    %c4_200 = arith.constant 4 : index
    %c0_201 = arith.constant 0 : index
    %c0_202 = arith.constant 0 : index
    %401 = vector.load %arg12[%c4_200, %c0_201, %c0_202] : memref<8x1x256xf32, #tpu.memory_space<vmem>>, vector<1x1x256xf32>
    %402 = vector.shape_cast %401 : vector<1x1x256xf32> to vector<1x256xf32>
    %403 = vector.broadcast %402 : vector<1x256xf32> to vector<12x256xf32>
    %404 = arith.addf %400, %403 : vector<12x256xf32>
    %405 = vector.extract_strided_slice %404 {offsets = [0, 0], sizes = [12, 128], strides = [1, 1]} : vector<12x256xf32> to vector<12x128xf32>
    %406 = vector.extract_strided_slice %326 {offsets = [2, 0], sizes = [12, 128], strides = [1, 1]} : vector<14x128xf32> to vector<12x128xf32>
    %407 = arith.addf %405, %406 : vector<12x128xf32>
    %408 = vector.extract_strided_slice %404 {offsets = [0, 128], sizes = [12, 128], strides = [1, 1]} : vector<12x256xf32> to vector<12x128xf32>
    %409 = vector.extract_strided_slice %329 {offsets = [2, 0], sizes = [12, 128], strides = [1, 1]} : vector<14x128xf32> to vector<12x128xf32>
    %410 = arith.addf %408, %409 : vector<12x128xf32>
    %cst_203 = arith.constant dense<0.000000e+00> : vector<128xf32>
    %411 = vector.multi_reduction <add>, %407, %cst_203 [0] : vector<12x128xf32> to vector<128xf32>
    %412 = vector.shape_cast %411 : vector<128xf32> to vector<1x128xf32>
    %cst_204 = arith.constant 1.200000e+01 : f32
    %413 = vector.broadcast %cst_204 : f32 to vector<1x128xf32>
    %414 = arith.divf %412, %413 : vector<1x128xf32>
    %415 = vector.broadcast %414 : vector<1x128xf32> to vector<12x128xf32>
    %416 = arith.subf %407, %415 : vector<12x128xf32>
    %417 = arith.mulf %416, %416 : vector<12x128xf32>
    %cst_205 = arith.constant dense<0.000000e+00> : vector<128xf32>
    %418 = vector.multi_reduction <add>, %417, %cst_205 [0] : vector<12x128xf32> to vector<128xf32>
    %419 = vector.shape_cast %418 : vector<128xf32> to vector<1x128xf32>
    %cst_206 = arith.constant 1.200000e+01 : f32
    %420 = vector.broadcast %cst_206 : f32 to vector<1x128xf32>
    %421 = arith.divf %419, %420 : vector<1x128xf32>
    %cst_207 = arith.constant 9.99999974E-6 : f32
    %422 = vector.broadcast %cst_207 : f32 to vector<1x128xf32>
    %423 = arith.addf %421, %422 : vector<1x128xf32>
    %424 = math.rsqrt %423 : vector<1x128xf32>
    %425 = vector.broadcast %424 : vector<1x128xf32> to vector<12x128xf32>
    %426 = arith.mulf %416, %425 : vector<12x128xf32>
    %c5 = arith.constant 5 : index
    %c0_208 = arith.constant 0 : index
    %c0_209 = arith.constant 0 : index
    %427 = vector.load %arg4[%c5, %c0_208, %c0_209] : memref<8x1x128xf32, #tpu.memory_space<vmem>>, vector<1x1x128xf32>
    %428 = vector.shape_cast %427 : vector<1x1x128xf32> to vector<1x128xf32>
    %429 = vector.broadcast %428 : vector<1x128xf32> to vector<12x128xf32>
    %430 = arith.mulf %426, %429 : vector<12x128xf32>
    %c5_210 = arith.constant 5 : index
    %c0_211 = arith.constant 0 : index
    %c0_212 = arith.constant 0 : index
    %431 = vector.load %arg5[%c5_210, %c0_211, %c0_212] : memref<8x1x128xf32, #tpu.memory_space<vmem>>, vector<1x1x128xf32>
    %432 = vector.shape_cast %431 : vector<1x1x128xf32> to vector<1x128xf32>
    %433 = vector.broadcast %432 : vector<1x128xf32> to vector<12x128xf32>
    %434 = arith.addf %430, %433 : vector<12x128xf32>
    %cst_213 = arith.constant dense<0.000000e+00> : vector<12x128xf32>
    %435 = tpu.matmul %407, %7, %cst_213 {dimension_numbers = #tpu.dot_dimension_numbers<[1], [0], [0], [1], [0, 0, 1, 1], [], []>} : vector<12x128xf32>, vector<128x128xf32>, vector<12x128xf32> -> vector<12x128xf32>
    %436 = arith.subf %407, %435 : vector<12x128xf32>
    %437 = arith.mulf %436, %436 : vector<12x128xf32>
    %cst_214 = arith.constant dense<0.000000e+00> : vector<12x128xf32>
    %438 = tpu.matmul %437, %7, %cst_214 {dimension_numbers = #tpu.dot_dimension_numbers<[1], [0], [0], [1], [0, 0, 1, 1], [], []>} : vector<12x128xf32>, vector<128x128xf32>, vector<12x128xf32> -> vector<12x128xf32>
    %cst_215 = arith.constant 1.14285719 : f32
    %439 = vector.broadcast %cst_215 : f32 to vector<12x128xf32>
    %440 = arith.mulf %438, %439 : vector<12x128xf32>
    %cst_216 = arith.constant 9.99999974E-6 : f32
    %441 = vector.broadcast %cst_216 : f32 to vector<12x128xf32>
    %442 = arith.addf %440, %441 : vector<12x128xf32>
    %443 = math.rsqrt %442 : vector<12x128xf32>
    %444 = arith.mulf %436, %443 : vector<12x128xf32>
    %c5_217 = arith.constant 5 : index
    %c0_218 = arith.constant 0 : index
    %c0_219 = arith.constant 0 : index
    %445 = vector.load %arg6[%c5_217, %c0_218, %c0_219] : memref<8x1x128xf32, #tpu.memory_space<vmem>>, vector<1x1x128xf32>
    %446 = vector.shape_cast %445 : vector<1x1x128xf32> to vector<1x128xf32>
    %447 = vector.broadcast %446 : vector<1x128xf32> to vector<12x128xf32>
    %448 = arith.mulf %444, %447 : vector<12x128xf32>
    %c5_220 = arith.constant 5 : index
    %c0_221 = arith.constant 0 : index
    %c0_222 = arith.constant 0 : index
    %449 = vector.load %arg7[%c5_220, %c0_221, %c0_222] : memref<8x1x128xf32, #tpu.memory_space<vmem>>, vector<1x1x128xf32>
    %450 = vector.shape_cast %449 : vector<1x1x128xf32> to vector<1x128xf32>
    %451 = vector.broadcast %450 : vector<1x128xf32> to vector<12x128xf32>
    %452 = arith.addf %448, %451 : vector<12x128xf32>
    %453 = tpu.concatenate %407, %434, %452 in 1 : vector<12x128xf32>, vector<12x128xf32>, vector<12x128xf32> -> vector<12x384xf32>
    %454 = vector.extract_strided_slice %453 {offsets = [0, 0], sizes = [8, 384], strides = [1, 1]} : vector<12x384xf32> to vector<8x384xf32>
    %455 = vector.extract_strided_slice %453 {offsets = [4, 0], sizes = [8, 384], strides = [1, 1]} : vector<12x384xf32> to vector<8x384xf32>
    %c5_223 = arith.constant 5 : index
    %c0_224 = arith.constant 0 : index
    %c0_225 = arith.constant 0 : index
    %456 = vector.load %arg8[%c5_223, %c0_224, %c0_225] : memref<8x384x256xbf16, #tpu.memory_space<vmem>>, vector<1x384x256xbf16>
    %457 = vector.shape_cast %456 : vector<1x384x256xbf16> to vector<384x256xbf16>
    %458 = arith.truncf %454 : vector<8x384xf32> to vector<8x384xbf16>
    %cst_226 = arith.constant dense<0.000000e+00> : vector<8x256xf32>
    %459 = tpu.matmul %458, %457, %cst_226 {dimension_numbers = #tpu.dot_dimension_numbers<[1], [0], [0], [1], [0, 0, 1, 1], [], []>} : vector<8x384xbf16>, vector<384x256xbf16>, vector<8x256xf32> -> vector<8x256xf32>
    %c5_227 = arith.constant 5 : index
    %c0_228 = arith.constant 0 : index
    %c0_229 = arith.constant 0 : index
    %460 = vector.load %arg9[%c5_227, %c0_228, %c0_229] : memref<8x384x256xbf16, #tpu.memory_space<vmem>>, vector<1x384x256xbf16>
    %461 = vector.shape_cast %460 : vector<1x384x256xbf16> to vector<384x256xbf16>
    %462 = arith.truncf %455 : vector<8x384xf32> to vector<8x384xbf16>
    %cst_230 = arith.constant dense<0.000000e+00> : vector<8x256xf32>
    %463 = tpu.matmul %462, %461, %cst_230 {dimension_numbers = #tpu.dot_dimension_numbers<[1], [0], [0], [1], [0, 0, 1, 1], [], []>} : vector<8x384xbf16>, vector<384x256xbf16>, vector<8x256xf32> -> vector<8x256xf32>
    %464 = arith.addf %459, %463 : vector<8x256xf32>
    %c5_231 = arith.constant 5 : index
    %c0_232 = arith.constant 0 : index
    %c0_233 = arith.constant 0 : index
    %465 = vector.load %arg10[%c5_231, %c0_232, %c0_233] : memref<8x1x256xf32, #tpu.memory_space<vmem>>, vector<1x1x256xf32>
    %466 = vector.shape_cast %465 : vector<1x1x256xf32> to vector<1x256xf32>
    %467 = vector.broadcast %466 : vector<1x256xf32> to vector<8x256xf32>
    %468 = arith.addf %464, %467 : vector<8x256xf32>
    %469 = vector.extract_strided_slice %468 {offsets = [0, 0], sizes = [8, 128], strides = [1, 1]} : vector<8x256xf32> to vector<8x128xf32>
    %470 = math.tanh %469 : vector<8x128xf32>
    %471 = vector.extract_strided_slice %468 {offsets = [0, 128], sizes = [8, 128], strides = [1, 1]} : vector<8x256xf32> to vector<8x128xf32>
    %472 = arith.negf %471 : vector<8x128xf32>
    %473 = math.exp %472 : vector<8x128xf32>
    %cst_234 = arith.constant 1.000000e+00 : f32
    %474 = vector.broadcast %cst_234 : f32 to vector<8x128xf32>
    %475 = arith.addf %474, %473 : vector<8x128xf32>
    %476 = arith.divf %474, %475 : vector<8x128xf32>
    %477 = arith.mulf %470, %476 : vector<8x128xf32>
    %c5_235 = arith.constant 5 : index
    %c0_236 = arith.constant 0 : index
    %c0_237 = arith.constant 0 : index
    %478 = vector.load %arg11[%c5_235, %c0_236, %c0_237] : memref<8x128x256xbf16, #tpu.memory_space<vmem>>, vector<1x128x256xbf16>
    %479 = vector.shape_cast %478 : vector<1x128x256xbf16> to vector<128x256xbf16>
    %480 = arith.truncf %477 : vector<8x128xf32> to vector<8x128xbf16>
    %cst_238 = arith.constant dense<0.000000e+00> : vector<8x256xf32>
    %481 = tpu.matmul %480, %479, %cst_238 {dimension_numbers = #tpu.dot_dimension_numbers<[1], [0], [0], [1], [0, 0, 1, 1], [], []>} : vector<8x128xbf16>, vector<128x256xbf16>, vector<8x256xf32> -> vector<8x256xf32>
    %c5_239 = arith.constant 5 : index
    %c0_240 = arith.constant 0 : index
    %c0_241 = arith.constant 0 : index
    %482 = vector.load %arg12[%c5_239, %c0_240, %c0_241] : memref<8x1x256xf32, #tpu.memory_space<vmem>>, vector<1x1x256xf32>
    %483 = vector.shape_cast %482 : vector<1x1x256xf32> to vector<1x256xf32>
    %484 = vector.broadcast %483 : vector<1x256xf32> to vector<8x256xf32>
    %485 = arith.addf %481, %484 : vector<8x256xf32>
    %486 = vector.extract_strided_slice %485 {offsets = [0, 0], sizes = [8, 128], strides = [1, 1]} : vector<8x256xf32> to vector<8x128xf32>
    %487 = vector.extract_strided_slice %407 {offsets = [4, 0], sizes = [8, 128], strides = [1, 1]} : vector<12x128xf32> to vector<8x128xf32>
    %488 = arith.addf %486, %487 : vector<8x128xf32>
    %489 = vector.extract_strided_slice %485 {offsets = [0, 128], sizes = [8, 128], strides = [1, 1]} : vector<8x256xf32> to vector<8x128xf32>
    %490 = vector.extract_strided_slice %410 {offsets = [4, 0], sizes = [8, 128], strides = [1, 1]} : vector<12x128xf32> to vector<8x128xf32>
    %491 = arith.addf %489, %490 : vector<8x128xf32>
    %cst_242 = arith.constant dense<0.000000e+00> : vector<128xf32>
    %492 = vector.multi_reduction <add>, %488, %cst_242 [0] : vector<8x128xf32> to vector<128xf32>
    %493 = vector.shape_cast %492 : vector<128xf32> to vector<1x128xf32>
    %cst_243 = arith.constant 8.000000e+00 : f32
    %494 = vector.broadcast %cst_243 : f32 to vector<1x128xf32>
    %495 = arith.divf %493, %494 : vector<1x128xf32>
    %496 = vector.broadcast %495 : vector<1x128xf32> to vector<8x128xf32>
    %497 = arith.subf %488, %496 : vector<8x128xf32>
    %498 = arith.mulf %497, %497 : vector<8x128xf32>
    %cst_244 = arith.constant dense<0.000000e+00> : vector<128xf32>
    %499 = vector.multi_reduction <add>, %498, %cst_244 [0] : vector<8x128xf32> to vector<128xf32>
    %500 = vector.shape_cast %499 : vector<128xf32> to vector<1x128xf32>
    %cst_245 = arith.constant 8.000000e+00 : f32
    %501 = vector.broadcast %cst_245 : f32 to vector<1x128xf32>
    %502 = arith.divf %500, %501 : vector<1x128xf32>
    %cst_246 = arith.constant 9.99999974E-6 : f32
    %503 = vector.broadcast %cst_246 : f32 to vector<1x128xf32>
    %504 = arith.addf %502, %503 : vector<1x128xf32>
    %505 = math.rsqrt %504 : vector<1x128xf32>
    %506 = vector.broadcast %505 : vector<1x128xf32> to vector<8x128xf32>
    %507 = arith.mulf %497, %506 : vector<8x128xf32>
    %c6 = arith.constant 6 : index
    %c0_247 = arith.constant 0 : index
    %c0_248 = arith.constant 0 : index
    %508 = vector.load %arg4[%c6, %c0_247, %c0_248] : memref<8x1x128xf32, #tpu.memory_space<vmem>>, vector<1x1x128xf32>
    %509 = vector.shape_cast %508 : vector<1x1x128xf32> to vector<1x128xf32>
    %510 = vector.broadcast %509 : vector<1x128xf32> to vector<8x128xf32>
    %511 = arith.mulf %507, %510 : vector<8x128xf32>
    %c6_249 = arith.constant 6 : index
    %c0_250 = arith.constant 0 : index
    %c0_251 = arith.constant 0 : index
    %512 = vector.load %arg5[%c6_249, %c0_250, %c0_251] : memref<8x1x128xf32, #tpu.memory_space<vmem>>, vector<1x1x128xf32>
    %513 = vector.shape_cast %512 : vector<1x1x128xf32> to vector<1x128xf32>
    %514 = vector.broadcast %513 : vector<1x128xf32> to vector<8x128xf32>
    %515 = arith.addf %511, %514 : vector<8x128xf32>
    %cst_252 = arith.constant dense<0.000000e+00> : vector<8x128xf32>
    %516 = tpu.matmul %488, %7, %cst_252 {dimension_numbers = #tpu.dot_dimension_numbers<[1], [0], [0], [1], [0, 0, 1, 1], [], []>} : vector<8x128xf32>, vector<128x128xf32>, vector<8x128xf32> -> vector<8x128xf32>
    %517 = arith.subf %488, %516 : vector<8x128xf32>
    %518 = arith.mulf %517, %517 : vector<8x128xf32>
    %cst_253 = arith.constant dense<0.000000e+00> : vector<8x128xf32>
    %519 = tpu.matmul %518, %7, %cst_253 {dimension_numbers = #tpu.dot_dimension_numbers<[1], [0], [0], [1], [0, 0, 1, 1], [], []>} : vector<8x128xf32>, vector<128x128xf32>, vector<8x128xf32> -> vector<8x128xf32>
    %cst_254 = arith.constant 1.14285719 : f32
    %520 = vector.broadcast %cst_254 : f32 to vector<8x128xf32>
    %521 = arith.mulf %519, %520 : vector<8x128xf32>
    %cst_255 = arith.constant 9.99999974E-6 : f32
    %522 = vector.broadcast %cst_255 : f32 to vector<8x128xf32>
    %523 = arith.addf %521, %522 : vector<8x128xf32>
    %524 = math.rsqrt %523 : vector<8x128xf32>
    %525 = arith.mulf %517, %524 : vector<8x128xf32>
    %c6_256 = arith.constant 6 : index
    %c0_257 = arith.constant 0 : index
    %c0_258 = arith.constant 0 : index
    %526 = vector.load %arg6[%c6_256, %c0_257, %c0_258] : memref<8x1x128xf32, #tpu.memory_space<vmem>>, vector<1x1x128xf32>
    %527 = vector.shape_cast %526 : vector<1x1x128xf32> to vector<1x128xf32>
    %528 = vector.broadcast %527 : vector<1x128xf32> to vector<8x128xf32>
    %529 = arith.mulf %525, %528 : vector<8x128xf32>
    %c6_259 = arith.constant 6 : index
    %c0_260 = arith.constant 0 : index
    %c0_261 = arith.constant 0 : index
    %530 = vector.load %arg7[%c6_259, %c0_260, %c0_261] : memref<8x1x128xf32, #tpu.memory_space<vmem>>, vector<1x1x128xf32>
    %531 = vector.shape_cast %530 : vector<1x1x128xf32> to vector<1x128xf32>
    %532 = vector.broadcast %531 : vector<1x128xf32> to vector<8x128xf32>
    %533 = arith.addf %529, %532 : vector<8x128xf32>
    %534 = tpu.concatenate %488, %515, %533 in 1 : vector<8x128xf32>, vector<8x128xf32>, vector<8x128xf32> -> vector<8x384xf32>
    %535 = vector.extract_strided_slice %534 {offsets = [0, 0], sizes = [6, 384], strides = [1, 1]} : vector<8x384xf32> to vector<6x384xf32>
    %536 = vector.extract_strided_slice %534 {offsets = [2, 0], sizes = [6, 384], strides = [1, 1]} : vector<8x384xf32> to vector<6x384xf32>
    %c6_262 = arith.constant 6 : index
    %c0_263 = arith.constant 0 : index
    %c0_264 = arith.constant 0 : index
    %537 = vector.load %arg8[%c6_262, %c0_263, %c0_264] : memref<8x384x256xbf16, #tpu.memory_space<vmem>>, vector<1x384x256xbf16>
    %538 = vector.shape_cast %537 : vector<1x384x256xbf16> to vector<384x256xbf16>
    %539 = arith.truncf %535 : vector<6x384xf32> to vector<6x384xbf16>
    %cst_265 = arith.constant dense<0.000000e+00> : vector<6x256xf32>
    %540 = tpu.matmul %539, %538, %cst_265 {dimension_numbers = #tpu.dot_dimension_numbers<[1], [0], [0], [1], [0, 0, 1, 1], [], []>} : vector<6x384xbf16>, vector<384x256xbf16>, vector<6x256xf32> -> vector<6x256xf32>
    %c6_266 = arith.constant 6 : index
    %c0_267 = arith.constant 0 : index
    %c0_268 = arith.constant 0 : index
    %541 = vector.load %arg9[%c6_266, %c0_267, %c0_268] : memref<8x384x256xbf16, #tpu.memory_space<vmem>>, vector<1x384x256xbf16>
    %542 = vector.shape_cast %541 : vector<1x384x256xbf16> to vector<384x256xbf16>
    %543 = arith.truncf %536 : vector<6x384xf32> to vector<6x384xbf16>
    %cst_269 = arith.constant dense<0.000000e+00> : vector<6x256xf32>
    %544 = tpu.matmul %543, %542, %cst_269 {dimension_numbers = #tpu.dot_dimension_numbers<[1], [0], [0], [1], [0, 0, 1, 1], [], []>} : vector<6x384xbf16>, vector<384x256xbf16>, vector<6x256xf32> -> vector<6x256xf32>
    %545 = arith.addf %540, %544 : vector<6x256xf32>
    %c6_270 = arith.constant 6 : index
    %c0_271 = arith.constant 0 : index
    %c0_272 = arith.constant 0 : index
    %546 = vector.load %arg10[%c6_270, %c0_271, %c0_272] : memref<8x1x256xf32, #tpu.memory_space<vmem>>, vector<1x1x256xf32>
    %547 = vector.shape_cast %546 : vector<1x1x256xf32> to vector<1x256xf32>
    %548 = vector.broadcast %547 : vector<1x256xf32> to vector<6x256xf32>
    %549 = arith.addf %545, %548 : vector<6x256xf32>
    %550 = vector.extract_strided_slice %549 {offsets = [0, 0], sizes = [6, 128], strides = [1, 1]} : vector<6x256xf32> to vector<6x128xf32>
    %551 = math.tanh %550 : vector<6x128xf32>
    %552 = vector.extract_strided_slice %549 {offsets = [0, 128], sizes = [6, 128], strides = [1, 1]} : vector<6x256xf32> to vector<6x128xf32>
    %553 = arith.negf %552 : vector<6x128xf32>
    %554 = math.exp %553 : vector<6x128xf32>
    %cst_273 = arith.constant 1.000000e+00 : f32
    %555 = vector.broadcast %cst_273 : f32 to vector<6x128xf32>
    %556 = arith.addf %555, %554 : vector<6x128xf32>
    %557 = arith.divf %555, %556 : vector<6x128xf32>
    %558 = arith.mulf %551, %557 : vector<6x128xf32>
    %c6_274 = arith.constant 6 : index
    %c0_275 = arith.constant 0 : index
    %c0_276 = arith.constant 0 : index
    %559 = vector.load %arg11[%c6_274, %c0_275, %c0_276] : memref<8x128x256xbf16, #tpu.memory_space<vmem>>, vector<1x128x256xbf16>
    %560 = vector.shape_cast %559 : vector<1x128x256xbf16> to vector<128x256xbf16>
    %561 = arith.truncf %558 : vector<6x128xf32> to vector<6x128xbf16>
    %cst_277 = arith.constant dense<0.000000e+00> : vector<6x256xf32>
    %562 = tpu.matmul %561, %560, %cst_277 {dimension_numbers = #tpu.dot_dimension_numbers<[1], [0], [0], [1], [0, 0, 1, 1], [], []>} : vector<6x128xbf16>, vector<128x256xbf16>, vector<6x256xf32> -> vector<6x256xf32>
    %c6_278 = arith.constant 6 : index
    %c0_279 = arith.constant 0 : index
    %c0_280 = arith.constant 0 : index
    %563 = vector.load %arg12[%c6_278, %c0_279, %c0_280] : memref<8x1x256xf32, #tpu.memory_space<vmem>>, vector<1x1x256xf32>
    %564 = vector.shape_cast %563 : vector<1x1x256xf32> to vector<1x256xf32>
    %565 = vector.broadcast %564 : vector<1x256xf32> to vector<6x256xf32>
    %566 = arith.addf %562, %565 : vector<6x256xf32>
    %567 = vector.extract_strided_slice %566 {offsets = [0, 0], sizes = [6, 128], strides = [1, 1]} : vector<6x256xf32> to vector<6x128xf32>
    %568 = vector.extract_strided_slice %488 {offsets = [2, 0], sizes = [6, 128], strides = [1, 1]} : vector<8x128xf32> to vector<6x128xf32>
    %569 = arith.addf %567, %568 : vector<6x128xf32>
    %570 = vector.extract_strided_slice %566 {offsets = [0, 128], sizes = [6, 128], strides = [1, 1]} : vector<6x256xf32> to vector<6x128xf32>
    %571 = vector.extract_strided_slice %491 {offsets = [2, 0], sizes = [6, 128], strides = [1, 1]} : vector<8x128xf32> to vector<6x128xf32>
    %572 = arith.addf %570, %571 : vector<6x128xf32>
    %cst_281 = arith.constant dense<0.000000e+00> : vector<128xf32>
    %573 = vector.multi_reduction <add>, %569, %cst_281 [0] : vector<6x128xf32> to vector<128xf32>
    %574 = vector.shape_cast %573 : vector<128xf32> to vector<1x128xf32>
    %cst_282 = arith.constant 6.000000e+00 : f32
    %575 = vector.broadcast %cst_282 : f32 to vector<1x128xf32>
    %576 = arith.divf %574, %575 : vector<1x128xf32>
    %577 = vector.broadcast %576 : vector<1x128xf32> to vector<6x128xf32>
    %578 = arith.subf %569, %577 : vector<6x128xf32>
    %579 = arith.mulf %578, %578 : vector<6x128xf32>
    %cst_283 = arith.constant dense<0.000000e+00> : vector<128xf32>
    %580 = vector.multi_reduction <add>, %579, %cst_283 [0] : vector<6x128xf32> to vector<128xf32>
    %581 = vector.shape_cast %580 : vector<128xf32> to vector<1x128xf32>
    %cst_284 = arith.constant 6.000000e+00 : f32
    %582 = vector.broadcast %cst_284 : f32 to vector<1x128xf32>
    %583 = arith.divf %581, %582 : vector<1x128xf32>
    %cst_285 = arith.constant 9.99999974E-6 : f32
    %584 = vector.broadcast %cst_285 : f32 to vector<1x128xf32>
    %585 = arith.addf %583, %584 : vector<1x128xf32>
    %586 = math.rsqrt %585 : vector<1x128xf32>
    %587 = vector.broadcast %586 : vector<1x128xf32> to vector<6x128xf32>
    %588 = arith.mulf %578, %587 : vector<6x128xf32>
    %c7 = arith.constant 7 : index
    %c0_286 = arith.constant 0 : index
    %c0_287 = arith.constant 0 : index
    %589 = vector.load %arg4[%c7, %c0_286, %c0_287] : memref<8x1x128xf32, #tpu.memory_space<vmem>>, vector<1x1x128xf32>
    %590 = vector.shape_cast %589 : vector<1x1x128xf32> to vector<1x128xf32>
    %591 = vector.broadcast %590 : vector<1x128xf32> to vector<6x128xf32>
    %592 = arith.mulf %588, %591 : vector<6x128xf32>
    %c7_288 = arith.constant 7 : index
    %c0_289 = arith.constant 0 : index
    %c0_290 = arith.constant 0 : index
    %593 = vector.load %arg5[%c7_288, %c0_289, %c0_290] : memref<8x1x128xf32, #tpu.memory_space<vmem>>, vector<1x1x128xf32>
    %594 = vector.shape_cast %593 : vector<1x1x128xf32> to vector<1x128xf32>
    %595 = vector.broadcast %594 : vector<1x128xf32> to vector<6x128xf32>
    %596 = arith.addf %592, %595 : vector<6x128xf32>
    %cst_291 = arith.constant dense<0.000000e+00> : vector<6x128xf32>
    %597 = tpu.matmul %569, %7, %cst_291 {dimension_numbers = #tpu.dot_dimension_numbers<[1], [0], [0], [1], [0, 0, 1, 1], [], []>} : vector<6x128xf32>, vector<128x128xf32>, vector<6x128xf32> -> vector<6x128xf32>
    %598 = arith.subf %569, %597 : vector<6x128xf32>
    %599 = arith.mulf %598, %598 : vector<6x128xf32>
    %cst_292 = arith.constant dense<0.000000e+00> : vector<6x128xf32>
    %600 = tpu.matmul %599, %7, %cst_292 {dimension_numbers = #tpu.dot_dimension_numbers<[1], [0], [0], [1], [0, 0, 1, 1], [], []>} : vector<6x128xf32>, vector<128x128xf32>, vector<6x128xf32> -> vector<6x128xf32>
    %cst_293 = arith.constant 1.14285719 : f32
    %601 = vector.broadcast %cst_293 : f32 to vector<6x128xf32>
    %602 = arith.mulf %600, %601 : vector<6x128xf32>
    %cst_294 = arith.constant 9.99999974E-6 : f32
    %603 = vector.broadcast %cst_294 : f32 to vector<6x128xf32>
    %604 = arith.addf %602, %603 : vector<6x128xf32>
    %605 = math.rsqrt %604 : vector<6x128xf32>
    %606 = arith.mulf %598, %605 : vector<6x128xf32>
    %c7_295 = arith.constant 7 : index
    %c0_296 = arith.constant 0 : index
    %c0_297 = arith.constant 0 : index
    %607 = vector.load %arg6[%c7_295, %c0_296, %c0_297] : memref<8x1x128xf32, #tpu.memory_space<vmem>>, vector<1x1x128xf32>
    %608 = vector.shape_cast %607 : vector<1x1x128xf32> to vector<1x128xf32>
    %609 = vector.broadcast %608 : vector<1x128xf32> to vector<6x128xf32>
    %610 = arith.mulf %606, %609 : vector<6x128xf32>
    %c7_298 = arith.constant 7 : index
    %c0_299 = arith.constant 0 : index
    %c0_300 = arith.constant 0 : index
    %611 = vector.load %arg7[%c7_298, %c0_299, %c0_300] : memref<8x1x128xf32, #tpu.memory_space<vmem>>, vector<1x1x128xf32>
    %612 = vector.shape_cast %611 : vector<1x1x128xf32> to vector<1x128xf32>
    %613 = vector.broadcast %612 : vector<1x128xf32> to vector<6x128xf32>
    %614 = arith.addf %610, %613 : vector<6x128xf32>
    %615 = tpu.concatenate %569, %596, %614 in 1 : vector<6x128xf32>, vector<6x128xf32>, vector<6x128xf32> -> vector<6x384xf32>
    %616 = vector.extract_strided_slice %615 {offsets = [0, 0], sizes = [2, 384], strides = [1, 1]} : vector<6x384xf32> to vector<2x384xf32>
    %617 = vector.extract_strided_slice %615 {offsets = [4, 0], sizes = [2, 384], strides = [1, 1]} : vector<6x384xf32> to vector<2x384xf32>
    %c7_301 = arith.constant 7 : index
    %c0_302 = arith.constant 0 : index
    %c0_303 = arith.constant 0 : index
    %618 = vector.load %arg8[%c7_301, %c0_302, %c0_303] : memref<8x384x256xbf16, #tpu.memory_space<vmem>>, vector<1x384x256xbf16>
    %619 = vector.shape_cast %618 : vector<1x384x256xbf16> to vector<384x256xbf16>
    %620 = arith.truncf %616 : vector<2x384xf32> to vector<2x384xbf16>
    %cst_304 = arith.constant dense<0.000000e+00> : vector<2x256xf32>
    %621 = tpu.matmul %620, %619, %cst_304 {dimension_numbers = #tpu.dot_dimension_numbers<[1], [0], [0], [1], [0, 0, 1, 1], [], []>} : vector<2x384xbf16>, vector<384x256xbf16>, vector<2x256xf32> -> vector<2x256xf32>
    %c7_305 = arith.constant 7 : index
    %c0_306 = arith.constant 0 : index
    %c0_307 = arith.constant 0 : index
    %622 = vector.load %arg9[%c7_305, %c0_306, %c0_307] : memref<8x384x256xbf16, #tpu.memory_space<vmem>>, vector<1x384x256xbf16>
    %623 = vector.shape_cast %622 : vector<1x384x256xbf16> to vector<384x256xbf16>
    %624 = arith.truncf %617 : vector<2x384xf32> to vector<2x384xbf16>
    %cst_308 = arith.constant dense<0.000000e+00> : vector<2x256xf32>
    %625 = tpu.matmul %624, %623, %cst_308 {dimension_numbers = #tpu.dot_dimension_numbers<[1], [0], [0], [1], [0, 0, 1, 1], [], []>} : vector<2x384xbf16>, vector<384x256xbf16>, vector<2x256xf32> -> vector<2x256xf32>
    %626 = arith.addf %621, %625 : vector<2x256xf32>
    %c7_309 = arith.constant 7 : index
    %c0_310 = arith.constant 0 : index
    %c0_311 = arith.constant 0 : index
    %627 = vector.load %arg10[%c7_309, %c0_310, %c0_311] : memref<8x1x256xf32, #tpu.memory_space<vmem>>, vector<1x1x256xf32>
    %628 = vector.shape_cast %627 : vector<1x1x256xf32> to vector<1x256xf32>
    %629 = vector.broadcast %628 : vector<1x256xf32> to vector<2x256xf32>
    %630 = arith.addf %626, %629 : vector<2x256xf32>
    %631 = vector.extract_strided_slice %630 {offsets = [0, 0], sizes = [2, 128], strides = [1, 1]} : vector<2x256xf32> to vector<2x128xf32>
    %632 = math.tanh %631 : vector<2x128xf32>
    %633 = vector.extract_strided_slice %630 {offsets = [0, 128], sizes = [2, 128], strides = [1, 1]} : vector<2x256xf32> to vector<2x128xf32>
    %634 = arith.negf %633 : vector<2x128xf32>
    %635 = math.exp %634 : vector<2x128xf32>
    %cst_312 = arith.constant 1.000000e+00 : f32
    %636 = vector.broadcast %cst_312 : f32 to vector<2x128xf32>
    %637 = arith.addf %636, %635 : vector<2x128xf32>
    %638 = arith.divf %636, %637 : vector<2x128xf32>
    %639 = arith.mulf %632, %638 : vector<2x128xf32>
    %c7_313 = arith.constant 7 : index
    %c0_314 = arith.constant 0 : index
    %c0_315 = arith.constant 0 : index
    %640 = vector.load %arg11[%c7_313, %c0_314, %c0_315] : memref<8x128x256xbf16, #tpu.memory_space<vmem>>, vector<1x128x256xbf16>
    %641 = vector.shape_cast %640 : vector<1x128x256xbf16> to vector<128x256xbf16>
    %642 = arith.truncf %639 : vector<2x128xf32> to vector<2x128xbf16>
    %cst_316 = arith.constant dense<0.000000e+00> : vector<2x256xf32>
    %643 = tpu.matmul %642, %641, %cst_316 {dimension_numbers = #tpu.dot_dimension_numbers<[1], [0], [0], [1], [0, 0, 1, 1], [], []>} : vector<2x128xbf16>, vector<128x256xbf16>, vector<2x256xf32> -> vector<2x256xf32>
    %c7_317 = arith.constant 7 : index
    %c0_318 = arith.constant 0 : index
    %c0_319 = arith.constant 0 : index
    %644 = vector.load %arg12[%c7_317, %c0_318, %c0_319] : memref<8x1x256xf32, #tpu.memory_space<vmem>>, vector<1x1x256xf32>
    %645 = vector.shape_cast %644 : vector<1x1x256xf32> to vector<1x256xf32>
    %646 = vector.broadcast %645 : vector<1x256xf32> to vector<2x256xf32>
    %647 = arith.addf %643, %646 : vector<2x256xf32>
    %648 = vector.extract_strided_slice %647 {offsets = [0, 128], sizes = [2, 128], strides = [1, 1]} : vector<2x256xf32> to vector<2x128xf32>
    %649 = vector.extract_strided_slice %572 {offsets = [4, 0], sizes = [2, 128], strides = [1, 1]} : vector<6x128xf32> to vector<2x128xf32>
    %650 = arith.addf %648, %649 : vector<2x128xf32>
    %cst_320 = arith.constant 0.000000e+00 : f32
    %651 = vector.broadcast %cst_320 : f32 to vector<2x128xf32>
    %652 = arith.maximumf %650, %651 : vector<2x128xf32>
    %c0_321 = arith.constant 0 : index
    %c0_322 = arith.constant 0 : index
    %653 = vector.load %arg13[%c0_321, %c0_322] : memref<128x128xbf16, #tpu.memory_space<vmem>>, vector<128x128xbf16>
    %654 = arith.truncf %652 : vector<2x128xf32> to vector<2x128xbf16>
    %cst_323 = arith.constant dense<0.000000e+00> : vector<2x128xf32>
    %655 = tpu.matmul %654, %653, %cst_323 {dimension_numbers = #tpu.dot_dimension_numbers<[1], [0], [0], [1], [0, 0, 1, 1], [], []>} : vector<2x128xbf16>, vector<128x128xbf16>, vector<2x128xf32> -> vector<2x128xf32>
    %c0_324 = arith.constant 0 : index
    %c0_325 = arith.constant 0 : index
    %656 = vector.load %arg14[%c0_324, %c0_325] : memref<1x128xf32, #tpu.memory_space<vmem>>, vector<1x128xf32>
    %657 = vector.broadcast %656 : vector<1x128xf32> to vector<2x128xf32>
    %658 = arith.addf %655, %657 : vector<2x128xf32>
    %cst_326 = arith.constant 0.000000e+00 : f32
    %659 = vector.broadcast %cst_326 : f32 to vector<2x128xf32>
    %660 = arith.maximumf %658, %659 : vector<2x128xf32>
    %c0_327 = arith.constant 0 : index
    %c0_328 = arith.constant 0 : index
    %661 = vector.load %arg15[%c0_327, %c0_328] : memref<128x96xbf16, #tpu.memory_space<vmem>>, vector<128x96xbf16>
    %662 = arith.truncf %660 : vector<2x128xf32> to vector<2x128xbf16>
    %cst_329 = arith.constant dense<0.000000e+00> : vector<2x96xf32>
    %663 = tpu.matmul %662, %661, %cst_329 {dimension_numbers = #tpu.dot_dimension_numbers<[1], [0], [0], [1], [0, 0, 1, 1], [], []>} : vector<2x128xbf16>, vector<128x96xbf16>, vector<2x96xf32> -> vector<2x96xf32>
    %c0_330 = arith.constant 0 : index
    %c0_331 = arith.constant 0 : index
    %664 = vector.load %arg16[%c0_330, %c0_331] : memref<1x96xf32, #tpu.memory_space<vmem>>, vector<1x96xf32>
    %665 = vector.broadcast %664 : vector<1x96xf32> to vector<2x96xf32>
    %666 = arith.addf %663, %665 : vector<2x96xf32>
    %c0_332 = arith.constant 0 : index
    %c0_333 = arith.constant 0 : index
    %667 = vector.load %arg17[%c0_332, %c0_333] : memref<2x96xf32, #tpu.memory_space<vmem>>, vector<2x96xf32>
    tpu.vector_store %arg17[%c0_332, %c0_333], %666 {strides = array<i32>} : memref<2x96xf32, #tpu.memory_space<vmem>>, vector<2x96xf32>,
    return
  }
}

</mosaic_0001>

<llo_original>
// kernel: tpu_custom_call.1
$region0: #{tpu_custom_call.1}
  #allocation0 [shape = 'u32[]', space=smem, size = 0x4, offset = 0x4, fixed_abs, tag = 'smem constant byte address 0x4 - core index']
  #allocation1 [shape = 'u32[72,128]{1,0:T(1,128)}', space=vmem, size = 0x9000, scoped, tag = 'internal scratch']
  %s0 = inlined_call_operand.vmem [shape: f32[26,8], index: 0, kind: input, shape index: {}]
  %s1 = inlined_call_operand.hbm [shape: bf16[8,128], index: 1, kind: input, shape index: {}]
  %s2 = inlined_call_operand.hbm [shape: f32[1,128], index: 2, kind: input, shape index: {}]
  %s3 = inlined_call_operand.hbm [shape: f32[128,128], index: 3, kind: input, shape index: {}]
  %s4 = inlined_call_operand.hbm [shape: f32[8,1,128], index: 4, kind: input, shape index: {}]
  %s5 = inlined_call_operand.hbm [shape: f32[8,1,128], index: 5, kind: input, shape index: {}]
  %s6 = inlined_call_operand.hbm [shape: f32[8,1,128], index: 6, kind: input, shape index: {}]
  %s7 = inlined_call_operand.hbm [shape: f32[8,1,128], index: 7, kind: input, shape index: {}]
  %s8 = inlined_call_operand.hbm [shape: bf16[8,384,256], index: 8, kind: input, shape index: {}]
  %s9 = inlined_call_operand.hbm [shape: bf16[8,384,256], index: 9, kind: input, shape index: {}]
  %s10 = inlined_call_operand.hbm [shape: f32[8,1,256], index: 10, kind: input, shape index: {}]
  %s11 = inlined_call_operand.hbm [shape: bf16[8,128,256], index: 11, kind: input, shape index: {}]
  %s12 = inlined_call_operand.hbm [shape: f32[8,1,256], index: 12, kind: input, shape index: {}]
  %s13 = inlined_call_operand.hbm [shape: bf16[128,128], index: 13, kind: input, shape index: {}]
  %s14 = inlined_call_operand.hbm [shape: f32[1,128], index: 14, kind: input, shape index: {}]
  %s15 = inlined_call_operand.vmem [shape: bf16[128,96], index: 15, kind: input, shape index: {}]
  %s16 = inlined_call_operand.hbm [shape: f32[1,96], index: 16, kind: input, shape index: {}]
  %s17 = inlined_call_operand.hbm [shape: f32[2,96], index: 17, kind: output, shape index: {}]
  %s18 = sld [smem:[#allocation0]]
  $region138: #{tpu_custom_call.1} parent=0
    _
  %s20 = ssub.s32 1, %s18
  %s21 = scalar_select 0, %s20, %s18
  $region1: #{tpu_custom_call.1} parent=0
    #allocation2 [shape = 'u8[2048]{0}', space=vmem, size = 0x800, scoped, tag = 'input window, operand 1, single buffered']
    #allocation3 [shape = 's32[1]{0}', space=sflag, size = 0x4, scoped, tag = 'scoped memory for tpu_custom_call.1']
    #allocation4 [shape = 's32[1]{0}', space=sflag, size = 0x4, scoped, tag = 'scoped memory for tpu_custom_call.1']
    #allocation5 [shape = 'u8[512]{0}', space=vmem, size = 0x400, scoped, tag = 'input window, operand 2, single buffered']
    #allocation6 [shape = 's32[1]{0}', space=sflag, size = 0x4, scoped, tag = 'scoped memory for tpu_custom_call.1']
    #allocation7 [shape = 'u8[65536]{0}', space=vmem, size = 0x10000, scoped, tag = 'input window, operand 3, single buffered']
    #allocation8 [shape = 'u8[4096]{0}', space=vmem, size = 0x1000, scoped, tag = 'input window, operand 4, single buffered']
    #allocation9 [shape = 's32[1]{0}', space=sflag, size = 0x4, scoped, tag = 'scoped memory for tpu_custom_call.1']
    #allocation10 [shape = 'u8[4096]{0}', space=vmem, size = 0x1000, scoped, tag = 'input window, operand 5, single buffered']
    #allocation11 [shape = 'u8[4096]{0}', space=vmem, size = 0x1000, scoped, tag = 'input window, operand 6, single buffered']
    #allocation12 [shape = 's32[1]{0}', space=sflag, size = 0x4, scoped, tag = 'scoped memory for tpu_custom_call.1']
    #allocation13 [shape = 'u8[4096]{0}', space=vmem, size = 0x1000, scoped, tag = 'input window, operand 7, single buffered']
    #allocation14 [shape = 'u8[1572864]{0}', space=vmem, size = 0x180000, scoped, tag = 'input window, operand 8, single buffered']
    #allocation15 [shape = 's32[1]{0}', space=sflag, size = 0x4, scoped, tag = 'scoped memory for tpu_custom_call.1']
    #allocation16 [shape = 'u8[1572864]{0}', space=vmem, size = 0x180000, scoped, tag = 'input window, operand 9, single buffered']
    #allocation17 [shape = 'u8[8192]{0}', space=vmem, size = 0x2000, scoped, tag = 'input window, operand 10, single buffered']
    #allocation18 [shape = 's32[1]{0}', space=sflag, size = 0x4, scoped, tag = 'scoped memory for tpu_custom_call.1']
    #allocation19 [shape = 'u8[524288]{0}', space=vmem, size = 0x80000, scoped, tag = 'input window, operand 11, single buffered']
    #allocation20 [shape = 'u8[8192]{0}', space=vmem, size = 0x2000, scoped, tag = 'input window, operand 12, single buffered']
    #allocation21 [shape = 's32[1]{0}', space=sflag, size = 0x4, scoped, tag = 'scoped memory for tpu_custom_call.1']
    #allocation22 [shape = 'u8[32768]{0}', space=vmem, size = 0x8000, scoped, tag = 'input window, operand 13, single buffered']
    #allocation23 [shape = 'u8[512]{0}', space=vmem, size = 0x400, scoped, tag = 'input window, operand 14, single buffered']
    #allocation24 [shape = 's32[1]{0}', space=sflag, size = 0x4, scoped, tag = 'scoped memory for tpu_custom_call.1']
    #allocation25 [shape = 'u8[512]{0}', space=vmem, size = 0x400, scoped, tag = 'input window, operand 16, single buffered']
    #allocation26 [shape = 'u8[1024]{0}', space=vmem, size = 0x400, scoped, tag = 'output window, operand 0, single buffered']
    %22 = vsyncpa [#allocation3], 0
    %23 = vsyncpa [#allocation6], 0
    %24 = vsyncpa [#allocation9], 0
    %25 = vsyncpa [#allocation12], 0
    %26 = vsyncpa [#allocation15], 0
    %27 = vsyncpa [#allocation18], 0
    %28 = vsyncpa [#allocation21], 0
    %29 = vsyncpa [#allocation24], 0
    %30 = vsyncpa [#allocation4], 0
    // Predicated region
    $region2: #{tpu_custom_call.1} parent=1 // pred_check
      _
    $region3: #{tpu_custom_call.1} parent=1 // pred_check_branch
      %32 = sbr.rel (0) target = $region5
    $region4: #{tpu_custom_call.1} parent=1 // pred_region
      _
    $region5: #{tpu_custom_call.1} parent=1 // pred_fallthru
      _
    // Predicated region
    $region6: #{tpu_custom_call.1} parent=1 // pred_check
      _
    $region7: #{tpu_custom_call.1} parent=1 // pred_check_branch
      %34 = sbr.rel (0) target = $region9
    $region8: #{tpu_custom_call.1} parent=1 // pred_region
      %36 = vsyncadd [#allocation3], 0
      %s38 = sshll.u32 %s1, 4
      %s39 = int_to_ptr.hbm [resolvable:$true] %s38
      %s40 = sshll.u32 [#allocation2], 4
      %s41 = int_to_ptr.vmem [resolvable:$true] %s40
      %43 = dma.hbm_to_vmem [thread:$0]  %s39, 64, %s41, [#allocation3]
    $region9: #{tpu_custom_call.1} parent=1 // pred_fallthru
      _
    // Predicated region
    $region10: #{tpu_custom_call.1} parent=1 // pred_check
      _
    $region11: #{tpu_custom_call.1} parent=1 // pred_check_branch
      %45 = sbr.rel (0) target = $region13
    $region12: #{tpu_custom_call.1} parent=1 // pred_region
      %47 = vsyncadd [#allocation6], 0
      %s49 = sshll.u32 %s2, 4
      %s50 = int_to_ptr.hbm [resolvable:$true] %s49
      %s51 = sshll.u32 [#allocation5], 4
      %s52 = int_to_ptr.vmem [resolvable:$true] %s51
      %54 = dma.hbm_to_vmem [thread:$0]  %s50, 16, %s52, [#allocation6]
    $region13: #{tpu_custom_call.1} parent=1 // pred_fallthru
      _
    // Predicated region
    $region14: #{tpu_custom_call.1} parent=1 // pred_check
      _
    $region15: #{tpu_custom_call.1} parent=1 // pred_check_branch
      %56 = sbr.rel (0) target = $region17
    $region16: #{tpu_custom_call.1} parent=1 // pred_region
      %58 = vsyncadd [#allocation6], 0
      %s59 = sshll.u32 %s3, 4
      %s60 = int_to_ptr.hbm [resolvable:$true] %s59
      %s61 = sshll.u32 [#allocation7], 4
      %s62 = int_to_ptr.vmem [resolvable:$true] %s61
      %67 = dma.hbm_to_vmem [thread:$0]  %s60, 2048, %s62, [#allocation6], 128, 128, 8
    $region17: #{tpu_custom_call.1} parent=1 // pred_fallthru
      _
    // Predicated region
    $region18: #{tpu_custom_call.1} parent=1 // pred_check
      _
    $region19: #{tpu_custom_call.1} parent=1 // pred_check_branch
      %69 = sbr.rel (0) target = $region21
    $region20: #{tpu_custom_call.1} parent=1 // pred_region
      %71 = vsyncadd [#allocation9], 0
      %s72 = sshll.u32 %s4, 4
      %s73 = int_to_ptr.hbm [resolvable:$true] %s72
      %s74 = sshll.u32 [#allocation8], 4
      %s75 = int_to_ptr.vmem [resolvable:$true] %s74
      %80 = dma.hbm_to_vmem [thread:$0]  %s73, 128, %s75, [#allocation9], 16, 16, 1
    $region21: #{tpu_custom_call.1} parent=1 // pred_fallthru
      _
    // Predicated region
    $region22: #{tpu_custom_call.1} parent=1 // pred_check
      _
    $region23: #{tpu_custom_call.1} parent=1 // pred_check_branch
      %82 = sbr.rel (0) target = $region25
    $region24: #{tpu_custom_call.1} parent=1 // pred_region
      %84 = vsyncadd [#allocation9], 0
      %s85 = sshll.u32 %s5, 4
      %s86 = int_to_ptr.hbm [resolvable:$true] %s85
      %s87 = sshll.u32 [#allocation10], 4
      %s88 = int_to_ptr.vmem [resolvable:$true] %s87
      %93 = dma.hbm_to_vmem [thread:$0]  %s86, 128, %s88, [#allocation9], 16, 16, 1
    $region25: #{tpu_custom_call.1} parent=1 // pred_fallthru
      _
    // Predicated region
    $region26: #{tpu_custom_call.1} parent=1 // pred_check
      _
    $region27: #{tpu_custom_call.1} parent=1 // pred_check_branch
      %95 = sbr.rel (0) target = $region29
    $region28: #{tpu_custom_call.1} parent=1 // pred_region
      %97 = vsyncadd [#allocation12], 0
      %s98 = sshll.u32 %s6, 4
      %s99 = int_to_ptr.hbm [resolvable:$true] %s98
      %s100 = sshll.u32 [#allocation11], 4
      %s101 = int_to_ptr.vmem [resolvable:$true] %s100
      %106 = dma.hbm_to_vmem [thread:$0]  %s99, 128, %s101, [#allocation12], 16, 16, 1
    $region29: #{tpu_custom_call.1} parent=1 // pred_fallthru
      _
    // Predicated region
    $region30: #{tpu_custom_call.1} parent=1 // pred_check
      _
    $region31: #{tpu_custom_call.1} parent=1 // pred_check_branch
      %108 = sbr.rel (0) target = $region33
    $region32: #{tpu_custom_call.1} parent=1 // pred_region
      %110 = vsyncadd [#allocation12], 0
      %s111 = sshll.u32 %s7, 4
      %s112 = int_to_ptr.hbm [resolvable:$true] %s111
      %s113 = sshll.u32 [#allocation13], 4
      %s114 = int_to_ptr.vmem [resolvable:$true] %s113
      %119 = dma.hbm_to_vmem [thread:$0]  %s112, 128, %s114, [#allocation12], 16, 16, 1
    $region33: #{tpu_custom_call.1} parent=1 // pred_fallthru
      _
    // Predicated region
    $region34: #{tpu_custom_call.1} parent=1 // pred_check
      _
    $region35: #{tpu_custom_call.1} parent=1 // pred_check_branch
      %121 = sbr.rel (0) target = $region37
    $region36: #{tpu_custom_call.1} parent=1 // pred_region
      %123 = vsyncadd [#allocation15], 0
      %s124 = sshll.u32 %s8, 4
      %s125 = int_to_ptr.hbm [resolvable:$true] %s124
      %s126 = sshll.u32 [#allocation14], 4
      %s127 = int_to_ptr.vmem [resolvable:$true] %s126
      %132 = dma.hbm_to_vmem [thread:$0]  %s125, 49152, %s127, [#allocation15], 128, 128, 8
    $region37: #{tpu_custom_call.1} parent=1 // pred_fallthru
      _
    // Predicated region
    $region38: #{tpu_custom_call.1} parent=1 // pred_check
      _
    $region39: #{tpu_custom_call.1} parent=1 // pred_check_branch
      %134 = sbr.rel (0) target = $region41
    $region40: #{tpu_custom_call.1} parent=1 // pred_region
      %136 = vsyncadd [#allocation15], 0
      %s137 = sshll.u32 %s9, 4
      %s138 = int_to_ptr.hbm [resolvable:$true] %s137
      %s139 = sshll.u32 [#allocation16], 4
      %s140 = int_to_ptr.vmem [resolvable:$true] %s139
      %145 = dma.hbm_to_vmem [thread:$0]  %s138, 49152, %s140, [#allocation15], 128, 128, 8
    $region41: #{tpu_custom_call.1} parent=1 // pred_fallthru
      _
    // Predicated region
    $region42: #{tpu_custom_call.1} parent=1 // pred_check
      _
    $region43: #{tpu_custom_call.1} parent=1 // pred_check_branch
      %147 = sbr.rel (0) target = $region45
    $region44: #{tpu_custom_call.1} parent=1 // pred_region
      %149 = vsyncadd [#allocation18], 0
      %s150 = sshll.u32 %s10, 4
      %s151 = int_to_ptr.hbm [resolvable:$true] %s150
      %s152 = sshll.u32 [#allocation17], 4
      %s153 = int_to_ptr.vmem [resolvable:$true] %s152
      %158 = dma.hbm_to_vmem [thread:$0]  %s151, 256, %s153, [#allocation18], 32, 32, 2
    $region45: #{tpu_custom_call.1} parent=1 // pred_fallthru
      _
    // Predicated region
    $region46: #{tpu_custom_call.1} parent=1 // pred_check
      _
    $region47: #{tpu_custom_call.1} parent=1 // pred_check_branch
      %160 = sbr.rel (0) target = $region49
    $region48: #{tpu_custom_call.1} parent=1 // pred_region
      %162 = vsyncadd [#allocation18], 0
      %s163 = sshll.u32 %s11, 4
      %s164 = int_to_ptr.hbm [resolvable:$true] %s163
      %s165 = sshll.u32 [#allocation19], 4
      %s166 = int_to_ptr.vmem [resolvable:$true] %s165
      %171 = dma.hbm_to_vmem [thread:$0]  %s164, 16384, %s166, [#allocation18], 128, 128, 8
    $region49: #{tpu_custom_call.1} parent=1 // pred_fallthru
      _
    // Predicated region
    $region50: #{tpu_custom_call.1} parent=1 // pred_check
      _
    $region51: #{tpu_custom_call.1} parent=1 // pred_check_branch
      %173 = sbr.rel (0) target = $region53
    $region52: #{tpu_custom_call.1} parent=1 // pred_region
      %175 = vsyncadd [#allocation21], 0
      %s176 = sshll.u32 %s12, 4
      %s177 = int_to_ptr.hbm [resolvable:$true] %s176
      %s178 = sshll.u32 [#allocation20], 4
      %s179 = int_to_ptr.vmem [resolvable:$true] %s178
      %184 = dma.hbm_to_vmem [thread:$0]  %s177, 256, %s179, [#allocation21], 32, 32, 2
    $region53: #{tpu_custom_call.1} parent=1 // pred_fallthru
      _
    // Predicated region
    $region54: #{tpu_custom_call.1} parent=1 // pred_check
      _
    $region55: #{tpu_custom_call.1} parent=1 // pred_check_branch
      %186 = sbr.rel (0) target = $region57
    $region56: #{tpu_custom_call.1} parent=1 // pred_region
      %188 = vsyncadd [#allocation21], 0
      %s189 = sshll.u32 %s13, 4
      %s190 = int_to_ptr.hbm [resolvable:$true] %s189
      %s191 = sshll.u32 [#allocation22], 4
      %s192 = int_to_ptr.vmem [resolvable:$true] %s191
      %197 = dma.hbm_to_vmem [thread:$0]  %s190, 1024, %s192, [#allocation21], 64, 64, 4
    $region57: #{tpu_custom_call.1} parent=1 // pred_fallthru
      _
    // Predicated region
    $region58: #{tpu_custom_call.1} parent=1 // pred_check
      _
    $region59: #{tpu_custom_call.1} parent=1 // pred_check_branch
      %199 = sbr.rel (0) target = $region61
    $region60: #{tpu_custom_call.1} parent=1 // pred_region
      %201 = vsyncadd [#allocation24], 0
      %s203 = sshll.u32 %s14, 4
      %s204 = int_to_ptr.hbm [resolvable:$true] %s203
      %s205 = sshll.u32 [#allocation23], 4
      %s206 = int_to_ptr.vmem [resolvable:$true] %s205
      %208 = dma.hbm_to_vmem [thread:$0]  %s204, 16, %s206, [#allocation24]
    $region61: #{tpu_custom_call.1} parent=1 // pred_fallthru
      _
    // Predicated region
    $region62: #{tpu_custom_call.1} parent=1 // pred_check
      _
    $region63: #{tpu_custom_call.1} parent=1 // pred_check_branch
      %210 = sbr.rel (0) target = $region65
    $region64: #{tpu_custom_call.1} parent=1 // pred_region
      _
    $region65: #{tpu_custom_call.1} parent=1 // pred_fallthru
      _
    // Predicated region
    $region66: #{tpu_custom_call.1} parent=1 // pred_check
      _
    $region67: #{tpu_custom_call.1} parent=1 // pred_check_branch
      %212 = sbr.rel (0) target = $region69
    $region68: #{tpu_custom_call.1} parent=1 // pred_region
      %214 = vsyncadd [#allocation24], 0
      %s216 = sshll.u32 %s16, 4
      %s217 = int_to_ptr.hbm [resolvable:$true] %s216
      %s218 = sshll.u32 [#allocation25], 4
      %s219 = int_to_ptr.vmem [resolvable:$true] %s218
      %221 = dma.hbm_to_vmem [thread:$0]  %s217, 16, %s219, [#allocation24]
    $region69: #{tpu_custom_call.1} parent=1 // pred_fallthru
      _
    // Predicated region
    $region70: #{tpu_custom_call.1} parent=1 // pred_check
      _
    $region71: #{tpu_custom_call.1} parent=1 // pred_check_branch
      %223 = sbr.rel (0) target = $region73
    $region72: #{tpu_custom_call.1} parent=1 // pred_region
      %225 = dma.done [#allocation3], 64
    $region73: #{tpu_custom_call.1} parent=1 // pred_fallthru
      _
    // Predicated region
    $region74: #{tpu_custom_call.1} parent=1 // pred_check
      _
    $region75: #{tpu_custom_call.1} parent=1 // pred_check_branch
      %227 = sbr.rel (0) target = $region77
    $region76: #{tpu_custom_call.1} parent=1 // pred_region
      %229 = dma.done [#allocation6], 16
    $region77: #{tpu_custom_call.1} parent=1 // pred_fallthru
      _
    // Predicated region
    $region78: #{tpu_custom_call.1} parent=1 // pred_check
      _
    $region79: #{tpu_custom_call.1} parent=1 // pred_check_branch
      %231 = sbr.rel (0) target = $region81
    $region80: #{tpu_custom_call.1} parent=1 // pred_region
      %233 = dma.done [#allocation6], 2048
    $region81: #{tpu_custom_call.1} parent=1 // pred_fallthru
      _
    // Predicated region
    $region82: #{tpu_custom_call.1} parent=1 // pred_check
      _
    $region83: #{tpu_custom_call.1} parent=1 // pred_check_branch
      %235 = sbr.rel (0) target = $region85
    $region84: #{tpu_custom_call.1} parent=1 // pred_region
      %237 = dma.done [#allocation9], 128
    $region85: #{tpu_custom_call.1} parent=1 // pred_fallthru
      _
    // Predicated region
    $region86: #{tpu_custom_call.1} parent=1 // pred_check
      _
    $region87: #{tpu_custom_call.1} parent=1 // pred_check_branch
      %239 = sbr.rel (0) target = $region89
    $region88: #{tpu_custom_call.1} parent=1 // pred_region
      %241 = dma.done [#allocation9], 128
    $region89: #{tpu_custom_call.1} parent=1 // pred_fallthru
      _
    // Predicated region
    $region90: #{tpu_custom_call.1} parent=1 // pred_check
      _
    $region91: #{tpu_custom_call.1} parent=1 // pred_check_branch
      %243 = sbr.rel (0) target = $region93
    $region92: #{tpu_custom_call.1} parent=1 // pred_region
      %245 = dma.done [#allocation12], 128
    $region93: #{tpu_custom_call.1} parent=1 // pred_fallthru
      _
    // Predicated region
    $region94: #{tpu_custom_call.1} parent=1 // pred_check
      _
    $region95: #{tpu_custom_call.1} parent=1 // pred_check_branch
      %247 = sbr.rel (0) target = $region97
    $region96: #{tpu_custom_call.1} parent=1 // pred_region
      %249 = dma.done [#allocation12], 128
    $region97: #{tpu_custom_call.1} parent=1 // pred_fallthru
      _
    // Predicated region
    $region98: #{tpu_custom_call.1} parent=1 // pred_check
      _
    $region99: #{tpu_custom_call.1} parent=1 // pred_check_branch
      %251 = sbr.rel (0) target = $region101
    $region100: #{tpu_custom_call.1} parent=1 // pred_region
      %253 = dma.done [#allocation15], 49152
    $region101: #{tpu_custom_call.1} parent=1 // pred_fallthru
      _
    // Predicated region
    $region102: #{tpu_custom_call.1} parent=1 // pred_check
      _
    $region103: #{tpu_custom_call.1} parent=1 // pred_check_branch
      %255 = sbr.rel (0) target = $region105
    $region104: #{tpu_custom_call.1} parent=1 // pred_region
      %257 = dma.done [#allocation15], 49152
    $region105: #{tpu_custom_call.1} parent=1 // pred_fallthru
      _
    // Predicated region
    $region106: #{tpu_custom_call.1} parent=1 // pred_check
      _
    $region107: #{tpu_custom_call.1} parent=1 // pred_check_branch
      %259 = sbr.rel (0) target = $region109
    $region108: #{tpu_custom_call.1} parent=1 // pred_region
      %261 = dma.done [#allocation18], 256
    $region109: #{tpu_custom_call.1} parent=1 // pred_fallthru
      _
    // Predicated region
    $region110: #{tpu_custom_call.1} parent=1 // pred_check
      _
    $region111: #{tpu_custom_call.1} parent=1 // pred_check_branch
      %263 = sbr.rel (0) target = $region113
    $region112: #{tpu_custom_call.1} parent=1 // pred_region
      %265 = dma.done [#allocation18], 16384
    $region113: #{tpu_custom_call.1} parent=1 // pred_fallthru
      _
    // Predicated region
    $region114: #{tpu_custom_call.1} parent=1 // pred_check
      _
    $region115: #{tpu_custom_call.1} parent=1 // pred_check_branch
      %267 = sbr.rel (0) target = $region117
    $region116: #{tpu_custom_call.1} parent=1 // pred_region
      %269 = dma.done [#allocation21], 256
    $region117: #{tpu_custom_call.1} parent=1 // pred_fallthru
      _
    // Predicated region
    $region118: #{tpu_custom_call.1} parent=1 // pred_check
      _
    $region119: #{tpu_custom_call.1} parent=1 // pred_check_branch
      %271 = sbr.rel (0) target = $region121
    $region120: #{tpu_custom_call.1} parent=1 // pred_region
      %273 = dma.done [#allocation21], 1024
    $region121: #{tpu_custom_call.1} parent=1 // pred_fallthru
      _
    // Predicated region
    $region122: #{tpu_custom_call.1} parent=1 // pred_check
      _
    $region123: #{tpu_custom_call.1} parent=1 // pred_check_branch
      %275 = sbr.rel (0) target = $region125
    $region124: #{tpu_custom_call.1} parent=1 // pred_region
      %277 = dma.done [#allocation24], 16
    $region125: #{tpu_custom_call.1} parent=1 // pred_fallthru
      _
    // Predicated region
    $region126: #{tpu_custom_call.1} parent=1 // pred_check
      _
    $region127: #{tpu_custom_call.1} parent=1 // pred_check_branch
      %279 = sbr.rel (0) target = $region129
    $region128: #{tpu_custom_call.1} parent=1 // pred_region
      %281 = dma.done [#allocation24], 16
    $region129: #{tpu_custom_call.1} parent=1 // pred_fallthru
      _
    %v283 = vld [vmem:[%s0] sm:$0xff]
    %v284 = vld [vmem:[%s0 + $0x8] sm:$0xff]
    %v285 = vld [vmem:[%s0 + $0x10] sm:$0xff]
    %v286 = vld [vmem:[%s0 + $0x18] sm:$0x3]
    %v287 = vld [vmem:[#allocation2] sm:$0xf]
    %v288 = vpack.c.bf16 %v284, %v283
    %v289 = vpack.c.bf16 %v286, %v285
    %v290 = vld [vmem:[#allocation5] sm:$0x1]
    %v292 = vperm.slane %v290, 0
    %vm294 = vcmask 64512
    %v296 = vsel %vm294, %v288, 0
    %v299 = vsel %vm294, %v289, 0
    %vm301 = vcmask 1043456
    %v303 = vsel %vm301, %v287, 0
    %305 = vmatpush.bf16.msra.mxu0 0
    %306 = vmatpush.bf16.msra.mxu0 0
    %307 = vmatpush.bf16.msra.mxu0 0
    %308 = vmatpush.bf16.msra.mxu0 0
    %309 = vmatpush.bf16.msra.mxu0 0
    %310 = vmatpush.bf16.msra.mxu0 0
    %311 = vmatpush.bf16.msra.mxu0 0
    %312 = vmatpush.bf16.msra.mxu0 %v303
    %313 = vmatmul.bf16.gmra.mxu0 %v296
    %v314 = vpop.f32.mrf.mxu0
    %v315 = vadd.f32 %v292, %v314
    %v316 = vpop.f32.mrf.mxu0
    %v317 = vadd.f32 %v292, %v316
    %318 = vmatmul.bf16.gmra.mxu0 %v299
    %v319 = vpop.f32.mrf.mxu0
    %v320 = vadd.f32 %v292, %v319
    %v321 = vpop.f32.mrf.mxu0
    %v322 = vadd.f32 %v292, %v321
    %323 = vdwg.mxu0
    %v324 = vld [vmem:[#allocation7] sm:$0xff]
    %v325 = vld [vmem:[#allocation7 + $0x8] sm:$0xff]
    %v326 = vld [vmem:[#allocation7 + $0x10] sm:$0xff]
    %v327 = vld [vmem:[#allocation7 + $0x18] sm:$0xff]
    %v328 = vld [vmem:[#allocation7 + $0x20] sm:$0xff]
    %v329 = vld [vmem:[#allocation7 + $0x28] sm:$0xff]
    %v330 = vld [vmem:[#allocation7 + $0x30] sm:$0xff]
    %v331 = vld [vmem:[#allocation7 + $0x38] sm:$0xff]
    %v332 = vld [vmem:[#allocation7 + $0x40] sm:$0xff]
    %v333 = vld [vmem:[#allocation7 + $0x48] sm:$0xff]
    %v334 = vld [vmem:[#allocation7 + $0x50] sm:$0xff]
    %v335 = vld [vmem:[#allocation7 + $0x58] sm:$0xff]
    %v336 = vld [vmem:[#allocation7 + $0x60] sm:$0xff]
    %v337 = vld [vmem:[#allocation7 + $0x68] sm:$0xff]
    %v338 = vld [vmem:[#allocation7 + $0x70] sm:$0xff]
    %v339 = vld [vmem:[#allocation7 + $0x78] sm:$0xff]
    %v340 = vadd.f32 %v315, %v317
    %v341 = vadd.f32 %v340, %v320
    %vm342 = vcmask 1041408
    %v343 = vsel %vm342, %v322, 0.0
    %v344 = vadd.f32 %v341, %v343
    %v345 = vrot.slane %v344, 4
    %v346 = vadd.f32 %v344, %v345
    %v347 = vrot.slane %v346, 2
    %v348 = vadd.f32 %v346, %v347
    %v349 = vrot.slane %v348, 1
    %v350 = vadd.f32 %v348, %v349
    %v351 = vrcp.pop 26.0
    %v352 = vmul.f32 26.0, %v351
    %v353 = vsub.f32 1.0, %v352
    %v354 = vmul.f32 %v351, %v353
    %v355 = vadd.f32 %v351, %v354
    %vm356 = vweird.f32 %v351
    %v357 = vsel %vm356, %v351, %v355
    %v358 = vmul.f32 %v350, %v357
    %v359 = vsub.f32 %v315, %v358
    %v360 = vsub.f32 %v317, %v358
    %v361 = vsub.f32 %v320, %v358
    %v362 = vsub.f32 %v322, %v358
    %v363 = vmul.f32 %v359, %v359
    %v364 = vmul.f32 %v360, %v360
    %v365 = vmul.f32 %v361, %v361
    %v366 = vmul.f32 %v362, %v362
    %v367 = vadd.f32 %v363, %v364
    %v368 = vadd.f32 %v367, %v365
    %v369 = vsel %vm342, %v366, 0.0
    %v370 = vadd.f32 %v368, %v369
    %v371 = vrot.slane %v370, 4
    %v372 = vadd.f32 %v370, %v371
    %v373 = vrot.slane %v372, 2
    %v374 = vadd.f32 %v372, %v373
    %v375 = vrot.slane %v374, 1
    %v376 = vadd.f32 %v374, %v375
    %v377 = vmul.f32 %v376, %v357
    %v378 = vadd.f32 %v377, 1e-05
    %v379 = vrsqrt.pop %v378
    %v380 = vmul.f32 %v379, %v378
    %v381 = vmul.f32 %v380, %v379
    %v382 = vmul.f32 0.5, %v381
    %v383 = vsub.f32 1.5, %v382
    %v384 = vmul.f32 %v379, %v383
    %vm385 = vweird.f32 %v378
    %vm386 = vweird.f32 %v379
    %vm387 = vmor %vm385, %vm386
    %v388 = vsel %vm387, %v379, %v384
    %v389 = vmul.f32 %v359, %v388
    %v390 = vmul.f32 %v360, %v388
    %v391 = vmul.f32 %v361, %v388
    %v392 = vmul.f32 %v362, %v388
    %v393 = vld [vmem:[#allocation8] sm:$0x1]
    %v395 = vperm.slane %v393, 0
    %v397 = vmul.f32 %v389, %v395
    %v398 = vmul.f32 %v390, %v395
    %v399 = vmul.f32 %v391, %v395
    %v400 = vmul.f32 %v392, %v395
    %v401 = vld [vmem:[#allocation10] sm:$0x1]
    %v403 = vperm.slane %v401, 0
    %v405 = vadd.f32 %v397, %v403
    %v406 = vadd.f32 %v398, %v403
    %v407 = vadd.f32 %v399, %v403
    %v408 = vadd.f32 %v400, %v403
    %409 = vmatpush.msra.mxu0 %v339
    %410 = vmatpush.msra.mxu0 %v338
    %411 = vmatpush.msra.mxu0 %v337
    %412 = vmatpush.msra.mxu0 %v336
    %413 = vmatpush.msra.mxu0 %v335
    %414 = vmatpush.msra.mxu0 %v334
    %415 = vmatpush.msra.mxu0 %v333
    %416 = vmatpush.msra.mxu0 %v332
    %417 = vmatpush.msra.mxu0 %v331
    %418 = vmatpush.msra.mxu0 %v330
    %419 = vmatpush.msra.mxu0 %v329
    %420 = vmatpush.msra.mxu0 %v328
    %421 = vmatpush.msra.mxu0 %v327
    %422 = vmatpush.msra.mxu0 %v326
    %423 = vmatpush.msra.mxu0 %v325
    %424 = vmatpush.msra.mxu0 %v324
    %425 = vmatmul.f32.gmra.mxu0 %v315
    %v426 = vpop.f32.mrf.mxu0
    %v427 = vadd.f32 0.0, %v426
    %428 = vmatmul.f32.gmra.mxu0 %v317
    %v429 = vpop.f32.mrf.mxu0
    %v430 = vadd.f32 0.0, %v429
    %431 = vmatmul.f32.gmra.mxu0 %v320
    %v432 = vpop.f32.mrf.mxu0
    %v433 = vadd.f32 0.0, %v432
    %434 = vmatmul.f32.gmra.mxu0 %v322
    %v435 = vpop.f32.mrf.mxu0
    %v436 = vadd.f32 0.0, %v435
    %437 = vdwg.mxu0
    %v438 = vsub.f32 %v315, %v427
    %v439 = vsub.f32 %v317, %v430
    %v440 = vsub.f32 %v320, %v433
    %v441 = vsub.f32 %v322, %v436
    %v442 = vmul.f32 %v438, %v438
    %v443 = vmul.f32 %v439, %v439
    %v444 = vmul.f32 %v440, %v440
    %v445 = vmul.f32 %v441, %v441
    %446 = vmatpush.msra.mxu0 %v339
    %447 = vmatpush.msra.mxu0 %v338
    %448 = vmatpush.msra.mxu0 %v337
    %449 = vmatpush.msra.mxu0 %v336
    %450 = vmatpush.msra.mxu0 %v335
    %451 = vmatpush.msra.mxu0 %v334
    %452 = vmatpush.msra.mxu0 %v333
    %453 = vmatpush.msra.mxu0 %v332
    %454 = vmatpush.msra.mxu0 %v331
    %455 = vmatpush.msra.mxu0 %v330
    %456 = vmatpush.msra.mxu0 %v329
    %457 = vmatpush.msra.mxu0 %v328
    %458 = vmatpush.msra.mxu0 %v327
    %459 = vmatpush.msra.mxu0 %v326
    %460 = vmatpush.msra.mxu0 %v325
    %461 = vmatpush.msra.mxu0 %v324
    %462 = vmatmul.f32.gmra.mxu0 %v442
    %v463 = vpop.f32.mrf.mxu0
    %v464 = vadd.f32 0.0, %v463
    %465 = vmatmul.f32.gmra.mxu0 %v443
    %v466 = vpop.f32.mrf.mxu0
    %v467 = vadd.f32 0.0, %v466
    %468 = vmatmul.f32.gmra.mxu0 %v444
    %v469 = vpop.f32.mrf.mxu0
    %v470 = vadd.f32 0.0, %v469
    %471 = vmatmul.f32.gmra.mxu0 %v445
    %v472 = vpop.f32.mrf.mxu0
    %v473 = vadd.f32 0.0, %v472
    %474 = vdwg.mxu0
    %v475 = vmul.f32 %v464, 1.1428572
    %v476 = vmul.f32 %v467, 1.1428572
    %v477 = vmul.f32 %v470, 1.1428572
    %v478 = vmul.f32 %v473, 1.1428572
    %v479 = vadd.f32 %v475, 1e-05
    %v480 = vadd.f32 %v476, 1e-05
    %v481 = vadd.f32 %v477, 1e-05
    %v482 = vadd.f32 %v478, 1e-05
    %v483 = vrsqrt.pop %v479
    %v484 = vmul.f32 %v483, %v479
    %v485 = vmul.f32 %v484, %v483
    %v486 = vmul.f32 0.5, %v485
    %v487 = vsub.f32 1.5, %v486
    %v488 = vmul.f32 %v483, %v487
    %vm489 = vweird.f32 %v479
    %vm490 = vweird.f32 %v483
    %vm491 = vmor %vm489, %vm490
    %v492 = vsel %vm491, %v483, %v488
    %v493 = vrsqrt.pop %v480
    %v494 = vmul.f32 %v493, %v480
    %v495 = vmul.f32 %v494, %v493
    %v496 = vmul.f32 0.5, %v495
    %v497 = vsub.f32 1.5, %v496
    %v498 = vmul.f32 %v493, %v497
    %vm499 = vweird.f32 %v480
    %vm500 = vweird.f32 %v493
    %vm501 = vmor %vm499, %vm500
    %v502 = vsel %vm501, %v493, %v498
    %v503 = vrsqrt.pop %v481
    %v504 = vmul.f32 %v503, %v481
    %v505 = vmul.f32 %v504, %v503
    %v506 = vmul.f32 0.5, %v505
    %v507 = vsub.f32 1.5, %v506
    %v508 = vmul.f32 %v503, %v507
    %vm509 = vweird.f32 %v481
    %vm510 = vweird.f32 %v503
    %vm511 = vmor %vm509, %vm510
    %v512 = vsel %vm511, %v503, %v508
    %v513 = vrsqrt.pop %v482
    %v514 = vmul.f32 %v513, %v482
    %v515 = vmul.f32 %v514, %v513
    %v516 = vmul.f32 0.5, %v515
    %v517 = vsub.f32 1.5, %v516
    %v518 = vmul.f32 %v513, %v517
    %vm519 = vweird.f32 %v482
    %vm520 = vweird.f32 %v513
    %vm521 = vmor %vm519, %vm520
    %v522 = vsel %vm521, %v513, %v518
    %v523 = vmul.f32 %v438, %v492
    %v524 = vmul.f32 %v439, %v502
    %v525 = vmul.f32 %v440, %v512
    %v526 = vmul.f32 %v441, %v522
    %v527 = vld [vmem:[#allocation11] sm:$0x1]
    %v529 = vperm.slane %v527, 0
    %v531 = vmul.f32 %v523, %v529
    %v532 = vmul.f32 %v524, %v529
    %v533 = vmul.f32 %v525, %v529
    %v534 = vmul.f32 %v526, %v529
    %v535 = vld [vmem:[#allocation13] sm:$0x1]
    %v537 = vperm.slane %v535, 0
    %v539 = vadd.f32 %v531, %v537
    %v540 = vadd.f32 %v532, %v537
    %v541 = vadd.f32 %v533, %v537
    %v542 = vadd.f32 %v534, %v537
    %v543 = vld [vmem:[#allocation14] sm:$0xff]
    %v544 = vld [vmem:[#allocation14 + $0x8] sm:$0xff]
    %v545 = vld [vmem:[#allocation14 + $0x10] sm:$0xff]
    %v546 = vld [vmem:[#allocation14 + $0x18] sm:$0xff]
    %v547 = vld [vmem:[#allocation14 + $0x20] sm:$0xff]
    %v548 = vld [vmem:[#allocation14 + $0x28] sm:$0xff]
    %v549 = vld [vmem:[#allocation14 + $0x30] sm:$0xff]
    %v550 = vld [vmem:[#allocation14 + $0x38] sm:$0xff]
    %v551 = vld [vmem:[#allocation14 + $0x40] sm:$0xff]
    %v552 = vld [vmem:[#allocation14 + $0x48] sm:$0xff]
    %v553 = vld [vmem:[#allocation14 + $0x50] sm:$0xff]
    %v554 = vld [vmem:[#allocation14 + $0x58] sm:$0xff]
    %v555 = vld [vmem:[#allocation14 + $0x60] sm:$0xff]
    %v556 = vld [vmem:[#allocation14 + $0x68] sm:$0xff]
    %v557 = vld [vmem:[#allocation14 + $0x70] sm:$0xff]
    %v558 = vld [vmem:[#allocation14 + $0x78] sm:$0xff]
    %v559 = vld [vmem:[#allocation14 + $0x80] sm:$0xff]
    %v560 = vld [vmem:[#allocation14 + $0x88] sm:$0xff]
    %v561 = vld [vmem:[#allocation14 + $0x90] sm:$0xff]
    %v562 = vld [vmem:[#allocation14 + $0x98] sm:$0xff]
    %v563 = vld [vmem:[#allocation14 + $0xa0] sm:$0xff]
    %v564 = vld [vmem:[#allocation14 + $0xa8] sm:$0xff]
    %v565 = vld [vmem:[#allocation14 + $0xb0] sm:$0xff]
    %v566 = vld [vmem:[#allocation14 + $0xb8] sm:$0xff]
    %v567 = vld [vmem:[#allocation14 + $0xc0] sm:$0xff]
    %v568 = vld [vmem:[#allocation14 + $0xc8] sm:$0xff]
    %v569 = vld [vmem:[#allocation14 + $0xd0] sm:$0xff]
    %v570 = vld [vmem:[#allocation14 + $0xd8] sm:$0xff]
    %v571 = vld [vmem:[#allocation14 + $0xe0] sm:$0xff]
    %v572 = vld [vmem:[#allocation14 + $0xe8] sm:$0xff]
    %v573 = vld [vmem:[#allocation14 + $0xf0] sm:$0xff]
    %v574 = vld [vmem:[#allocation14 + $0xf8] sm:$0xff]
    %v575 = vld [vmem:[#allocation14 + $0x100] sm:$0xff]
    %v576 = vld [vmem:[#allocation14 + $0x108] sm:$0xff]
    %v577 = vld [vmem:[#allocation14 + $0x110] sm:$0xff]
    %v578 = vld [vmem:[#allocation14 + $0x118] sm:$0xff]
    %v579 = vld [vmem:[#allocation14 + $0x120] sm:$0xff]
    %v580 = vld [vmem:[#allocation14 + $0x128] sm:$0xff]
    %v581 = vld [vmem:[#allocation14 + $0x130] sm:$0xff]
    %v582 = vld [vmem:[#allocation14 + $0x138] sm:$0xff]
    %v583 = vld [vmem:[#allocation14 + $0x140] sm:$0xff]
    %v584 = vld [vmem:[#allocation14 + $0x148] sm:$0xff]
    %v585 = vld [vmem:[#allocation14 + $0x150] sm:$0xff]
    %v586 = vld [vmem:[#allocation14 + $0x158] sm:$0xff]
    %v587 = vld [vmem:[#allocation14 + $0x160] sm:$0xff]
    %v588 = vld [vmem:[#allocation14 + $0x168] sm:$0xff]
    %v589 = vld [vmem:[#allocation14 + $0x170] sm:$0xff]
    %v590 = vld [vmem:[#allocation14 + $0x178] sm:$0xff]
    %v591 = vpack.c.bf16 %v317, %v315
    %v592 = vpack.c.bf16 %v406, %v405
    %v593 = vpack.c.bf16 %v540, %v539
    %v594 = vpack.c.bf16 %v320, %v320
    %v595 = vpack.c.bf16 %v407, %v407
    %v596 = vpack.c.bf16 %v541, %v541
    %v597 = vld [vmem:[#allocation16] sm:$0xff]
    %v598 = vld [vmem:[#allocation16 + $0x8] sm:$0xff]
    %v599 = vld [vmem:[#allocation16 + $0x10] sm:$0xff]
    %v600 = vld [vmem:[#allocation16 + $0x18] sm:$0xff]
    %v601 = vld [vmem:[#allocation16 + $0x20] sm:$0xff]
    %v602 = vld [vmem:[#allocation16 + $0x28] sm:$0xff]
    %v603 = vld [vmem:[#allocation16 + $0x30] sm:$0xff]
    %v604 = vld [vmem:[#allocation16 + $0x38] sm:$0xff]
    %v605 = vld [vmem:[#allocation16 + $0x40] sm:$0xff]
    %v606 = vld [vmem:[#allocation16 + $0x48] sm:$0xff]
    %v607 = vld [vmem:[#allocation16 + $0x50] sm:$0xff]
    %v608 = vld [vmem:[#allocation16 + $0x58] sm:$0xff]
    %v609 = vld [vmem:[#allocation16 + $0x60] sm:$0xff]
    %v610 = vld [vmem:[#allocation16 + $0x68] sm:$0xff]
    %v611 = vld [vmem:[#allocation16 + $0x70] sm:$0xff]
    %v612 = vld [vmem:[#allocation16 + $0x78] sm:$0xff]
    %v613 = vld [vmem:[#allocation16 + $0x80] sm:$0xff]
    %v614 = vld [vmem:[#allocation16 + $0x88] sm:$0xff]
    %v615 = vld [vmem:[#allocation16 + $0x90] sm:$0xff]
    %v616 = vld [vmem:[#allocation16 + $0x98] sm:$0xff]
    %v617 = vld [vmem:[#allocation16 + $0xa0] sm:$0xff]
    %v618 = vld [vmem:[#allocation16 + $0xa8] sm:$0xff]
    %v619 = vld [vmem:[#allocation16 + $0xb0] sm:$0xff]
    %v620 = vld [vmem:[#allocation16 + $0xb8] sm:$0xff]
    %v621 = vld [vmem:[#allocation16 + $0xc0] sm:$0xff]
    %v622 = vld [vmem:[#allocation16 + $0xc8] sm:$0xff]
    %v623 = vld [vmem:[#allocation16 + $0xd0] sm:$0xff]
    %v624 = vld [vmem:[#allocation16 + $0xd8] sm:$0xff]
    %v625 = vld [vmem:[#allocation16 + $0xe0] sm:$0xff]
    %v626 = vld [vmem:[#allocation16 + $0xe8] sm:$0xff]
    %v627 = vld [vmem:[#allocation16 + $0xf0] sm:$0xff]
    %v628 = vld [vmem:[#allocation16 + $0xf8] sm:$0xff]
    %v629 = vld [vmem:[#allocation16 + $0x100] sm:$0xff]
    %v630 = vld [vmem:[#allocation16 + $0x108] sm:$0xff]
    %v631 = vld [vmem:[#allocation16 + $0x110] sm:$0xff]
    %v632 = vld [vmem:[#allocation16 + $0x118] sm:$0xff]
    %v633 = vld [vmem:[#allocation16 + $0x120] sm:$0xff]
    %v634 = vld [vmem:[#allocation16 + $0x128] sm:$0xff]
    %v635 = vld [vmem:[#allocation16 + $0x130] sm:$0xff]
    %v636 = vld [vmem:[#allocation16 + $0x138] sm:$0xff]
    %v637 = vld [vmem:[#allocation16 + $0x140] sm:$0xff]
    %v638 = vld [vmem:[#allocation16 + $0x148] sm:$0xff]
    %v639 = vld [vmem:[#allocation16 + $0x150] sm:$0xff]
    %v640 = vld [vmem:[#allocation16 + $0x158] sm:$0xff]
    %v641 = vld [vmem:[#allocation16 + $0x160] sm:$0xff]
    %v642 = vld [vmem:[#allocation16 + $0x168] sm:$0xff]
    %v643 = vld [vmem:[#allocation16 + $0x170] sm:$0xff]
    %v644 = vld [vmem:[#allocation16 + $0x178] sm:$0xff]
    %v645 = vpack.c.bf16 %v322, %v320
    %v646 = vpack.c.bf16 %v408, %v407
    %v647 = vpack.c.bf16 %v542, %v541
    %vm654 = vcmask 1046528
    %v655 = vrot.slane %v591, 1
    %v656 = vrot.slane %v645, 1
    %v657 = vsel %vm654, %v655, %v656
    %v658 = vrot.slane %v592, 1
    %v659 = vrot.slane %v646, 1
    %v660 = vsel %vm654, %v658, %v659
    %v661 = vrot.slane %v593, 1
    %v662 = vrot.slane %v647, 1
    %v663 = vsel %vm654, %v661, %v662
    %v718 = vunpack.c.l.b16 %v597
    %v719 = vunpack.c.h.b16 %v597
    %v720 = vunpack.c.l.b16 %v598
    %v721 = vunpack.c.h.b16 %v598
    %v722 = vunpack.c.l.b16 %v599
    %v723 = vunpack.c.h.b16 %v599
    %v724 = vunpack.c.l.b16 %v600
    %v725 = vunpack.c.h.b16 %v600
    %v726 = vunpack.c.l.b16 %v601
    %v727 = vunpack.c.h.b16 %v601
    %v728 = vunpack.c.l.b16 %v602
    %v729 = vunpack.c.h.b16 %v602
    %v730 = vunpack.c.l.b16 %v603
    %v731 = vunpack.c.h.b16 %v603
    %v732 = vunpack.c.l.b16 %v604
    %v733 = vunpack.c.h.b16 %v604
    %v734 = vunpack.c.l.b16 %v605
    %v735 = vunpack.c.h.b16 %v605
    %v736 = vunpack.c.l.b16 %v606
    %v737 = vunpack.c.h.b16 %v606
    %v738 = vunpack.c.l.b16 %v607
    %v739 = vunpack.c.h.b16 %v607
    %v740 = vunpack.c.l.b16 %v608
    %v741 = vunpack.c.h.b16 %v608
    %v742 = vunpack.c.l.b16 %v609
    %v743 = vunpack.c.h.b16 %v609
    %v744 = vunpack.c.l.b16 %v610
    %v745 = vunpack.c.h.b16 %v610
    %v746 = vunpack.c.l.b16 %v611
    %v747 = vunpack.c.h.b16 %v611
    %v748 = vunpack.c.l.b16 %v612
    %v749 = vunpack.c.h.b16 %v612
    %v750 = vunpack.c.l.b16 %v613
    %v751 = vunpack.c.h.b16 %v613
    %v752 = vunpack.c.l.b16 %v614
    %v753 = vunpack.c.h.b16 %v614
    %v754 = vunpack.c.l.b16 %v615
    %v755 = vunpack.c.h.b16 %v615
    %v756 = vunpack.c.l.b16 %v616
    %v757 = vunpack.c.h.b16 %v616
    %v758 = vunpack.c.l.b16 %v617
    %v759 = vunpack.c.h.b16 %v617
    %v760 = vunpack.c.l.b16 %v618
    %v761 = vunpack.c.h.b16 %v618
    %v762 = vunpack.c.l.b16 %v619
    %v763 = vunpack.c.h.b16 %v619
    %v764 = vunpack.c.l.b16 %v620
    %v765 = vunpack.c.h.b16 %v620
    %v766 = vunpack.c.l.b16 %v621
    %v767 = vunpack.c.h.b16 %v621
    %v768 = vunpack.c.l.b16 %v622
    %v769 = vunpack.c.h.b16 %v622
    %v770 = vunpack.c.l.b16 %v623
    %v771 = vunpack.c.h.b16 %v623
    %v772 = vunpack.c.l.b16 %v624
    %v773 = vunpack.c.h.b16 %v624
    %v774 = vunpack.c.l.b16 %v625
    %v775 = vunpack.c.h.b16 %v625
    %v776 = vunpack.c.l.b16 %v626
    %v777 = vunpack.c.h.b16 %v626
    %v778 = vunpack.c.l.b16 %v627
    %v779 = vunpack.c.h.b16 %v627
    %v780 = vunpack.c.l.b16 %v628
    %v781 = vunpack.c.h.b16 %v628
    %v782 = vunpack.c.l.b16 %v629
    %v783 = vunpack.c.h.b16 %v629
    %v784 = vunpack.c.l.b16 %v630
    %v785 = vunpack.c.h.b16 %v630
    %v786 = vunpack.c.l.b16 %v631
    %v787 = vunpack.c.h.b16 %v631
    %v788 = vunpack.c.l.b16 %v632
    %v789 = vunpack.c.h.b16 %v632
    %v790 = vunpack.c.l.b16 %v633
    %v791 = vunpack.c.h.b16 %v633
    %v792 = vunpack.c.l.b16 %v634
    %v793 = vunpack.c.h.b16 %v634
    %v794 = vunpack.c.l.b16 %v635
    %v795 = vunpack.c.h.b16 %v635
    %v796 = vunpack.c.l.b16 %v636
    %v797 = vunpack.c.h.b16 %v636
    %v798 = vunpack.c.l.b16 %v637
    %v799 = vunpack.c.h.b16 %v637
    %v800 = vunpack.c.l.b16 %v638
    %v801 = vunpack.c.h.b16 %v638
    %v802 = vunpack.c.l.b16 %v639
    %v803 = vunpack.c.h.b16 %v639
    %v804 = vunpack.c.l.b16 %v640
    %v805 = vunpack.c.h.b16 %v640
    %v806 = vunpack.c.l.b16 %v641
    %v807 = vunpack.c.h.b16 %v641
    %v808 = vunpack.c.l.b16 %v642
    %v809 = vunpack.c.h.b16 %v642
    %v810 = vunpack.c.l.b16 %v643
    %v811 = vunpack.c.h.b16 %v643
    %v812 = vunpack.c.l.b16 %v644
    %v813 = vunpack.c.h.b16 %v644
    %v814 = vpack.c.b16 %v720, %v718
    %v815 = vpack.c.b16 %v721, %v719
    %v816 = vpack.c.b16 %v724, %v722
    %v817 = vpack.c.b16 %v725, %v723
    %v818 = vpack.c.b16 %v728, %v726
    %v819 = vpack.c.b16 %v729, %v727
    %v820 = vpack.c.b16 %v732, %v730
    %v821 = vpack.c.b16 %v733, %v731
    %v822 = vpack.c.b16 %v736, %v734
    %v823 = vpack.c.b16 %v737, %v735
    %v824 = vpack.c.b16 %v740, %v738
    %v825 = vpack.c.b16 %v741, %v739
    %v826 = vpack.c.b16 %v744, %v742
    %v827 = vpack.c.b16 %v745, %v743
    %v828 = vpack.c.b16 %v748, %v746
    %v829 = vpack.c.b16 %v749, %v747
    %v830 = vpack.c.b16 %v752, %v750
    %v831 = vpack.c.b16 %v753, %v751
    %v832 = vpack.c.b16 %v756, %v754
    %v833 = vpack.c.b16 %v757, %v755
    %v834 = vpack.c.b16 %v760, %v758
    %v835 = vpack.c.b16 %v761, %v759
    %v836 = vpack.c.b16 %v764, %v762
    %v837 = vpack.c.b16 %v765, %v763
    %v838 = vpack.c.b16 %v768, %v766
    %v839 = vpack.c.b16 %v769, %v767
    %v840 = vpack.c.b16 %v772, %v770
    %v841 = vpack.c.b16 %v773, %v771
    %v842 = vpack.c.b16 %v776, %v774
    %v843 = vpack.c.b16 %v777, %v775
    %v844 = vpack.c.b16 %v780, %v778
    %v845 = vpack.c.b16 %v781, %v779
    %v846 = vpack.c.b16 %v784, %v782
    %v847 = vpack.c.b16 %v785, %v783
    %v848 = vpack.c.b16 %v788, %v786
    %v849 = vpack.c.b16 %v789, %v787
    %v850 = vpack.c.b16 %v792, %v790
    %v851 = vpack.c.b16 %v793, %v791
    %v852 = vpack.c.b16 %v796, %v794
    %v853 = vpack.c.b16 %v797, %v795
    %v854 = vpack.c.b16 %v800, %v798
    %v855 = vpack.c.b16 %v801, %v799
    %v856 = vpack.c.b16 %v804, %v802
    %v857 = vpack.c.b16 %v805, %v803
    %v858 = vpack.c.b16 %v808, %v806
    %v859 = vpack.c.b16 %v809, %v807
    %v860 = vpack.c.b16 %v812, %v810
    %v861 = vpack.c.b16 %v813, %v811
    %910 = vmatpush.bf16.msra.mxu0 %v828
    %911 = vmatpush.bf16.msra.mxu0 %v826
    %912 = vmatpush.bf16.msra.mxu0 %v824
    %913 = vmatpush.bf16.msra.mxu0 %v822
    %914 = vmatpush.bf16.msra.mxu0 %v820
    %915 = vmatpush.bf16.msra.mxu0 %v818
    %916 = vmatpush.bf16.msra.mxu0 %v816
    %917 = vmatpush.bf16.msra.mxu0 %v814
    %918 = vmatmul.bf16.gmra.mxu0 %v657
    %v919 = vpop.f32.mrf.mxu0
    %v920 = vadd.f32 0.0, %v919
    %v921 = vpop.f32.mrf.mxu0
    %v922 = vadd.f32 0.0, %v921
    %923 = vmatmul.bf16.gmra.mxu0 %v656
    %v924 = vpop.f32.mrf.mxu0
    %v925 = vadd.f32 0.0, %v924
    %v926 = vpop.f32.mrf.mxu0
    %927 = vdwg.mxu0
    %928 = vmatpush.bf16.msra.mxu0 %v844
    %929 = vmatpush.bf16.msra.mxu0 %v842
    %930 = vmatpush.bf16.msra.mxu0 %v840
    %931 = vmatpush.bf16.msra.mxu0 %v838
    %932 = vmatpush.bf16.msra.mxu0 %v836
    %933 = vmatpush.bf16.msra.mxu0 %v834
    %934 = vmatpush.bf16.msra.mxu0 %v832
    %935 = vmatpush.bf16.msra.mxu0 %v830
    %936 = vmatmul.bf16.gmra.mxu0 %v660
    %v937 = vpop.f32.mrf.mxu0
    %v938 = vadd.f32 %v920, %v937
    %v939 = vpop.f32.mrf.mxu0
    %v940 = vadd.f32 %v922, %v939
    %941 = vmatmul.bf16.gmra.mxu0 %v659
    %v942 = vpop.f32.mrf.mxu0
    %v943 = vadd.f32 %v925, %v942
    %v944 = vpop.f32.mrf.mxu0
    %945 = vdwg.mxu0
    %946 = vmatpush.bf16.msra.mxu0 %v860
    %947 = vmatpush.bf16.msra.mxu0 %v858
    %948 = vmatpush.bf16.msra.mxu0 %v856
    %949 = vmatpush.bf16.msra.mxu0 %v854
    %950 = vmatpush.bf16.msra.mxu0 %v852
    %951 = vmatpush.bf16.msra.mxu0 %v850
    %952 = vmatpush.bf16.msra.mxu0 %v848
    %953 = vmatpush.bf16.msra.mxu0 %v846
    %954 = vmatmul.bf16.gmra.mxu0 %v663
    %v955 = vpop.f32.mrf.mxu0
    %v956 = vadd.f32 %v938, %v955
    %v957 = vpop.f32.mrf.mxu0
    %v958 = vadd.f32 %v940, %v957
    %959 = vmatmul.bf16.gmra.mxu0 %v662
    %v960 = vpop.f32.mrf.mxu0
    %v961 = vadd.f32 %v943, %v960
    %v962 = vpop.f32.mrf.mxu0
    %963 = vdwg.mxu0
    %964 = vmatpush.bf16.msra.mxu0 %v829
    %965 = vmatpush.bf16.msra.mxu0 %v827
    %966 = vmatpush.bf16.msra.mxu0 %v825
    %967 = vmatpush.bf16.msra.mxu0 %v823
    %968 = vmatpush.bf16.msra.mxu0 %v821
    %969 = vmatpush.bf16.msra.mxu0 %v819
    %970 = vmatpush.bf16.msra.mxu0 %v817
    %971 = vmatpush.bf16.msra.mxu0 %v815
    %972 = vmatmul.bf16.gmra.mxu0 %v657
    %v973 = vpop.f32.mrf.mxu0
    %v974 = vadd.f32 0.0, %v973
    %v975 = vpop.f32.mrf.mxu0
    %v976 = vadd.f32 0.0, %v975
    %977 = vmatmul.bf16.gmra.mxu0 %v656
    %v978 = vpop.f32.mrf.mxu0
    %v979 = vadd.f32 0.0, %v978
    %v980 = vpop.f32.mrf.mxu0
    %981 = vdwg.mxu0
    %982 = vmatpush.bf16.msra.mxu0 %v845
    %983 = vmatpush.bf16.msra.mxu0 %v843
    %984 = vmatpush.bf16.msra.mxu0 %v841
    %985 = vmatpush.bf16.msra.mxu0 %v839
    %986 = vmatpush.bf16.msra.mxu0 %v837
    %987 = vmatpush.bf16.msra.mxu0 %v835
    %988 = vmatpush.bf16.msra.mxu0 %v833
    %989 = vmatpush.bf16.msra.mxu0 %v831
    %990 = vmatmul.bf16.gmra.mxu0 %v660
    %v991 = vpop.f32.mrf.mxu0
    %v992 = vadd.f32 %v974, %v991
    %v993 = vpop.f32.mrf.mxu0
    %v994 = vadd.f32 %v976, %v993
    %995 = vmatmul.bf16.gmra.mxu0 %v659
    %v996 = vpop.f32.mrf.mxu0
    %v997 = vadd.f32 %v979, %v996
    %v998 = vpop.f32.mrf.mxu0
    %999 = vdwg.mxu0
    %1000 = vmatpush.bf16.msra.mxu0 %v861
    %1001 = vmatpush.bf16.msra.mxu0 %v859
    %1002 = vmatpush.bf16.msra.mxu0 %v857
    %1003 = vmatpush.bf16.msra.mxu0 %v855
    %1004 = vmatpush.bf16.msra.mxu0 %v853
    %1005 = vmatpush.bf16.msra.mxu0 %v851
    %1006 = vmatpush.bf16.msra.mxu0 %v849
    %1007 = vmatpush.bf16.msra.mxu0 %v847
    %1008 = vmatmul.bf16.gmra.mxu0 %v663
    %v1009 = vpop.f32.mrf.mxu0
    %v1010 = vadd.f32 %v992, %v1009
    %v1011 = vpop.f32.mrf.mxu0
    %v1012 = vadd.f32 %v994, %v1011
    %1013 = vmatmul.bf16.gmra.mxu0 %v662
    %v1014 = vpop.f32.mrf.mxu0
    %v1015 = vadd.f32 %v997, %v1014
    %v1016 = vpop.f32.mrf.mxu0
    %1017 = vdwg.mxu0
    %v1066 = vunpack.c.l.b16 %v543
    %v1067 = vunpack.c.h.b16 %v543
    %v1068 = vunpack.c.l.b16 %v544
    %v1069 = vunpack.c.h.b16 %v544
    %v1070 = vunpack.c.l.b16 %v545
    %v1071 = vunpack.c.h.b16 %v545
    %v1072 = vunpack.c.l.b16 %v546
    %v1073 = vunpack.c.h.b16 %v546
    %v1074 = vunpack.c.l.b16 %v547
    %v1075 = vunpack.c.h.b16 %v547
    %v1076 = vunpack.c.l.b16 %v548
    %v1077 = vunpack.c.h.b16 %v548
    %v1078 = vunpack.c.l.b16 %v549
    %v1079 = vunpack.c.h.b16 %v549
    %v1080 = vunpack.c.l.b16 %v550
    %v1081 = vunpack.c.h.b16 %v550
    %v1082 = vunpack.c.l.b16 %v551
    %v1083 = vunpack.c.h.b16 %v551
    %v1084 = vunpack.c.l.b16 %v552
    %v1085 = vunpack.c.h.b16 %v552
    %v1086 = vunpack.c.l.b16 %v553
    %v1087 = vunpack.c.h.b16 %v553
    %v1088 = vunpack.c.l.b16 %v554
    %v1089 = vunpack.c.h.b16 %v554
    %v1090 = vunpack.c.l.b16 %v555
    %v1091 = vunpack.c.h.b16 %v555
    %v1092 = vunpack.c.l.b16 %v556
    %v1093 = vunpack.c.h.b16 %v556
    %v1094 = vunpack.c.l.b16 %v557
    %v1095 = vunpack.c.h.b16 %v557
    %v1096 = vunpack.c.l.b16 %v558
    %v1097 = vunpack.c.h.b16 %v558
    %v1098 = vunpack.c.l.b16 %v559
    %v1099 = vunpack.c.h.b16 %v559
    %v1100 = vunpack.c.l.b16 %v560
    %v1101 = vunpack.c.h.b16 %v560
    %v1102 = vunpack.c.l.b16 %v561
    %v1103 = vunpack.c.h.b16 %v561
    %v1104 = vunpack.c.l.b16 %v562
    %v1105 = vunpack.c.h.b16 %v562
    %v1106 = vunpack.c.l.b16 %v563
    %v1107 = vunpack.c.h.b16 %v563
    %v1108 = vunpack.c.l.b16 %v564
    %v1109 = vunpack.c.h.b16 %v564
    %v1110 = vunpack.c.l.b16 %v565
    %v1111 = vunpack.c.h.b16 %v565
    %v1112 = vunpack.c.l.b16 %v566
    %v1113 = vunpack.c.h.b16 %v566
    %v1114 = vunpack.c.l.b16 %v567
    %v1115 = vunpack.c.h.b16 %v567
    %v1116 = vunpack.c.l.b16 %v568
    %v1117 = vunpack.c.h.b16 %v568
    %v1118 = vunpack.c.l.b16 %v569
    %v1119 = vunpack.c.h.b16 %v569
    %v1120 = vunpack.c.l.b16 %v570
    %v1121 = vunpack.c.h.b16 %v570
    %v1122 = vunpack.c.l.b16 %v571
    %v1123 = vunpack.c.h.b16 %v571
    %v1124 = vunpack.c.l.b16 %v572
    %v1125 = vunpack.c.h.b16 %v572
    %v1126 = vunpack.c.l.b16 %v573
    %v1127 = vunpack.c.h.b16 %v573
    %v1128 = vunpack.c.l.b16 %v574
    %v1129 = vunpack.c.h.b16 %v574
    %v1130 = vunpack.c.l.b16 %v575
    %v1131 = vunpack.c.h.b16 %v575
    %v1132 = vunpack.c.l.b16 %v576
    %v1133 = vunpack.c.h.b16 %v576
    %v1134 = vunpack.c.l.b16 %v577
    %v1135 = vunpack.c.h.b16 %v577
    %v1136 = vunpack.c.l.b16 %v578
    %v1137 = vunpack.c.h.b16 %v578
    %v1138 = vunpack.c.l.b16 %v579
    %v1139 = vunpack.c.h.b16 %v579
    %v1140 = vunpack.c.l.b16 %v580
    %v1141 = vunpack.c.h.b16 %v580
    %v1142 = vunpack.c.l.b16 %v581
    %v1143 = vunpack.c.h.b16 %v581
    %v1144 = vunpack.c.l.b16 %v582
    %v1145 = vunpack.c.h.b16 %v582
    %v1146 = vunpack.c.l.b16 %v583
    %v1147 = vunpack.c.h.b16 %v583
    %v1148 = vunpack.c.l.b16 %v584
    %v1149 = vunpack.c.h.b16 %v584
    %v1150 = vunpack.c.l.b16 %v585
    %v1151 = vunpack.c.h.b16 %v585
    %v1152 = vunpack.c.l.b16 %v586
    %v1153 = vunpack.c.h.b16 %v586
    %v1154 = vunpack.c.l.b16 %v587
    %v1155 = vunpack.c.h.b16 %v587
    %v1156 = vunpack.c.l.b16 %v588
    %v1157 = vunpack.c.h.b16 %v588
    %v1158 = vunpack.c.l.b16 %v589
    %v1159 = vunpack.c.h.b16 %v589
    %v1160 = vunpack.c.l.b16 %v590
    %v1161 = vunpack.c.h.b16 %v590
    %v1162 = vpack.c.b16 %v1068, %v1066
    %v1163 = vpack.c.b16 %v1069, %v1067
    %v1164 = vpack.c.b16 %v1072, %v1070
    %v1165 = vpack.c.b16 %v1073, %v1071
    %v1166 = vpack.c.b16 %v1076, %v1074
    %v1167 = vpack.c.b16 %v1077, %v1075
    %v1168 = vpack.c.b16 %v1080, %v1078
    %v1169 = vpack.c.b16 %v1081, %v1079
    %v1170 = vpack.c.b16 %v1084, %v1082
    %v1171 = vpack.c.b16 %v1085, %v1083
    %v1172 = vpack.c.b16 %v1088, %v1086
    %v1173 = vpack.c.b16 %v1089, %v1087
    %v1174 = vpack.c.b16 %v1092, %v1090
    %v1175 = vpack.c.b16 %v1093, %v1091
    %v1176 = vpack.c.b16 %v1096, %v1094
    %v1177 = vpack.c.b16 %v1097, %v1095
    %v1178 = vpack.c.b16 %v1100, %v1098
    %v1179 = vpack.c.b16 %v1101, %v1099
    %v1180 = vpack.c.b16 %v1104, %v1102
    %v1181 = vpack.c.b16 %v1105, %v1103
    %v1182 = vpack.c.b16 %v1108, %v1106
    %v1183 = vpack.c.b16 %v1109, %v1107
    %v1184 = vpack.c.b16 %v1112, %v1110
    %v1185 = vpack.c.b16 %v1113, %v1111
    %v1186 = vpack.c.b16 %v1116, %v1114
    %v1187 = vpack.c.b16 %v1117, %v1115
    %v1188 = vpack.c.b16 %v1120, %v1118
    %v1189 = vpack.c.b16 %v1121, %v1119
    %v1190 = vpack.c.b16 %v1124, %v1122
    %v1191 = vpack.c.b16 %v1125, %v1123
    %v1192 = vpack.c.b16 %v1128, %v1126
    %v1193 = vpack.c.b16 %v1129, %v1127
    %v1194 = vpack.c.b16 %v1132, %v1130
    %v1195 = vpack.c.b16 %v1133, %v1131
    %v1196 = vpack.c.b16 %v1136, %v1134
    %v1197 = vpack.c.b16 %v1137, %v1135
    %v1198 = vpack.c.b16 %v1140, %v1138
    %v1199 = vpack.c.b16 %v1141, %v1139
    %v1200 = vpack.c.b16 %v1144, %v1142
    %v1201 = vpack.c.b16 %v1145, %v1143
    %v1202 = vpack.c.b16 %v1148, %v1146
    %v1203 = vpack.c.b16 %v1149, %v1147
    %v1204 = vpack.c.b16 %v1152, %v1150
    %v1205 = vpack.c.b16 %v1153, %v1151
    %v1206 = vpack.c.b16 %v1156, %v1154
    %v1207 = vpack.c.b16 %v1157, %v1155
    %v1208 = vpack.c.b16 %v1160, %v1158
    %v1209 = vpack.c.b16 %v1161, %v1159
    %1258 = vmatpush.bf16.msra.mxu0 %v1176
    %1259 = vmatpush.bf16.msra.mxu0 %v1174
    %1260 = vmatpush.bf16.msra.mxu0 %v1172
    %1261 = vmatpush.bf16.msra.mxu0 %v1170
    %1262 = vmatpush.bf16.msra.mxu0 %v1168
    %1263 = vmatpush.bf16.msra.mxu0 %v1166
    %1264 = vmatpush.bf16.msra.mxu0 %v1164
    %1265 = vmatpush.bf16.msra.mxu0 %v1162
    %1266 = vmatmul.bf16.gmra.mxu0 %v591
    %v1267 = vpop.f32.mrf.mxu0
    %v1268 = vadd.f32 %v956, %v1267
    %v1269 = vpop.f32.mrf.mxu0
    %v1270 = vadd.f32 %v958, %v1269
    %1271 = vmatmul.bf16.gmra.mxu0 %v594
    %v1272 = vpop.f32.mrf.mxu0
    %v1273 = vadd.f32 %v961, %v1272
    %v1274 = vpop.f32.mrf.mxu0
    %1275 = vdwg.mxu0
    %1276 = vmatpush.bf16.msra.mxu0 %v1192
    %1277 = vmatpush.bf16.msra.mxu0 %v1190
    %1278 = vmatpush.bf16.msra.mxu0 %v1188
    %1279 = vmatpush.bf16.msra.mxu0 %v1186
    %1280 = vmatpush.bf16.msra.mxu0 %v1184
    %1281 = vmatpush.bf16.msra.mxu0 %v1182
    %1282 = vmatpush.bf16.msra.mxu0 %v1180
    %1283 = vmatpush.bf16.msra.mxu0 %v1178
    %1284 = vmatmul.bf16.gmra.mxu0 %v592
    %v1285 = vpop.f32.mrf.mxu0
    %v1286 = vadd.f32 %v1268, %v1285
    %v1287 = vpop.f32.mrf.mxu0
    %v1288 = vadd.f32 %v1270, %v1287
    %1289 = vmatmul.bf16.gmra.mxu0 %v595
    %v1290 = vpop.f32.mrf.mxu0
    %v1291 = vadd.f32 %v1273, %v1290
    %v1292 = vpop.f32.mrf.mxu0
    %1293 = vdwg.mxu0
    %1294 = vmatpush.bf16.msra.mxu0 %v1208
    %1295 = vmatpush.bf16.msra.mxu0 %v1206
    %1296 = vmatpush.bf16.msra.mxu0 %v1204
    %1297 = vmatpush.bf16.msra.mxu0 %v1202
    %1298 = vmatpush.bf16.msra.mxu0 %v1200
    %1299 = vmatpush.bf16.msra.mxu0 %v1198
    %1300 = vmatpush.bf16.msra.mxu0 %v1196
    %1301 = vmatpush.bf16.msra.mxu0 %v1194
    %1302 = vmatmul.bf16.gmra.mxu0 %v593
    %v1303 = vpop.f32.mrf.mxu0
    %v1304 = vadd.f32 %v1286, %v1303
    %v1305 = vpop.f32.mrf.mxu0
    %v1306 = vadd.f32 %v1288, %v1305
    %1307 = vmatmul.bf16.gmra.mxu0 %v596
    %v1308 = vpop.f32.mrf.mxu0
    %v1309 = vadd.f32 %v1291, %v1308
    %v1310 = vpop.f32.mrf.mxu0
    %1311 = vdwg.mxu0
    %1312 = vmatpush.bf16.msra.mxu0 %v1177
    %1313 = vmatpush.bf16.msra.mxu0 %v1175
    %1314 = vmatpush.bf16.msra.mxu0 %v1173
    %1315 = vmatpush.bf16.msra.mxu0 %v1171
    %1316 = vmatpush.bf16.msra.mxu0 %v1169
    %1317 = vmatpush.bf16.msra.mxu0 %v1167
    %1318 = vmatpush.bf16.msra.mxu0 %v1165
    %1319 = vmatpush.bf16.msra.mxu0 %v1163
    %1320 = vmatmul.bf16.gmra.mxu0 %v591
    %v1321 = vpop.f32.mrf.mxu0
    %v1322 = vadd.f32 %v1010, %v1321
    %v1323 = vpop.f32.mrf.mxu0
    %v1324 = vadd.f32 %v1012, %v1323
    %1325 = vmatmul.bf16.gmra.mxu0 %v594
    %v1326 = vpop.f32.mrf.mxu0
    %v1327 = vadd.f32 %v1015, %v1326
    %v1328 = vpop.f32.mrf.mxu0
    %1329 = vdwg.mxu0
    %1330 = vmatpush.bf16.msra.mxu0 %v1193
    %1331 = vmatpush.bf16.msra.mxu0 %v1191
    %1332 = vmatpush.bf16.msra.mxu0 %v1189
    %1333 = vmatpush.bf16.msra.mxu0 %v1187
    %1334 = vmatpush.bf16.msra.mxu0 %v1185
    %1335 = vmatpush.bf16.msra.mxu0 %v1183
    %1336 = vmatpush.bf16.msra.mxu0 %v1181
    %1337 = vmatpush.bf16.msra.mxu0 %v1179
    %1338 = vmatmul.bf16.gmra.mxu0 %v592
    %v1339 = vpop.f32.mrf.mxu0
    %v1340 = vadd.f32 %v1322, %v1339
    %v1341 = vpop.f32.mrf.mxu0
    %v1342 = vadd.f32 %v1324, %v1341
    %1343 = vmatmul.bf16.gmra.mxu0 %v595
    %v1344 = vpop.f32.mrf.mxu0
    %v1345 = vadd.f32 %v1327, %v1344
    %v1346 = vpop.f32.mrf.mxu0
    %1347 = vdwg.mxu0
    %1348 = vmatpush.bf16.msra.mxu0 %v1209
    %1349 = vmatpush.bf16.msra.mxu0 %v1207
    %1350 = vmatpush.bf16.msra.mxu0 %v1205
    %1351 = vmatpush.bf16.msra.mxu0 %v1203
    %1352 = vmatpush.bf16.msra.mxu0 %v1201
    %1353 = vmatpush.bf16.msra.mxu0 %v1199
    %1354 = vmatpush.bf16.msra.mxu0 %v1197
    %1355 = vmatpush.bf16.msra.mxu0 %v1195
    %1356 = vmatmul.bf16.gmra.mxu0 %v593
    %v1357 = vpop.f32.mrf.mxu0
    %v1358 = vadd.f32 %v1340, %v1357
    %v1359 = vpop.f32.mrf.mxu0
    %v1360 = vadd.f32 %v1342, %v1359
    %1361 = vmatmul.bf16.gmra.mxu0 %v596
    %v1362 = vpop.f32.mrf.mxu0
    %v1363 = vadd.f32 %v1345, %v1362
    %v1364 = vpop.f32.mrf.mxu0
    %1365 = vdwg.mxu0
    %v1366 = vld [vmem:[#allocation17] sm:$0x3]
    %v1368 = vperm.slane %v1366, 0
    %v1369 = vperm.slane %v1366, 1
    %v1372 = vadd.f32 %v1304, %v1368
    %v1373 = vadd.f32 %v1358, %v1369
    %v1374 = vadd.f32 %v1306, %v1368
    %v1375 = vadd.f32 %v1360, %v1369
    %v1376 = vadd.f32 %v1309, %v1368
    %v1377 = vadd.f32 %v1363, %v1369
    %v1378 = vtanh.pop %v1372
    %v1379 = vtanh.pop %v1374
    %v1380 = vtanh.pop %v1376
    %v1381 = vxor.u32 %v1373, 2147483648
    %v1382 = vxor.u32 %v1375, 2147483648
    %v1383 = vxor.u32 %v1377, 2147483648
    %v1384 = vmul.f32 %v1381, 1.442695
    %v1385 = vpow.pop %v1384
    %v1386 = vmul.f32 %v1382, 1.442695
    %v1387 = vpow.pop %v1386
    %v1388 = vmul.f32 %v1383, 1.442695
    %v1389 = vpow.pop %v1388
    %v1390 = vadd.f32 %v1385, 1.0
    %v1391 = vadd.f32 %v1387, 1.0
    %v1392 = vadd.f32 %v1389, 1.0
    %v1393 = vrcp.pop %v1390
    %v1394 = vmul.f32 %v1390, %v1393
    %v1395 = vsub.f32 1.0, %v1394
    %v1396 = vmul.f32 %v1393, %v1395
    %v1397 = vadd.f32 %v1393, %v1396
    %vm1398 = vweird.f32 %v1390
    %vm1399 = vweird.f32 %v1393
    %vm1400 = vmor %vm1398, %vm1399
    %v1401 = vsel %vm1400, %v1393, %v1397
    %v1402 = vand.u32 2147483647, %v1390
    %vm1403 = vcmp.eq.f32.partialorder %v1402, 8.507059e+37
    %v1404 = vand.u32 %v1390, 2147483648
    %v1405 = vor.u32 1.1754944e-38, %v1404
    %v1406 = vsel %vm1403, %v1405, %v1401
    %v1407 = vmul.f32 1.0, %v1406
    %v1408 = vrcp.pop %v1391
    %v1409 = vmul.f32 %v1391, %v1408
    %v1410 = vsub.f32 1.0, %v1409
    %v1411 = vmul.f32 %v1408, %v1410
    %v1412 = vadd.f32 %v1408, %v1411
    %vm1413 = vweird.f32 %v1391
    %vm1414 = vweird.f32 %v1408
    %vm1415 = vmor %vm1413, %vm1414
    %v1416 = vsel %vm1415, %v1408, %v1412
    %v1417 = vand.u32 2147483647, %v1391
    %vm1418 = vcmp.eq.f32.partialorder %v1417, 8.507059e+37
    %v1419 = vand.u32 %v1391, 2147483648
    %v1420 = vor.u32 1.1754944e-38, %v1419
    %v1421 = vsel %vm1418, %v1420, %v1416
    %v1422 = vmul.f32 1.0, %v1421
    %v1423 = vrcp.pop %v1392
    %v1424 = vmul.f32 %v1392, %v1423
    %v1425 = vsub.f32 1.0, %v1424
    %v1426 = vmul.f32 %v1423, %v1425
    %v1427 = vadd.f32 %v1423, %v1426
    %vm1428 = vweird.f32 %v1392
    %vm1429 = vweird.f32 %v1423
    %vm1430 = vmor %vm1428, %vm1429
    %v1431 = vsel %vm1430, %v1423, %v1427
    %v1432 = vand.u32 2147483647, %v1392
    %vm1433 = vcmp.eq.f32.partialorder %v1432, 8.507059e+37
    %v1434 = vand.u32 %v1392, 2147483648
    %v1435 = vor.u32 1.1754944e-38, %v1434
    %v1436 = vsel %vm1433, %v1435, %v1431
    %v1437 = vmul.f32 1.0, %v1436
    %v1438 = vmul.f32 %v1378, %v1407
    %v1439 = vmul.f32 %v1379, %v1422
    %v1440 = vmul.f32 %v1380, %v1437
    %v1441 = vld [vmem:[#allocation19] sm:$0xff]
    %v1442 = vld [vmem:[#allocation19 + $0x8] sm:$0xff]
    %v1443 = vld [vmem:[#allocation19 + $0x10] sm:$0xff]
    %v1444 = vld [vmem:[#allocation19 + $0x18] sm:$0xff]
    %v1445 = vld [vmem:[#allocation19 + $0x20] sm:$0xff]
    %v1446 = vld [vmem:[#allocation19 + $0x28] sm:$0xff]
    %v1447 = vld [vmem:[#allocation19 + $0x30] sm:$0xff]
    %v1448 = vld [vmem:[#allocation19 + $0x38] sm:$0xff]
    %v1449 = vld [vmem:[#allocation19 + $0x40] sm:$0xff]
    %v1450 = vld [vmem:[#allocation19 + $0x48] sm:$0xff]
    %v1451 = vld [vmem:[#allocation19 + $0x50] sm:$0xff]
    %v1452 = vld [vmem:[#allocation19 + $0x58] sm:$0xff]
    %v1453 = vld [vmem:[#allocation19 + $0x60] sm:$0xff]
    %v1454 = vld [vmem:[#allocation19 + $0x68] sm:$0xff]
    %v1455 = vld [vmem:[#allocation19 + $0x70] sm:$0xff]
    %v1456 = vld [vmem:[#allocation19 + $0x78] sm:$0xff]
    %v1457 = vpack.c.bf16 %v1439, %v1438
    %v1458 = vpack.c.bf16 %v1440, %v1440
    %v1459 = vld [vmem:[#allocation20] sm:$0x3]
    %v1461 = vperm.slane %v1459, 0
    %v1462 = vperm.slane %v1459, 1
    %v1481 = vunpack.c.l.b16 %v1441
    %v1482 = vunpack.c.h.b16 %v1441
    %v1483 = vunpack.c.l.b16 %v1442
    %v1484 = vunpack.c.h.b16 %v1442
    %v1485 = vunpack.c.l.b16 %v1443
    %v1486 = vunpack.c.h.b16 %v1443
    %v1487 = vunpack.c.l.b16 %v1444
    %v1488 = vunpack.c.h.b16 %v1444
    %v1489 = vunpack.c.l.b16 %v1445
    %v1490 = vunpack.c.h.b16 %v1445
    %v1491 = vunpack.c.l.b16 %v1446
    %v1492 = vunpack.c.h.b16 %v1446
    %v1493 = vunpack.c.l.b16 %v1447
    %v1494 = vunpack.c.h.b16 %v1447
    %v1495 = vunpack.c.l.b16 %v1448
    %v1496 = vunpack.c.h.b16 %v1448
    %v1497 = vunpack.c.l.b16 %v1449
    %v1498 = vunpack.c.h.b16 %v1449
    %v1499 = vunpack.c.l.b16 %v1450
    %v1500 = vunpack.c.h.b16 %v1450
    %v1501 = vunpack.c.l.b16 %v1451
    %v1502 = vunpack.c.h.b16 %v1451
    %v1503 = vunpack.c.l.b16 %v1452
    %v1504 = vunpack.c.h.b16 %v1452
    %v1505 = vunpack.c.l.b16 %v1453
    %v1506 = vunpack.c.h.b16 %v1453
    %v1507 = vunpack.c.l.b16 %v1454
    %v1508 = vunpack.c.h.b16 %v1454
    %v1509 = vunpack.c.l.b16 %v1455
    %v1510 = vunpack.c.h.b16 %v1455
    %v1511 = vunpack.c.l.b16 %v1456
    %v1512 = vunpack.c.h.b16 %v1456
    %v1513 = vpack.c.b16 %v1483, %v1481
    %v1514 = vpack.c.b16 %v1484, %v1482
    %v1515 = vpack.c.b16 %v1487, %v1485
    %v1516 = vpack.c.b16 %v1488, %v1486
    %v1517 = vpack.c.b16 %v1491, %v1489
    %v1518 = vpack.c.b16 %v1492, %v1490
    %v1519 = vpack.c.b16 %v1495, %v1493
    %v1520 = vpack.c.b16 %v1496, %v1494
    %v1521 = vpack.c.b16 %v1499, %v1497
    %v1522 = vpack.c.b16 %v1500, %v1498
    %v1523 = vpack.c.b16 %v1503, %v1501
    %v1524 = vpack.c.b16 %v1504, %v1502
    %v1525 = vpack.c.b16 %v1507, %v1505
    %v1526 = vpack.c.b16 %v1508, %v1506
    %v1527 = vpack.c.b16 %v1511, %v1509
    %v1528 = vpack.c.b16 %v1512, %v1510
    %1545 = vmatpush.bf16.msra.mxu0 %v1527
    %1546 = vmatpush.bf16.msra.mxu0 %v1525
    %1547 = vmatpush.bf16.msra.mxu0 %v1523
    %1548 = vmatpush.bf16.msra.mxu0 %v1521
    %1549 = vmatpush.bf16.msra.mxu0 %v1519
    %1550 = vmatpush.bf16.msra.mxu0 %v1517
    %1551 = vmatpush.bf16.msra.mxu0 %v1515
    %1552 = vmatpush.bf16.msra.mxu0 %v1513
    %1553 = vmatmul.bf16.gmra.mxu0 %v1457
    %v1554 = vpop.f32.mrf.mxu0
    %v1555 = vadd.f32 %v1461, %v1554
    %v1556 = vpop.f32.mrf.mxu0
    %v1557 = vadd.f32 %v1461, %v1556
    %1558 = vmatmul.bf16.gmra.mxu0 %v1458
    %v1559 = vpop.f32.mrf.mxu0
    %v1560 = vadd.f32 %v1461, %v1559
    %v1561 = vpop.f32.mrf.mxu0
    %1562 = vdwg.mxu0
    %1563 = vmatpush.bf16.msra.mxu0 %v1528
    %1564 = vmatpush.bf16.msra.mxu0 %v1526
    %1565 = vmatpush.bf16.msra.mxu0 %v1524
    %1566 = vmatpush.bf16.msra.mxu0 %v1522
    %1567 = vmatpush.bf16.msra.mxu0 %v1520
    %1568 = vmatpush.bf16.msra.mxu0 %v1518
    %1569 = vmatpush.bf16.msra.mxu0 %v1516
    %1570 = vmatpush.bf16.msra.mxu0 %v1514
    %1571 = vmatmul.bf16.gmra.mxu0 %v1457
    %v1572 = vpop.f32.mrf.mxu0
    %v1573 = vadd.f32 %v1462, %v1572
    %v1574 = vpop.f32.mrf.mxu0
    %v1575 = vadd.f32 %v1462, %v1574
    %1576 = vmatmul.bf16.gmra.mxu0 %v1458
    %v1577 = vpop.f32.mrf.mxu0
    %v1578 = vadd.f32 %v1462, %v1577
    %v1579 = vpop.f32.mrf.mxu0
    %1580 = vdwg.mxu0
    %vm1585 = vcmask 1045504
    %v1586 = vrot.slane %v315, 2
    %v1587 = vrot.slane %v317, 2
    %v1588 = vsel %vm1585, %v1586, %v1587
    %v1589 = vrot.slane %v320, 2
    %v1590 = vsel %vm1585, %v1587, %v1589
    %v1591 = vrot.slane %v322, 2
    %v1592 = vsel %vm1585, %v1589, %v1591
    %v1596 = vadd.f32 %v1555, %v1588
    %v1597 = vadd.f32 %v1557, %v1590
    %v1598 = vadd.f32 %v1560, %v1592
    %v1599 = vadd.f32 %v1596, %v1597
    %v1600 = vadd.f32 %v1599, %v1598
    %v1601 = vrot.slane %v1600, 4
    %v1602 = vadd.f32 %v1600, %v1601
    %v1603 = vrot.slane %v1602, 2
    %v1604 = vadd.f32 %v1602, %v1603
    %v1605 = vrot.slane %v1604, 1
    %v1606 = vadd.f32 %v1604, %v1605
    %v1607 = vrcp.pop 24.0
    %v1608 = vmul.f32 24.0, %v1607
    %v1609 = vsub.f32 1.0, %v1608
    %v1610 = vmul.f32 %v1607, %v1609
    %v1611 = vadd.f32 %v1607, %v1610
    %vm1612 = vweird.f32 %v1607
    %v1613 = vsel %vm1612, %v1607, %v1611
    %v1614 = vmul.f32 %v1606, %v1613
    %v1615 = vsub.f32 %v1596, %v1614
    %v1616 = vsub.f32 %v1597, %v1614
    %v1617 = vsub.f32 %v1598, %v1614
    %v1618 = vmul.f32 %v1615, %v1615
    %v1619 = vmul.f32 %v1616, %v1616
    %v1620 = vmul.f32 %v1617, %v1617
    %v1621 = vadd.f32 %v1618, %v1619
    %v1622 = vadd.f32 %v1621, %v1620
    %v1623 = vrot.slane %v1622, 4
    %v1624 = vadd.f32 %v1622, %v1623
    %v1625 = vrot.slane %v1624, 2
    %v1626 = vadd.f32 %v1624, %v1625
    %v1627 = vrot.slane %v1626, 1
    %v1628 = vadd.f32 %v1626, %v1627
    %v1629 = vmul.f32 %v1628, %v1613
    %v1630 = vadd.f32 %v1629, 1e-05
    %v1631 = vrsqrt.pop %v1630
    %v1632 = vmul.f32 %v1631, %v1630
    %v1633 = vmul.f32 %v1632, %v1631
    %v1634 = vmul.f32 0.5, %v1633
    %v1635 = vsub.f32 1.5, %v1634
    %v1636 = vmul.f32 %v1631, %v1635
    %vm1637 = vweird.f32 %v1630
    %vm1638 = vweird.f32 %v1631
    %vm1639 = vmor %vm1637, %vm1638
    %v1640 = vsel %vm1639, %v1631, %v1636
    %v1641 = vmul.f32 %v1615, %v1640
    %v1642 = vmul.f32 %v1616, %v1640
    %v1643 = vmul.f32 %v1617, %v1640
    %s1644 = scalar_lea.vmem [#allocation8], 1
    %v1645 = vld [vmem:[%s1644] sm:$0x1]
    %v1647 = vperm.slane %v1645, 0
    %v1649 = vmul.f32 %v1641, %v1647
    %v1650 = vmul.f32 %v1642, %v1647
    %v1651 = vmul.f32 %v1643, %v1647
    %s1652 = scalar_lea.vmem [#allocation10], 1
    %v1653 = vld [vmem:[%s1652] sm:$0x1]
    %v1655 = vperm.slane %v1653, 0
    %v1657 = vadd.f32 %v1649, %v1655
    %v1658 = vadd.f32 %v1650, %v1655
    %v1659 = vadd.f32 %v1651, %v1655
    %1660 = vmatpush.msra.mxu0 %v339
    %1661 = vmatpush.msra.mxu0 %v338
    %1662 = vmatpush.msra.mxu0 %v337
    %1663 = vmatpush.msra.mxu0 %v336
    %1664 = vmatpush.msra.mxu0 %v335
    %1665 = vmatpush.msra.mxu0 %v334
    %1666 = vmatpush.msra.mxu0 %v333
    %1667 = vmatpush.msra.mxu0 %v332
    %1668 = vmatpush.msra.mxu0 %v331
    %1669 = vmatpush.msra.mxu0 %v330
    %1670 = vmatpush.msra.mxu0 %v329
    %1671 = vmatpush.msra.mxu0 %v328
    %1672 = vmatpush.msra.mxu0 %v327
    %1673 = vmatpush.msra.mxu0 %v326
    %1674 = vmatpush.msra.mxu0 %v325
    %1675 = vmatpush.msra.mxu0 %v324
    %1676 = vmatmul.f32.gmra.mxu0 %v1596
    %v1677 = vpop.f32.mrf.mxu0
    %v1678 = vadd.f32 0.0, %v1677
    %1679 = vmatmul.f32.gmra.mxu0 %v1597
    %v1680 = vpop.f32.mrf.mxu0
    %v1681 = vadd.f32 0.0, %v1680
    %1682 = vmatmul.f32.gmra.mxu0 %v1598
    %v1683 = vpop.f32.mrf.mxu0
    %v1684 = vadd.f32 0.0, %v1683
    %1685 = vdwg.mxu0
    %v1686 = vsub.f32 %v1596, %v1678
    %v1687 = vsub.f32 %v1597, %v1681
    %v1688 = vsub.f32 %v1598, %v1684
    %v1689 = vmul.f32 %v1686, %v1686
    %v1690 = vmul.f32 %v1687, %v1687
    %v1691 = vmul.f32 %v1688, %v1688
    %1692 = vmatpush.msra.mxu0 %v339
    %1693 = vmatpush.msra.mxu0 %v338
    %1694 = vmatpush.msra.mxu0 %v337
    %1695 = vmatpush.msra.mxu0 %v336
    %1696 = vmatpush.msra.mxu0 %v335
    %1697 = vmatpush.msra.mxu0 %v334
    %1698 = vmatpush.msra.mxu0 %v333
    %1699 = vmatpush.msra.mxu0 %v332
    %1700 = vmatpush.msra.mxu0 %v331
    %1701 = vmatpush.msra.mxu0 %v330
    %1702 = vmatpush.msra.mxu0 %v329
    %1703 = vmatpush.msra.mxu0 %v328
    %1704 = vmatpush.msra.mxu0 %v327
    %1705 = vmatpush.msra.mxu0 %v326
    %1706 = vmatpush.msra.mxu0 %v325
    %1707 = vmatpush.msra.mxu0 %v324
    %1708 = vmatmul.f32.gmra.mxu0 %v1689
    %v1709 = vpop.f32.mrf.mxu0
    %v1710 = vadd.f32 0.0, %v1709
    %1711 = vmatmul.f32.gmra.mxu0 %v1690
    %v1712 = vpop.f32.mrf.mxu0
    %v1713 = vadd.f32 0.0, %v1712
    %1714 = vmatmul.f32.gmra.mxu0 %v1691
    %v1715 = vpop.f32.mrf.mxu0
    %v1716 = vadd.f32 0.0, %v1715
    %1717 = vdwg.mxu0
    %v1718 = vmul.f32 %v1710, 1.1428572
    %v1719 = vmul.f32 %v1713, 1.1428572
    %v1720 = vmul.f32 %v1716, 1.1428572
    %v1721 = vadd.f32 %v1718, 1e-05
    %v1722 = vadd.f32 %v1719, 1e-05
    %v1723 = vadd.f32 %v1720, 1e-05
    %v1724 = vrsqrt.pop %v1721
    %v1725 = vmul.f32 %v1724, %v1721
    %v1726 = vmul.f32 %v1725, %v1724
    %v1727 = vmul.f32 0.5, %v1726
    %v1728 = vsub.f32 1.5, %v1727
    %v1729 = vmul.f32 %v1724, %v1728
    %vm1730 = vweird.f32 %v1721
    %vm1731 = vweird.f32 %v1724
    %vm1732 = vmor %vm1730, %vm1731
    %v1733 = vsel %vm1732, %v1724, %v1729
    %v1734 = vrsqrt.pop %v1722
    %v1735 = vmul.f32 %v1734, %v1722
    %v1736 = vmul.f32 %v1735, %v1734
    %v1737 = vmul.f32 0.5, %v1736
    %v1738 = vsub.f32 1.5, %v1737
    %v1739 = vmul.f32 %v1734, %v1738
    %vm1740 = vweird.f32 %v1722
    %vm1741 = vweird.f32 %v1734
    %vm1742 = vmor %vm1740, %vm1741
    %v1743 = vsel %vm1742, %v1734, %v1739
    %v1744 = vrsqrt.pop %v1723
    %v1745 = vmul.f32 %v1744, %v1723
    %v1746 = vmul.f32 %v1745, %v1744
    %v1747 = vmul.f32 0.5, %v1746
    %v1748 = vsub.f32 1.5, %v1747
    %v1749 = vmul.f32 %v1744, %v1748
    %vm1750 = vweird.f32 %v1723
    %vm1751 = vweird.f32 %v1744
    %vm1752 = vmor %vm1750, %vm1751
    %v1753 = vsel %vm1752, %v1744, %v1749
    %v1754 = vmul.f32 %v1686, %v1733
    %v1755 = vmul.f32 %v1687, %v1743
    %v1756 = vmul.f32 %v1688, %v1753
    %s1757 = scalar_lea.vmem [#allocation11], 1
    %v1758 = vld [vmem:[%s1757] sm:$0x1]
    %v1760 = vperm.slane %v1758, 0
    %v1762 = vmul.f32 %v1754, %v1760
    %v1763 = vmul.f32 %v1755, %v1760
    %v1764 = vmul.f32 %v1756, %v1760
    %s1765 = scalar_lea.vmem [#allocation13], 1
    %v1766 = vld [vmem:[%s1765] sm:$0x1]
    %v1768 = vperm.slane %v1766, 0
    %v1770 = vadd.f32 %v1762, %v1768
    %v1771 = vadd.f32 %v1763, %v1768
    %v1772 = vadd.f32 %v1764, %v1768
    %s1773 = scalar_lea.vmem [#allocation14], 384
    %v1774 = vld [vmem:[%s1773] sm:$0xff]
    %v1775 = vld [vmem:[%s1773 + $0x8] sm:$0xff]
    %v1776 = vld [vmem:[%s1773 + $0x10] sm:$0xff]
    %v1777 = vld [vmem:[%s1773 + $0x18] sm:$0xff]
    %v1778 = vld [vmem:[%s1773 + $0x20] sm:$0xff]
    %v1779 = vld [vmem:[%s1773 + $0x28] sm:$0xff]
    %v1780 = vld [vmem:[%s1773 + $0x30] sm:$0xff]
    %v1781 = vld [vmem:[%s1773 + $0x38] sm:$0xff]
    %v1782 = vld [vmem:[%s1773 + $0x40] sm:$0xff]
    %v1783 = vld [vmem:[%s1773 + $0x48] sm:$0xff]
    %v1784 = vld [vmem:[%s1773 + $0x50] sm:$0xff]
    %v1785 = vld [vmem:[%s1773 + $0x58] sm:$0xff]
    %v1786 = vld [vmem:[%s1773 + $0x60] sm:$0xff]
    %v1787 = vld [vmem:[%s1773 + $0x68] sm:$0xff]
    %v1788 = vld [vmem:[%s1773 + $0x70] sm:$0xff]
    %v1789 = vld [vmem:[%s1773 + $0x78] sm:$0xff]
    %v1790 = vld [vmem:[%s1773 + $0x80] sm:$0xff]
    %v1791 = vld [vmem:[%s1773 + $0x88] sm:$0xff]
    %v1792 = vld [vmem:[%s1773 + $0x90] sm:$0xff]
    %v1793 = vld [vmem:[%s1773 + $0x98] sm:$0xff]
    %v1794 = vld [vmem:[%s1773 + $0xa0] sm:$0xff]
    %v1795 = vld [vmem:[%s1773 + $0xa8] sm:$0xff]
    %v1796 = vld [vmem:[%s1773 + $0xb0] sm:$0xff]
    %v1797 = vld [vmem:[%s1773 + $0xb8] sm:$0xff]
    %v1798 = vld [vmem:[%s1773 + $0xc0] sm:$0xff]
    %v1799 = vld [vmem:[%s1773 + $0xc8] sm:$0xff]
    %v1800 = vld [vmem:[%s1773 + $0xd0] sm:$0xff]
    %v1801 = vld [vmem:[%s1773 + $0xd8] sm:$0xff]
    %v1802 = vld [vmem:[%s1773 + $0xe0] sm:$0xff]
    %v1803 = vld [vmem:[%s1773 + $0xe8] sm:$0xff]
    %v1804 = vld [vmem:[%s1773 + $0xf0] sm:$0xff]
    %v1805 = vld [vmem:[%s1773 + $0xf8] sm:$0xff]
    %v1806 = vld [vmem:[%s1773 + $0x100] sm:$0xff]
    %v1807 = vld [vmem:[%s1773 + $0x108] sm:$0xff]
    %v1808 = vld [vmem:[%s1773 + $0x110] sm:$0xff]
    %v1809 = vld [vmem:[%s1773 + $0x118] sm:$0xff]
    %v1810 = vld [vmem:[%s1773 + $0x120] sm:$0xff]
    %v1811 = vld [vmem:[%s1773 + $0x128] sm:$0xff]
    %v1812 = vld [vmem:[%s1773 + $0x130] sm:$0xff]
    %v1813 = vld [vmem:[%s1773 + $0x138] sm:$0xff]
    %v1814 = vld [vmem:[%s1773 + $0x140] sm:$0xff]
    %v1815 = vld [vmem:[%s1773 + $0x148] sm:$0xff]
    %v1816 = vld [vmem:[%s1773 + $0x150] sm:$0xff]
    %v1817 = vld [vmem:[%s1773 + $0x158] sm:$0xff]
    %v1818 = vld [vmem:[%s1773 + $0x160] sm:$0xff]
    %v1819 = vld [vmem:[%s1773 + $0x168] sm:$0xff]
    %v1820 = vld [vmem:[%s1773 + $0x170] sm:$0xff]
    %v1821 = vld [vmem:[%s1773 + $0x178] sm:$0xff]
    %v1822 = vpack.c.bf16 %v1597, %v1596
    %v1823 = vpack.c.bf16 %v1658, %v1657
    %v1824 = vpack.c.bf16 %v1771, %v1770
    %v1825 = vpack.c.bf16 %v1598, %v1598
    %v1826 = vpack.c.bf16 %v1659, %v1659
    %v1827 = vpack.c.bf16 %v1772, %v1772
    %s1828 = scalar_lea.vmem [#allocation16], 384
    %v1829 = vld [vmem:[%s1828] sm:$0xff]
    %v1830 = vld [vmem:[%s1828 + $0x8] sm:$0xff]
    %v1831 = vld [vmem:[%s1828 + $0x10] sm:$0xff]
    %v1832 = vld [vmem:[%s1828 + $0x18] sm:$0xff]
    %v1833 = vld [vmem:[%s1828 + $0x20] sm:$0xff]
    %v1834 = vld [vmem:[%s1828 + $0x28] sm:$0xff]
    %v1835 = vld [vmem:[%s1828 + $0x30] sm:$0xff]
    %v1836 = vld [vmem:[%s1828 + $0x38] sm:$0xff]
    %v1837 = vld [vmem:[%s1828 + $0x40] sm:$0xff]
    %v1838 = vld [vmem:[%s1828 + $0x48] sm:$0xff]
    %v1839 = vld [vmem:[%s1828 + $0x50] sm:$0xff]
    %v1840 = vld [vmem:[%s1828 + $0x58] sm:$0xff]
    %v1841 = vld [vmem:[%s1828 + $0x60] sm:$0xff]
    %v1842 = vld [vmem:[%s1828 + $0x68] sm:$0xff]
    %v1843 = vld [vmem:[%s1828 + $0x70] sm:$0xff]
    %v1844 = vld [vmem:[%s1828 + $0x78] sm:$0xff]
    %v1845 = vld [vmem:[%s1828 + $0x80] sm:$0xff]
    %v1846 = vld [vmem:[%s1828 + $0x88] sm:$0xff]
    %v1847 = vld [vmem:[%s1828 + $0x90] sm:$0xff]
    %v1848 = vld [vmem:[%s1828 + $0x98] sm:$0xff]
    %v1849 = vld [vmem:[%s1828 + $0xa0] sm:$0xff]
    %v1850 = vld [vmem:[%s1828 + $0xa8] sm:$0xff]
    %v1851 = vld [vmem:[%s1828 + $0xb0] sm:$0xff]
    %v1852 = vld [vmem:[%s1828 + $0xb8] sm:$0xff]
    %v1853 = vld [vmem:[%s1828 + $0xc0] sm:$0xff]
    %v1854 = vld [vmem:[%s1828 + $0xc8] sm:$0xff]
    %v1855 = vld [vmem:[%s1828 + $0xd0] sm:$0xff]
    %v1856 = vld [vmem:[%s1828 + $0xd8] sm:$0xff]
    %v1857 = vld [vmem:[%s1828 + $0xe0] sm:$0xff]
    %v1858 = vld [vmem:[%s1828 + $0xe8] sm:$0xff]
    %v1859 = vld [vmem:[%s1828 + $0xf0] sm:$0xff]
    %v1860 = vld [vmem:[%s1828 + $0xf8] sm:$0xff]
    %v1861 = vld [vmem:[%s1828 + $0x100] sm:$0xff]
    %v1862 = vld [vmem:[%s1828 + $0x108] sm:$0xff]
    %v1863 = vld [vmem:[%s1828 + $0x110] sm:$0xff]
    %v1864 = vld [vmem:[%s1828 + $0x118] sm:$0xff]
    %v1865 = vld [vmem:[%s1828 + $0x120] sm:$0xff]
    %v1866 = vld [vmem:[%s1828 + $0x128] sm:$0xff]
    %v1867 = vld [vmem:[%s1828 + $0x130] sm:$0xff]
    %v1868 = vld [vmem:[%s1828 + $0x138] sm:$0xff]
    %v1869 = vld [vmem:[%s1828 + $0x140] sm:$0xff]
    %v1870 = vld [vmem:[%s1828 + $0x148] sm:$0xff]
    %v1871 = vld [vmem:[%s1828 + $0x150] sm:$0xff]
    %v1872 = vld [vmem:[%s1828 + $0x158] sm:$0xff]
    %v1873 = vld [vmem:[%s1828 + $0x160] sm:$0xff]
    %v1874 = vld [vmem:[%s1828 + $0x168] sm:$0xff]
    %v1875 = vld [vmem:[%s1828 + $0x170] sm:$0xff]
    %v1876 = vld [vmem:[%s1828 + $0x178] sm:$0xff]
    %vm1883 = vcmask 1045504
    %v1884 = vrot.slane %v1822, 2
    %v1885 = vrot.slane %v1825, 2
    %v1886 = vsel %vm1883, %v1884, %v1885
    %v1887 = vrot.slane %v1823, 2
    %v1888 = vrot.slane %v1826, 2
    %v1889 = vsel %vm1883, %v1887, %v1888
    %v1890 = vrot.slane %v1824, 2
    %v1891 = vrot.slane %v1827, 2
    %v1892 = vsel %vm1883, %v1890, %v1891
    %v1947 = vunpack.c.l.b16 %v1829
    %v1948 = vunpack.c.h.b16 %v1829
    %v1949 = vunpack.c.l.b16 %v1830
    %v1950 = vunpack.c.h.b16 %v1830
    %v1951 = vunpack.c.l.b16 %v1831
    %v1952 = vunpack.c.h.b16 %v1831
    %v1953 = vunpack.c.l.b16 %v1832
    %v1954 = vunpack.c.h.b16 %v1832
    %v1955 = vunpack.c.l.b16 %v1833
    %v1956 = vunpack.c.h.b16 %v1833
    %v1957 = vunpack.c.l.b16 %v1834
    %v1958 = vunpack.c.h.b16 %v1834
    %v1959 = vunpack.c.l.b16 %v1835
    %v1960 = vunpack.c.h.b16 %v1835
    %v1961 = vunpack.c.l.b16 %v1836
    %v1962 = vunpack.c.h.b16 %v1836
    %v1963 = vunpack.c.l.b16 %v1837
    %v1964 = vunpack.c.h.b16 %v1837
    %v1965 = vunpack.c.l.b16 %v1838
    %v1966 = vunpack.c.h.b16 %v1838
    %v1967 = vunpack.c.l.b16 %v1839
    %v1968 = vunpack.c.h.b16 %v1839
    %v1969 = vunpack.c.l.b16 %v1840
    %v1970 = vunpack.c.h.b16 %v1840
    %v1971 = vunpack.c.l.b16 %v1841
    %v1972 = vunpack.c.h.b16 %v1841
    %v1973 = vunpack.c.l.b16 %v1842
    %v1974 = vunpack.c.h.b16 %v1842
    %v1975 = vunpack.c.l.b16 %v1843
    %v1976 = vunpack.c.h.b16 %v1843
    %v1977 = vunpack.c.l.b16 %v1844
    %v1978 = vunpack.c.h.b16 %v1844
    %v1979 = vunpack.c.l.b16 %v1845
    %v1980 = vunpack.c.h.b16 %v1845
    %v1981 = vunpack.c.l.b16 %v1846
    %v1982 = vunpack.c.h.b16 %v1846
    %v1983 = vunpack.c.l.b16 %v1847
    %v1984 = vunpack.c.h.b16 %v1847
    %v1985 = vunpack.c.l.b16 %v1848
    %v1986 = vunpack.c.h.b16 %v1848
    %v1987 = vunpack.c.l.b16 %v1849
    %v1988 = vunpack.c.h.b16 %v1849
    %v1989 = vunpack.c.l.b16 %v1850
    %v1990 = vunpack.c.h.b16 %v1850
    %v1991 = vunpack.c.l.b16 %v1851
    %v1992 = vunpack.c.h.b16 %v1851
    %v1993 = vunpack.c.l.b16 %v1852
    %v1994 = vunpack.c.h.b16 %v1852
    %v1995 = vunpack.c.l.b16 %v1853
    %v1996 = vunpack.c.h.b16 %v1853
    %v1997 = vunpack.c.l.b16 %v1854
    %v1998 = vunpack.c.h.b16 %v1854
    %v1999 = vunpack.c.l.b16 %v1855
    %v2000 = vunpack.c.h.b16 %v1855
    %v2001 = vunpack.c.l.b16 %v1856
    %v2002 = vunpack.c.h.b16 %v1856
    %v2003 = vunpack.c.l.b16 %v1857
    %v2004 = vunpack.c.h.b16 %v1857
    %v2005 = vunpack.c.l.b16 %v1858
    %v2006 = vunpack.c.h.b16 %v1858
    %v2007 = vunpack.c.l.b16 %v1859
    %v2008 = vunpack.c.h.b16 %v1859
    %v2009 = vunpack.c.l.b16 %v1860
    %v2010 = vunpack.c.h.b16 %v1860
    %v2011 = vunpack.c.l.b16 %v1861
    %v2012 = vunpack.c.h.b16 %v1861
    %v2013 = vunpack.c.l.b16 %v1862
    %v2014 = vunpack.c.h.b16 %v1862
    %v2015 = vunpack.c.l.b16 %v1863
    %v2016 = vunpack.c.h.b16 %v1863
    %v2017 = vunpack.c.l.b16 %v1864
    %v2018 = vunpack.c.h.b16 %v1864
    %v2019 = vunpack.c.l.b16 %v1865
    %v2020 = vunpack.c.h.b16 %v1865
    %v2021 = vunpack.c.l.b16 %v1866
    %v2022 = vunpack.c.h.b16 %v1866
    %v2023 = vunpack.c.l.b16 %v1867
    %v2024 = vunpack.c.h.b16 %v1867
    %v2025 = vunpack.c.l.b16 %v1868
    %v2026 = vunpack.c.h.b16 %v1868
    %v2027 = vunpack.c.l.b16 %v1869
    %v2028 = vunpack.c.h.b16 %v1869
    %v2029 = vunpack.c.l.b16 %v1870
    %v2030 = vunpack.c.h.b16 %v1870
    %v2031 = vunpack.c.l.b16 %v1871
    %v2032 = vunpack.c.h.b16 %v1871
    %v2033 = vunpack.c.l.b16 %v1872
    %v2034 = vunpack.c.h.b16 %v1872
    %v2035 = vunpack.c.l.b16 %v1873
    %v2036 = vunpack.c.h.b16 %v1873
    %v2037 = vunpack.c.l.b16 %v1874
    %v2038 = vunpack.c.h.b16 %v1874
    %v2039 = vunpack.c.l.b16 %v1875
    %v2040 = vunpack.c.h.b16 %v1875
    %v2041 = vunpack.c.l.b16 %v1876
    %v2042 = vunpack.c.h.b16 %v1876
    %v2043 = vpack.c.b16 %v1949, %v1947
    %v2044 = vpack.c.b16 %v1950, %v1948
    %v2045 = vpack.c.b16 %v1953, %v1951
    %v2046 = vpack.c.b16 %v1954, %v1952
    %v2047 = vpack.c.b16 %v1957, %v1955
    %v2048 = vpack.c.b16 %v1958, %v1956
    %v2049 = vpack.c.b16 %v1961, %v1959
    %v2050 = vpack.c.b16 %v1962, %v1960
    %v2051 = vpack.c.b16 %v1965, %v1963
    %v2052 = vpack.c.b16 %v1966, %v1964
    %v2053 = vpack.c.b16 %v1969, %v1967
    %v2054 = vpack.c.b16 %v1970, %v1968
    %v2055 = vpack.c.b16 %v1973, %v1971
    %v2056 = vpack.c.b16 %v1974, %v1972
    %v2057 = vpack.c.b16 %v1977, %v1975
    %v2058 = vpack.c.b16 %v1978, %v1976
    %v2059 = vpack.c.b16 %v1981, %v1979
    %v2060 = vpack.c.b16 %v1982, %v1980
    %v2061 = vpack.c.b16 %v1985, %v1983
    %v2062 = vpack.c.b16 %v1986, %v1984
    %v2063 = vpack.c.b16 %v1989, %v1987
    %v2064 = vpack.c.b16 %v1990, %v1988
    %v2065 = vpack.c.b16 %v1993, %v1991
    %v2066 = vpack.c.b16 %v1994, %v1992
    %v2067 = vpack.c.b16 %v1997, %v1995
    %v2068 = vpack.c.b16 %v1998, %v1996
    %v2069 = vpack.c.b16 %v2001, %v1999
    %v2070 = vpack.c.b16 %v2002, %v2000
    %v2071 = vpack.c.b16 %v2005, %v2003
    %v2072 = vpack.c.b16 %v2006, %v2004
    %v2073 = vpack.c.b16 %v2009, %v2007
    %v2074 = vpack.c.b16 %v2010, %v2008
    %v2075 = vpack.c.b16 %v2013, %v2011
    %v2076 = vpack.c.b16 %v2014, %v2012
    %v2077 = vpack.c.b16 %v2017, %v2015
    %v2078 = vpack.c.b16 %v2018, %v2016
    %v2079 = vpack.c.b16 %v2021, %v2019
    %v2080 = vpack.c.b16 %v2022, %v2020
    %v2081 = vpack.c.b16 %v2025, %v2023
    %v2082 = vpack.c.b16 %v2026, %v2024
    %v2083 = vpack.c.b16 %v2029, %v2027
    %v2084 = vpack.c.b16 %v2030, %v2028
    %v2085 = vpack.c.b16 %v2033, %v2031
    %v2086 = vpack.c.b16 %v2034, %v2032
    %v2087 = vpack.c.b16 %v2037, %v2035
    %v2088 = vpack.c.b16 %v2038, %v2036
    %v2089 = vpack.c.b16 %v2041, %v2039
    %v2090 = vpack.c.b16 %v2042, %v2040
    %2139 = vmatpush.bf16.msra.mxu0 %v2057
    %2140 = vmatpush.bf16.msra.mxu0 %v2055
    %2141 = vmatpush.bf16.msra.mxu0 %v2053
    %2142 = vmatpush.bf16.msra.mxu0 %v2051
    %2143 = vmatpush.bf16.msra.mxu0 %v2049
    %2144 = vmatpush.bf16.msra.mxu0 %v2047
    %2145 = vmatpush.bf16.msra.mxu0 %v2045
    %2146 = vmatpush.bf16.msra.mxu0 %v2043
    %2147 = vmatmul.bf16.gmra.mxu0 %v1886
    %v2148 = vpop.f32.mrf.mxu0
    %v2149 = vadd.f32 0.0, %v2148
    %v2150 = vpop.f32.mrf.mxu0
    %v2151 = vadd.f32 0.0, %v2150
    %2152 = vmatmul.bf16.gmra.mxu0 %v1885
    %v2153 = vpop.f32.mrf.mxu0
    %v2154 = vadd.f32 0.0, %v2153
    %v2155 = vpop.f32.mrf.mxu0
    %2156 = vdwg.mxu0
    %2157 = vmatpush.bf16.msra.mxu0 %v2073
    %2158 = vmatpush.bf16.msra.mxu0 %v2071
    %2159 = vmatpush.bf16.msra.mxu0 %v2069
    %2160 = vmatpush.bf16.msra.mxu0 %v2067
    %2161 = vmatpush.bf16.msra.mxu0 %v2065
    %2162 = vmatpush.bf16.msra.mxu0 %v2063
    %2163 = vmatpush.bf16.msra.mxu0 %v2061
    %2164 = vmatpush.bf16.msra.mxu0 %v2059
    %2165 = vmatmul.bf16.gmra.mxu0 %v1889
    %v2166 = vpop.f32.mrf.mxu0
    %v2167 = vadd.f32 %v2149, %v2166
    %v2168 = vpop.f32.mrf.mxu0
    %v2169 = vadd.f32 %v2151, %v2168
    %2170 = vmatmul.bf16.gmra.mxu0 %v1888
    %v2171 = vpop.f32.mrf.mxu0
    %v2172 = vadd.f32 %v2154, %v2171
    %v2173 = vpop.f32.mrf.mxu0
    %2174 = vdwg.mxu0
    %2175 = vmatpush.bf16.msra.mxu0 %v2089
    %2176 = vmatpush.bf16.msra.mxu0 %v2087
    %2177 = vmatpush.bf16.msra.mxu0 %v2085
    %2178 = vmatpush.bf16.msra.mxu0 %v2083
    %2179 = vmatpush.bf16.msra.mxu0 %v2081
    %2180 = vmatpush.bf16.msra.mxu0 %v2079
    %2181 = vmatpush.bf16.msra.mxu0 %v2077
    %2182 = vmatpush.bf16.msra.mxu0 %v2075
    %2183 = vmatmul.bf16.gmra.mxu0 %v1892
    %v2184 = vpop.f32.mrf.mxu0
    %v2185 = vadd.f32 %v2167, %v2184
    %v2186 = vpop.f32.mrf.mxu0
    %v2187 = vadd.f32 %v2169, %v2186
    %2188 = vmatmul.bf16.gmra.mxu0 %v1891
    %v2189 = vpop.f32.mrf.mxu0
    %v2190 = vadd.f32 %v2172, %v2189
    %v2191 = vpop.f32.mrf.mxu0
    %2192 = vdwg.mxu0
    %2193 = vmatpush.bf16.msra.mxu0 %v2058
    %2194 = vmatpush.bf16.msra.mxu0 %v2056
    %2195 = vmatpush.bf16.msra.mxu0 %v2054
    %2196 = vmatpush.bf16.msra.mxu0 %v2052
    %2197 = vmatpush.bf16.msra.mxu0 %v2050
    %2198 = vmatpush.bf16.msra.mxu0 %v2048
    %2199 = vmatpush.bf16.msra.mxu0 %v2046
    %2200 = vmatpush.bf16.msra.mxu0 %v2044
    %2201 = vmatmul.bf16.gmra.mxu0 %v1886
    %v2202 = vpop.f32.mrf.mxu0
    %v2203 = vadd.f32 0.0, %v2202
    %v2204 = vpop.f32.mrf.mxu0
    %v2205 = vadd.f32 0.0, %v2204
    %2206 = vmatmul.bf16.gmra.mxu0 %v1885
    %v2207 = vpop.f32.mrf.mxu0
    %v2208 = vadd.f32 0.0, %v2207
    %v2209 = vpop.f32.mrf.mxu0
    %2210 = vdwg.mxu0
    %2211 = vmatpush.bf16.msra.mxu0 %v2074
    %2212 = vmatpush.bf16.msra.mxu0 %v2072
    %2213 = vmatpush.bf16.msra.mxu0 %v2070
    %2214 = vmatpush.bf16.msra.mxu0 %v2068
    %2215 = vmatpush.bf16.msra.mxu0 %v2066
    %2216 = vmatpush.bf16.msra.mxu0 %v2064
    %2217 = vmatpush.bf16.msra.mxu0 %v2062
    %2218 = vmatpush.bf16.msra.mxu0 %v2060
    %2219 = vmatmul.bf16.gmra.mxu0 %v1889
    %v2220 = vpop.f32.mrf.mxu0
    %v2221 = vadd.f32 %v2203, %v2220
    %v2222 = vpop.f32.mrf.mxu0
    %v2223 = vadd.f32 %v2205, %v2222
    %2224 = vmatmul.bf16.gmra.mxu0 %v1888
    %v2225 = vpop.f32.mrf.mxu0
    %v2226 = vadd.f32 %v2208, %v2225
    %v2227 = vpop.f32.mrf.mxu0
    %2228 = vdwg.mxu0
    %2229 = vmatpush.bf16.msra.mxu0 %v2090
    %2230 = vmatpush.bf16.msra.mxu0 %v2088
    %2231 = vmatpush.bf16.msra.mxu0 %v2086
    %2232 = vmatpush.bf16.msra.mxu0 %v2084
    %2233 = vmatpush.bf16.msra.mxu0 %v2082
    %2234 = vmatpush.bf16.msra.mxu0 %v2080
    %2235 = vmatpush.bf16.msra.mxu0 %v2078
    %2236 = vmatpush.bf16.msra.mxu0 %v2076
    %2237 = vmatmul.bf16.gmra.mxu0 %v1892
    %v2238 = vpop.f32.mrf.mxu0
    %v2239 = vadd.f32 %v2221, %v2238
    %v2240 = vpop.f32.mrf.mxu0
    %v2241 = vadd.f32 %v2223, %v2240
    %2242 = vmatmul.bf16.gmra.mxu0 %v1891
    %v2243 = vpop.f32.mrf.mxu0
    %v2244 = vadd.f32 %v2226, %v2243
    %v2245 = vpop.f32.mrf.mxu0
    %2246 = vdwg.mxu0
    %v2295 = vunpack.c.l.b16 %v1774
    %v2296 = vunpack.c.h.b16 %v1774
    %v2297 = vunpack.c.l.b16 %v1775
    %v2298 = vunpack.c.h.b16 %v1775
    %v2299 = vunpack.c.l.b16 %v1776
    %v2300 = vunpack.c.h.b16 %v1776
    %v2301 = vunpack.c.l.b16 %v1777
    %v2302 = vunpack.c.h.b16 %v1777
    %v2303 = vunpack.c.l.b16 %v1778
    %v2304 = vunpack.c.h.b16 %v1778
    %v2305 = vunpack.c.l.b16 %v1779
    %v2306 = vunpack.c.h.b16 %v1779
    %v2307 = vunpack.c.l.b16 %v1780
    %v2308 = vunpack.c.h.b16 %v1780
    %v2309 = vunpack.c.l.b16 %v1781
    %v2310 = vunpack.c.h.b16 %v1781
    %v2311 = vunpack.c.l.b16 %v1782
    %v2312 = vunpack.c.h.b16 %v1782
    %v2313 = vunpack.c.l.b16 %v1783
    %v2314 = vunpack.c.h.b16 %v1783
    %v2315 = vunpack.c.l.b16 %v1784
    %v2316 = vunpack.c.h.b16 %v1784
    %v2317 = vunpack.c.l.b16 %v1785
    %v2318 = vunpack.c.h.b16 %v1785
    %v2319 = vunpack.c.l.b16 %v1786
    %v2320 = vunpack.c.h.b16 %v1786
    %v2321 = vunpack.c.l.b16 %v1787
    %v2322 = vunpack.c.h.b16 %v1787
    %v2323 = vunpack.c.l.b16 %v1788
    %v2324 = vunpack.c.h.b16 %v1788
    %v2325 = vunpack.c.l.b16 %v1789
    %v2326 = vunpack.c.h.b16 %v1789
    %v2327 = vunpack.c.l.b16 %v1790
    %v2328 = vunpack.c.h.b16 %v1790
    %v2329 = vunpack.c.l.b16 %v1791
    %v2330 = vunpack.c.h.b16 %v1791
    %v2331 = vunpack.c.l.b16 %v1792
    %v2332 = vunpack.c.h.b16 %v1792
    %v2333 = vunpack.c.l.b16 %v1793
    %v2334 = vunpack.c.h.b16 %v1793
    %v2335 = vunpack.c.l.b16 %v1794
    %v2336 = vunpack.c.h.b16 %v1794
    %v2337 = vunpack.c.l.b16 %v1795
    %v2338 = vunpack.c.h.b16 %v1795
    %v2339 = vunpack.c.l.b16 %v1796
    %v2340 = vunpack.c.h.b16 %v1796
    %v2341 = vunpack.c.l.b16 %v1797
    %v2342 = vunpack.c.h.b16 %v1797
    %v2343 = vunpack.c.l.b16 %v1798
    %v2344 = vunpack.c.h.b16 %v1798
    %v2345 = vunpack.c.l.b16 %v1799
    %v2346 = vunpack.c.h.b16 %v1799
    %v2347 = vunpack.c.l.b16 %v1800
    %v2348 = vunpack.c.h.b16 %v1800
    %v2349 = vunpack.c.l.b16 %v1801
    %v2350 = vunpack.c.h.b16 %v1801
    %v2351 = vunpack.c.l.b16 %v1802
    %v2352 = vunpack.c.h.b16 %v1802
    %v2353 = vunpack.c.l.b16 %v1803
    %v2354 = vunpack.c.h.b16 %v1803
    %v2355 = vunpack.c.l.b16 %v1804
    %v2356 = vunpack.c.h.b16 %v1804
    %v2357 = vunpack.c.l.b16 %v1805
    %v2358 = vunpack.c.h.b16 %v1805
    %v2359 = vunpack.c.l.b16 %v1806
    %v2360 = vunpack.c.h.b16 %v1806
    %v2361 = vunpack.c.l.b16 %v1807
    %v2362 = vunpack.c.h.b16 %v1807
    %v2363 = vunpack.c.l.b16 %v1808
    %v2364 = vunpack.c.h.b16 %v1808
    %v2365 = vunpack.c.l.b16 %v1809
    %v2366 = vunpack.c.h.b16 %v1809
    %v2367 = vunpack.c.l.b16 %v1810
    %v2368 = vunpack.c.h.b16 %v1810
    %v2369 = vunpack.c.l.b16 %v1811
    %v2370 = vunpack.c.h.b16 %v1811
    %v2371 = vunpack.c.l.b16 %v1812
    %v2372 = vunpack.c.h.b16 %v1812
    %v2373 = vunpack.c.l.b16 %v1813
    %v2374 = vunpack.c.h.b16 %v1813
    %v2375 = vunpack.c.l.b16 %v1814
    %v2376 = vunpack.c.h.b16 %v1814
    %v2377 = vunpack.c.l.b16 %v1815
    %v2378 = vunpack.c.h.b16 %v1815
    %v2379 = vunpack.c.l.b16 %v1816
    %v2380 = vunpack.c.h.b16 %v1816
    %v2381 = vunpack.c.l.b16 %v1817
    %v2382 = vunpack.c.h.b16 %v1817
    %v2383 = vunpack.c.l.b16 %v1818
    %v2384 = vunpack.c.h.b16 %v1818
    %v2385 = vunpack.c.l.b16 %v1819
    %v2386 = vunpack.c.h.b16 %v1819
    %v2387 = vunpack.c.l.b16 %v1820
    %v2388 = vunpack.c.h.b16 %v1820
    %v2389 = vunpack.c.l.b16 %v1821
    %v2390 = vunpack.c.h.b16 %v1821
    %v2391 = vpack.c.b16 %v2297, %v2295
    %v2392 = vpack.c.b16 %v2298, %v2296
    %v2393 = vpack.c.b16 %v2301, %v2299
    %v2394 = vpack.c.b16 %v2302, %v2300
    %v2395 = vpack.c.b16 %v2305, %v2303
    %v2396 = vpack.c.b16 %v2306, %v2304
    %v2397 = vpack.c.b16 %v2309, %v2307
    %v2398 = vpack.c.b16 %v2310, %v2308
    %v2399 = vpack.c.b16 %v2313, %v2311
    %v2400 = vpack.c.b16 %v2314, %v2312
    %v2401 = vpack.c.b16 %v2317, %v2315
    %v2402 = vpack.c.b16 %v2318, %v2316
    %v2403 = vpack.c.b16 %v2321, %v2319
    %v2404 = vpack.c.b16 %v2322, %v2320
    %v2405 = vpack.c.b16 %v2325, %v2323
    %v2406 = vpack.c.b16 %v2326, %v2324
    %v2407 = vpack.c.b16 %v2329, %v2327
    %v2408 = vpack.c.b16 %v2330, %v2328
    %v2409 = vpack.c.b16 %v2333, %v2331
    %v2410 = vpack.c.b16 %v2334, %v2332
    %v2411 = vpack.c.b16 %v2337, %v2335
    %v2412 = vpack.c.b16 %v2338, %v2336
    %v2413 = vpack.c.b16 %v2341, %v2339
    %v2414 = vpack.c.b16 %v2342, %v2340
    %v2415 = vpack.c.b16 %v2345, %v2343
    %v2416 = vpack.c.b16 %v2346, %v2344
    %v2417 = vpack.c.b16 %v2349, %v2347
    %v2418 = vpack.c.b16 %v2350, %v2348
    %v2419 = vpack.c.b16 %v2353, %v2351
    %v2420 = vpack.c.b16 %v2354, %v2352
    %v2421 = vpack.c.b16 %v2357, %v2355
    %v2422 = vpack.c.b16 %v2358, %v2356
    %v2423 = vpack.c.b16 %v2361, %v2359
    %v2424 = vpack.c.b16 %v2362, %v2360
    %v2425 = vpack.c.b16 %v2365, %v2363
    %v2426 = vpack.c.b16 %v2366, %v2364
    %v2427 = vpack.c.b16 %v2369, %v2367
    %v2428 = vpack.c.b16 %v2370, %v2368
    %v2429 = vpack.c.b16 %v2373, %v2371
    %v2430 = vpack.c.b16 %v2374, %v2372
    %v2431 = vpack.c.b16 %v2377, %v2375
    %v2432 = vpack.c.b16 %v2378, %v2376
    %v2433 = vpack.c.b16 %v2381, %v2379
    %v2434 = vpack.c.b16 %v2382, %v2380
    %v2435 = vpack.c.b16 %v2385, %v2383
    %v2436 = vpack.c.b16 %v2386, %v2384
    %v2437 = vpack.c.b16 %v2389, %v2387
    %v2438 = vpack.c.b16 %v2390, %v2388
    %2487 = vmatpush.bf16.msra.mxu0 %v2405
    %2488 = vmatpush.bf16.msra.mxu0 %v2403
    %2489 = vmatpush.bf16.msra.mxu0 %v2401
    %2490 = vmatpush.bf16.msra.mxu0 %v2399
    %2491 = vmatpush.bf16.msra.mxu0 %v2397
    %2492 = vmatpush.bf16.msra.mxu0 %v2395
    %2493 = vmatpush.bf16.msra.mxu0 %v2393
    %2494 = vmatpush.bf16.msra.mxu0 %v2391
    %2495 = vmatmul.bf16.gmra.mxu0 %v1822
    %v2496 = vpop.f32.mrf.mxu0
    %v2497 = vadd.f32 %v2185, %v2496
    %v2498 = vpop.f32.mrf.mxu0
    %v2499 = vadd.f32 %v2187, %v2498
    %2500 = vmatmul.bf16.gmra.mxu0 %v1825
    %v2501 = vpop.f32.mrf.mxu0
    %v2502 = vadd.f32 %v2190, %v2501
    %v2503 = vpop.f32.mrf.mxu0
    %2504 = vdwg.mxu0
    %2505 = vmatpush.bf16.msra.mxu0 %v2421
    %2506 = vmatpush.bf16.msra.mxu0 %v2419
    %2507 = vmatpush.bf16.msra.mxu0 %v2417
    %2508 = vmatpush.bf16.msra.mxu0 %v2415
    %2509 = vmatpush.bf16.msra.mxu0 %v2413
    %2510 = vmatpush.bf16.msra.mxu0 %v2411
    %2511 = vmatpush.bf16.msra.mxu0 %v2409
    %2512 = vmatpush.bf16.msra.mxu0 %v2407
    %2513 = vmatmul.bf16.gmra.mxu0 %v1823
    %v2514 = vpop.f32.mrf.mxu0
    %v2515 = vadd.f32 %v2497, %v2514
    %v2516 = vpop.f32.mrf.mxu0
    %v2517 = vadd.f32 %v2499, %v2516
    %2518 = vmatmul.bf16.gmra.mxu0 %v1826
    %v2519 = vpop.f32.mrf.mxu0
    %v2520 = vadd.f32 %v2502, %v2519
    %v2521 = vpop.f32.mrf.mxu0
    %2522 = vdwg.mxu0
    %2523 = vmatpush.bf16.msra.mxu0 %v2437
    %2524 = vmatpush.bf16.msra.mxu0 %v2435
    %2525 = vmatpush.bf16.msra.mxu0 %v2433
    %2526 = vmatpush.bf16.msra.mxu0 %v2431
    %2527 = vmatpush.bf16.msra.mxu0 %v2429
    %2528 = vmatpush.bf16.msra.mxu0 %v2427
    %2529 = vmatpush.bf16.msra.mxu0 %v2425
    %2530 = vmatpush.bf16.msra.mxu0 %v2423
    %2531 = vmatmul.bf16.gmra.mxu0 %v1824
    %v2532 = vpop.f32.mrf.mxu0
    %v2533 = vadd.f32 %v2515, %v2532
    %v2534 = vpop.f32.mrf.mxu0
    %v2535 = vadd.f32 %v2517, %v2534
    %2536 = vmatmul.bf16.gmra.mxu0 %v1827
    %v2537 = vpop.f32.mrf.mxu0
    %v2538 = vadd.f32 %v2520, %v2537
    %v2539 = vpop.f32.mrf.mxu0
    %2540 = vdwg.mxu0
    %2541 = vmatpush.bf16.msra.mxu0 %v2406
    %2542 = vmatpush.bf16.msra.mxu0 %v2404
    %2543 = vmatpush.bf16.msra.mxu0 %v2402
    %2544 = vmatpush.bf16.msra.mxu0 %v2400
    %2545 = vmatpush.bf16.msra.mxu0 %v2398
    %2546 = vmatpush.bf16.msra.mxu0 %v2396
    %2547 = vmatpush.bf16.msra.mxu0 %v2394
    %2548 = vmatpush.bf16.msra.mxu0 %v2392
    %2549 = vmatmul.bf16.gmra.mxu0 %v1822
    %v2550 = vpop.f32.mrf.mxu0
    %v2551 = vadd.f32 %v2239, %v2550
    %v2552 = vpop.f32.mrf.mxu0
    %v2553 = vadd.f32 %v2241, %v2552
    %2554 = vmatmul.bf16.gmra.mxu0 %v1825
    %v2555 = vpop.f32.mrf.mxu0
    %v2556 = vadd.f32 %v2244, %v2555
    %v2557 = vpop.f32.mrf.mxu0
    %2558 = vdwg.mxu0
    %2559 = vmatpush.bf16.msra.mxu0 %v2422
    %2560 = vmatpush.bf16.msra.mxu0 %v2420
    %2561 = vmatpush.bf16.msra.mxu0 %v2418
    %2562 = vmatpush.bf16.msra.mxu0 %v2416
    %2563 = vmatpush.bf16.msra.mxu0 %v2414
    %2564 = vmatpush.bf16.msra.mxu0 %v2412
    %2565 = vmatpush.bf16.msra.mxu0 %v2410
    %2566 = vmatpush.bf16.msra.mxu0 %v2408
    %2567 = vmatmul.bf16.gmra.mxu0 %v1823
    %v2568 = vpop.f32.mrf.mxu0
    %v2569 = vadd.f32 %v2551, %v2568
    %v2570 = vpop.f32.mrf.mxu0
    %v2571 = vadd.f32 %v2553, %v2570
    %2572 = vmatmul.bf16.gmra.mxu0 %v1826
    %v2573 = vpop.f32.mrf.mxu0
    %v2574 = vadd.f32 %v2556, %v2573
    %v2575 = vpop.f32.mrf.mxu0
    %2576 = vdwg.mxu0
    %2577 = vmatpush.bf16.msra.mxu0 %v2438
    %2578 = vmatpush.bf16.msra.mxu0 %v2436
    %2579 = vmatpush.bf16.msra.mxu0 %v2434
    %2580 = vmatpush.bf16.msra.mxu0 %v2432
    %2581 = vmatpush.bf16.msra.mxu0 %v2430
    %2582 = vmatpush.bf16.msra.mxu0 %v2428
    %2583 = vmatpush.bf16.msra.mxu0 %v2426
    %2584 = vmatpush.bf16.msra.mxu0 %v2424
    %2585 = vmatmul.bf16.gmra.mxu0 %v1824
    %v2586 = vpop.f32.mrf.mxu0
    %v2587 = vadd.f32 %v2569, %v2586
    %v2588 = vpop.f32.mrf.mxu0
    %v2589 = vadd.f32 %v2571, %v2588
    %2590 = vmatmul.bf16.gmra.mxu0 %v1827
    %v2591 = vpop.f32.mrf.mxu0
    %v2592 = vadd.f32 %v2574, %v2591
    %v2593 = vpop.f32.mrf.mxu0
    %2594 = vdwg.mxu0
    %s2595 = scalar_lea.vmem [#allocation17], 2
    %v2596 = vld [vmem:[%s2595] sm:$0x3]
    %v2598 = vperm.slane %v2596, 0
    %v2599 = vperm.slane %v2596, 1
    %v2602 = vadd.f32 %v2533, %v2598
    %v2603 = vadd.f32 %v2587, %v2599
    %v2604 = vadd.f32 %v2535, %v2598
    %v2605 = vadd.f32 %v2589, %v2599
    %v2606 = vadd.f32 %v2538, %v2598
    %v2607 = vadd.f32 %v2592, %v2599
    %v2608 = vtanh.pop %v2602
    %v2609 = vtanh.pop %v2604
    %v2610 = vtanh.pop %v2606
    %v2611 = vxor.u32 %v2603, 2147483648
    %v2612 = vxor.u32 %v2605, 2147483648
    %v2613 = vxor.u32 %v2607, 2147483648
    %v2614 = vmul.f32 %v2611, 1.442695
    %v2615 = vpow.pop %v2614
    %v2616 = vmul.f32 %v2612, 1.442695
    %v2617 = vpow.pop %v2616
    %v2618 = vmul.f32 %v2613, 1.442695
    %v2619 = vpow.pop %v2618
    %v2620 = vadd.f32 %v2615, 1.0
    %v2621 = vadd.f32 %v2617, 1.0
    %v2622 = vadd.f32 %v2619, 1.0
    %v2623 = vrcp.pop %v2620
    %v2624 = vmul.f32 %v2620, %v2623
    %v2625 = vsub.f32 1.0, %v2624
    %v2626 = vmul.f32 %v2623, %v2625
    %v2627 = vadd.f32 %v2623, %v2626
    %vm2628 = vweird.f32 %v2620
    %vm2629 = vweird.f32 %v2623
    %vm2630 = vmor %vm2628, %vm2629
    %v2631 = vsel %vm2630, %v2623, %v2627
    %v2632 = vand.u32 2147483647, %v2620
    %vm2633 = vcmp.eq.f32.partialorder %v2632, 8.507059e+37
    %v2634 = vand.u32 %v2620, 2147483648
    %v2635 = vor.u32 1.1754944e-38, %v2634
    %v2636 = vsel %vm2633, %v2635, %v2631
    %v2637 = vmul.f32 1.0, %v2636
    %v2638 = vrcp.pop %v2621
    %v2639 = vmul.f32 %v2621, %v2638
    %v2640 = vsub.f32 1.0, %v2639
    %v2641 = vmul.f32 %v2638, %v2640
    %v2642 = vadd.f32 %v2638, %v2641
    %vm2643 = vweird.f32 %v2621
    %vm2644 = vweird.f32 %v2638
    %vm2645 = vmor %vm2643, %vm2644
    %v2646 = vsel %vm2645, %v2638, %v2642
    %v2647 = vand.u32 2147483647, %v2621
    %vm2648 = vcmp.eq.f32.partialorder %v2647, 8.507059e+37
    %v2649 = vand.u32 %v2621, 2147483648
    %v2650 = vor.u32 1.1754944e-38, %v2649
    %v2651 = vsel %vm2648, %v2650, %v2646
    %v2652 = vmul.f32 1.0, %v2651
    %v2653 = vrcp.pop %v2622
    %v2654 = vmul.f32 %v2622, %v2653
    %v2655 = vsub.f32 1.0, %v2654
    %v2656 = vmul.f32 %v2653, %v2655
    %v2657 = vadd.f32 %v2653, %v2656
    %vm2658 = vweird.f32 %v2622
    %vm2659 = vweird.f32 %v2653
    %vm2660 = vmor %vm2658, %vm2659
    %v2661 = vsel %vm2660, %v2653, %v2657
    %v2662 = vand.u32 2147483647, %v2622
    %vm2663 = vcmp.eq.f32.partialorder %v2662, 8.507059e+37
    %v2664 = vand.u32 %v2622, 2147483648
    %v2665 = vor.u32 1.1754944e-38, %v2664
    %v2666 = vsel %vm2663, %v2665, %v2661
    %v2667 = vmul.f32 1.0, %v2666
    %v2668 = vmul.f32 %v2608, %v2637
    %v2669 = vmul.f32 %v2609, %v2652
    %v2670 = vmul.f32 %v2610, %v2667
    %s2671 = scalar_lea.vmem [#allocation19], 128
    %v2672 = vld [vmem:[%s2671] sm:$0xff]
    %v2673 = vld [vmem:[%s2671 + $0x8] sm:$0xff]
    %v2674 = vld [vmem:[%s2671 + $0x10] sm:$0xff]
    %v2675 = vld [vmem:[%s2671 + $0x18] sm:$0xff]
    %v2676 = vld [vmem:[%s2671 + $0x20] sm:$0xff]
    %v2677 = vld [vmem:[%s2671 + $0x28] sm:$0xff]
    %v2678 = vld [vmem:[%s2671 + $0x30] sm:$0xff]
    %v2679 = vld [vmem:[%s2671 + $0x38] sm:$0xff]
    %v2680 = vld [vmem:[%s2671 + $0x40] sm:$0xff]
    %v2681 = vld [vmem:[%s2671 + $0x48] sm:$0xff]
    %v2682 = vld [vmem:[%s2671 + $0x50] sm:$0xff]
    %v2683 = vld [vmem:[%s2671 + $0x58] sm:$0xff]
    %v2684 = vld [vmem:[%s2671 + $0x60] sm:$0xff]
    %v2685 = vld [vmem:[%s2671 + $0x68] sm:$0xff]
    %v2686 = vld [vmem:[%s2671 + $0x70] sm:$0xff]
    %v2687 = vld [vmem:[%s2671 + $0x78] sm:$0xff]
    %v2688 = vpack.c.bf16 %v2669, %v2668
    %v2689 = vpack.c.bf16 %v2670, %v2670
    %s2690 = scalar_lea.vmem [#allocation20], 2
    %v2691 = vld [vmem:[%s2690] sm:$0x3]
    %v2693 = vperm.slane %v2691, 0
    %v2694 = vperm.slane %v2691, 1
    %v2713 = vunpack.c.l.b16 %v2672
    %v2714 = vunpack.c.h.b16 %v2672
    %v2715 = vunpack.c.l.b16 %v2673
    %v2716 = vunpack.c.h.b16 %v2673
    %v2717 = vunpack.c.l.b16 %v2674
    %v2718 = vunpack.c.h.b16 %v2674
    %v2719 = vunpack.c.l.b16 %v2675
    %v2720 = vunpack.c.h.b16 %v2675
    %v2721 = vunpack.c.l.b16 %v2676
    %v2722 = vunpack.c.h.b16 %v2676
    %v2723 = vunpack.c.l.b16 %v2677
    %v2724 = vunpack.c.h.b16 %v2677
    %v2725 = vunpack.c.l.b16 %v2678
    %v2726 = vunpack.c.h.b16 %v2678
    %v2727 = vunpack.c.l.b16 %v2679
    %v2728 = vunpack.c.h.b16 %v2679
    %v2729 = vunpack.c.l.b16 %v2680
    %v2730 = vunpack.c.h.b16 %v2680
    %v2731 = vunpack.c.l.b16 %v2681
    %v2732 = vunpack.c.h.b16 %v2681
    %v2733 = vunpack.c.l.b16 %v2682
    %v2734 = vunpack.c.h.b16 %v2682
    %v2735 = vunpack.c.l.b16 %v2683
    %v2736 = vunpack.c.h.b16 %v2683
    %v2737 = vunpack.c.l.b16 %v2684
    %v2738 = vunpack.c.h.b16 %v2684
    %v2739 = vunpack.c.l.b16 %v2685
    %v2740 = vunpack.c.h.b16 %v2685
    %v2741 = vunpack.c.l.b16 %v2686
    %v2742 = vunpack.c.h.b16 %v2686
    %v2743 = vunpack.c.l.b16 %v2687
    %v2744 = vunpack.c.h.b16 %v2687
    %v2745 = vpack.c.b16 %v2715, %v2713
    %v2746 = vpack.c.b16 %v2716, %v2714
    %v2747 = vpack.c.b16 %v2719, %v2717
    %v2748 = vpack.c.b16 %v2720, %v2718
    %v2749 = vpack.c.b16 %v2723, %v2721
    %v2750 = vpack.c.b16 %v2724, %v2722
    %v2751 = vpack.c.b16 %v2727, %v2725
    %v2752 = vpack.c.b16 %v2728, %v2726
    %v2753 = vpack.c.b16 %v2731, %v2729
    %v2754 = vpack.c.b16 %v2732, %v2730
    %v2755 = vpack.c.b16 %v2735, %v2733
    %v2756 = vpack.c.b16 %v2736, %v2734
    %v2757 = vpack.c.b16 %v2739, %v2737
    %v2758 = vpack.c.b16 %v2740, %v2738
    %v2759 = vpack.c.b16 %v2743, %v2741
    %v2760 = vpack.c.b16 %v2744, %v2742
    %2777 = vmatpush.bf16.msra.mxu0 %v2759
    %2778 = vmatpush.bf16.msra.mxu0 %v2757
    %2779 = vmatpush.bf16.msra.mxu0 %v2755
    %2780 = vmatpush.bf16.msra.mxu0 %v2753
    %2781 = vmatpush.bf16.msra.mxu0 %v2751
    %2782 = vmatpush.bf16.msra.mxu0 %v2749
    %2783 = vmatpush.bf16.msra.mxu0 %v2747
    %2784 = vmatpush.bf16.msra.mxu0 %v2745
    %2785 = vmatmul.bf16.gmra.mxu0 %v2688
    %v2786 = vpop.f32.mrf.mxu0
    %v2787 = vadd.f32 %v2693, %v2786
    %v2788 = vpop.f32.mrf.mxu0
    %v2789 = vadd.f32 %v2693, %v2788
    %2790 = vmatmul.bf16.gmra.mxu0 %v2689
    %v2791 = vpop.f32.mrf.mxu0
    %v2792 = vadd.f32 %v2693, %v2791
    %v2793 = vpop.f32.mrf.mxu0
    %2794 = vdwg.mxu0
    %2795 = vmatpush.bf16.msra.mxu0 %v2760
    %2796 = vmatpush.bf16.msra.mxu0 %v2758
    %2797 = vmatpush.bf16.msra.mxu0 %v2756
    %2798 = vmatpush.bf16.msra.mxu0 %v2754
    %2799 = vmatpush.bf16.msra.mxu0 %v2752
    %2800 = vmatpush.bf16.msra.mxu0 %v2750
    %2801 = vmatpush.bf16.msra.mxu0 %v2748
    %2802 = vmatpush.bf16.msra.mxu0 %v2746
    %2803 = vmatmul.bf16.gmra.mxu0 %v2688
    %v2804 = vpop.f32.mrf.mxu0
    %v2805 = vadd.f32 %v2694, %v2804
    %v2806 = vpop.f32.mrf.mxu0
    %v2807 = vadd.f32 %v2694, %v2806
    %2808 = vmatmul.bf16.gmra.mxu0 %v2689
    %v2809 = vpop.f32.mrf.mxu0
    %v2810 = vadd.f32 %v2694, %v2809
    %v2811 = vpop.f32.mrf.mxu0
    %2812 = vdwg.mxu0
    %v2816 = vrot.slane %v1596, 4
    %v2817 = vrot.slane %v1597, 4
    %v2818 = vsel %vm301, %v2816, %v2817
    %v2819 = vrot.slane %v1598, 4
    %v2820 = vsel %vm301, %v2817, %v2819
    %v2824 = vadd.f32 %v2787, %v2818
    %v2825 = vadd.f32 %v2789, %v2820
    %v2826 = vadd.f32 %v2792, %v2819
    %v2830 = vrot.slane %v1573, 4
    %v2831 = vrot.slane %v1575, 4
    %v2832 = vsel %vm301, %v2830, %v2831
    %v2833 = vrot.slane %v1578, 4
    %v2834 = vsel %vm301, %v2831, %v2833
    %v2838 = vadd.f32 %v2805, %v2832
    %v2839 = vadd.f32 %v2807, %v2834
    %v2840 = vadd.f32 %v2810, %v2833
    %v2841 = vadd.f32 %v2824, %v2825
    %v2842 = vsel %vm301, %v2826, 0.0
    %v2843 = vadd.f32 %v2841, %v2842
    %v2844 = vrot.slane %v2843, 4
    %v2845 = vadd.f32 %v2843, %v2844
    %v2846 = vrot.slane %v2845, 2
    %v2847 = vadd.f32 %v2845, %v2846
    %v2848 = vrot.slane %v2847, 1
    %v2849 = vadd.f32 %v2847, %v2848
    %v2850 = vrcp.pop 20.0
    %v2851 = vmul.f32 20.0, %v2850
    %v2852 = vsub.f32 1.0, %v2851
    %v2853 = vmul.f32 %v2850, %v2852
    %v2854 = vadd.f32 %v2850, %v2853
    %vm2855 = vweird.f32 %v2850
    %v2856 = vsel %vm2855, %v2850, %v2854
    %v2857 = vmul.f32 %v2849, %v2856
    %v2858 = vsub.f32 %v2824, %v2857
    %v2859 = vsub.f32 %v2825, %v2857
    %v2860 = vsub.f32 %v2826, %v2857
    %v2861 = vmul.f32 %v2858, %v2858
    %v2862 = vmul.f32 %v2859, %v2859
    %v2863 = vmul.f32 %v2860, %v2860
    %v2864 = vadd.f32 %v2861, %v2862
    %v2865 = vsel %vm301, %v2863, 0.0
    %v2866 = vadd.f32 %v2864, %v2865
    %v2867 = vrot.slane %v2866, 4
    %v2868 = vadd.f32 %v2866, %v2867
    %v2869 = vrot.slane %v2868, 2
    %v2870 = vadd.f32 %v2868, %v2869
    %v2871 = vrot.slane %v2870, 1
    %v2872 = vadd.f32 %v2870, %v2871
    %v2873 = vmul.f32 %v2872, %v2856
    %v2874 = vadd.f32 %v2873, 1e-05
    %v2875 = vrsqrt.pop %v2874
    %v2876 = vmul.f32 %v2875, %v2874
    %v2877 = vmul.f32 %v2876, %v2875
    %v2878 = vmul.f32 0.5, %v2877
    %v2879 = vsub.f32 1.5, %v2878
    %v2880 = vmul.f32 %v2875, %v2879
    %vm2881 = vweird.f32 %v2874
    %vm2882 = vweird.f32 %v2875
    %vm2883 = vmor %vm2881, %vm2882
    %v2884 = vsel %vm2883, %v2875, %v2880
    %v2885 = vmul.f32 %v2858, %v2884
    %v2886 = vmul.f32 %v2859, %v2884
    %v2887 = vmul.f32 %v2860, %v2884
    %s2888 = scalar_lea.vmem [#allocation8], 2
    %v2889 = vld [vmem:[%s2888] sm:$0x1]
    %v2891 = vperm.slane %v2889, 0
    %v2893 = vmul.f32 %v2885, %v2891
    %v2894 = vmul.f32 %v2886, %v2891
    %v2895 = vmul.f32 %v2887, %v2891
    %s2896 = scalar_lea.vmem [#allocation10], 2
    %v2897 = vld [vmem:[%s2896] sm:$0x1]
    %v2899 = vperm.slane %v2897, 0
    %v2901 = vadd.f32 %v2893, %v2899
    %v2902 = vadd.f32 %v2894, %v2899
    %v2903 = vadd.f32 %v2895, %v2899
    %2904 = vmatpush.msra.mxu0 %v339
    %2905 = vmatpush.msra.mxu0 %v338
    %2906 = vmatpush.msra.mxu0 %v337
    %2907 = vmatpush.msra.mxu0 %v336
    %2908 = vmatpush.msra.mxu0 %v335
    %2909 = vmatpush.msra.mxu0 %v334
    %2910 = vmatpush.msra.mxu0 %v333
    %2911 = vmatpush.msra.mxu0 %v332
    %2912 = vmatpush.msra.mxu0 %v331
    %2913 = vmatpush.msra.mxu0 %v330
    %2914 = vmatpush.msra.mxu0 %v329
    %2915 = vmatpush.msra.mxu0 %v328
    %2916 = vmatpush.msra.mxu0 %v327
    %2917 = vmatpush.msra.mxu0 %v326
    %2918 = vmatpush.msra.mxu0 %v325
    %2919 = vmatpush.msra.mxu0 %v324
    %2920 = vmatmul.f32.gmra.mxu0 %v2824
    %v2921 = vpop.f32.mrf.mxu0
    %v2922 = vadd.f32 0.0, %v2921
    %2923 = vmatmul.f32.gmra.mxu0 %v2825
    %v2924 = vpop.f32.mrf.mxu0
    %v2925 = vadd.f32 0.0, %v2924
    %2926 = vmatmul.f32.gmra.mxu0 %v2826
    %v2927 = vpop.f32.mrf.mxu0
    %v2928 = vadd.f32 0.0, %v2927
    %2929 = vdwg.mxu0
    %v2930 = vsub.f32 %v2824, %v2922
    %v2931 = vsub.f32 %v2825, %v2925
    %v2932 = vsub.f32 %v2826, %v2928
    %v2933 = vmul.f32 %v2930, %v2930
    %v2934 = vmul.f32 %v2931, %v2931
    %v2935 = vmul.f32 %v2932, %v2932
    %2936 = vmatpush.msra.mxu0 %v339
    %2937 = vmatpush.msra.mxu0 %v338
    %2938 = vmatpush.msra.mxu0 %v337
    %2939 = vmatpush.msra.mxu0 %v336
    %2940 = vmatpush.msra.mxu0 %v335
    %2941 = vmatpush.msra.mxu0 %v334
    %2942 = vmatpush.msra.mxu0 %v333
    %2943 = vmatpush.msra.mxu0 %v332
    %2944 = vmatpush.msra.mxu0 %v331
    %2945 = vmatpush.msra.mxu0 %v330
    %2946 = vmatpush.msra.mxu0 %v329
    %2947 = vmatpush.msra.mxu0 %v328
    %2948 = vmatpush.msra.mxu0 %v327
    %2949 = vmatpush.msra.mxu0 %v326
    %2950 = vmatpush.msra.mxu0 %v325
    %2951 = vmatpush.msra.mxu0 %v324
    %2952 = vmatmul.f32.gmra.mxu0 %v2933
    %v2953 = vpop.f32.mrf.mxu0
    %v2954 = vadd.f32 0.0, %v2953
    %2955 = vmatmul.f32.gmra.mxu0 %v2934
    %v2956 = vpop.f32.mrf.mxu0
    %v2957 = vadd.f32 0.0, %v2956
    %2958 = vmatmul.f32.gmra.mxu0 %v2935
    %v2959 = vpop.f32.mrf.mxu0
    %v2960 = vadd.f32 0.0, %v2959
    %2961 = vdwg.mxu0
    %v2962 = vmul.f32 %v2954, 1.1428572
    %v2963 = vmul.f32 %v2957, 1.1428572
    %v2964 = vmul.f32 %v2960, 1.1428572
    %v2965 = vadd.f32 %v2962, 1e-05
    %v2966 = vadd.f32 %v2963, 1e-05
    %v2967 = vadd.f32 %v2964, 1e-05
    %v2968 = vrsqrt.pop %v2965
    %v2969 = vmul.f32 %v2968, %v2965
    %v2970 = vmul.f32 %v2969, %v2968
    %v2971 = vmul.f32 0.5, %v2970
    %v2972 = vsub.f32 1.5, %v2971
    %v2973 = vmul.f32 %v2968, %v2972
    %vm2974 = vweird.f32 %v2965
    %vm2975 = vweird.f32 %v2968
    %vm2976 = vmor %vm2974, %vm2975
    %v2977 = vsel %vm2976, %v2968, %v2973
    %v2978 = vrsqrt.pop %v2966
    %v2979 = vmul.f32 %v2978, %v2966
    %v2980 = vmul.f32 %v2979, %v2978
    %v2981 = vmul.f32 0.5, %v2980
    %v2982 = vsub.f32 1.5, %v2981
    %v2983 = vmul.f32 %v2978, %v2982
    %vm2984 = vweird.f32 %v2966
    %vm2985 = vweird.f32 %v2978
    %vm2986 = vmor %vm2984, %vm2985
    %v2987 = vsel %vm2986, %v2978, %v2983
    %v2988 = vrsqrt.pop %v2967
    %v2989 = vmul.f32 %v2988, %v2967
    %v2990 = vmul.f32 %v2989, %v2988
    %v2991 = vmul.f32 0.5, %v2990
    %v2992 = vsub.f32 1.5, %v2991
    %v2993 = vmul.f32 %v2988, %v2992
    %vm2994 = vweird.f32 %v2967
    %vm2995 = vweird.f32 %v2988
    %vm2996 = vmor %vm2994, %vm2995
    %v2997 = vsel %vm2996, %v2988, %v2993
    %v2998 = vmul.f32 %v2930, %v2977
    %v2999 = vmul.f32 %v2931, %v2987
    %v3000 = vmul.f32 %v2932, %v2997
    %s3001 = scalar_lea.vmem [#allocation11], 2
    %v3002 = vld [vmem:[%s3001] sm:$0x1]
    %v3004 = vperm.slane %v3002, 0
    %v3006 = vmul.f32 %v2998, %v3004
    %v3007 = vmul.f32 %v2999, %v3004
    %v3008 = vmul.f32 %v3000, %v3004
    %s3009 = scalar_lea.vmem [#allocation13], 2
    %v3010 = vld [vmem:[%s3009] sm:$0x1]
    %v3012 = vperm.slane %v3010, 0
    %v3014 = vadd.f32 %v3006, %v3012
    %v3015 = vadd.f32 %v3007, %v3012
    %v3016 = vadd.f32 %v3008, %v3012
    %s3017 = scalar_lea.vmem [#allocation14], 768
    %v3018 = vld [vmem:[%s3017] sm:$0xff]
    %v3019 = vld [vmem:[%s3017 + $0x8] sm:$0xff]
    %v3020 = vld [vmem:[%s3017 + $0x10] sm:$0xff]
    %v3021 = vld [vmem:[%s3017 + $0x18] sm:$0xff]
    %v3022 = vld [vmem:[%s3017 + $0x20] sm:$0xff]
    %v3023 = vld [vmem:[%s3017 + $0x28] sm:$0xff]
    %v3024 = vld [vmem:[%s3017 + $0x30] sm:$0xff]
    %v3025 = vld [vmem:[%s3017 + $0x38] sm:$0xff]
    %v3026 = vld [vmem:[%s3017 + $0x40] sm:$0xff]
    %v3027 = vld [vmem:[%s3017 + $0x48] sm:$0xff]
    %v3028 = vld [vmem:[%s3017 + $0x50] sm:$0xff]
    %v3029 = vld [vmem:[%s3017 + $0x58] sm:$0xff]
    %v3030 = vld [vmem:[%s3017 + $0x60] sm:$0xff]
    %v3031 = vld [vmem:[%s3017 + $0x68] sm:$0xff]
    %v3032 = vld [vmem:[%s3017 + $0x70] sm:$0xff]
    %v3033 = vld [vmem:[%s3017 + $0x78] sm:$0xff]
    %v3034 = vld [vmem:[%s3017 + $0x80] sm:$0xff]
    %v3035 = vld [vmem:[%s3017 + $0x88] sm:$0xff]
    %v3036 = vld [vmem:[%s3017 + $0x90] sm:$0xff]
    %v3037 = vld [vmem:[%s3017 + $0x98] sm:$0xff]
    %v3038 = vld [vmem:[%s3017 + $0xa0] sm:$0xff]
    %v3039 = vld [vmem:[%s3017 + $0xa8] sm:$0xff]
    %v3040 = vld [vmem:[%s3017 + $0xb0] sm:$0xff]
    %v3041 = vld [vmem:[%s3017 + $0xb8] sm:$0xff]
    %v3042 = vld [vmem:[%s3017 + $0xc0] sm:$0xff]
    %v3043 = vld [vmem:[%s3017 + $0xc8] sm:$0xff]
    %v3044 = vld [vmem:[%s3017 + $0xd0] sm:$0xff]
    %v3045 = vld [vmem:[%s3017 + $0xd8] sm:$0xff]
    %v3046 = vld [vmem:[%s3017 + $0xe0] sm:$0xff]
    %v3047 = vld [vmem:[%s3017 + $0xe8] sm:$0xff]
    %v3048 = vld [vmem:[%s3017 + $0xf0] sm:$0xff]
    %v3049 = vld [vmem:[%s3017 + $0xf8] sm:$0xff]
    %v3050 = vld [vmem:[%s3017 + $0x100] sm:$0xff]
    %v3051 = vld [vmem:[%s3017 + $0x108] sm:$0xff]
    %v3052 = vld [vmem:[%s3017 + $0x110] sm:$0xff]
    %v3053 = vld [vmem:[%s3017 + $0x118] sm:$0xff]
    %v3054 = vld [vmem:[%s3017 + $0x120] sm:$0xff]
    %v3055 = vld [vmem:[%s3017 + $0x128] sm:$0xff]
    %v3056 = vld [vmem:[%s3017 + $0x130] sm:$0xff]
    %v3057 = vld [vmem:[%s3017 + $0x138] sm:$0xff]
    %v3058 = vld [vmem:[%s3017 + $0x140] sm:$0xff]
    %v3059 = vld [vmem:[%s3017 + $0x148] sm:$0xff]
    %v3060 = vld [vmem:[%s3017 + $0x150] sm:$0xff]
    %v3061 = vld [vmem:[%s3017 + $0x158] sm:$0xff]
    %v3062 = vld [vmem:[%s3017 + $0x160] sm:$0xff]
    %v3063 = vld [vmem:[%s3017 + $0x168] sm:$0xff]
    %v3064 = vld [vmem:[%s3017 + $0x170] sm:$0xff]
    %v3065 = vld [vmem:[%s3017 + $0x178] sm:$0xff]
    %v3066 = vpack.c.bf16 %v2825, %v2824
    %v3067 = vpack.c.bf16 %v2902, %v2901
    %v3068 = vpack.c.bf16 %v3015, %v3014
    %v3069 = vpack.c.bf16 %v2826, %v2826
    %v3070 = vpack.c.bf16 %v2903, %v2903
    %v3071 = vpack.c.bf16 %v3016, %v3016
    %s3072 = scalar_lea.vmem [#allocation16], 768
    %v3073 = vld [vmem:[%s3072] sm:$0xff]
    %v3074 = vld [vmem:[%s3072 + $0x8] sm:$0xff]
    %v3075 = vld [vmem:[%s3072 + $0x10] sm:$0xff]
    %v3076 = vld [vmem:[%s3072 + $0x18] sm:$0xff]
    %v3077 = vld [vmem:[%s3072 + $0x20] sm:$0xff]
    %v3078 = vld [vmem:[%s3072 + $0x28] sm:$0xff]
    %v3079 = vld [vmem:[%s3072 + $0x30] sm:$0xff]
    %v3080 = vld [vmem:[%s3072 + $0x38] sm:$0xff]
    %v3081 = vld [vmem:[%s3072 + $0x40] sm:$0xff]
    %v3082 = vld [vmem:[%s3072 + $0x48] sm:$0xff]
    %v3083 = vld [vmem:[%s3072 + $0x50] sm:$0xff]
    %v3084 = vld [vmem:[%s3072 + $0x58] sm:$0xff]
    %v3085 = vld [vmem:[%s3072 + $0x60] sm:$0xff]
    %v3086 = vld [vmem:[%s3072 + $0x68] sm:$0xff]
    %v3087 = vld [vmem:[%s3072 + $0x70] sm:$0xff]
    %v3088 = vld [vmem:[%s3072 + $0x78] sm:$0xff]
    %v3089 = vld [vmem:[%s3072 + $0x80] sm:$0xff]
    %v3090 = vld [vmem:[%s3072 + $0x88] sm:$0xff]
    %v3091 = vld [vmem:[%s3072 + $0x90] sm:$0xff]
    %v3092 = vld [vmem:[%s3072 + $0x98] sm:$0xff]
    %v3093 = vld [vmem:[%s3072 + $0xa0] sm:$0xff]
    %v3094 = vld [vmem:[%s3072 + $0xa8] sm:$0xff]
    %v3095 = vld [vmem:[%s3072 + $0xb0] sm:$0xff]
    %v3096 = vld [vmem:[%s3072 + $0xb8] sm:$0xff]
    %v3097 = vld [vmem:[%s3072 + $0xc0] sm:$0xff]
    %v3098 = vld [vmem:[%s3072 + $0xc8] sm:$0xff]
    %v3099 = vld [vmem:[%s3072 + $0xd0] sm:$0xff]
    %v3100 = vld [vmem:[%s3072 + $0xd8] sm:$0xff]
    %v3101 = vld [vmem:[%s3072 + $0xe0] sm:$0xff]
    %v3102 = vld [vmem:[%s3072 + $0xe8] sm:$0xff]
    %v3103 = vld [vmem:[%s3072 + $0xf0] sm:$0xff]
    %v3104 = vld [vmem:[%s3072 + $0xf8] sm:$0xff]
    %v3105 = vld [vmem:[%s3072 + $0x100] sm:$0xff]
    %v3106 = vld [vmem:[%s3072 + $0x108] sm:$0xff]
    %v3107 = vld [vmem:[%s3072 + $0x110] sm:$0xff]
    %v3108 = vld [vmem:[%s3072 + $0x118] sm:$0xff]
    %v3109 = vld [vmem:[%s3072 + $0x120] sm:$0xff]
    %v3110 = vld [vmem:[%s3072 + $0x128] sm:$0xff]
    %v3111 = vld [vmem:[%s3072 + $0x130] sm:$0xff]
    %v3112 = vld [vmem:[%s3072 + $0x138] sm:$0xff]
    %v3113 = vld [vmem:[%s3072 + $0x140] sm:$0xff]
    %v3114 = vld [vmem:[%s3072 + $0x148] sm:$0xff]
    %v3115 = vld [vmem:[%s3072 + $0x150] sm:$0xff]
    %v3116 = vld [vmem:[%s3072 + $0x158] sm:$0xff]
    %v3117 = vld [vmem:[%s3072 + $0x160] sm:$0xff]
    %v3118 = vld [vmem:[%s3072 + $0x168] sm:$0xff]
    %v3119 = vld [vmem:[%s3072 + $0x170] sm:$0xff]
    %v3120 = vld [vmem:[%s3072 + $0x178] sm:$0xff]
    %v3127 = vrot.slane %v3066, 1
    %v3128 = vrot.slane %v3069, 1
    %v3129 = vsel %vm654, %v3127, %v3128
    %v3130 = vrot.slane %v3067, 1
    %v3131 = vrot.slane %v3070, 1
    %v3132 = vsel %vm654, %v3130, %v3131
    %v3133 = vrot.slane %v3068, 1
    %v3134 = vrot.slane %v3071, 1
    %v3135 = vsel %vm654, %v3133, %v3134
    %v3190 = vunpack.c.l.b16 %v3073
    %v3191 = vunpack.c.h.b16 %v3073
    %v3192 = vunpack.c.l.b16 %v3074
    %v3193 = vunpack.c.h.b16 %v3074
    %v3194 = vunpack.c.l.b16 %v3075
    %v3195 = vunpack.c.h.b16 %v3075
    %v3196 = vunpack.c.l.b16 %v3076
    %v3197 = vunpack.c.h.b16 %v3076
    %v3198 = vunpack.c.l.b16 %v3077
    %v3199 = vunpack.c.h.b16 %v3077
    %v3200 = vunpack.c.l.b16 %v3078
    %v3201 = vunpack.c.h.b16 %v3078
    %v3202 = vunpack.c.l.b16 %v3079
    %v3203 = vunpack.c.h.b16 %v3079
    %v3204 = vunpack.c.l.b16 %v3080
    %v3205 = vunpack.c.h.b16 %v3080
    %v3206 = vunpack.c.l.b16 %v3081
    %v3207 = vunpack.c.h.b16 %v3081
    %v3208 = vunpack.c.l.b16 %v3082
    %v3209 = vunpack.c.h.b16 %v3082
    %v3210 = vunpack.c.l.b16 %v3083
    %v3211 = vunpack.c.h.b16 %v3083
    %v3212 = vunpack.c.l.b16 %v3084
    %v3213 = vunpack.c.h.b16 %v3084
    %v3214 = vunpack.c.l.b16 %v3085
    %v3215 = vunpack.c.h.b16 %v3085
    %v3216 = vunpack.c.l.b16 %v3086
    %v3217 = vunpack.c.h.b16 %v3086
    %v3218 = vunpack.c.l.b16 %v3087
    %v3219 = vunpack.c.h.b16 %v3087
    %v3220 = vunpack.c.l.b16 %v3088
    %v3221 = vunpack.c.h.b16 %v3088
    %v3222 = vunpack.c.l.b16 %v3089
    %v3223 = vunpack.c.h.b16 %v3089
    %v3224 = vunpack.c.l.b16 %v3090
    %v3225 = vunpack.c.h.b16 %v3090
    %v3226 = vunpack.c.l.b16 %v3091
    %v3227 = vunpack.c.h.b16 %v3091
    %v3228 = vunpack.c.l.b16 %v3092
    %v3229 = vunpack.c.h.b16 %v3092
    %v3230 = vunpack.c.l.b16 %v3093
    %v3231 = vunpack.c.h.b16 %v3093
    %v3232 = vunpack.c.l.b16 %v3094
    %v3233 = vunpack.c.h.b16 %v3094
    %v3234 = vunpack.c.l.b16 %v3095
    %v3235 = vunpack.c.h.b16 %v3095
    %v3236 = vunpack.c.l.b16 %v3096
    %v3237 = vunpack.c.h.b16 %v3096
    %v3238 = vunpack.c.l.b16 %v3097
    %v3239 = vunpack.c.h.b16 %v3097
    %v3240 = vunpack.c.l.b16 %v3098
    %v3241 = vunpack.c.h.b16 %v3098
    %v3242 = vunpack.c.l.b16 %v3099
    %v3243 = vunpack.c.h.b16 %v3099
    %v3244 = vunpack.c.l.b16 %v3100
    %v3245 = vunpack.c.h.b16 %v3100
    %v3246 = vunpack.c.l.b16 %v3101
    %v3247 = vunpack.c.h.b16 %v3101
    %v3248 = vunpack.c.l.b16 %v3102
    %v3249 = vunpack.c.h.b16 %v3102
    %v3250 = vunpack.c.l.b16 %v3103
    %v3251 = vunpack.c.h.b16 %v3103
    %v3252 = vunpack.c.l.b16 %v3104
    %v3253 = vunpack.c.h.b16 %v3104
    %v3254 = vunpack.c.l.b16 %v3105
    %v3255 = vunpack.c.h.b16 %v3105
    %v3256 = vunpack.c.l.b16 %v3106
    %v3257 = vunpack.c.h.b16 %v3106
    %v3258 = vunpack.c.l.b16 %v3107
    %v3259 = vunpack.c.h.b16 %v3107
    %v3260 = vunpack.c.l.b16 %v3108
    %v3261 = vunpack.c.h.b16 %v3108
    %v3262 = vunpack.c.l.b16 %v3109
    %v3263 = vunpack.c.h.b16 %v3109
    %v3264 = vunpack.c.l.b16 %v3110
    %v3265 = vunpack.c.h.b16 %v3110
    %v3266 = vunpack.c.l.b16 %v3111
    %v3267 = vunpack.c.h.b16 %v3111
    %v3268 = vunpack.c.l.b16 %v3112
    %v3269 = vunpack.c.h.b16 %v3112
    %v3270 = vunpack.c.l.b16 %v3113
    %v3271 = vunpack.c.h.b16 %v3113
    %v3272 = vunpack.c.l.b16 %v3114
    %v3273 = vunpack.c.h.b16 %v3114
    %v3274 = vunpack.c.l.b16 %v3115
    %v3275 = vunpack.c.h.b16 %v3115
    %v3276 = vunpack.c.l.b16 %v3116
    %v3277 = vunpack.c.h.b16 %v3116
    %v3278 = vunpack.c.l.b16 %v3117
    %v3279 = vunpack.c.h.b16 %v3117
    %v3280 = vunpack.c.l.b16 %v3118
    %v3281 = vunpack.c.h.b16 %v3118
    %v3282 = vunpack.c.l.b16 %v3119
    %v3283 = vunpack.c.h.b16 %v3119
    %v3284 = vunpack.c.l.b16 %v3120
    %v3285 = vunpack.c.h.b16 %v3120
    %v3286 = vpack.c.b16 %v3192, %v3190
    %v3287 = vpack.c.b16 %v3193, %v3191
    %v3288 = vpack.c.b16 %v3196, %v3194
    %v3289 = vpack.c.b16 %v3197, %v3195
    %v3290 = vpack.c.b16 %v3200, %v3198
    %v3291 = vpack.c.b16 %v3201, %v3199
    %v3292 = vpack.c.b16 %v3204, %v3202
    %v3293 = vpack.c.b16 %v3205, %v3203
    %v3294 = vpack.c.b16 %v3208, %v3206
    %v3295 = vpack.c.b16 %v3209, %v3207
    %v3296 = vpack.c.b16 %v3212, %v3210
    %v3297 = vpack.c.b16 %v3213, %v3211
    %v3298 = vpack.c.b16 %v3216, %v3214
    %v3299 = vpack.c.b16 %v3217, %v3215
    %v3300 = vpack.c.b16 %v3220, %v3218
    %v3301 = vpack.c.b16 %v3221, %v3219
    %v3302 = vpack.c.b16 %v3224, %v3222
    %v3303 = vpack.c.b16 %v3225, %v3223
    %v3304 = vpack.c.b16 %v3228, %v3226
    %v3305 = vpack.c.b16 %v3229, %v3227
    %v3306 = vpack.c.b16 %v3232, %v3230
    %v3307 = vpack.c.b16 %v3233, %v3231
    %v3308 = vpack.c.b16 %v3236, %v3234
    %v3309 = vpack.c.b16 %v3237, %v3235
    %v3310 = vpack.c.b16 %v3240, %v3238
    %v3311 = vpack.c.b16 %v3241, %v3239
    %v3312 = vpack.c.b16 %v3244, %v3242
    %v3313 = vpack.c.b16 %v3245, %v3243
    %v3314 = vpack.c.b16 %v3248, %v3246
    %v3315 = vpack.c.b16 %v3249, %v3247
    %v3316 = vpack.c.b16 %v3252, %v3250
    %v3317 = vpack.c.b16 %v3253, %v3251
    %v3318 = vpack.c.b16 %v3256, %v3254
    %v3319 = vpack.c.b16 %v3257, %v3255
    %v3320 = vpack.c.b16 %v3260, %v3258
    %v3321 = vpack.c.b16 %v3261, %v3259
    %v3322 = vpack.c.b16 %v3264, %v3262
    %v3323 = vpack.c.b16 %v3265, %v3263
    %v3324 = vpack.c.b16 %v3268, %v3266
    %v3325 = vpack.c.b16 %v3269, %v3267
    %v3326 = vpack.c.b16 %v3272, %v3270
    %v3327 = vpack.c.b16 %v3273, %v3271
    %v3328 = vpack.c.b16 %v3276, %v3274
    %v3329 = vpack.c.b16 %v3277, %v3275
    %v3330 = vpack.c.b16 %v3280, %v3278
    %v3331 = vpack.c.b16 %v3281, %v3279
    %v3332 = vpack.c.b16 %v3284, %v3282
    %v3333 = vpack.c.b16 %v3285, %v3283
    %3382 = vmatpush.bf16.msra.mxu0 %v3300
    %3383 = vmatpush.bf16.msra.mxu0 %v3298
    %3384 = vmatpush.bf16.msra.mxu0 %v3296
    %3385 = vmatpush.bf16.msra.mxu0 %v3294
    %3386 = vmatpush.bf16.msra.mxu0 %v3292
    %3387 = vmatpush.bf16.msra.mxu0 %v3290
    %3388 = vmatpush.bf16.msra.mxu0 %v3288
    %3389 = vmatpush.bf16.msra.mxu0 %v3286
    %3390 = vmatmul.bf16.gmra.mxu0 %v3129
    %v3391 = vpop.f32.mrf.mxu0
    %v3392 = vadd.f32 0.0, %v3391
    %v3393 = vpop.f32.mrf.mxu0
    %v3394 = vadd.f32 0.0, %v3393
    %3395 = vmatmul.bf16.gmra.mxu0 %v3128
    %v3396 = vpop.f32.mrf.mxu0
    %v3397 = vadd.f32 0.0, %v3396
    %v3398 = vpop.f32.mrf.mxu0
    %3399 = vdwg.mxu0
    %3400 = vmatpush.bf16.msra.mxu0 %v3316
    %3401 = vmatpush.bf16.msra.mxu0 %v3314
    %3402 = vmatpush.bf16.msra.mxu0 %v3312
    %3403 = vmatpush.bf16.msra.mxu0 %v3310
    %3404 = vmatpush.bf16.msra.mxu0 %v3308
    %3405 = vmatpush.bf16.msra.mxu0 %v3306
    %3406 = vmatpush.bf16.msra.mxu0 %v3304
    %3407 = vmatpush.bf16.msra.mxu0 %v3302
    %3408 = vmatmul.bf16.gmra.mxu0 %v3132
    %v3409 = vpop.f32.mrf.mxu0
    %v3410 = vadd.f32 %v3392, %v3409
    %v3411 = vpop.f32.mrf.mxu0
    %v3412 = vadd.f32 %v3394, %v3411
    %3413 = vmatmul.bf16.gmra.mxu0 %v3131
    %v3414 = vpop.f32.mrf.mxu0
    %v3415 = vadd.f32 %v3397, %v3414
    %v3416 = vpop.f32.mrf.mxu0
    %3417 = vdwg.mxu0
    %3418 = vmatpush.bf16.msra.mxu0 %v3332
    %3419 = vmatpush.bf16.msra.mxu0 %v3330
    %3420 = vmatpush.bf16.msra.mxu0 %v3328
    %3421 = vmatpush.bf16.msra.mxu0 %v3326
    %3422 = vmatpush.bf16.msra.mxu0 %v3324
    %3423 = vmatpush.bf16.msra.mxu0 %v3322
    %3424 = vmatpush.bf16.msra.mxu0 %v3320
    %3425 = vmatpush.bf16.msra.mxu0 %v3318
    %3426 = vmatmul.bf16.gmra.mxu0 %v3135
    %v3427 = vpop.f32.mrf.mxu0
    %v3428 = vadd.f32 %v3410, %v3427
    %v3429 = vpop.f32.mrf.mxu0
    %v3430 = vadd.f32 %v3412, %v3429
    %3431 = vmatmul.bf16.gmra.mxu0 %v3134
    %v3432 = vpop.f32.mrf.mxu0
    %v3433 = vadd.f32 %v3415, %v3432
    %v3434 = vpop.f32.mrf.mxu0
    %3435 = vdwg.mxu0
    %3436 = vmatpush.bf16.msra.mxu0 %v3301
    %3437 = vmatpush.bf16.msra.mxu0 %v3299
    %3438 = vmatpush.bf16.msra.mxu0 %v3297
    %3439 = vmatpush.bf16.msra.mxu0 %v3295
    %3440 = vmatpush.bf16.msra.mxu0 %v3293
    %3441 = vmatpush.bf16.msra.mxu0 %v3291
    %3442 = vmatpush.bf16.msra.mxu0 %v3289
    %3443 = vmatpush.bf16.msra.mxu0 %v3287
    %3444 = vmatmul.bf16.gmra.mxu0 %v3129
    %v3445 = vpop.f32.mrf.mxu0
    %v3446 = vadd.f32 0.0, %v3445
    %v3447 = vpop.f32.mrf.mxu0
    %v3448 = vadd.f32 0.0, %v3447
    %3449 = vmatmul.bf16.gmra.mxu0 %v3128
    %v3450 = vpop.f32.mrf.mxu0
    %v3451 = vadd.f32 0.0, %v3450
    %v3452 = vpop.f32.mrf.mxu0
    %3453 = vdwg.mxu0
    %3454 = vmatpush.bf16.msra.mxu0 %v3317
    %3455 = vmatpush.bf16.msra.mxu0 %v3315
    %3456 = vmatpush.bf16.msra.mxu0 %v3313
    %3457 = vmatpush.bf16.msra.mxu0 %v3311
    %3458 = vmatpush.bf16.msra.mxu0 %v3309
    %3459 = vmatpush.bf16.msra.mxu0 %v3307
    %3460 = vmatpush.bf16.msra.mxu0 %v3305
    %3461 = vmatpush.bf16.msra.mxu0 %v3303
    %3462 = vmatmul.bf16.gmra.mxu0 %v3132
    %v3463 = vpop.f32.mrf.mxu0
    %v3464 = vadd.f32 %v3446, %v3463
    %v3465 = vpop.f32.mrf.mxu0
    %v3466 = vadd.f32 %v3448, %v3465
    %3467 = vmatmul.bf16.gmra.mxu0 %v3131
    %v3468 = vpop.f32.mrf.mxu0
    %v3469 = vadd.f32 %v3451, %v3468
    %v3470 = vpop.f32.mrf.mxu0
    %3471 = vdwg.mxu0
    %3472 = vmatpush.bf16.msra.mxu0 %v3333
    %3473 = vmatpush.bf16.msra.mxu0 %v3331
    %3474 = vmatpush.bf16.msra.mxu0 %v3329
    %3475 = vmatpush.bf16.msra.mxu0 %v3327
    %3476 = vmatpush.bf16.msra.mxu0 %v3325
    %3477 = vmatpush.bf16.msra.mxu0 %v3323
    %3478 = vmatpush.bf16.msra.mxu0 %v3321
    %3479 = vmatpush.bf16.msra.mxu0 %v3319
    %3480 = vmatmul.bf16.gmra.mxu0 %v3135
    %v3481 = vpop.f32.mrf.mxu0
    %v3482 = vadd.f32 %v3464, %v3481
    %v3483 = vpop.f32.mrf.mxu0
    %v3484 = vadd.f32 %v3466, %v3483
    %3485 = vmatmul.bf16.gmra.mxu0 %v3134
    %v3486 = vpop.f32.mrf.mxu0
    %v3487 = vadd.f32 %v3469, %v3486
    %v3488 = vpop.f32.mrf.mxu0
    %3489 = vdwg.mxu0
    %v3538 = vunpack.c.l.b16 %v3018
    %v3539 = vunpack.c.h.b16 %v3018
    %v3540 = vunpack.c.l.b16 %v3019
    %v3541 = vunpack.c.h.b16 %v3019
    %v3542 = vunpack.c.l.b16 %v3020
    %v3543 = vunpack.c.h.b16 %v3020
    %v3544 = vunpack.c.l.b16 %v3021
    %v3545 = vunpack.c.h.b16 %v3021
    %v3546 = vunpack.c.l.b16 %v3022
    %v3547 = vunpack.c.h.b16 %v3022
    %v3548 = vunpack.c.l.b16 %v3023
    %v3549 = vunpack.c.h.b16 %v3023
    %v3550 = vunpack.c.l.b16 %v3024
    %v3551 = vunpack.c.h.b16 %v3024
    %v3552 = vunpack.c.l.b16 %v3025
    %v3553 = vunpack.c.h.b16 %v3025
    %v3554 = vunpack.c.l.b16 %v3026
    %v3555 = vunpack.c.h.b16 %v3026
    %v3556 = vunpack.c.l.b16 %v3027
    %v3557 = vunpack.c.h.b16 %v3027
    %v3558 = vunpack.c.l.b16 %v3028
    %v3559 = vunpack.c.h.b16 %v3028
    %v3560 = vunpack.c.l.b16 %v3029
    %v3561 = vunpack.c.h.b16 %v3029
    %v3562 = vunpack.c.l.b16 %v3030
    %v3563 = vunpack.c.h.b16 %v3030
    %v3564 = vunpack.c.l.b16 %v3031
    %v3565 = vunpack.c.h.b16 %v3031
    %v3566 = vunpack.c.l.b16 %v3032
    %v3567 = vunpack.c.h.b16 %v3032
    %v3568 = vunpack.c.l.b16 %v3033
    %v3569 = vunpack.c.h.b16 %v3033
    %v3570 = vunpack.c.l.b16 %v3034
    %v3571 = vunpack.c.h.b16 %v3034
    %v3572 = vunpack.c.l.b16 %v3035
    %v3573 = vunpack.c.h.b16 %v3035
    %v3574 = vunpack.c.l.b16 %v3036
    %v3575 = vunpack.c.h.b16 %v3036
    %v3576 = vunpack.c.l.b16 %v3037
    %v3577 = vunpack.c.h.b16 %v3037
    %v3578 = vunpack.c.l.b16 %v3038
    %v3579 = vunpack.c.h.b16 %v3038
    %v3580 = vunpack.c.l.b16 %v3039
    %v3581 = vunpack.c.h.b16 %v3039
    %v3582 = vunpack.c.l.b16 %v3040
    %v3583 = vunpack.c.h.b16 %v3040
    %v3584 = vunpack.c.l.b16 %v3041
    %v3585 = vunpack.c.h.b16 %v3041
    %v3586 = vunpack.c.l.b16 %v3042
    %v3587 = vunpack.c.h.b16 %v3042
    %v3588 = vunpack.c.l.b16 %v3043
    %v3589 = vunpack.c.h.b16 %v3043
    %v3590 = vunpack.c.l.b16 %v3044
    %v3591 = vunpack.c.h.b16 %v3044
    %v3592 = vunpack.c.l.b16 %v3045
    %v3593 = vunpack.c.h.b16 %v3045
    %v3594 = vunpack.c.l.b16 %v3046
    %v3595 = vunpack.c.h.b16 %v3046
    %v3596 = vunpack.c.l.b16 %v3047
    %v3597 = vunpack.c.h.b16 %v3047
    %v3598 = vunpack.c.l.b16 %v3048
    %v3599 = vunpack.c.h.b16 %v3048
    %v3600 = vunpack.c.l.b16 %v3049
    %v3601 = vunpack.c.h.b16 %v3049
    %v3602 = vunpack.c.l.b16 %v3050
    %v3603 = vunpack.c.h.b16 %v3050
    %v3604 = vunpack.c.l.b16 %v3051
    %v3605 = vunpack.c.h.b16 %v3051
    %v3606 = vunpack.c.l.b16 %v3052
    %v3607 = vunpack.c.h.b16 %v3052
    %v3608 = vunpack.c.l.b16 %v3053
    %v3609 = vunpack.c.h.b16 %v3053
    %v3610 = vunpack.c.l.b16 %v3054
    %v3611 = vunpack.c.h.b16 %v3054
    %v3612 = vunpack.c.l.b16 %v3055
    %v3613 = vunpack.c.h.b16 %v3055
    %v3614 = vunpack.c.l.b16 %v3056
    %v3615 = vunpack.c.h.b16 %v3056
    %v3616 = vunpack.c.l.b16 %v3057
    %v3617 = vunpack.c.h.b16 %v3057
    %v3618 = vunpack.c.l.b16 %v3058
    %v3619 = vunpack.c.h.b16 %v3058
    %v3620 = vunpack.c.l.b16 %v3059
    %v3621 = vunpack.c.h.b16 %v3059
    %v3622 = vunpack.c.l.b16 %v3060
    %v3623 = vunpack.c.h.b16 %v3060
    %v3624 = vunpack.c.l.b16 %v3061
    %v3625 = vunpack.c.h.b16 %v3061
    %v3626 = vunpack.c.l.b16 %v3062
    %v3627 = vunpack.c.h.b16 %v3062
    %v3628 = vunpack.c.l.b16 %v3063
    %v3629 = vunpack.c.h.b16 %v3063
    %v3630 = vunpack.c.l.b16 %v3064
    %v3631 = vunpack.c.h.b16 %v3064
    %v3632 = vunpack.c.l.b16 %v3065
    %v3633 = vunpack.c.h.b16 %v3065
    %v3634 = vpack.c.b16 %v3540, %v3538
    %v3635 = vpack.c.b16 %v3541, %v3539
    %v3636 = vpack.c.b16 %v3544, %v3542
    %v3637 = vpack.c.b16 %v3545, %v3543
    %v3638 = vpack.c.b16 %v3548, %v3546
    %v3639 = vpack.c.b16 %v3549, %v3547
    %v3640 = vpack.c.b16 %v3552, %v3550
    %v3641 = vpack.c.b16 %v3553, %v3551
    %v3642 = vpack.c.b16 %v3556, %v3554
    %v3643 = vpack.c.b16 %v3557, %v3555
    %v3644 = vpack.c.b16 %v3560, %v3558
    %v3645 = vpack.c.b16 %v3561, %v3559
    %v3646 = vpack.c.b16 %v3564, %v3562
    %v3647 = vpack.c.b16 %v3565, %v3563
    %v3648 = vpack.c.b16 %v3568, %v3566
    %v3649 = vpack.c.b16 %v3569, %v3567
    %v3650 = vpack.c.b16 %v3572, %v3570
    %v3651 = vpack.c.b16 %v3573, %v3571
    %v3652 = vpack.c.b16 %v3576, %v3574
    %v3653 = vpack.c.b16 %v3577, %v3575
    %v3654 = vpack.c.b16 %v3580, %v3578
    %v3655 = vpack.c.b16 %v3581, %v3579
    %v3656 = vpack.c.b16 %v3584, %v3582
    %v3657 = vpack.c.b16 %v3585, %v3583
    %v3658 = vpack.c.b16 %v3588, %v3586
    %v3659 = vpack.c.b16 %v3589, %v3587
    %v3660 = vpack.c.b16 %v3592, %v3590
    %v3661 = vpack.c.b16 %v3593, %v3591
    %v3662 = vpack.c.b16 %v3596, %v3594
    %v3663 = vpack.c.b16 %v3597, %v3595
    %v3664 = vpack.c.b16 %v3600, %v3598
    %v3665 = vpack.c.b16 %v3601, %v3599
    %v3666 = vpack.c.b16 %v3604, %v3602
    %v3667 = vpack.c.b16 %v3605, %v3603
    %v3668 = vpack.c.b16 %v3608, %v3606
    %v3669 = vpack.c.b16 %v3609, %v3607
    %v3670 = vpack.c.b16 %v3612, %v3610
    %v3671 = vpack.c.b16 %v3613, %v3611
    %v3672 = vpack.c.b16 %v3616, %v3614
    %v3673 = vpack.c.b16 %v3617, %v3615
    %v3674 = vpack.c.b16 %v3620, %v3618
    %v3675 = vpack.c.b16 %v3621, %v3619
    %v3676 = vpack.c.b16 %v3624, %v3622
    %v3677 = vpack.c.b16 %v3625, %v3623
    %v3678 = vpack.c.b16 %v3628, %v3626
    %v3679 = vpack.c.b16 %v3629, %v3627
    %v3680 = vpack.c.b16 %v3632, %v3630
    %v3681 = vpack.c.b16 %v3633, %v3631
    %3730 = vmatpush.bf16.msra.mxu0 %v3648
    %3731 = vmatpush.bf16.msra.mxu0 %v3646
    %3732 = vmatpush.bf16.msra.mxu0 %v3644
    %3733 = vmatpush.bf16.msra.mxu0 %v3642
    %3734 = vmatpush.bf16.msra.mxu0 %v3640
    %3735 = vmatpush.bf16.msra.mxu0 %v3638
    %3736 = vmatpush.bf16.msra.mxu0 %v3636
    %3737 = vmatpush.bf16.msra.mxu0 %v3634
    %3738 = vmatmul.bf16.gmra.mxu0 %v3066
    %v3739 = vpop.f32.mrf.mxu0
    %v3740 = vadd.f32 %v3428, %v3739
    %v3741 = vpop.f32.mrf.mxu0
    %v3742 = vadd.f32 %v3430, %v3741
    %3743 = vmatmul.bf16.gmra.mxu0 %v3069
    %v3744 = vpop.f32.mrf.mxu0
    %v3745 = vadd.f32 %v3433, %v3744
    %v3746 = vpop.f32.mrf.mxu0
    %3747 = vdwg.mxu0
    %3748 = vmatpush.bf16.msra.mxu0 %v3664
    %3749 = vmatpush.bf16.msra.mxu0 %v3662
    %3750 = vmatpush.bf16.msra.mxu0 %v3660
    %3751 = vmatpush.bf16.msra.mxu0 %v3658
    %3752 = vmatpush.bf16.msra.mxu0 %v3656
    %3753 = vmatpush.bf16.msra.mxu0 %v3654
    %3754 = vmatpush.bf16.msra.mxu0 %v3652
    %3755 = vmatpush.bf16.msra.mxu0 %v3650
    %3756 = vmatmul.bf16.gmra.mxu0 %v3067
    %v3757 = vpop.f32.mrf.mxu0
    %v3758 = vadd.f32 %v3740, %v3757
    %v3759 = vpop.f32.mrf.mxu0
    %v3760 = vadd.f32 %v3742, %v3759
    %3761 = vmatmul.bf16.gmra.mxu0 %v3070
    %v3762 = vpop.f32.mrf.mxu0
    %v3763 = vadd.f32 %v3745, %v3762
    %v3764 = vpop.f32.mrf.mxu0
    %3765 = vdwg.mxu0
    %3766 = vmatpush.bf16.msra.mxu0 %v3680
    %3767 = vmatpush.bf16.msra.mxu0 %v3678
    %3768 = vmatpush.bf16.msra.mxu0 %v3676
    %3769 = vmatpush.bf16.msra.mxu0 %v3674
    %3770 = vmatpush.bf16.msra.mxu0 %v3672
    %3771 = vmatpush.bf16.msra.mxu0 %v3670
    %3772 = vmatpush.bf16.msra.mxu0 %v3668
    %3773 = vmatpush.bf16.msra.mxu0 %v3666
    %3774 = vmatmul.bf16.gmra.mxu0 %v3068
    %v3775 = vpop.f32.mrf.mxu0
    %v3776 = vadd.f32 %v3758, %v3775
    %v3777 = vpop.f32.mrf.mxu0
    %v3778 = vadd.f32 %v3760, %v3777
    %3779 = vmatmul.bf16.gmra.mxu0 %v3071
    %v3780 = vpop.f32.mrf.mxu0
    %v3781 = vadd.f32 %v3763, %v3780
    %v3782 = vpop.f32.mrf.mxu0
    %3783 = vdwg.mxu0
    %3784 = vmatpush.bf16.msra.mxu0 %v3649
    %3785 = vmatpush.bf16.msra.mxu0 %v3647
    %3786 = vmatpush.bf16.msra.mxu0 %v3645
    %3787 = vmatpush.bf16.msra.mxu0 %v3643
    %3788 = vmatpush.bf16.msra.mxu0 %v3641
    %3789 = vmatpush.bf16.msra.mxu0 %v3639
    %3790 = vmatpush.bf16.msra.mxu0 %v3637
    %3791 = vmatpush.bf16.msra.mxu0 %v3635
    %3792 = vmatmul.bf16.gmra.mxu0 %v3066
    %v3793 = vpop.f32.mrf.mxu0
    %v3794 = vadd.f32 %v3482, %v3793
    %v3795 = vpop.f32.mrf.mxu0
    %v3796 = vadd.f32 %v3484, %v3795
    %3797 = vmatmul.bf16.gmra.mxu0 %v3069
    %v3798 = vpop.f32.mrf.mxu0
    %v3799 = vadd.f32 %v3487, %v3798
    %v3800 = vpop.f32.mrf.mxu0
    %3801 = vdwg.mxu0
    %3802 = vmatpush.bf16.msra.mxu0 %v3665
    %3803 = vmatpush.bf16.msra.mxu0 %v3663
    %3804 = vmatpush.bf16.msra.mxu0 %v3661
    %3805 = vmatpush.bf16.msra.mxu0 %v3659
    %3806 = vmatpush.bf16.msra.mxu0 %v3657
    %3807 = vmatpush.bf16.msra.mxu0 %v3655
    %3808 = vmatpush.bf16.msra.mxu0 %v3653
    %3809 = vmatpush.bf16.msra.mxu0 %v3651
    %3810 = vmatmul.bf16.gmra.mxu0 %v3067
    %v3811 = vpop.f32.mrf.mxu0
    %v3812 = vadd.f32 %v3794, %v3811
    %v3813 = vpop.f32.mrf.mxu0
    %v3814 = vadd.f32 %v3796, %v3813
    %3815 = vmatmul.bf16.gmra.mxu0 %v3070
    %v3816 = vpop.f32.mrf.mxu0
    %v3817 = vadd.f32 %v3799, %v3816
    %v3818 = vpop.f32.mrf.mxu0
    %3819 = vdwg.mxu0
    %3820 = vmatpush.bf16.msra.mxu0 %v3681
    %3821 = vmatpush.bf16.msra.mxu0 %v3679
    %3822 = vmatpush.bf16.msra.mxu0 %v3677
    %3823 = vmatpush.bf16.msra.mxu0 %v3675
    %3824 = vmatpush.bf16.msra.mxu0 %v3673
    %3825 = vmatpush.bf16.msra.mxu0 %v3671
    %3826 = vmatpush.bf16.msra.mxu0 %v3669
    %3827 = vmatpush.bf16.msra.mxu0 %v3667
    %3828 = vmatmul.bf16.gmra.mxu0 %v3068
    %v3829 = vpop.f32.mrf.mxu0
    %v3830 = vadd.f32 %v3812, %v3829
    %v3831 = vpop.f32.mrf.mxu0
    %v3832 = vadd.f32 %v3814, %v3831
    %3833 = vmatmul.bf16.gmra.mxu0 %v3071
    %v3834 = vpop.f32.mrf.mxu0
    %v3835 = vadd.f32 %v3817, %v3834
    %v3836 = vpop.f32.mrf.mxu0
    %3837 = vdwg.mxu0
    %s3838 = scalar_lea.vmem [#allocation17], 4
    %v3839 = vld [vmem:[%s3838] sm:$0x3]
    %v3841 = vperm.slane %v3839, 0
    %v3842 = vperm.slane %v3839, 1
    %v3845 = vadd.f32 %v3776, %v3841
    %v3846 = vadd.f32 %v3830, %v3842
    %v3847 = vadd.f32 %v3778, %v3841
    %v3848 = vadd.f32 %v3832, %v3842
    %v3849 = vadd.f32 %v3781, %v3841
    %v3850 = vadd.f32 %v3835, %v3842
    %v3851 = vtanh.pop %v3845
    %v3852 = vtanh.pop %v3847
    %v3853 = vtanh.pop %v3849
    %v3854 = vxor.u32 %v3846, 2147483648
    %v3855 = vxor.u32 %v3848, 2147483648
    %v3856 = vxor.u32 %v3850, 2147483648
    %v3857 = vmul.f32 %v3854, 1.442695
    %v3858 = vpow.pop %v3857
    %v3859 = vmul.f32 %v3855, 1.442695
    %v3860 = vpow.pop %v3859
    %v3861 = vmul.f32 %v3856, 1.442695
    %v3862 = vpow.pop %v3861
    %v3863 = vadd.f32 %v3858, 1.0
    %v3864 = vadd.f32 %v3860, 1.0
    %v3865 = vadd.f32 %v3862, 1.0
    %v3866 = vrcp.pop %v3863
    %v3867 = vmul.f32 %v3863, %v3866
    %v3868 = vsub.f32 1.0, %v3867
    %v3869 = vmul.f32 %v3866, %v3868
    %v3870 = vadd.f32 %v3866, %v3869
    %vm3871 = vweird.f32 %v3863
    %vm3872 = vweird.f32 %v3866
    %vm3873 = vmor %vm3871, %vm3872
    %v3874 = vsel %vm3873, %v3866, %v3870
    %v3875 = vand.u32 2147483647, %v3863
    %vm3876 = vcmp.eq.f32.partialorder %v3875, 8.507059e+37
    %v3877 = vand.u32 %v3863, 2147483648
    %v3878 = vor.u32 1.1754944e-38, %v3877
    %v3879 = vsel %vm3876, %v3878, %v3874
    %v3880 = vmul.f32 1.0, %v3879
    %v3881 = vrcp.pop %v3864
    %v3882 = vmul.f32 %v3864, %v3881
    %v3883 = vsub.f32 1.0, %v3882
    %v3884 = vmul.f32 %v3881, %v3883
    %v3885 = vadd.f32 %v3881, %v3884
    %vm3886 = vweird.f32 %v3864
    %vm3887 = vweird.f32 %v3881
    %vm3888 = vmor %vm3886, %vm3887
    %v3889 = vsel %vm3888, %v3881, %v3885
    %v3890 = vand.u32 2147483647, %v3864
    %vm3891 = vcmp.eq.f32.partialorder %v3890, 8.507059e+37
    %v3892 = vand.u32 %v3864, 2147483648
    %v3893 = vor.u32 1.1754944e-38, %v3892
    %v3894 = vsel %vm3891, %v3893, %v3889
    %v3895 = vmul.f32 1.0, %v3894
    %v3896 = vrcp.pop %v3865
    %v3897 = vmul.f32 %v3865, %v3896
    %v3898 = vsub.f32 1.0, %v3897
    %v3899 = vmul.f32 %v3896, %v3898
    %v3900 = vadd.f32 %v3896, %v3899
    %vm3901 = vweird.f32 %v3865
    %vm3902 = vweird.f32 %v3896
    %vm3903 = vmor %vm3901, %vm3902
    %v3904 = vsel %vm3903, %v3896, %v3900
    %v3905 = vand.u32 2147483647, %v3865
    %vm3906 = vcmp.eq.f32.partialorder %v3905, 8.507059e+37
    %v3907 = vand.u32 %v3865, 2147483648
    %v3908 = vor.u32 1.1754944e-38, %v3907
    %v3909 = vsel %vm3906, %v3908, %v3904
    %v3910 = vmul.f32 1.0, %v3909
    %v3911 = vmul.f32 %v3851, %v3880
    %v3912 = vmul.f32 %v3852, %v3895
    %v3913 = vmul.f32 %v3853, %v3910
    %s3914 = scalar_lea.vmem [#allocation19], 256
    %v3915 = vld [vmem:[%s3914] sm:$0xff]
    %v3916 = vld [vmem:[%s3914 + $0x8] sm:$0xff]
    %v3917 = vld [vmem:[%s3914 + $0x10] sm:$0xff]
    %v3918 = vld [vmem:[%s3914 + $0x18] sm:$0xff]
    %v3919 = vld [vmem:[%s3914 + $0x20] sm:$0xff]
    %v3920 = vld [vmem:[%s3914 + $0x28] sm:$0xff]
    %v3921 = vld [vmem:[%s3914 + $0x30] sm:$0xff]
    %v3922 = vld [vmem:[%s3914 + $0x38] sm:$0xff]
    %v3923 = vld [vmem:[%s3914 + $0x40] sm:$0xff]
    %v3924 = vld [vmem:[%s3914 + $0x48] sm:$0xff]
    %v3925 = vld [vmem:[%s3914 + $0x50] sm:$0xff]
    %v3926 = vld [vmem:[%s3914 + $0x58] sm:$0xff]
    %v3927 = vld [vmem:[%s3914 + $0x60] sm:$0xff]
    %v3928 = vld [vmem:[%s3914 + $0x68] sm:$0xff]
    %v3929 = vld [vmem:[%s3914 + $0x70] sm:$0xff]
    %v3930 = vld [vmem:[%s3914 + $0x78] sm:$0xff]
    %v3931 = vpack.c.bf16 %v3912, %v3911
    %v3932 = vpack.c.bf16 %v3913, %v3913
    %s3933 = scalar_lea.vmem [#allocation20], 4
    %v3934 = vld [vmem:[%s3933] sm:$0x3]
    %v3936 = vperm.slane %v3934, 0
    %v3937 = vperm.slane %v3934, 1
    %v3956 = vunpack.c.l.b16 %v3915
    %v3957 = vunpack.c.h.b16 %v3915
    %v3958 = vunpack.c.l.b16 %v3916
    %v3959 = vunpack.c.h.b16 %v3916
    %v3960 = vunpack.c.l.b16 %v3917
    %v3961 = vunpack.c.h.b16 %v3917
    %v3962 = vunpack.c.l.b16 %v3918
    %v3963 = vunpack.c.h.b16 %v3918
    %v3964 = vunpack.c.l.b16 %v3919
    %v3965 = vunpack.c.h.b16 %v3919
    %v3966 = vunpack.c.l.b16 %v3920
    %v3967 = vunpack.c.h.b16 %v3920
    %v3968 = vunpack.c.l.b16 %v3921
    %v3969 = vunpack.c.h.b16 %v3921
    %v3970 = vunpack.c.l.b16 %v3922
    %v3971 = vunpack.c.h.b16 %v3922
    %v3972 = vunpack.c.l.b16 %v3923
    %v3973 = vunpack.c.h.b16 %v3923
    %v3974 = vunpack.c.l.b16 %v3924
    %v3975 = vunpack.c.h.b16 %v3924
    %v3976 = vunpack.c.l.b16 %v3925
    %v3977 = vunpack.c.h.b16 %v3925
    %v3978 = vunpack.c.l.b16 %v3926
    %v3979 = vunpack.c.h.b16 %v3926
    %v3980 = vunpack.c.l.b16 %v3927
    %v3981 = vunpack.c.h.b16 %v3927
    %v3982 = vunpack.c.l.b16 %v3928
    %v3983 = vunpack.c.h.b16 %v3928
    %v3984 = vunpack.c.l.b16 %v3929
    %v3985 = vunpack.c.h.b16 %v3929
    %v3986 = vunpack.c.l.b16 %v3930
    %v3987 = vunpack.c.h.b16 %v3930
    %v3988 = vpack.c.b16 %v3958, %v3956
    %v3989 = vpack.c.b16 %v3959, %v3957
    %v3990 = vpack.c.b16 %v3962, %v3960
    %v3991 = vpack.c.b16 %v3963, %v3961
    %v3992 = vpack.c.b16 %v3966, %v3964
    %v3993 = vpack.c.b16 %v3967, %v3965
    %v3994 = vpack.c.b16 %v3970, %v3968
    %v3995 = vpack.c.b16 %v3971, %v3969
    %v3996 = vpack.c.b16 %v3974, %v3972
    %v3997 = vpack.c.b16 %v3975, %v3973
    %v3998 = vpack.c.b16 %v3978, %v3976
    %v3999 = vpack.c.b16 %v3979, %v3977
    %v4000 = vpack.c.b16 %v3982, %v3980
    %v4001 = vpack.c.b16 %v3983, %v3981
    %v4002 = vpack.c.b16 %v3986, %v3984
    %v4003 = vpack.c.b16 %v3987, %v3985
    %4020 = vmatpush.bf16.msra.mxu0 %v4002
    %4021 = vmatpush.bf16.msra.mxu0 %v4000
    %4022 = vmatpush.bf16.msra.mxu0 %v3998
    %4023 = vmatpush.bf16.msra.mxu0 %v3996
    %4024 = vmatpush.bf16.msra.mxu0 %v3994
    %4025 = vmatpush.bf16.msra.mxu0 %v3992
    %4026 = vmatpush.bf16.msra.mxu0 %v3990
    %4027 = vmatpush.bf16.msra.mxu0 %v3988
    %4028 = vmatmul.bf16.gmra.mxu0 %v3931
    %v4029 = vpop.f32.mrf.mxu0
    %v4030 = vadd.f32 %v3936, %v4029
    %v4031 = vpop.f32.mrf.mxu0
    %v4032 = vadd.f32 %v3936, %v4031
    %4033 = vmatmul.bf16.gmra.mxu0 %v3932
    %v4034 = vpop.f32.mrf.mxu0
    %v4035 = vadd.f32 %v3936, %v4034
    %v4036 = vpop.f32.mrf.mxu0
    %4037 = vdwg.mxu0
    %4038 = vmatpush.bf16.msra.mxu0 %v4003
    %4039 = vmatpush.bf16.msra.mxu0 %v4001
    %4040 = vmatpush.bf16.msra.mxu0 %v3999
    %4041 = vmatpush.bf16.msra.mxu0 %v3997
    %4042 = vmatpush.bf16.msra.mxu0 %v3995
    %4043 = vmatpush.bf16.msra.mxu0 %v3993
    %4044 = vmatpush.bf16.msra.mxu0 %v3991
    %4045 = vmatpush.bf16.msra.mxu0 %v3989
    %4046 = vmatmul.bf16.gmra.mxu0 %v3931
    %v4047 = vpop.f32.mrf.mxu0
    %v4048 = vadd.f32 %v3937, %v4047
    %v4049 = vpop.f32.mrf.mxu0
    %v4050 = vadd.f32 %v3937, %v4049
    %4051 = vmatmul.bf16.gmra.mxu0 %v3932
    %v4052 = vpop.f32.mrf.mxu0
    %v4053 = vadd.f32 %v3937, %v4052
    %v4054 = vpop.f32.mrf.mxu0
    %4055 = vdwg.mxu0
    %v4059 = vrot.slane %v2824, 2
    %v4060 = vrot.slane %v2825, 2
    %v4061 = vsel %vm1585, %v4059, %v4060
    %v4062 = vrot.slane %v2826, 2
    %v4063 = vsel %vm1585, %v4060, %v4062
    %v4067 = vadd.f32 %v4030, %v4061
    %v4068 = vadd.f32 %v4032, %v4063
    %v4069 = vadd.f32 %v4035, %v4062
    %v4073 = vrot.slane %v2838, 2
    %v4074 = vrot.slane %v2839, 2
    %v4075 = vsel %vm1585, %v4073, %v4074
    %v4076 = vrot.slane %v2840, 2
    %v4077 = vsel %vm1585, %v4074, %v4076
    %v4081 = vadd.f32 %v4048, %v4075
    %v4082 = vadd.f32 %v4050, %v4077
    %v4083 = vadd.f32 %v4053, %v4076
    %v4084 = vadd.f32 %v4067, %v4068
    %v4085 = vsel %vm342, %v4069, 0.0
    %v4086 = vadd.f32 %v4084, %v4085
    %v4087 = vrot.slane %v4086, 4
    %v4088 = vadd.f32 %v4086, %v4087
    %v4089 = vrot.slane %v4088, 2
    %v4090 = vadd.f32 %v4088, %v4089
    %v4091 = vrot.slane %v4090, 1
    %v4092 = vadd.f32 %v4090, %v4091
    %v4093 = vrcp.pop 18.0
    %v4094 = vmul.f32 18.0, %v4093
    %v4095 = vsub.f32 1.0, %v4094
    %v4096 = vmul.f32 %v4093, %v4095
    %v4097 = vadd.f32 %v4093, %v4096
    %vm4098 = vweird.f32 %v4093
    %v4099 = vsel %vm4098, %v4093, %v4097
    %v4100 = vmul.f32 %v4092, %v4099
    %v4101 = vsub.f32 %v4067, %v4100
    %v4102 = vsub.f32 %v4068, %v4100
    %v4103 = vsub.f32 %v4069, %v4100
    %v4104 = vmul.f32 %v4101, %v4101
    %v4105 = vmul.f32 %v4102, %v4102
    %v4106 = vmul.f32 %v4103, %v4103
    %v4107 = vadd.f32 %v4104, %v4105
    %v4108 = vsel %vm342, %v4106, 0.0
    %v4109 = vadd.f32 %v4107, %v4108
    %v4110 = vrot.slane %v4109, 4
    %v4111 = vadd.f32 %v4109, %v4110
    %v4112 = vrot.slane %v4111, 2
    %v4113 = vadd.f32 %v4111, %v4112
    %v4114 = vrot.slane %v4113, 1
    %v4115 = vadd.f32 %v4113, %v4114
    %v4116 = vmul.f32 %v4115, %v4099
    %v4117 = vadd.f32 %v4116, 1e-05
    %v4118 = vrsqrt.pop %v4117
    %v4119 = vmul.f32 %v4118, %v4117
    %v4120 = vmul.f32 %v4119, %v4118
    %v4121 = vmul.f32 0.5, %v4120
    %v4122 = vsub.f32 1.5, %v4121
    %v4123 = vmul.f32 %v4118, %v4122
    %vm4124 = vweird.f32 %v4117
    %vm4125 = vweird.f32 %v4118
    %vm4126 = vmor %vm4124, %vm4125
    %v4127 = vsel %vm4126, %v4118, %v4123
    %v4128 = vmul.f32 %v4101, %v4127
    %v4129 = vmul.f32 %v4102, %v4127
    %v4130 = vmul.f32 %v4103, %v4127
    %s4131 = scalar_lea.vmem [#allocation8], 3
    %v4132 = vld [vmem:[%s4131] sm:$0x1]
    %v4134 = vperm.slane %v4132, 0
    %v4136 = vmul.f32 %v4128, %v4134
    %v4137 = vmul.f32 %v4129, %v4134
    %v4138 = vmul.f32 %v4130, %v4134
    %s4139 = scalar_lea.vmem [#allocation10], 3
    %v4140 = vld [vmem:[%s4139] sm:$0x1]
    %v4142 = vperm.slane %v4140, 0
    %v4144 = vadd.f32 %v4136, %v4142
    %v4145 = vadd.f32 %v4137, %v4142
    %v4146 = vadd.f32 %v4138, %v4142
    %4147 = vmatpush.msra.mxu0 %v339
    %4148 = vmatpush.msra.mxu0 %v338
    %4149 = vmatpush.msra.mxu0 %v337
    %4150 = vmatpush.msra.mxu0 %v336
    %4151 = vmatpush.msra.mxu0 %v335
    %4152 = vmatpush.msra.mxu0 %v334
    %4153 = vmatpush.msra.mxu0 %v333
    %4154 = vmatpush.msra.mxu0 %v332
    %4155 = vmatpush.msra.mxu0 %v331
    %4156 = vmatpush.msra.mxu0 %v330
    %4157 = vmatpush.msra.mxu0 %v329
    %4158 = vmatpush.msra.mxu0 %v328
    %4159 = vmatpush.msra.mxu0 %v327
    %4160 = vmatpush.msra.mxu0 %v326
    %4161 = vmatpush.msra.mxu0 %v325
    %4162 = vmatpush.msra.mxu0 %v324
    %4163 = vmatmul.f32.gmra.mxu0 %v4067
    %v4164 = vpop.f32.mrf.mxu0
    %v4165 = vadd.f32 0.0, %v4164
    %4166 = vmatmul.f32.gmra.mxu0 %v4068
    %v4167 = vpop.f32.mrf.mxu0
    %v4168 = vadd.f32 0.0, %v4167
    %4169 = vmatmul.f32.gmra.mxu0 %v4069
    %v4170 = vpop.f32.mrf.mxu0
    %v4171 = vadd.f32 0.0, %v4170
    %4172 = vdwg.mxu0
    %v4173 = vsub.f32 %v4067, %v4165
    %v4174 = vsub.f32 %v4068, %v4168
    %v4175 = vsub.f32 %v4069, %v4171
    %v4176 = vmul.f32 %v4173, %v4173
    %v4177 = vmul.f32 %v4174, %v4174
    %v4178 = vmul.f32 %v4175, %v4175
    %4179 = vmatpush.msra.mxu0 %v339
    %4180 = vmatpush.msra.mxu0 %v338
    %4181 = vmatpush.msra.mxu0 %v337
    %4182 = vmatpush.msra.mxu0 %v336
    %4183 = vmatpush.msra.mxu0 %v335
    %4184 = vmatpush.msra.mxu0 %v334
    %4185 = vmatpush.msra.mxu0 %v333
    %4186 = vmatpush.msra.mxu0 %v332
    %4187 = vmatpush.msra.mxu0 %v331
    %4188 = vmatpush.msra.mxu0 %v330
    %4189 = vmatpush.msra.mxu0 %v329
    %4190 = vmatpush.msra.mxu0 %v328
    %4191 = vmatpush.msra.mxu0 %v327
    %4192 = vmatpush.msra.mxu0 %v326
    %4193 = vmatpush.msra.mxu0 %v325
    %4194 = vmatpush.msra.mxu0 %v324
    %4195 = vmatmul.f32.gmra.mxu0 %v4176
    %v4196 = vpop.f32.mrf.mxu0
    %v4197 = vadd.f32 0.0, %v4196
    %4198 = vmatmul.f32.gmra.mxu0 %v4177
    %v4199 = vpop.f32.mrf.mxu0
    %v4200 = vadd.f32 0.0, %v4199
    %4201 = vmatmul.f32.gmra.mxu0 %v4178
    %v4202 = vpop.f32.mrf.mxu0
    %v4203 = vadd.f32 0.0, %v4202
    %4204 = vdwg.mxu0
    %v4205 = vmul.f32 %v4197, 1.1428572
    %v4206 = vmul.f32 %v4200, 1.1428572
    %v4207 = vmul.f32 %v4203, 1.1428572
    %v4208 = vadd.f32 %v4205, 1e-05
    %v4209 = vadd.f32 %v4206, 1e-05
    %v4210 = vadd.f32 %v4207, 1e-05
    %v4211 = vrsqrt.pop %v4208
    %v4212 = vmul.f32 %v4211, %v4208
    %v4213 = vmul.f32 %v4212, %v4211
    %v4214 = vmul.f32 0.5, %v4213
    %v4215 = vsub.f32 1.5, %v4214
    %v4216 = vmul.f32 %v4211, %v4215
    %vm4217 = vweird.f32 %v4208
    %vm4218 = vweird.f32 %v4211
    %vm4219 = vmor %vm4217, %vm4218
    %v4220 = vsel %vm4219, %v4211, %v4216
    %v4221 = vrsqrt.pop %v4209
    %v4222 = vmul.f32 %v4221, %v4209
    %v4223 = vmul.f32 %v4222, %v4221
    %v4224 = vmul.f32 0.5, %v4223
    %v4225 = vsub.f32 1.5, %v4224
    %v4226 = vmul.f32 %v4221, %v4225
    %vm4227 = vweird.f32 %v4209
    %vm4228 = vweird.f32 %v4221
    %vm4229 = vmor %vm4227, %vm4228
    %v4230 = vsel %vm4229, %v4221, %v4226
    %v4231 = vrsqrt.pop %v4210
    %v4232 = vmul.f32 %v4231, %v4210
    %v4233 = vmul.f32 %v4232, %v4231
    %v4234 = vmul.f32 0.5, %v4233
    %v4235 = vsub.f32 1.5, %v4234
    %v4236 = vmul.f32 %v4231, %v4235
    %vm4237 = vweird.f32 %v4210
    %vm4238 = vweird.f32 %v4231
    %vm4239 = vmor %vm4237, %vm4238
    %v4240 = vsel %vm4239, %v4231, %v4236
    %v4241 = vmul.f32 %v4173, %v4220
    %v4242 = vmul.f32 %v4174, %v4230
    %v4243 = vmul.f32 %v4175, %v4240
    %s4244 = scalar_lea.vmem [#allocation11], 3
    %v4245 = vld [vmem:[%s4244] sm:$0x1]
    %v4247 = vperm.slane %v4245, 0
    %v4249 = vmul.f32 %v4241, %v4247
    %v4250 = vmul.f32 %v4242, %v4247
    %v4251 = vmul.f32 %v4243, %v4247
    %s4252 = scalar_lea.vmem [#allocation13], 3
    %v4253 = vld [vmem:[%s4252] sm:$0x1]
    %v4255 = vperm.slane %v4253, 0
    %v4257 = vadd.f32 %v4249, %v4255
    %v4258 = vadd.f32 %v4250, %v4255
    %v4259 = vadd.f32 %v4251, %v4255
    %s4260 = scalar_lea.vmem [#allocation14], 1152
    %v4261 = vld [vmem:[%s4260] sm:$0xff]
    %v4262 = vld [vmem:[%s4260 + $0x8] sm:$0xff]
    %v4263 = vld [vmem:[%s4260 + $0x10] sm:$0xff]
    %v4264 = vld [vmem:[%s4260 + $0x18] sm:$0xff]
    %v4265 = vld [vmem:[%s4260 + $0x20] sm:$0xff]
    %v4266 = vld [vmem:[%s4260 + $0x28] sm:$0xff]
    %v4267 = vld [vmem:[%s4260 + $0x30] sm:$0xff]
    %v4268 = vld [vmem:[%s4260 + $0x38] sm:$0xff]
    %v4269 = vld [vmem:[%s4260 + $0x40] sm:$0xff]
    %v4270 = vld [vmem:[%s4260 + $0x48] sm:$0xff]
    %v4271 = vld [vmem:[%s4260 + $0x50] sm:$0xff]
    %v4272 = vld [vmem:[%s4260 + $0x58] sm:$0xff]
    %v4273 = vld [vmem:[%s4260 + $0x60] sm:$0xff]
    %v4274 = vld [vmem:[%s4260 + $0x68] sm:$0xff]
    %v4275 = vld [vmem:[%s4260 + $0x70] sm:$0xff]
    %v4276 = vld [vmem:[%s4260 + $0x78] sm:$0xff]
    %v4277 = vld [vmem:[%s4260 + $0x80] sm:$0xff]
    %v4278 = vld [vmem:[%s4260 + $0x88] sm:$0xff]
    %v4279 = vld [vmem:[%s4260 + $0x90] sm:$0xff]
    %v4280 = vld [vmem:[%s4260 + $0x98] sm:$0xff]
    %v4281 = vld [vmem:[%s4260 + $0xa0] sm:$0xff]
    %v4282 = vld [vmem:[%s4260 + $0xa8] sm:$0xff]
    %v4283 = vld [vmem:[%s4260 + $0xb0] sm:$0xff]
    %v4284 = vld [vmem:[%s4260 + $0xb8] sm:$0xff]
    %v4285 = vld [vmem:[%s4260 + $0xc0] sm:$0xff]
    %v4286 = vld [vmem:[%s4260 + $0xc8] sm:$0xff]
    %v4287 = vld [vmem:[%s4260 + $0xd0] sm:$0xff]
    %v4288 = vld [vmem:[%s4260 + $0xd8] sm:$0xff]
    %v4289 = vld [vmem:[%s4260 + $0xe0] sm:$0xff]
    %v4290 = vld [vmem:[%s4260 + $0xe8] sm:$0xff]
    %v4291 = vld [vmem:[%s4260 + $0xf0] sm:$0xff]
    %v4292 = vld [vmem:[%s4260 + $0xf8] sm:$0xff]
    %v4293 = vld [vmem:[%s4260 + $0x100] sm:$0xff]
    %v4294 = vld [vmem:[%s4260 + $0x108] sm:$0xff]
    %v4295 = vld [vmem:[%s4260 + $0x110] sm:$0xff]
    %v4296 = vld [vmem:[%s4260 + $0x118] sm:$0xff]
    %v4297 = vld [vmem:[%s4260 + $0x120] sm:$0xff]
    %v4298 = vld [vmem:[%s4260 + $0x128] sm:$0xff]
    %v4299 = vld [vmem:[%s4260 + $0x130] sm:$0xff]
    %v4300 = vld [vmem:[%s4260 + $0x138] sm:$0xff]
    %v4301 = vld [vmem:[%s4260 + $0x140] sm:$0xff]
    %v4302 = vld [vmem:[%s4260 + $0x148] sm:$0xff]
    %v4303 = vld [vmem:[%s4260 + $0x150] sm:$0xff]
    %v4304 = vld [vmem:[%s4260 + $0x158] sm:$0xff]
    %v4305 = vld [vmem:[%s4260 + $0x160] sm:$0xff]
    %v4306 = vld [vmem:[%s4260 + $0x168] sm:$0xff]
    %v4307 = vld [vmem:[%s4260 + $0x170] sm:$0xff]
    %v4308 = vld [vmem:[%s4260 + $0x178] sm:$0xff]
    %v4309 = vpack.c.bf16 %v4068, %v4067
    %v4310 = vpack.c.bf16 %v4145, %v4144
    %v4311 = vpack.c.bf16 %v4258, %v4257
    %s4312 = scalar_lea.vmem [#allocation16], 1152
    %v4313 = vld [vmem:[%s4312] sm:$0xff]
    %v4314 = vld [vmem:[%s4312 + $0x8] sm:$0xff]
    %v4315 = vld [vmem:[%s4312 + $0x10] sm:$0xff]
    %v4316 = vld [vmem:[%s4312 + $0x18] sm:$0xff]
    %v4317 = vld [vmem:[%s4312 + $0x20] sm:$0xff]
    %v4318 = vld [vmem:[%s4312 + $0x28] sm:$0xff]
    %v4319 = vld [vmem:[%s4312 + $0x30] sm:$0xff]
    %v4320 = vld [vmem:[%s4312 + $0x38] sm:$0xff]
    %v4321 = vld [vmem:[%s4312 + $0x40] sm:$0xff]
    %v4322 = vld [vmem:[%s4312 + $0x48] sm:$0xff]
    %v4323 = vld [vmem:[%s4312 + $0x50] sm:$0xff]
    %v4324 = vld [vmem:[%s4312 + $0x58] sm:$0xff]
    %v4325 = vld [vmem:[%s4312 + $0x60] sm:$0xff]
    %v4326 = vld [vmem:[%s4312 + $0x68] sm:$0xff]
    %v4327 = vld [vmem:[%s4312 + $0x70] sm:$0xff]
    %v4328 = vld [vmem:[%s4312 + $0x78] sm:$0xff]
    %v4329 = vld [vmem:[%s4312 + $0x80] sm:$0xff]
    %v4330 = vld [vmem:[%s4312 + $0x88] sm:$0xff]
    %v4331 = vld [vmem:[%s4312 + $0x90] sm:$0xff]
    %v4332 = vld [vmem:[%s4312 + $0x98] sm:$0xff]
    %v4333 = vld [vmem:[%s4312 + $0xa0] sm:$0xff]
    %v4334 = vld [vmem:[%s4312 + $0xa8] sm:$0xff]
    %v4335 = vld [vmem:[%s4312 + $0xb0] sm:$0xff]
    %v4336 = vld [vmem:[%s4312 + $0xb8] sm:$0xff]
    %v4337 = vld [vmem:[%s4312 + $0xc0] sm:$0xff]
    %v4338 = vld [vmem:[%s4312 + $0xc8] sm:$0xff]
    %v4339 = vld [vmem:[%s4312 + $0xd0] sm:$0xff]
    %v4340 = vld [vmem:[%s4312 + $0xd8] sm:$0xff]
    %v4341 = vld [vmem:[%s4312 + $0xe0] sm:$0xff]
    %v4342 = vld [vmem:[%s4312 + $0xe8] sm:$0xff]
    %v4343 = vld [vmem:[%s4312 + $0xf0] sm:$0xff]
    %v4344 = vld [vmem:[%s4312 + $0xf8] sm:$0xff]
    %v4345 = vld [vmem:[%s4312 + $0x100] sm:$0xff]
    %v4346 = vld [vmem:[%s4312 + $0x108] sm:$0xff]
    %v4347 = vld [vmem:[%s4312 + $0x110] sm:$0xff]
    %v4348 = vld [vmem:[%s4312 + $0x118] sm:$0xff]
    %v4349 = vld [vmem:[%s4312 + $0x120] sm:$0xff]
    %v4350 = vld [vmem:[%s4312 + $0x128] sm:$0xff]
    %v4351 = vld [vmem:[%s4312 + $0x130] sm:$0xff]
    %v4352 = vld [vmem:[%s4312 + $0x138] sm:$0xff]
    %v4353 = vld [vmem:[%s4312 + $0x140] sm:$0xff]
    %v4354 = vld [vmem:[%s4312 + $0x148] sm:$0xff]
    %v4355 = vld [vmem:[%s4312 + $0x150] sm:$0xff]
    %v4356 = vld [vmem:[%s4312 + $0x158] sm:$0xff]
    %v4357 = vld [vmem:[%s4312 + $0x160] sm:$0xff]
    %v4358 = vld [vmem:[%s4312 + $0x168] sm:$0xff]
    %v4359 = vld [vmem:[%s4312 + $0x170] sm:$0xff]
    %v4360 = vld [vmem:[%s4312 + $0x178] sm:$0xff]
    %v4361 = vpack.c.bf16 %v4069, %v4069
    %v4362 = vpack.c.bf16 %v4146, %v4146
    %v4363 = vpack.c.bf16 %v4259, %v4259
    %v4370 = vrot.slane %v4309, 2
    %v4371 = vrot.slane %v4361, 2
    %v4372 = vsel %vm1883, %v4370, %v4371
    %v4373 = vrot.slane %v4310, 2
    %v4374 = vrot.slane %v4362, 2
    %v4375 = vsel %vm1883, %v4373, %v4374
    %v4376 = vrot.slane %v4311, 2
    %v4377 = vrot.slane %v4363, 2
    %v4378 = vsel %vm1883, %v4376, %v4377
    %v4430 = vunpack.c.l.b16 %v4313
    %v4431 = vunpack.c.h.b16 %v4313
    %v4432 = vunpack.c.l.b16 %v4314
    %v4433 = vunpack.c.h.b16 %v4314
    %v4434 = vunpack.c.l.b16 %v4315
    %v4435 = vunpack.c.h.b16 %v4315
    %v4436 = vunpack.c.l.b16 %v4316
    %v4437 = vunpack.c.h.b16 %v4316
    %v4438 = vunpack.c.l.b16 %v4317
    %v4439 = vunpack.c.h.b16 %v4317
    %v4440 = vunpack.c.l.b16 %v4318
    %v4441 = vunpack.c.h.b16 %v4318
    %v4442 = vunpack.c.l.b16 %v4319
    %v4443 = vunpack.c.h.b16 %v4319
    %v4444 = vunpack.c.l.b16 %v4320
    %v4445 = vunpack.c.h.b16 %v4320
    %v4446 = vunpack.c.l.b16 %v4321
    %v4447 = vunpack.c.h.b16 %v4321
    %v4448 = vunpack.c.l.b16 %v4322
    %v4449 = vunpack.c.h.b16 %v4322
    %v4450 = vunpack.c.l.b16 %v4323
    %v4451 = vunpack.c.h.b16 %v4323
    %v4452 = vunpack.c.l.b16 %v4324
    %v4453 = vunpack.c.h.b16 %v4324
    %v4454 = vunpack.c.l.b16 %v4325
    %v4455 = vunpack.c.h.b16 %v4325
    %v4456 = vunpack.c.l.b16 %v4326
    %v4457 = vunpack.c.h.b16 %v4326
    %v4458 = vunpack.c.l.b16 %v4327
    %v4459 = vunpack.c.h.b16 %v4327
    %v4460 = vunpack.c.l.b16 %v4328
    %v4461 = vunpack.c.h.b16 %v4328
    %v4462 = vunpack.c.l.b16 %v4329
    %v4463 = vunpack.c.h.b16 %v4329
    %v4464 = vunpack.c.l.b16 %v4330
    %v4465 = vunpack.c.h.b16 %v4330
    %v4466 = vunpack.c.l.b16 %v4331
    %v4467 = vunpack.c.h.b16 %v4331
    %v4468 = vunpack.c.l.b16 %v4332
    %v4469 = vunpack.c.h.b16 %v4332
    %v4470 = vunpack.c.l.b16 %v4333
    %v4471 = vunpack.c.h.b16 %v4333
    %v4472 = vunpack.c.l.b16 %v4334
    %v4473 = vunpack.c.h.b16 %v4334
    %v4474 = vunpack.c.l.b16 %v4335
    %v4475 = vunpack.c.h.b16 %v4335
    %v4476 = vunpack.c.l.b16 %v4336
    %v4477 = vunpack.c.h.b16 %v4336
    %v4478 = vunpack.c.l.b16 %v4337
    %v4479 = vunpack.c.h.b16 %v4337
    %v4480 = vunpack.c.l.b16 %v4338
    %v4481 = vunpack.c.h.b16 %v4338
    %v4482 = vunpack.c.l.b16 %v4339
    %v4483 = vunpack.c.h.b16 %v4339
    %v4484 = vunpack.c.l.b16 %v4340
    %v4485 = vunpack.c.h.b16 %v4340
    %v4486 = vunpack.c.l.b16 %v4341
    %v4487 = vunpack.c.h.b16 %v4341
    %v4488 = vunpack.c.l.b16 %v4342
    %v4489 = vunpack.c.h.b16 %v4342
    %v4490 = vunpack.c.l.b16 %v4343
    %v4491 = vunpack.c.h.b16 %v4343
    %v4492 = vunpack.c.l.b16 %v4344
    %v4493 = vunpack.c.h.b16 %v4344
    %v4494 = vunpack.c.l.b16 %v4345
    %v4495 = vunpack.c.h.b16 %v4345
    %v4496 = vunpack.c.l.b16 %v4346
    %v4497 = vunpack.c.h.b16 %v4346
    %v4498 = vunpack.c.l.b16 %v4347
    %v4499 = vunpack.c.h.b16 %v4347
    %v4500 = vunpack.c.l.b16 %v4348
    %v4501 = vunpack.c.h.b16 %v4348
    %v4502 = vunpack.c.l.b16 %v4349
    %v4503 = vunpack.c.h.b16 %v4349
    %v4504 = vunpack.c.l.b16 %v4350
    %v4505 = vunpack.c.h.b16 %v4350
    %v4506 = vunpack.c.l.b16 %v4351
    %v4507 = vunpack.c.h.b16 %v4351
    %v4508 = vunpack.c.l.b16 %v4352
    %v4509 = vunpack.c.h.b16 %v4352
    %v4510 = vunpack.c.l.b16 %v4353
    %v4511 = vunpack.c.h.b16 %v4353
    %v4512 = vunpack.c.l.b16 %v4354
    %v4513 = vunpack.c.h.b16 %v4354
    %v4514 = vunpack.c.l.b16 %v4355
    %v4515 = vunpack.c.h.b16 %v4355
    %v4516 = vunpack.c.l.b16 %v4356
    %v4517 = vunpack.c.h.b16 %v4356
    %v4518 = vunpack.c.l.b16 %v4357
    %v4519 = vunpack.c.h.b16 %v4357
    %v4520 = vunpack.c.l.b16 %v4358
    %v4521 = vunpack.c.h.b16 %v4358
    %v4522 = vunpack.c.l.b16 %v4359
    %v4523 = vunpack.c.h.b16 %v4359
    %v4524 = vunpack.c.l.b16 %v4360
    %v4525 = vunpack.c.h.b16 %v4360
    %v4526 = vpack.c.b16 %v4432, %v4430
    %v4527 = vpack.c.b16 %v4433, %v4431
    %v4528 = vpack.c.b16 %v4436, %v4434
    %v4529 = vpack.c.b16 %v4437, %v4435
    %v4530 = vpack.c.b16 %v4440, %v4438
    %v4531 = vpack.c.b16 %v4441, %v4439
    %v4532 = vpack.c.b16 %v4444, %v4442
    %v4533 = vpack.c.b16 %v4445, %v4443
    %v4534 = vpack.c.b16 %v4448, %v4446
    %v4535 = vpack.c.b16 %v4449, %v4447
    %v4536 = vpack.c.b16 %v4452, %v4450
    %v4537 = vpack.c.b16 %v4453, %v4451
    %v4538 = vpack.c.b16 %v4456, %v4454
    %v4539 = vpack.c.b16 %v4457, %v4455
    %v4540 = vpack.c.b16 %v4460, %v4458
    %v4541 = vpack.c.b16 %v4461, %v4459
    %v4542 = vpack.c.b16 %v4464, %v4462
    %v4543 = vpack.c.b16 %v4465, %v4463
    %v4544 = vpack.c.b16 %v4468, %v4466
    %v4545 = vpack.c.b16 %v4469, %v4467
    %v4546 = vpack.c.b16 %v4472, %v4470
    %v4547 = vpack.c.b16 %v4473, %v4471
    %v4548 = vpack.c.b16 %v4476, %v4474
    %v4549 = vpack.c.b16 %v4477, %v4475
    %v4550 = vpack.c.b16 %v4480, %v4478
    %v4551 = vpack.c.b16 %v4481, %v4479
    %v4552 = vpack.c.b16 %v4484, %v4482
    %v4553 = vpack.c.b16 %v4485, %v4483
    %v4554 = vpack.c.b16 %v4488, %v4486
    %v4555 = vpack.c.b16 %v4489, %v4487
    %v4556 = vpack.c.b16 %v4492, %v4490
    %v4557 = vpack.c.b16 %v4493, %v4491
    %v4558 = vpack.c.b16 %v4496, %v4494
    %v4559 = vpack.c.b16 %v4497, %v4495
    %v4560 = vpack.c.b16 %v4500, %v4498
    %v4561 = vpack.c.b16 %v4501, %v4499
    %v4562 = vpack.c.b16 %v4504, %v4502
    %v4563 = vpack.c.b16 %v4505, %v4503
    %v4564 = vpack.c.b16 %v4508, %v4506
    %v4565 = vpack.c.b16 %v4509, %v4507
    %v4566 = vpack.c.b16 %v4512, %v4510
    %v4567 = vpack.c.b16 %v4513, %v4511
    %v4568 = vpack.c.b16 %v4516, %v4514
    %v4569 = vpack.c.b16 %v4517, %v4515
    %v4570 = vpack.c.b16 %v4520, %v4518
    %v4571 = vpack.c.b16 %v4521, %v4519
    %v4572 = vpack.c.b16 %v4524, %v4522
    %v4573 = vpack.c.b16 %v4525, %v4523
    %4622 = vmatpush.bf16.msra.mxu0 %v4540
    %4623 = vmatpush.bf16.msra.mxu0 %v4538
    %4624 = vmatpush.bf16.msra.mxu0 %v4536
    %4625 = vmatpush.bf16.msra.mxu0 %v4534
    %4626 = vmatpush.bf16.msra.mxu0 %v4532
    %4627 = vmatpush.bf16.msra.mxu0 %v4530
    %4628 = vmatpush.bf16.msra.mxu0 %v4528
    %4629 = vmatpush.bf16.msra.mxu0 %v4526
    %4630 = vmatmul.bf16.gmra.mxu0 %v4372
    %v4631 = vpop.f32.mrf.mxu0
    %v4632 = vadd.f32 0.0, %v4631
    %v4633 = vpop.f32.mrf.mxu0
    %v4634 = vadd.f32 0.0, %v4633
    %4635 = vdwg.mxu0
    %4636 = vmatpush.bf16.msra.mxu0 %v4556
    %4637 = vmatpush.bf16.msra.mxu0 %v4554
    %4638 = vmatpush.bf16.msra.mxu0 %v4552
    %4639 = vmatpush.bf16.msra.mxu0 %v4550
    %4640 = vmatpush.bf16.msra.mxu0 %v4548
    %4641 = vmatpush.bf16.msra.mxu0 %v4546
    %4642 = vmatpush.bf16.msra.mxu0 %v4544
    %4643 = vmatpush.bf16.msra.mxu0 %v4542
    %4644 = vmatmul.bf16.gmra.mxu0 %v4375
    %v4645 = vpop.f32.mrf.mxu0
    %v4646 = vadd.f32 %v4632, %v4645
    %v4647 = vpop.f32.mrf.mxu0
    %v4648 = vadd.f32 %v4634, %v4647
    %4649 = vdwg.mxu0
    %4650 = vmatpush.bf16.msra.mxu0 %v4572
    %4651 = vmatpush.bf16.msra.mxu0 %v4570
    %4652 = vmatpush.bf16.msra.mxu0 %v4568
    %4653 = vmatpush.bf16.msra.mxu0 %v4566
    %4654 = vmatpush.bf16.msra.mxu0 %v4564
    %4655 = vmatpush.bf16.msra.mxu0 %v4562
    %4656 = vmatpush.bf16.msra.mxu0 %v4560
    %4657 = vmatpush.bf16.msra.mxu0 %v4558
    %4658 = vmatmul.bf16.gmra.mxu0 %v4378
    %v4659 = vpop.f32.mrf.mxu0
    %v4660 = vadd.f32 %v4646, %v4659
    %v4661 = vpop.f32.mrf.mxu0
    %v4662 = vadd.f32 %v4648, %v4661
    %4663 = vdwg.mxu0
    %4664 = vmatpush.bf16.msra.mxu0 %v4541
    %4665 = vmatpush.bf16.msra.mxu0 %v4539
    %4666 = vmatpush.bf16.msra.mxu0 %v4537
    %4667 = vmatpush.bf16.msra.mxu0 %v4535
    %4668 = vmatpush.bf16.msra.mxu0 %v4533
    %4669 = vmatpush.bf16.msra.mxu0 %v4531
    %4670 = vmatpush.bf16.msra.mxu0 %v4529
    %4671 = vmatpush.bf16.msra.mxu0 %v4527
    %4672 = vmatmul.bf16.gmra.mxu0 %v4372
    %v4673 = vpop.f32.mrf.mxu0
    %v4674 = vadd.f32 0.0, %v4673
    %v4675 = vpop.f32.mrf.mxu0
    %v4676 = vadd.f32 0.0, %v4675
    %4677 = vdwg.mxu0
    %4678 = vmatpush.bf16.msra.mxu0 %v4557
    %4679 = vmatpush.bf16.msra.mxu0 %v4555
    %4680 = vmatpush.bf16.msra.mxu0 %v4553
    %4681 = vmatpush.bf16.msra.mxu0 %v4551
    %4682 = vmatpush.bf16.msra.mxu0 %v4549
    %4683 = vmatpush.bf16.msra.mxu0 %v4547
    %4684 = vmatpush.bf16.msra.mxu0 %v4545
    %4685 = vmatpush.bf16.msra.mxu0 %v4543
    %4686 = vmatmul.bf16.gmra.mxu0 %v4375
    %v4687 = vpop.f32.mrf.mxu0
    %v4688 = vadd.f32 %v4674, %v4687
    %v4689 = vpop.f32.mrf.mxu0
    %v4690 = vadd.f32 %v4676, %v4689
    %4691 = vdwg.mxu0
    %4692 = vmatpush.bf16.msra.mxu0 %v4573
    %4693 = vmatpush.bf16.msra.mxu0 %v4571
    %4694 = vmatpush.bf16.msra.mxu0 %v4569
    %4695 = vmatpush.bf16.msra.mxu0 %v4567
    %4696 = vmatpush.bf16.msra.mxu0 %v4565
    %4697 = vmatpush.bf16.msra.mxu0 %v4563
    %4698 = vmatpush.bf16.msra.mxu0 %v4561
    %4699 = vmatpush.bf16.msra.mxu0 %v4559
    %4700 = vmatmul.bf16.gmra.mxu0 %v4378
    %v4701 = vpop.f32.mrf.mxu0
    %v4702 = vadd.f32 %v4688, %v4701
    %v4703 = vpop.f32.mrf.mxu0
    %v4704 = vadd.f32 %v4690, %v4703
    %4705 = vdwg.mxu0
    %v4754 = vunpack.c.l.b16 %v4261
    %v4755 = vunpack.c.h.b16 %v4261
    %v4756 = vunpack.c.l.b16 %v4262
    %v4757 = vunpack.c.h.b16 %v4262
    %v4758 = vunpack.c.l.b16 %v4263
    %v4759 = vunpack.c.h.b16 %v4263
    %v4760 = vunpack.c.l.b16 %v4264
    %v4761 = vunpack.c.h.b16 %v4264
    %v4762 = vunpack.c.l.b16 %v4265
    %v4763 = vunpack.c.h.b16 %v4265
    %v4764 = vunpack.c.l.b16 %v4266
    %v4765 = vunpack.c.h.b16 %v4266
    %v4766 = vunpack.c.l.b16 %v4267
    %v4767 = vunpack.c.h.b16 %v4267
    %v4768 = vunpack.c.l.b16 %v4268
    %v4769 = vunpack.c.h.b16 %v4268
    %v4770 = vunpack.c.l.b16 %v4269
    %v4771 = vunpack.c.h.b16 %v4269
    %v4772 = vunpack.c.l.b16 %v4270
    %v4773 = vunpack.c.h.b16 %v4270
    %v4774 = vunpack.c.l.b16 %v4271
    %v4775 = vunpack.c.h.b16 %v4271
    %v4776 = vunpack.c.l.b16 %v4272
    %v4777 = vunpack.c.h.b16 %v4272
    %v4778 = vunpack.c.l.b16 %v4273
    %v4779 = vunpack.c.h.b16 %v4273
    %v4780 = vunpack.c.l.b16 %v4274
    %v4781 = vunpack.c.h.b16 %v4274
    %v4782 = vunpack.c.l.b16 %v4275
    %v4783 = vunpack.c.h.b16 %v4275
    %v4784 = vunpack.c.l.b16 %v4276
    %v4785 = vunpack.c.h.b16 %v4276
    %v4786 = vunpack.c.l.b16 %v4277
    %v4787 = vunpack.c.h.b16 %v4277
    %v4788 = vunpack.c.l.b16 %v4278
    %v4789 = vunpack.c.h.b16 %v4278
    %v4790 = vunpack.c.l.b16 %v4279
    %v4791 = vunpack.c.h.b16 %v4279
    %v4792 = vunpack.c.l.b16 %v4280
    %v4793 = vunpack.c.h.b16 %v4280
    %v4794 = vunpack.c.l.b16 %v4281
    %v4795 = vunpack.c.h.b16 %v4281
    %v4796 = vunpack.c.l.b16 %v4282
    %v4797 = vunpack.c.h.b16 %v4282
    %v4798 = vunpack.c.l.b16 %v4283
    %v4799 = vunpack.c.h.b16 %v4283
    %v4800 = vunpack.c.l.b16 %v4284
    %v4801 = vunpack.c.h.b16 %v4284
    %v4802 = vunpack.c.l.b16 %v4285
    %v4803 = vunpack.c.h.b16 %v4285
    %v4804 = vunpack.c.l.b16 %v4286
    %v4805 = vunpack.c.h.b16 %v4286
    %v4806 = vunpack.c.l.b16 %v4287
    %v4807 = vunpack.c.h.b16 %v4287
    %v4808 = vunpack.c.l.b16 %v4288
    %v4809 = vunpack.c.h.b16 %v4288
    %v4810 = vunpack.c.l.b16 %v4289
    %v4811 = vunpack.c.h.b16 %v4289
    %v4812 = vunpack.c.l.b16 %v4290
    %v4813 = vunpack.c.h.b16 %v4290
    %v4814 = vunpack.c.l.b16 %v4291
    %v4815 = vunpack.c.h.b16 %v4291
    %v4816 = vunpack.c.l.b16 %v4292
    %v4817 = vunpack.c.h.b16 %v4292
    %v4818 = vunpack.c.l.b16 %v4293
    %v4819 = vunpack.c.h.b16 %v4293
    %v4820 = vunpack.c.l.b16 %v4294
    %v4821 = vunpack.c.h.b16 %v4294
    %v4822 = vunpack.c.l.b16 %v4295
    %v4823 = vunpack.c.h.b16 %v4295
    %v4824 = vunpack.c.l.b16 %v4296
    %v4825 = vunpack.c.h.b16 %v4296
    %v4826 = vunpack.c.l.b16 %v4297
    %v4827 = vunpack.c.h.b16 %v4297
    %v4828 = vunpack.c.l.b16 %v4298
    %v4829 = vunpack.c.h.b16 %v4298
    %v4830 = vunpack.c.l.b16 %v4299
    %v4831 = vunpack.c.h.b16 %v4299
    %v4832 = vunpack.c.l.b16 %v4300
    %v4833 = vunpack.c.h.b16 %v4300
    %v4834 = vunpack.c.l.b16 %v4301
    %v4835 = vunpack.c.h.b16 %v4301
    %v4836 = vunpack.c.l.b16 %v4302
    %v4837 = vunpack.c.h.b16 %v4302
    %v4838 = vunpack.c.l.b16 %v4303
    %v4839 = vunpack.c.h.b16 %v4303
    %v4840 = vunpack.c.l.b16 %v4304
    %v4841 = vunpack.c.h.b16 %v4304
    %v4842 = vunpack.c.l.b16 %v4305
    %v4843 = vunpack.c.h.b16 %v4305
    %v4844 = vunpack.c.l.b16 %v4306
    %v4845 = vunpack.c.h.b16 %v4306
    %v4846 = vunpack.c.l.b16 %v4307
    %v4847 = vunpack.c.h.b16 %v4307
    %v4848 = vunpack.c.l.b16 %v4308
    %v4849 = vunpack.c.h.b16 %v4308
    %v4850 = vpack.c.b16 %v4756, %v4754
    %v4851 = vpack.c.b16 %v4757, %v4755
    %v4852 = vpack.c.b16 %v4760, %v4758
    %v4853 = vpack.c.b16 %v4761, %v4759
    %v4854 = vpack.c.b16 %v4764, %v4762
    %v4855 = vpack.c.b16 %v4765, %v4763
    %v4856 = vpack.c.b16 %v4768, %v4766
    %v4857 = vpack.c.b16 %v4769, %v4767
    %v4858 = vpack.c.b16 %v4772, %v4770
    %v4859 = vpack.c.b16 %v4773, %v4771
    %v4860 = vpack.c.b16 %v4776, %v4774
    %v4861 = vpack.c.b16 %v4777, %v4775
    %v4862 = vpack.c.b16 %v4780, %v4778
    %v4863 = vpack.c.b16 %v4781, %v4779
    %v4864 = vpack.c.b16 %v4784, %v4782
    %v4865 = vpack.c.b16 %v4785, %v4783
    %v4866 = vpack.c.b16 %v4788, %v4786
    %v4867 = vpack.c.b16 %v4789, %v4787
    %v4868 = vpack.c.b16 %v4792, %v4790
    %v4869 = vpack.c.b16 %v4793, %v4791
    %v4870 = vpack.c.b16 %v4796, %v4794
    %v4871 = vpack.c.b16 %v4797, %v4795
    %v4872 = vpack.c.b16 %v4800, %v4798
    %v4873 = vpack.c.b16 %v4801, %v4799
    %v4874 = vpack.c.b16 %v4804, %v4802
    %v4875 = vpack.c.b16 %v4805, %v4803
    %v4876 = vpack.c.b16 %v4808, %v4806
    %v4877 = vpack.c.b16 %v4809, %v4807
    %v4878 = vpack.c.b16 %v4812, %v4810
    %v4879 = vpack.c.b16 %v4813, %v4811
    %v4880 = vpack.c.b16 %v4816, %v4814
    %v4881 = vpack.c.b16 %v4817, %v4815
    %v4882 = vpack.c.b16 %v4820, %v4818
    %v4883 = vpack.c.b16 %v4821, %v4819
    %v4884 = vpack.c.b16 %v4824, %v4822
    %v4885 = vpack.c.b16 %v4825, %v4823
    %v4886 = vpack.c.b16 %v4828, %v4826
    %v4887 = vpack.c.b16 %v4829, %v4827
    %v4888 = vpack.c.b16 %v4832, %v4830
    %v4889 = vpack.c.b16 %v4833, %v4831
    %v4890 = vpack.c.b16 %v4836, %v4834
    %v4891 = vpack.c.b16 %v4837, %v4835
    %v4892 = vpack.c.b16 %v4840, %v4838
    %v4893 = vpack.c.b16 %v4841, %v4839
    %v4894 = vpack.c.b16 %v4844, %v4842
    %v4895 = vpack.c.b16 %v4845, %v4843
    %v4896 = vpack.c.b16 %v4848, %v4846
    %v4897 = vpack.c.b16 %v4849, %v4847
    %4946 = vmatpush.bf16.msra.mxu0 %v4864
    %4947 = vmatpush.bf16.msra.mxu0 %v4862
    %4948 = vmatpush.bf16.msra.mxu0 %v4860
    %4949 = vmatpush.bf16.msra.mxu0 %v4858
    %4950 = vmatpush.bf16.msra.mxu0 %v4856
    %4951 = vmatpush.bf16.msra.mxu0 %v4854
    %4952 = vmatpush.bf16.msra.mxu0 %v4852
    %4953 = vmatpush.bf16.msra.mxu0 %v4850
    %4954 = vmatmul.bf16.gmra.mxu0 %v4309
    %v4955 = vpop.f32.mrf.mxu0
    %v4956 = vadd.f32 %v4660, %v4955
    %v4957 = vpop.f32.mrf.mxu0
    %v4958 = vadd.f32 %v4662, %v4957
    %4959 = vdwg.mxu0
    %4960 = vmatpush.bf16.msra.mxu0 %v4880
    %4961 = vmatpush.bf16.msra.mxu0 %v4878
    %4962 = vmatpush.bf16.msra.mxu0 %v4876
    %4963 = vmatpush.bf16.msra.mxu0 %v4874
    %4964 = vmatpush.bf16.msra.mxu0 %v4872
    %4965 = vmatpush.bf16.msra.mxu0 %v4870
    %4966 = vmatpush.bf16.msra.mxu0 %v4868
    %4967 = vmatpush.bf16.msra.mxu0 %v4866
    %4968 = vmatmul.bf16.gmra.mxu0 %v4310
    %v4969 = vpop.f32.mrf.mxu0
    %v4970 = vadd.f32 %v4956, %v4969
    %v4971 = vpop.f32.mrf.mxu0
    %v4972 = vadd.f32 %v4958, %v4971
    %4973 = vdwg.mxu0
    %4974 = vmatpush.bf16.msra.mxu0 %v4896
    %4975 = vmatpush.bf16.msra.mxu0 %v4894
    %4976 = vmatpush.bf16.msra.mxu0 %v4892
    %4977 = vmatpush.bf16.msra.mxu0 %v4890
    %4978 = vmatpush.bf16.msra.mxu0 %v4888
    %4979 = vmatpush.bf16.msra.mxu0 %v4886
    %4980 = vmatpush.bf16.msra.mxu0 %v4884
    %4981 = vmatpush.bf16.msra.mxu0 %v4882
    %4982 = vmatmul.bf16.gmra.mxu0 %v4311
    %v4983 = vpop.f32.mrf.mxu0
    %v4984 = vadd.f32 %v4970, %v4983
    %v4985 = vpop.f32.mrf.mxu0
    %v4986 = vadd.f32 %v4972, %v4985
    %4987 = vdwg.mxu0
    %4988 = vmatpush.bf16.msra.mxu0 %v4865
    %4989 = vmatpush.bf16.msra.mxu0 %v4863
    %4990 = vmatpush.bf16.msra.mxu0 %v4861
    %4991 = vmatpush.bf16.msra.mxu0 %v4859
    %4992 = vmatpush.bf16.msra.mxu0 %v4857
    %4993 = vmatpush.bf16.msra.mxu0 %v4855
    %4994 = vmatpush.bf16.msra.mxu0 %v4853
    %4995 = vmatpush.bf16.msra.mxu0 %v4851
    %4996 = vmatmul.bf16.gmra.mxu0 %v4309
    %v4997 = vpop.f32.mrf.mxu0
    %v4998 = vadd.f32 %v4702, %v4997
    %v4999 = vpop.f32.mrf.mxu0
    %v5000 = vadd.f32 %v4704, %v4999
    %5001 = vdwg.mxu0
    %5002 = vmatpush.bf16.msra.mxu0 %v4881
    %5003 = vmatpush.bf16.msra.mxu0 %v4879
    %5004 = vmatpush.bf16.msra.mxu0 %v4877
    %5005 = vmatpush.bf16.msra.mxu0 %v4875
    %5006 = vmatpush.bf16.msra.mxu0 %v4873
    %5007 = vmatpush.bf16.msra.mxu0 %v4871
    %5008 = vmatpush.bf16.msra.mxu0 %v4869
    %5009 = vmatpush.bf16.msra.mxu0 %v4867
    %5010 = vmatmul.bf16.gmra.mxu0 %v4310
    %v5011 = vpop.f32.mrf.mxu0
    %v5012 = vadd.f32 %v4998, %v5011
    %v5013 = vpop.f32.mrf.mxu0
    %v5014 = vadd.f32 %v5000, %v5013
    %5015 = vdwg.mxu0
    %5016 = vmatpush.bf16.msra.mxu0 %v4897
    %5017 = vmatpush.bf16.msra.mxu0 %v4895
    %5018 = vmatpush.bf16.msra.mxu0 %v4893
    %5019 = vmatpush.bf16.msra.mxu0 %v4891
    %5020 = vmatpush.bf16.msra.mxu0 %v4889
    %5021 = vmatpush.bf16.msra.mxu0 %v4887
    %5022 = vmatpush.bf16.msra.mxu0 %v4885
    %5023 = vmatpush.bf16.msra.mxu0 %v4883
    %5024 = vmatmul.bf16.gmra.mxu0 %v4311
    %v5025 = vpop.f32.mrf.mxu0
    %v5026 = vadd.f32 %v5012, %v5025
    %v5027 = vpop.f32.mrf.mxu0
    %v5028 = vadd.f32 %v5014, %v5027
    %5029 = vdwg.mxu0
    %s5030 = scalar_lea.vmem [#allocation17], 6
    %v5031 = vld [vmem:[%s5030] sm:$0x3]
    %v5033 = vperm.slane %v5031, 0
    %v5034 = vperm.slane %v5031, 1
    %v5037 = vadd.f32 %v4984, %v5033
    %v5038 = vadd.f32 %v5026, %v5034
    %v5039 = vadd.f32 %v4986, %v5033
    %v5040 = vadd.f32 %v5028, %v5034
    %v5041 = vtanh.pop %v5037
    %v5042 = vtanh.pop %v5039
    %v5043 = vxor.u32 %v5038, 2147483648
    %v5044 = vxor.u32 %v5040, 2147483648
    %v5045 = vmul.f32 %v5043, 1.442695
    %v5046 = vpow.pop %v5045
    %v5047 = vmul.f32 %v5044, 1.442695
    %v5048 = vpow.pop %v5047
    %v5049 = vadd.f32 %v5046, 1.0
    %v5050 = vadd.f32 %v5048, 1.0
    %v5051 = vrcp.pop %v5049
    %v5052 = vmul.f32 %v5049, %v5051
    %v5053 = vsub.f32 1.0, %v5052
    %v5054 = vmul.f32 %v5051, %v5053
    %v5055 = vadd.f32 %v5051, %v5054
    %vm5056 = vweird.f32 %v5049
    %vm5057 = vweird.f32 %v5051
    %vm5058 = vmor %vm5056, %vm5057
    %v5059 = vsel %vm5058, %v5051, %v5055
    %v5060 = vand.u32 2147483647, %v5049
    %vm5061 = vcmp.eq.f32.partialorder %v5060, 8.507059e+37
    %v5062 = vand.u32 %v5049, 2147483648
    %v5063 = vor.u32 1.1754944e-38, %v5062
    %v5064 = vsel %vm5061, %v5063, %v5059
    %v5065 = vmul.f32 1.0, %v5064
    %v5066 = vrcp.pop %v5050
    %v5067 = vmul.f32 %v5050, %v5066
    %v5068 = vsub.f32 1.0, %v5067
    %v5069 = vmul.f32 %v5066, %v5068
    %v5070 = vadd.f32 %v5066, %v5069
    %vm5071 = vweird.f32 %v5050
    %vm5072 = vweird.f32 %v5066
    %vm5073 = vmor %vm5071, %vm5072
    %v5074 = vsel %vm5073, %v5066, %v5070
    %v5075 = vand.u32 2147483647, %v5050
    %vm5076 = vcmp.eq.f32.partialorder %v5075, 8.507059e+37
    %v5077 = vand.u32 %v5050, 2147483648
    %v5078 = vor.u32 1.1754944e-38, %v5077
    %v5079 = vsel %vm5076, %v5078, %v5074
    %v5080 = vmul.f32 1.0, %v5079
    %v5081 = vmul.f32 %v5041, %v5065
    %v5082 = vmul.f32 %v5042, %v5080
    %s5083 = scalar_lea.vmem [#allocation19], 384
    %v5084 = vld [vmem:[%s5083] sm:$0xff]
    %v5085 = vld [vmem:[%s5083 + $0x8] sm:$0xff]
    %v5086 = vld [vmem:[%s5083 + $0x10] sm:$0xff]
    %v5087 = vld [vmem:[%s5083 + $0x18] sm:$0xff]
    %v5088 = vld [vmem:[%s5083 + $0x20] sm:$0xff]
    %v5089 = vld [vmem:[%s5083 + $0x28] sm:$0xff]
    %v5090 = vld [vmem:[%s5083 + $0x30] sm:$0xff]
    %v5091 = vld [vmem:[%s5083 + $0x38] sm:$0xff]
    %v5092 = vld [vmem:[%s5083 + $0x40] sm:$0xff]
    %v5093 = vld [vmem:[%s5083 + $0x48] sm:$0xff]
    %v5094 = vld [vmem:[%s5083 + $0x50] sm:$0xff]
    %v5095 = vld [vmem:[%s5083 + $0x58] sm:$0xff]
    %v5096 = vld [vmem:[%s5083 + $0x60] sm:$0xff]
    %v5097 = vld [vmem:[%s5083 + $0x68] sm:$0xff]
    %v5098 = vld [vmem:[%s5083 + $0x70] sm:$0xff]
    %v5099 = vld [vmem:[%s5083 + $0x78] sm:$0xff]
    %v5100 = vpack.c.bf16 %v5082, %v5081
    %s5101 = scalar_lea.vmem [#allocation20], 6
    %v5102 = vld [vmem:[%s5101] sm:$0x3]
    %v5104 = vperm.slane %v5102, 0
    %v5105 = vperm.slane %v5102, 1
    %v5124 = vunpack.c.l.b16 %v5084
    %v5125 = vunpack.c.h.b16 %v5084
    %v5126 = vunpack.c.l.b16 %v5085
    %v5127 = vunpack.c.h.b16 %v5085
    %v5128 = vunpack.c.l.b16 %v5086
    %v5129 = vunpack.c.h.b16 %v5086
    %v5130 = vunpack.c.l.b16 %v5087
    %v5131 = vunpack.c.h.b16 %v5087
    %v5132 = vunpack.c.l.b16 %v5088
    %v5133 = vunpack.c.h.b16 %v5088
    %v5134 = vunpack.c.l.b16 %v5089
    %v5135 = vunpack.c.h.b16 %v5089
    %v5136 = vunpack.c.l.b16 %v5090
    %v5137 = vunpack.c.h.b16 %v5090
    %v5138 = vunpack.c.l.b16 %v5091
    %v5139 = vunpack.c.h.b16 %v5091
    %v5140 = vunpack.c.l.b16 %v5092
    %v5141 = vunpack.c.h.b16 %v5092
    %v5142 = vunpack.c.l.b16 %v5093
    %v5143 = vunpack.c.h.b16 %v5093
    %v5144 = vunpack.c.l.b16 %v5094
    %v5145 = vunpack.c.h.b16 %v5094
    %v5146 = vunpack.c.l.b16 %v5095
    %v5147 = vunpack.c.h.b16 %v5095
    %v5148 = vunpack.c.l.b16 %v5096
    %v5149 = vunpack.c.h.b16 %v5096
    %v5150 = vunpack.c.l.b16 %v5097
    %v5151 = vunpack.c.h.b16 %v5097
    %v5152 = vunpack.c.l.b16 %v5098
    %v5153 = vunpack.c.h.b16 %v5098
    %v5154 = vunpack.c.l.b16 %v5099
    %v5155 = vunpack.c.h.b16 %v5099
    %v5156 = vpack.c.b16 %v5126, %v5124
    %v5157 = vpack.c.b16 %v5127, %v5125
    %v5158 = vpack.c.b16 %v5130, %v5128
    %v5159 = vpack.c.b16 %v5131, %v5129
    %v5160 = vpack.c.b16 %v5134, %v5132
    %v5161 = vpack.c.b16 %v5135, %v5133
    %v5162 = vpack.c.b16 %v5138, %v5136
    %v5163 = vpack.c.b16 %v5139, %v5137
    %v5164 = vpack.c.b16 %v5142, %v5140
    %v5165 = vpack.c.b16 %v5143, %v5141
    %v5166 = vpack.c.b16 %v5146, %v5144
    %v5167 = vpack.c.b16 %v5147, %v5145
    %v5168 = vpack.c.b16 %v5150, %v5148
    %v5169 = vpack.c.b16 %v5151, %v5149
    %v5170 = vpack.c.b16 %v5154, %v5152
    %v5171 = vpack.c.b16 %v5155, %v5153
    %5188 = vmatpush.bf16.msra.mxu0 %v5170
    %5189 = vmatpush.bf16.msra.mxu0 %v5168
    %5190 = vmatpush.bf16.msra.mxu0 %v5166
    %5191 = vmatpush.bf16.msra.mxu0 %v5164
    %5192 = vmatpush.bf16.msra.mxu0 %v5162
    %5193 = vmatpush.bf16.msra.mxu0 %v5160
    %5194 = vmatpush.bf16.msra.mxu0 %v5158
    %5195 = vmatpush.bf16.msra.mxu0 %v5156
    %5196 = vmatmul.bf16.gmra.mxu0 %v5100
    %v5197 = vpop.f32.mrf.mxu0
    %v5198 = vadd.f32 %v5104, %v5197
    %v5199 = vpop.f32.mrf.mxu0
    %v5200 = vadd.f32 %v5104, %v5199
    %5201 = vdwg.mxu0
    %5202 = vmatpush.bf16.msra.mxu0 %v5171
    %5203 = vmatpush.bf16.msra.mxu0 %v5169
    %5204 = vmatpush.bf16.msra.mxu0 %v5167
    %5205 = vmatpush.bf16.msra.mxu0 %v5165
    %5206 = vmatpush.bf16.msra.mxu0 %v5163
    %5207 = vmatpush.bf16.msra.mxu0 %v5161
    %5208 = vmatpush.bf16.msra.mxu0 %v5159
    %5209 = vmatpush.bf16.msra.mxu0 %v5157
    %5210 = vmatmul.bf16.gmra.mxu0 %v5100
    %v5211 = vpop.f32.mrf.mxu0
    %v5212 = vadd.f32 %v5105, %v5211
    %v5213 = vpop.f32.mrf.mxu0
    %v5214 = vadd.f32 %v5105, %v5213
    %5215 = vdwg.mxu0
    %v5219 = vrot.slane %v4067, 4
    %v5220 = vrot.slane %v4068, 4
    %v5221 = vsel %vm301, %v5219, %v5220
    %v5222 = vrot.slane %v4069, 4
    %v5223 = vsel %vm301, %v5220, %v5222
    %v5226 = vadd.f32 %v5198, %v5221
    %v5227 = vadd.f32 %v5200, %v5223
    %v5231 = vrot.slane %v4081, 4
    %v5232 = vrot.slane %v4082, 4
    %v5233 = vsel %vm301, %v5231, %v5232
    %v5234 = vrot.slane %v4083, 4
    %v5235 = vsel %vm301, %v5232, %v5234
    %v5238 = vadd.f32 %v5212, %v5233
    %v5239 = vadd.f32 %v5214, %v5235
    %v5240 = vsel %vm1585, %v5227, 0.0
    %v5241 = vadd.f32 %v5226, %v5240
    %v5242 = vrot.slane %v5241, 4
    %v5243 = vadd.f32 %v5241, %v5242
    %v5244 = vrot.slane %v5243, 2
    %v5245 = vadd.f32 %v5243, %v5244
    %v5246 = vrot.slane %v5245, 1
    %v5247 = vadd.f32 %v5245, %v5246
    %v5248 = vrcp.pop 14.0
    %v5249 = vmul.f32 14.0, %v5248
    %v5250 = vsub.f32 1.0, %v5249
    %v5251 = vmul.f32 %v5248, %v5250
    %v5252 = vadd.f32 %v5248, %v5251
    %vm5253 = vweird.f32 %v5248
    %v5254 = vsel %vm5253, %v5248, %v5252
    %v5255 = vmul.f32 %v5247, %v5254
    %v5256 = vsub.f32 %v5226, %v5255
    %v5257 = vsub.f32 %v5227, %v5255
    %v5258 = vmul.f32 %v5256, %v5256
    %v5259 = vmul.f32 %v5257, %v5257
    %v5260 = vsel %vm1585, %v5259, 0.0
    %v5261 = vadd.f32 %v5258, %v5260
    %v5262 = vrot.slane %v5261, 4
    %v5263 = vadd.f32 %v5261, %v5262
    %v5264 = vrot.slane %v5263, 2
    %v5265 = vadd.f32 %v5263, %v5264
    %v5266 = vrot.slane %v5265, 1
    %v5267 = vadd.f32 %v5265, %v5266
    %v5268 = vmul.f32 %v5267, %v5254
    %v5269 = vadd.f32 %v5268, 1e-05
    %v5270 = vrsqrt.pop %v5269
    %v5271 = vmul.f32 %v5270, %v5269
    %v5272 = vmul.f32 %v5271, %v5270
    %v5273 = vmul.f32 0.5, %v5272
    %v5274 = vsub.f32 1.5, %v5273
    %v5275 = vmul.f32 %v5270, %v5274
    %vm5276 = vweird.f32 %v5269
    %vm5277 = vweird.f32 %v5270
    %vm5278 = vmor %vm5276, %vm5277
    %v5279 = vsel %vm5278, %v5270, %v5275
    %v5280 = vmul.f32 %v5256, %v5279
    %v5281 = vmul.f32 %v5257, %v5279
    %s5282 = scalar_lea.vmem [#allocation8], 4
    %v5283 = vld [vmem:[%s5282] sm:$0x1]
    %v5285 = vperm.slane %v5283, 0
    %v5287 = vmul.f32 %v5280, %v5285
    %v5288 = vmul.f32 %v5281, %v5285
    %s5289 = scalar_lea.vmem [#allocation10], 4
    %v5290 = vld [vmem:[%s5289] sm:$0x1]
    %v5292 = vperm.slane %v5290, 0
    %v5294 = vadd.f32 %v5287, %v5292
    %v5295 = vadd.f32 %v5288, %v5292
    %5296 = vmatpush.msra.mxu0 %v339
    %5297 = vmatpush.msra.mxu0 %v338
    %5298 = vmatpush.msra.mxu0 %v337
    %5299 = vmatpush.msra.mxu0 %v336
    %5300 = vmatpush.msra.mxu0 %v335
    %5301 = vmatpush.msra.mxu0 %v334
    %5302 = vmatpush.msra.mxu0 %v333
    %5303 = vmatpush.msra.mxu0 %v332
    %5304 = vmatpush.msra.mxu0 %v331
    %5305 = vmatpush.msra.mxu0 %v330
    %5306 = vmatpush.msra.mxu0 %v329
    %5307 = vmatpush.msra.mxu0 %v328
    %5308 = vmatpush.msra.mxu0 %v327
    %5309 = vmatpush.msra.mxu0 %v326
    %5310 = vmatpush.msra.mxu0 %v325
    %5311 = vmatpush.msra.mxu0 %v324
    %5312 = vmatmul.f32.gmra.mxu0 %v5226
    %v5313 = vpop.f32.mrf.mxu0
    %v5314 = vadd.f32 0.0, %v5313
    %5315 = vmatmul.f32.gmra.mxu0 %v5227
    %v5316 = vpop.f32.mrf.mxu0
    %v5317 = vadd.f32 0.0, %v5316
    %5318 = vdwg.mxu0
    %v5319 = vsub.f32 %v5226, %v5314
    %v5320 = vsub.f32 %v5227, %v5317
    %v5321 = vmul.f32 %v5319, %v5319
    %v5322 = vmul.f32 %v5320, %v5320
    %5323 = vmatpush.msra.mxu0 %v339
    %5324 = vmatpush.msra.mxu0 %v338
    %5325 = vmatpush.msra.mxu0 %v337
    %5326 = vmatpush.msra.mxu0 %v336
    %5327 = vmatpush.msra.mxu0 %v335
    %5328 = vmatpush.msra.mxu0 %v334
    %5329 = vmatpush.msra.mxu0 %v333
    %5330 = vmatpush.msra.mxu0 %v332
    %5331 = vmatpush.msra.mxu0 %v331
    %5332 = vmatpush.msra.mxu0 %v330
    %5333 = vmatpush.msra.mxu0 %v329
    %5334 = vmatpush.msra.mxu0 %v328
    %5335 = vmatpush.msra.mxu0 %v327
    %5336 = vmatpush.msra.mxu0 %v326
    %5337 = vmatpush.msra.mxu0 %v325
    %5338 = vmatpush.msra.mxu0 %v324
    %5339 = vmatmul.f32.gmra.mxu0 %v5321
    %v5340 = vpop.f32.mrf.mxu0
    %v5341 = vadd.f32 0.0, %v5340
    %5342 = vmatmul.f32.gmra.mxu0 %v5322
    %v5343 = vpop.f32.mrf.mxu0
    %v5344 = vadd.f32 0.0, %v5343
    %5345 = vdwg.mxu0
    %v5346 = vmul.f32 %v5341, 1.1428572
    %v5347 = vmul.f32 %v5344, 1.1428572
    %v5348 = vadd.f32 %v5346, 1e-05
    %v5349 = vadd.f32 %v5347, 1e-05
    %v5350 = vrsqrt.pop %v5348
    %v5351 = vmul.f32 %v5350, %v5348
    %v5352 = vmul.f32 %v5351, %v5350
    %v5353 = vmul.f32 0.5, %v5352
    %v5354 = vsub.f32 1.5, %v5353
    %v5355 = vmul.f32 %v5350, %v5354
    %vm5356 = vweird.f32 %v5348
    %vm5357 = vweird.f32 %v5350
    %vm5358 = vmor %vm5356, %vm5357
    %v5359 = vsel %vm5358, %v5350, %v5355
    %v5360 = vrsqrt.pop %v5349
    %v5361 = vmul.f32 %v5360, %v5349
    %v5362 = vmul.f32 %v5361, %v5360
    %v5363 = vmul.f32 0.5, %v5362
    %v5364 = vsub.f32 1.5, %v5363
    %v5365 = vmul.f32 %v5360, %v5364
    %vm5366 = vweird.f32 %v5349
    %vm5367 = vweird.f32 %v5360
    %vm5368 = vmor %vm5366, %vm5367
    %v5369 = vsel %vm5368, %v5360, %v5365
    %v5370 = vmul.f32 %v5319, %v5359
    %v5371 = vmul.f32 %v5320, %v5369
    %s5372 = scalar_lea.vmem [#allocation11], 4
    %v5373 = vld [vmem:[%s5372] sm:$0x1]
    %v5375 = vperm.slane %v5373, 0
    %v5377 = vmul.f32 %v5370, %v5375
    %v5378 = vmul.f32 %v5371, %v5375
    %s5379 = scalar_lea.vmem [#allocation13], 4
    %v5380 = vld [vmem:[%s5379] sm:$0x1]
    %v5382 = vperm.slane %v5380, 0
    %v5384 = vadd.f32 %v5377, %v5382
    %v5385 = vadd.f32 %v5378, %v5382
    %s5386 = scalar_lea.vmem [#allocation14], 1536
    %v5387 = vld [vmem:[%s5386] sm:$0xff]
    %v5388 = vld [vmem:[%s5386 + $0x8] sm:$0xff]
    %v5389 = vld [vmem:[%s5386 + $0x10] sm:$0xff]
    %v5390 = vld [vmem:[%s5386 + $0x18] sm:$0xff]
    %v5391 = vld [vmem:[%s5386 + $0x20] sm:$0xff]
    %v5392 = vld [vmem:[%s5386 + $0x28] sm:$0xff]
    %v5393 = vld [vmem:[%s5386 + $0x30] sm:$0xff]
    %v5394 = vld [vmem:[%s5386 + $0x38] sm:$0xff]
    %v5395 = vld [vmem:[%s5386 + $0x40] sm:$0xff]
    %v5396 = vld [vmem:[%s5386 + $0x48] sm:$0xff]
    %v5397 = vld [vmem:[%s5386 + $0x50] sm:$0xff]
    %v5398 = vld [vmem:[%s5386 + $0x58] sm:$0xff]
    %v5399 = vld [vmem:[%s5386 + $0x60] sm:$0xff]
    %v5400 = vld [vmem:[%s5386 + $0x68] sm:$0xff]
    %v5401 = vld [vmem:[%s5386 + $0x70] sm:$0xff]
    %v5402 = vld [vmem:[%s5386 + $0x78] sm:$0xff]
    %v5403 = vld [vmem:[%s5386 + $0x80] sm:$0xff]
    %v5404 = vld [vmem:[%s5386 + $0x88] sm:$0xff]
    %v5405 = vld [vmem:[%s5386 + $0x90] sm:$0xff]
    %v5406 = vld [vmem:[%s5386 + $0x98] sm:$0xff]
    %v5407 = vld [vmem:[%s5386 + $0xa0] sm:$0xff]
    %v5408 = vld [vmem:[%s5386 + $0xa8] sm:$0xff]
    %v5409 = vld [vmem:[%s5386 + $0xb0] sm:$0xff]
    %v5410 = vld [vmem:[%s5386 + $0xb8] sm:$0xff]
    %v5411 = vld [vmem:[%s5386 + $0xc0] sm:$0xff]
    %v5412 = vld [vmem:[%s5386 + $0xc8] sm:$0xff]
    %v5413 = vld [vmem:[%s5386 + $0xd0] sm:$0xff]
    %v5414 = vld [vmem:[%s5386 + $0xd8] sm:$0xff]
    %v5415 = vld [vmem:[%s5386 + $0xe0] sm:$0xff]
    %v5416 = vld [vmem:[%s5386 + $0xe8] sm:$0xff]
    %v5417 = vld [vmem:[%s5386 + $0xf0] sm:$0xff]
    %v5418 = vld [vmem:[%s5386 + $0xf8] sm:$0xff]
    %v5419 = vld [vmem:[%s5386 + $0x100] sm:$0xff]
    %v5420 = vld [vmem:[%s5386 + $0x108] sm:$0xff]
    %v5421 = vld [vmem:[%s5386 + $0x110] sm:$0xff]
    %v5422 = vld [vmem:[%s5386 + $0x118] sm:$0xff]
    %v5423 = vld [vmem:[%s5386 + $0x120] sm:$0xff]
    %v5424 = vld [vmem:[%s5386 + $0x128] sm:$0xff]
    %v5425 = vld [vmem:[%s5386 + $0x130] sm:$0xff]
    %v5426 = vld [vmem:[%s5386 + $0x138] sm:$0xff]
    %v5427 = vld [vmem:[%s5386 + $0x140] sm:$0xff]
    %v5428 = vld [vmem:[%s5386 + $0x148] sm:$0xff]
    %v5429 = vld [vmem:[%s5386 + $0x150] sm:$0xff]
    %v5430 = vld [vmem:[%s5386 + $0x158] sm:$0xff]
    %v5431 = vld [vmem:[%s5386 + $0x160] sm:$0xff]
    %v5432 = vld [vmem:[%s5386 + $0x168] sm:$0xff]
    %v5433 = vld [vmem:[%s5386 + $0x170] sm:$0xff]
    %v5434 = vld [vmem:[%s5386 + $0x178] sm:$0xff]
    %v5435 = vpack.c.bf16 %v5227, %v5226
    %v5436 = vpack.c.bf16 %v5295, %v5294
    %v5437 = vpack.c.bf16 %v5385, %v5384
    %s5438 = scalar_lea.vmem [#allocation16], 1536
    %v5439 = vld [vmem:[%s5438] sm:$0xff]
    %v5440 = vld [vmem:[%s5438 + $0x8] sm:$0xff]
    %v5441 = vld [vmem:[%s5438 + $0x10] sm:$0xff]
    %v5442 = vld [vmem:[%s5438 + $0x18] sm:$0xff]
    %v5443 = vld [vmem:[%s5438 + $0x20] sm:$0xff]
    %v5444 = vld [vmem:[%s5438 + $0x28] sm:$0xff]
    %v5445 = vld [vmem:[%s5438 + $0x30] sm:$0xff]
    %v5446 = vld [vmem:[%s5438 + $0x38] sm:$0xff]
    %v5447 = vld [vmem:[%s5438 + $0x40] sm:$0xff]
    %v5448 = vld [vmem:[%s5438 + $0x48] sm:$0xff]
    %v5449 = vld [vmem:[%s5438 + $0x50] sm:$0xff]
    %v5450 = vld [vmem:[%s5438 + $0x58] sm:$0xff]
    %v5451 = vld [vmem:[%s5438 + $0x60] sm:$0xff]
    %v5452 = vld [vmem:[%s5438 + $0x68] sm:$0xff]
    %v5453 = vld [vmem:[%s5438 + $0x70] sm:$0xff]
    %v5454 = vld [vmem:[%s5438 + $0x78] sm:$0xff]
    %v5455 = vld [vmem:[%s5438 + $0x80] sm:$0xff]
    %v5456 = vld [vmem:[%s5438 + $0x88] sm:$0xff]
    %v5457 = vld [vmem:[%s5438 + $0x90] sm:$0xff]
    %v5458 = vld [vmem:[%s5438 + $0x98] sm:$0xff]
    %v5459 = vld [vmem:[%s5438 + $0xa0] sm:$0xff]
    %v5460 = vld [vmem:[%s5438 + $0xa8] sm:$0xff]
    %v5461 = vld [vmem:[%s5438 + $0xb0] sm:$0xff]
    %v5462 = vld [vmem:[%s5438 + $0xb8] sm:$0xff]
    %v5463 = vld [vmem:[%s5438 + $0xc0] sm:$0xff]
    %v5464 = vld [vmem:[%s5438 + $0xc8] sm:$0xff]
    %v5465 = vld [vmem:[%s5438 + $0xd0] sm:$0xff]
    %v5466 = vld [vmem:[%s5438 + $0xd8] sm:$0xff]
    %v5467 = vld [vmem:[%s5438 + $0xe0] sm:$0xff]
    %v5468 = vld [vmem:[%s5438 + $0xe8] sm:$0xff]
    %v5469 = vld [vmem:[%s5438 + $0xf0] sm:$0xff]
    %v5470 = vld [vmem:[%s5438 + $0xf8] sm:$0xff]
    %v5471 = vld [vmem:[%s5438 + $0x100] sm:$0xff]
    %v5472 = vld [vmem:[%s5438 + $0x108] sm:$0xff]
    %v5473 = vld [vmem:[%s5438 + $0x110] sm:$0xff]
    %v5474 = vld [vmem:[%s5438 + $0x118] sm:$0xff]
    %v5475 = vld [vmem:[%s5438 + $0x120] sm:$0xff]
    %v5476 = vld [vmem:[%s5438 + $0x128] sm:$0xff]
    %v5477 = vld [vmem:[%s5438 + $0x130] sm:$0xff]
    %v5478 = vld [vmem:[%s5438 + $0x138] sm:$0xff]
    %v5479 = vld [vmem:[%s5438 + $0x140] sm:$0xff]
    %v5480 = vld [vmem:[%s5438 + $0x148] sm:$0xff]
    %v5481 = vld [vmem:[%s5438 + $0x150] sm:$0xff]
    %v5482 = vld [vmem:[%s5438 + $0x158] sm:$0xff]
    %v5483 = vld [vmem:[%s5438 + $0x160] sm:$0xff]
    %v5484 = vld [vmem:[%s5438 + $0x168] sm:$0xff]
    %v5485 = vld [vmem:[%s5438 + $0x170] sm:$0xff]
    %v5486 = vld [vmem:[%s5438 + $0x178] sm:$0xff]
    %v5490 = vrot.slane %v5435, 1
    %v5491 = vrot.slane %v5436, 1
    %v5492 = vrot.slane %v5437, 1
    %v5544 = vunpack.c.l.b16 %v5439
    %v5545 = vunpack.c.h.b16 %v5439
    %v5546 = vunpack.c.l.b16 %v5440
    %v5547 = vunpack.c.h.b16 %v5440
    %v5548 = vunpack.c.l.b16 %v5441
    %v5549 = vunpack.c.h.b16 %v5441
    %v5550 = vunpack.c.l.b16 %v5442
    %v5551 = vunpack.c.h.b16 %v5442
    %v5552 = vunpack.c.l.b16 %v5443
    %v5553 = vunpack.c.h.b16 %v5443
    %v5554 = vunpack.c.l.b16 %v5444
    %v5555 = vunpack.c.h.b16 %v5444
    %v5556 = vunpack.c.l.b16 %v5445
    %v5557 = vunpack.c.h.b16 %v5445
    %v5558 = vunpack.c.l.b16 %v5446
    %v5559 = vunpack.c.h.b16 %v5446
    %v5560 = vunpack.c.l.b16 %v5447
    %v5561 = vunpack.c.h.b16 %v5447
    %v5562 = vunpack.c.l.b16 %v5448
    %v5563 = vunpack.c.h.b16 %v5448
    %v5564 = vunpack.c.l.b16 %v5449
    %v5565 = vunpack.c.h.b16 %v5449
    %v5566 = vunpack.c.l.b16 %v5450
    %v5567 = vunpack.c.h.b16 %v5450
    %v5568 = vunpack.c.l.b16 %v5451
    %v5569 = vunpack.c.h.b16 %v5451
    %v5570 = vunpack.c.l.b16 %v5452
    %v5571 = vunpack.c.h.b16 %v5452
    %v5572 = vunpack.c.l.b16 %v5453
    %v5573 = vunpack.c.h.b16 %v5453
    %v5574 = vunpack.c.l.b16 %v5454
    %v5575 = vunpack.c.h.b16 %v5454
    %v5576 = vunpack.c.l.b16 %v5455
    %v5577 = vunpack.c.h.b16 %v5455
    %v5578 = vunpack.c.l.b16 %v5456
    %v5579 = vunpack.c.h.b16 %v5456
    %v5580 = vunpack.c.l.b16 %v5457
    %v5581 = vunpack.c.h.b16 %v5457
    %v5582 = vunpack.c.l.b16 %v5458
    %v5583 = vunpack.c.h.b16 %v5458
    %v5584 = vunpack.c.l.b16 %v5459
    %v5585 = vunpack.c.h.b16 %v5459
    %v5586 = vunpack.c.l.b16 %v5460
    %v5587 = vunpack.c.h.b16 %v5460
    %v5588 = vunpack.c.l.b16 %v5461
    %v5589 = vunpack.c.h.b16 %v5461
    %v5590 = vunpack.c.l.b16 %v5462
    %v5591 = vunpack.c.h.b16 %v5462
    %v5592 = vunpack.c.l.b16 %v5463
    %v5593 = vunpack.c.h.b16 %v5463
    %v5594 = vunpack.c.l.b16 %v5464
    %v5595 = vunpack.c.h.b16 %v5464
    %v5596 = vunpack.c.l.b16 %v5465
    %v5597 = vunpack.c.h.b16 %v5465
    %v5598 = vunpack.c.l.b16 %v5466
    %v5599 = vunpack.c.h.b16 %v5466
    %v5600 = vunpack.c.l.b16 %v5467
    %v5601 = vunpack.c.h.b16 %v5467
    %v5602 = vunpack.c.l.b16 %v5468
    %v5603 = vunpack.c.h.b16 %v5468
    %v5604 = vunpack.c.l.b16 %v5469
    %v5605 = vunpack.c.h.b16 %v5469
    %v5606 = vunpack.c.l.b16 %v5470
    %v5607 = vunpack.c.h.b16 %v5470
    %v5608 = vunpack.c.l.b16 %v5471
    %v5609 = vunpack.c.h.b16 %v5471
    %v5610 = vunpack.c.l.b16 %v5472
    %v5611 = vunpack.c.h.b16 %v5472
    %v5612 = vunpack.c.l.b16 %v5473
    %v5613 = vunpack.c.h.b16 %v5473
    %v5614 = vunpack.c.l.b16 %v5474
    %v5615 = vunpack.c.h.b16 %v5474
    %v5616 = vunpack.c.l.b16 %v5475
    %v5617 = vunpack.c.h.b16 %v5475
    %v5618 = vunpack.c.l.b16 %v5476
    %v5619 = vunpack.c.h.b16 %v5476
    %v5620 = vunpack.c.l.b16 %v5477
    %v5621 = vunpack.c.h.b16 %v5477
    %v5622 = vunpack.c.l.b16 %v5478
    %v5623 = vunpack.c.h.b16 %v5478
    %v5624 = vunpack.c.l.b16 %v5479
    %v5625 = vunpack.c.h.b16 %v5479
    %v5626 = vunpack.c.l.b16 %v5480
    %v5627 = vunpack.c.h.b16 %v5480
    %v5628 = vunpack.c.l.b16 %v5481
    %v5629 = vunpack.c.h.b16 %v5481
    %v5630 = vunpack.c.l.b16 %v5482
    %v5631 = vunpack.c.h.b16 %v5482
    %v5632 = vunpack.c.l.b16 %v5483
    %v5633 = vunpack.c.h.b16 %v5483
    %v5634 = vunpack.c.l.b16 %v5484
    %v5635 = vunpack.c.h.b16 %v5484
    %v5636 = vunpack.c.l.b16 %v5485
    %v5637 = vunpack.c.h.b16 %v5485
    %v5638 = vunpack.c.l.b16 %v5486
    %v5639 = vunpack.c.h.b16 %v5486
    %v5640 = vpack.c.b16 %v5546, %v5544
    %v5641 = vpack.c.b16 %v5547, %v5545
    %v5642 = vpack.c.b16 %v5550, %v5548
    %v5643 = vpack.c.b16 %v5551, %v5549
    %v5644 = vpack.c.b16 %v5554, %v5552
    %v5645 = vpack.c.b16 %v5555, %v5553
    %v5646 = vpack.c.b16 %v5558, %v5556
    %v5647 = vpack.c.b16 %v5559, %v5557
    %v5648 = vpack.c.b16 %v5562, %v5560
    %v5649 = vpack.c.b16 %v5563, %v5561
    %v5650 = vpack.c.b16 %v5566, %v5564
    %v5651 = vpack.c.b16 %v5567, %v5565
    %v5652 = vpack.c.b16 %v5570, %v5568
    %v5653 = vpack.c.b16 %v5571, %v5569
    %v5654 = vpack.c.b16 %v5574, %v5572
    %v5655 = vpack.c.b16 %v5575, %v5573
    %v5656 = vpack.c.b16 %v5578, %v5576
    %v5657 = vpack.c.b16 %v5579, %v5577
    %v5658 = vpack.c.b16 %v5582, %v5580
    %v5659 = vpack.c.b16 %v5583, %v5581
    %v5660 = vpack.c.b16 %v5586, %v5584
    %v5661 = vpack.c.b16 %v5587, %v5585
    %v5662 = vpack.c.b16 %v5590, %v5588
    %v5663 = vpack.c.b16 %v5591, %v5589
    %v5664 = vpack.c.b16 %v5594, %v5592
    %v5665 = vpack.c.b16 %v5595, %v5593
    %v5666 = vpack.c.b16 %v5598, %v5596
    %v5667 = vpack.c.b16 %v5599, %v5597
    %v5668 = vpack.c.b16 %v5602, %v5600
    %v5669 = vpack.c.b16 %v5603, %v5601
    %v5670 = vpack.c.b16 %v5606, %v5604
    %v5671 = vpack.c.b16 %v5607, %v5605
    %v5672 = vpack.c.b16 %v5610, %v5608
    %v5673 = vpack.c.b16 %v5611, %v5609
    %v5674 = vpack.c.b16 %v5614, %v5612
    %v5675 = vpack.c.b16 %v5615, %v5613
    %v5676 = vpack.c.b16 %v5618, %v5616
    %v5677 = vpack.c.b16 %v5619, %v5617
    %v5678 = vpack.c.b16 %v5622, %v5620
    %v5679 = vpack.c.b16 %v5623, %v5621
    %v5680 = vpack.c.b16 %v5626, %v5624
    %v5681 = vpack.c.b16 %v5627, %v5625
    %v5682 = vpack.c.b16 %v5630, %v5628
    %v5683 = vpack.c.b16 %v5631, %v5629
    %v5684 = vpack.c.b16 %v5634, %v5632
    %v5685 = vpack.c.b16 %v5635, %v5633
    %v5686 = vpack.c.b16 %v5638, %v5636
    %v5687 = vpack.c.b16 %v5639, %v5637
    %5736 = vmatpush.bf16.msra.mxu0 %v5654
    %5737 = vmatpush.bf16.msra.mxu0 %v5652
    %5738 = vmatpush.bf16.msra.mxu0 %v5650
    %5739 = vmatpush.bf16.msra.mxu0 %v5648
    %5740 = vmatpush.bf16.msra.mxu0 %v5646
    %5741 = vmatpush.bf16.msra.mxu0 %v5644
    %5742 = vmatpush.bf16.msra.mxu0 %v5642
    %5743 = vmatpush.bf16.msra.mxu0 %v5640
    %5744 = vmatmul.bf16.gmra.mxu0 %v5490
    %v5745 = vpop.f32.mrf.mxu0
    %v5746 = vadd.f32 0.0, %v5745
    %v5747 = vpop.f32.mrf.mxu0
    %v5748 = vadd.f32 0.0, %v5747
    %5749 = vdwg.mxu0
    %5750 = vmatpush.bf16.msra.mxu0 %v5670
    %5751 = vmatpush.bf16.msra.mxu0 %v5668
    %5752 = vmatpush.bf16.msra.mxu0 %v5666
    %5753 = vmatpush.bf16.msra.mxu0 %v5664
    %5754 = vmatpush.bf16.msra.mxu0 %v5662
    %5755 = vmatpush.bf16.msra.mxu0 %v5660
    %5756 = vmatpush.bf16.msra.mxu0 %v5658
    %5757 = vmatpush.bf16.msra.mxu0 %v5656
    %5758 = vmatmul.bf16.gmra.mxu0 %v5491
    %v5759 = vpop.f32.mrf.mxu0
    %v5760 = vadd.f32 %v5746, %v5759
    %v5761 = vpop.f32.mrf.mxu0
    %v5762 = vadd.f32 %v5748, %v5761
    %5763 = vdwg.mxu0
    %5764 = vmatpush.bf16.msra.mxu0 %v5686
    %5765 = vmatpush.bf16.msra.mxu0 %v5684
    %5766 = vmatpush.bf16.msra.mxu0 %v5682
    %5767 = vmatpush.bf16.msra.mxu0 %v5680
    %5768 = vmatpush.bf16.msra.mxu0 %v5678
    %5769 = vmatpush.bf16.msra.mxu0 %v5676
    %5770 = vmatpush.bf16.msra.mxu0 %v5674
    %5771 = vmatpush.bf16.msra.mxu0 %v5672
    %5772 = vmatmul.bf16.gmra.mxu0 %v5492
    %v5773 = vpop.f32.mrf.mxu0
    %v5774 = vadd.f32 %v5760, %v5773
    %v5775 = vpop.f32.mrf.mxu0
    %v5776 = vadd.f32 %v5762, %v5775
    %5777 = vdwg.mxu0
    %5778 = vmatpush.bf16.msra.mxu0 %v5655
    %5779 = vmatpush.bf16.msra.mxu0 %v5653
    %5780 = vmatpush.bf16.msra.mxu0 %v5651
    %5781 = vmatpush.bf16.msra.mxu0 %v5649
    %5782 = vmatpush.bf16.msra.mxu0 %v5647
    %5783 = vmatpush.bf16.msra.mxu0 %v5645
    %5784 = vmatpush.bf16.msra.mxu0 %v5643
    %5785 = vmatpush.bf16.msra.mxu0 %v5641
    %5786 = vmatmul.bf16.gmra.mxu0 %v5490
    %v5787 = vpop.f32.mrf.mxu0
    %v5788 = vadd.f32 0.0, %v5787
    %v5789 = vpop.f32.mrf.mxu0
    %v5790 = vadd.f32 0.0, %v5789
    %5791 = vdwg.mxu0
    %5792 = vmatpush.bf16.msra.mxu0 %v5671
    %5793 = vmatpush.bf16.msra.mxu0 %v5669
    %5794 = vmatpush.bf16.msra.mxu0 %v5667
    %5795 = vmatpush.bf16.msra.mxu0 %v5665
    %5796 = vmatpush.bf16.msra.mxu0 %v5663
    %5797 = vmatpush.bf16.msra.mxu0 %v5661
    %5798 = vmatpush.bf16.msra.mxu0 %v5659
    %5799 = vmatpush.bf16.msra.mxu0 %v5657
    %5800 = vmatmul.bf16.gmra.mxu0 %v5491
    %v5801 = vpop.f32.mrf.mxu0
    %v5802 = vadd.f32 %v5788, %v5801
    %v5803 = vpop.f32.mrf.mxu0
    %v5804 = vadd.f32 %v5790, %v5803
    %5805 = vdwg.mxu0
    %5806 = vmatpush.bf16.msra.mxu0 %v5687
    %5807 = vmatpush.bf16.msra.mxu0 %v5685
    %5808 = vmatpush.bf16.msra.mxu0 %v5683
    %5809 = vmatpush.bf16.msra.mxu0 %v5681
    %5810 = vmatpush.bf16.msra.mxu0 %v5679
    %5811 = vmatpush.bf16.msra.mxu0 %v5677
    %5812 = vmatpush.bf16.msra.mxu0 %v5675
    %5813 = vmatpush.bf16.msra.mxu0 %v5673
    %5814 = vmatmul.bf16.gmra.mxu0 %v5492
    %v5815 = vpop.f32.mrf.mxu0
    %v5816 = vadd.f32 %v5802, %v5815
    %v5817 = vpop.f32.mrf.mxu0
    %v5818 = vadd.f32 %v5804, %v5817
    %5819 = vdwg.mxu0
    %v5868 = vunpack.c.l.b16 %v5387
    %v5869 = vunpack.c.h.b16 %v5387
    %v5870 = vunpack.c.l.b16 %v5388
    %v5871 = vunpack.c.h.b16 %v5388
    %v5872 = vunpack.c.l.b16 %v5389
    %v5873 = vunpack.c.h.b16 %v5389
    %v5874 = vunpack.c.l.b16 %v5390
    %v5875 = vunpack.c.h.b16 %v5390
    %v5876 = vunpack.c.l.b16 %v5391
    %v5877 = vunpack.c.h.b16 %v5391
    %v5878 = vunpack.c.l.b16 %v5392
    %v5879 = vunpack.c.h.b16 %v5392
    %v5880 = vunpack.c.l.b16 %v5393
    %v5881 = vunpack.c.h.b16 %v5393
    %v5882 = vunpack.c.l.b16 %v5394
    %v5883 = vunpack.c.h.b16 %v5394
    %v5884 = vunpack.c.l.b16 %v5395
    %v5885 = vunpack.c.h.b16 %v5395
    %v5886 = vunpack.c.l.b16 %v5396
    %v5887 = vunpack.c.h.b16 %v5396
    %v5888 = vunpack.c.l.b16 %v5397
    %v5889 = vunpack.c.h.b16 %v5397
    %v5890 = vunpack.c.l.b16 %v5398
    %v5891 = vunpack.c.h.b16 %v5398
    %v5892 = vunpack.c.l.b16 %v5399
    %v5893 = vunpack.c.h.b16 %v5399
    %v5894 = vunpack.c.l.b16 %v5400
    %v5895 = vunpack.c.h.b16 %v5400
    %v5896 = vunpack.c.l.b16 %v5401
    %v5897 = vunpack.c.h.b16 %v5401
    %v5898 = vunpack.c.l.b16 %v5402
    %v5899 = vunpack.c.h.b16 %v5402
    %v5900 = vunpack.c.l.b16 %v5403
    %v5901 = vunpack.c.h.b16 %v5403
    %v5902 = vunpack.c.l.b16 %v5404
    %v5903 = vunpack.c.h.b16 %v5404
    %v5904 = vunpack.c.l.b16 %v5405
    %v5905 = vunpack.c.h.b16 %v5405
    %v5906 = vunpack.c.l.b16 %v5406
    %v5907 = vunpack.c.h.b16 %v5406
    %v5908 = vunpack.c.l.b16 %v5407
    %v5909 = vunpack.c.h.b16 %v5407
    %v5910 = vunpack.c.l.b16 %v5408
    %v5911 = vunpack.c.h.b16 %v5408
    %v5912 = vunpack.c.l.b16 %v5409
    %v5913 = vunpack.c.h.b16 %v5409
    %v5914 = vunpack.c.l.b16 %v5410
    %v5915 = vunpack.c.h.b16 %v5410
    %v5916 = vunpack.c.l.b16 %v5411
    %v5917 = vunpack.c.h.b16 %v5411
    %v5918 = vunpack.c.l.b16 %v5412
    %v5919 = vunpack.c.h.b16 %v5412
    %v5920 = vunpack.c.l.b16 %v5413
    %v5921 = vunpack.c.h.b16 %v5413
    %v5922 = vunpack.c.l.b16 %v5414
    %v5923 = vunpack.c.h.b16 %v5414
    %v5924 = vunpack.c.l.b16 %v5415
    %v5925 = vunpack.c.h.b16 %v5415
    %v5926 = vunpack.c.l.b16 %v5416
    %v5927 = vunpack.c.h.b16 %v5416
    %v5928 = vunpack.c.l.b16 %v5417
    %v5929 = vunpack.c.h.b16 %v5417
    %v5930 = vunpack.c.l.b16 %v5418
    %v5931 = vunpack.c.h.b16 %v5418
    %v5932 = vunpack.c.l.b16 %v5419
    %v5933 = vunpack.c.h.b16 %v5419
    %v5934 = vunpack.c.l.b16 %v5420
    %v5935 = vunpack.c.h.b16 %v5420
    %v5936 = vunpack.c.l.b16 %v5421
    %v5937 = vunpack.c.h.b16 %v5421
    %v5938 = vunpack.c.l.b16 %v5422
    %v5939 = vunpack.c.h.b16 %v5422
    %v5940 = vunpack.c.l.b16 %v5423
    %v5941 = vunpack.c.h.b16 %v5423
    %v5942 = vunpack.c.l.b16 %v5424
    %v5943 = vunpack.c.h.b16 %v5424
    %v5944 = vunpack.c.l.b16 %v5425
    %v5945 = vunpack.c.h.b16 %v5425
    %v5946 = vunpack.c.l.b16 %v5426
    %v5947 = vunpack.c.h.b16 %v5426
    %v5948 = vunpack.c.l.b16 %v5427
    %v5949 = vunpack.c.h.b16 %v5427
    %v5950 = vunpack.c.l.b16 %v5428
    %v5951 = vunpack.c.h.b16 %v5428
    %v5952 = vunpack.c.l.b16 %v5429
    %v5953 = vunpack.c.h.b16 %v5429
    %v5954 = vunpack.c.l.b16 %v5430
    %v5955 = vunpack.c.h.b16 %v5430
    %v5956 = vunpack.c.l.b16 %v5431
    %v5957 = vunpack.c.h.b16 %v5431
    %v5958 = vunpack.c.l.b16 %v5432
    %v5959 = vunpack.c.h.b16 %v5432
    %v5960 = vunpack.c.l.b16 %v5433
    %v5961 = vunpack.c.h.b16 %v5433
    %v5962 = vunpack.c.l.b16 %v5434
    %v5963 = vunpack.c.h.b16 %v5434
    %v5964 = vpack.c.b16 %v5870, %v5868
    %v5965 = vpack.c.b16 %v5871, %v5869
    %v5966 = vpack.c.b16 %v5874, %v5872
    %v5967 = vpack.c.b16 %v5875, %v5873
    %v5968 = vpack.c.b16 %v5878, %v5876
    %v5969 = vpack.c.b16 %v5879, %v5877
    %v5970 = vpack.c.b16 %v5882, %v5880
    %v5971 = vpack.c.b16 %v5883, %v5881
    %v5972 = vpack.c.b16 %v5886, %v5884
    %v5973 = vpack.c.b16 %v5887, %v5885
    %v5974 = vpack.c.b16 %v5890, %v5888
    %v5975 = vpack.c.b16 %v5891, %v5889
    %v5976 = vpack.c.b16 %v5894, %v5892
    %v5977 = vpack.c.b16 %v5895, %v5893
    %v5978 = vpack.c.b16 %v5898, %v5896
    %v5979 = vpack.c.b16 %v5899, %v5897
    %v5980 = vpack.c.b16 %v5902, %v5900
    %v5981 = vpack.c.b16 %v5903, %v5901
    %v5982 = vpack.c.b16 %v5906, %v5904
    %v5983 = vpack.c.b16 %v5907, %v5905
    %v5984 = vpack.c.b16 %v5910, %v5908
    %v5985 = vpack.c.b16 %v5911, %v5909
    %v5986 = vpack.c.b16 %v5914, %v5912
    %v5987 = vpack.c.b16 %v5915, %v5913
    %v5988 = vpack.c.b16 %v5918, %v5916
    %v5989 = vpack.c.b16 %v5919, %v5917
    %v5990 = vpack.c.b16 %v5922, %v5920
    %v5991 = vpack.c.b16 %v5923, %v5921
    %v5992 = vpack.c.b16 %v5926, %v5924
    %v5993 = vpack.c.b16 %v5927, %v5925
    %v5994 = vpack.c.b16 %v5930, %v5928
    %v5995 = vpack.c.b16 %v5931, %v5929
    %v5996 = vpack.c.b16 %v5934, %v5932
    %v5997 = vpack.c.b16 %v5935, %v5933
    %v5998 = vpack.c.b16 %v5938, %v5936
    %v5999 = vpack.c.b16 %v5939, %v5937
    %v6000 = vpack.c.b16 %v5942, %v5940
    %v6001 = vpack.c.b16 %v5943, %v5941
    %v6002 = vpack.c.b16 %v5946, %v5944
    %v6003 = vpack.c.b16 %v5947, %v5945
    %v6004 = vpack.c.b16 %v5950, %v5948
    %v6005 = vpack.c.b16 %v5951, %v5949
    %v6006 = vpack.c.b16 %v5954, %v5952
    %v6007 = vpack.c.b16 %v5955, %v5953
    %v6008 = vpack.c.b16 %v5958, %v5956
    %v6009 = vpack.c.b16 %v5959, %v5957
    %v6010 = vpack.c.b16 %v5962, %v5960
    %v6011 = vpack.c.b16 %v5963, %v5961
    %6060 = vmatpush.bf16.msra.mxu0 %v5978
    %6061 = vmatpush.bf16.msra.mxu0 %v5976
    %6062 = vmatpush.bf16.msra.mxu0 %v5974
    %6063 = vmatpush.bf16.msra.mxu0 %v5972
    %6064 = vmatpush.bf16.msra.mxu0 %v5970
    %6065 = vmatpush.bf16.msra.mxu0 %v5968
    %6066 = vmatpush.bf16.msra.mxu0 %v5966
    %6067 = vmatpush.bf16.msra.mxu0 %v5964
    %6068 = vmatmul.bf16.gmra.mxu0 %v5435
    %v6069 = vpop.f32.mrf.mxu0
    %v6070 = vadd.f32 %v5774, %v6069
    %v6071 = vpop.f32.mrf.mxu0
    %v6072 = vadd.f32 %v5776, %v6071
    %6073 = vdwg.mxu0
    %6074 = vmatpush.bf16.msra.mxu0 %v5994
    %6075 = vmatpush.bf16.msra.mxu0 %v5992
    %6076 = vmatpush.bf16.msra.mxu0 %v5990
    %6077 = vmatpush.bf16.msra.mxu0 %v5988
    %6078 = vmatpush.bf16.msra.mxu0 %v5986
    %6079 = vmatpush.bf16.msra.mxu0 %v5984
    %6080 = vmatpush.bf16.msra.mxu0 %v5982
    %6081 = vmatpush.bf16.msra.mxu0 %v5980
    %6082 = vmatmul.bf16.gmra.mxu0 %v5436
    %v6083 = vpop.f32.mrf.mxu0
    %v6084 = vadd.f32 %v6070, %v6083
    %v6085 = vpop.f32.mrf.mxu0
    %v6086 = vadd.f32 %v6072, %v6085
    %6087 = vdwg.mxu0
    %6088 = vmatpush.bf16.msra.mxu0 %v6010
    %6089 = vmatpush.bf16.msra.mxu0 %v6008
    %6090 = vmatpush.bf16.msra.mxu0 %v6006
    %6091 = vmatpush.bf16.msra.mxu0 %v6004
    %6092 = vmatpush.bf16.msra.mxu0 %v6002
    %6093 = vmatpush.bf16.msra.mxu0 %v6000
    %6094 = vmatpush.bf16.msra.mxu0 %v5998
    %6095 = vmatpush.bf16.msra.mxu0 %v5996
    %6096 = vmatmul.bf16.gmra.mxu0 %v5437
    %v6097 = vpop.f32.mrf.mxu0
    %v6098 = vadd.f32 %v6084, %v6097
    %v6099 = vpop.f32.mrf.mxu0
    %v6100 = vadd.f32 %v6086, %v6099
    %6101 = vdwg.mxu0
    %6102 = vmatpush.bf16.msra.mxu0 %v5979
    %6103 = vmatpush.bf16.msra.mxu0 %v5977
    %6104 = vmatpush.bf16.msra.mxu0 %v5975
    %6105 = vmatpush.bf16.msra.mxu0 %v5973
    %6106 = vmatpush.bf16.msra.mxu0 %v5971
    %6107 = vmatpush.bf16.msra.mxu0 %v5969
    %6108 = vmatpush.bf16.msra.mxu0 %v5967
    %6109 = vmatpush.bf16.msra.mxu0 %v5965
    %6110 = vmatmul.bf16.gmra.mxu0 %v5435
    %v6111 = vpop.f32.mrf.mxu0
    %v6112 = vadd.f32 %v5816, %v6111
    %v6113 = vpop.f32.mrf.mxu0
    %v6114 = vadd.f32 %v5818, %v6113
    %6115 = vdwg.mxu0
    %6116 = vmatpush.bf16.msra.mxu0 %v5995
    %6117 = vmatpush.bf16.msra.mxu0 %v5993
    %6118 = vmatpush.bf16.msra.mxu0 %v5991
    %6119 = vmatpush.bf16.msra.mxu0 %v5989
    %6120 = vmatpush.bf16.msra.mxu0 %v5987
    %6121 = vmatpush.bf16.msra.mxu0 %v5985
    %6122 = vmatpush.bf16.msra.mxu0 %v5983
    %6123 = vmatpush.bf16.msra.mxu0 %v5981
    %6124 = vmatmul.bf16.gmra.mxu0 %v5436
    %v6125 = vpop.f32.mrf.mxu0
    %v6126 = vadd.f32 %v6112, %v6125
    %v6127 = vpop.f32.mrf.mxu0
    %v6128 = vadd.f32 %v6114, %v6127
    %6129 = vdwg.mxu0
    %6130 = vmatpush.bf16.msra.mxu0 %v6011
    %6131 = vmatpush.bf16.msra.mxu0 %v6009
    %6132 = vmatpush.bf16.msra.mxu0 %v6007
    %6133 = vmatpush.bf16.msra.mxu0 %v6005
    %6134 = vmatpush.bf16.msra.mxu0 %v6003
    %6135 = vmatpush.bf16.msra.mxu0 %v6001
    %6136 = vmatpush.bf16.msra.mxu0 %v5999
    %6137 = vmatpush.bf16.msra.mxu0 %v5997
    %6138 = vmatmul.bf16.gmra.mxu0 %v5437
    %v6139 = vpop.f32.mrf.mxu0
    %v6140 = vadd.f32 %v6126, %v6139
    %v6141 = vpop.f32.mrf.mxu0
    %v6142 = vadd.f32 %v6128, %v6141
    %6143 = vdwg.mxu0
    %s6144 = scalar_lea.vmem [#allocation17], 8
    %v6145 = vld [vmem:[%s6144] sm:$0x3]
    %v6147 = vperm.slane %v6145, 0
    %v6148 = vperm.slane %v6145, 1
    %v6151 = vadd.f32 %v6098, %v6147
    %v6152 = vadd.f32 %v6140, %v6148
    %v6153 = vadd.f32 %v6100, %v6147
    %v6154 = vadd.f32 %v6142, %v6148
    %v6155 = vtanh.pop %v6151
    %v6156 = vtanh.pop %v6153
    %v6157 = vxor.u32 %v6152, 2147483648
    %v6158 = vxor.u32 %v6154, 2147483648
    %v6159 = vmul.f32 %v6157, 1.442695
    %v6160 = vpow.pop %v6159
    %v6161 = vmul.f32 %v6158, 1.442695
    %v6162 = vpow.pop %v6161
    %v6163 = vadd.f32 %v6160, 1.0
    %v6164 = vadd.f32 %v6162, 1.0
    %v6165 = vrcp.pop %v6163
    %v6166 = vmul.f32 %v6163, %v6165
    %v6167 = vsub.f32 1.0, %v6166
    %v6168 = vmul.f32 %v6165, %v6167
    %v6169 = vadd.f32 %v6165, %v6168
    %vm6170 = vweird.f32 %v6163
    %vm6171 = vweird.f32 %v6165
    %vm6172 = vmor %vm6170, %vm6171
    %v6173 = vsel %vm6172, %v6165, %v6169
    %v6174 = vand.u32 2147483647, %v6163
    %vm6175 = vcmp.eq.f32.partialorder %v6174, 8.507059e+37
    %v6176 = vand.u32 %v6163, 2147483648
    %v6177 = vor.u32 1.1754944e-38, %v6176
    %v6178 = vsel %vm6175, %v6177, %v6173
    %v6179 = vmul.f32 1.0, %v6178
    %v6180 = vrcp.pop %v6164
    %v6181 = vmul.f32 %v6164, %v6180
    %v6182 = vsub.f32 1.0, %v6181
    %v6183 = vmul.f32 %v6180, %v6182
    %v6184 = vadd.f32 %v6180, %v6183
    %vm6185 = vweird.f32 %v6164
    %vm6186 = vweird.f32 %v6180
    %vm6187 = vmor %vm6185, %vm6186
    %v6188 = vsel %vm6187, %v6180, %v6184
    %v6189 = vand.u32 2147483647, %v6164
    %vm6190 = vcmp.eq.f32.partialorder %v6189, 8.507059e+37
    %v6191 = vand.u32 %v6164, 2147483648
    %v6192 = vor.u32 1.1754944e-38, %v6191
    %v6193 = vsel %vm6190, %v6192, %v6188
    %v6194 = vmul.f32 1.0, %v6193
    %v6195 = vmul.f32 %v6155, %v6179
    %v6196 = vmul.f32 %v6156, %v6194
    %s6197 = scalar_lea.vmem [#allocation19], 512
    %v6198 = vld [vmem:[%s6197] sm:$0xff]
    %v6199 = vld [vmem:[%s6197 + $0x8] sm:$0xff]
    %v6200 = vld [vmem:[%s6197 + $0x10] sm:$0xff]
    %v6201 = vld [vmem:[%s6197 + $0x18] sm:$0xff]
    %v6202 = vld [vmem:[%s6197 + $0x20] sm:$0xff]
    %v6203 = vld [vmem:[%s6197 + $0x28] sm:$0xff]
    %v6204 = vld [vmem:[%s6197 + $0x30] sm:$0xff]
    %v6205 = vld [vmem:[%s6197 + $0x38] sm:$0xff]
    %v6206 = vld [vmem:[%s6197 + $0x40] sm:$0xff]
    %v6207 = vld [vmem:[%s6197 + $0x48] sm:$0xff]
    %v6208 = vld [vmem:[%s6197 + $0x50] sm:$0xff]
    %v6209 = vld [vmem:[%s6197 + $0x58] sm:$0xff]
    %v6210 = vld [vmem:[%s6197 + $0x60] sm:$0xff]
    %v6211 = vld [vmem:[%s6197 + $0x68] sm:$0xff]
    %v6212 = vld [vmem:[%s6197 + $0x70] sm:$0xff]
    %v6213 = vld [vmem:[%s6197 + $0x78] sm:$0xff]
    %v6214 = vpack.c.bf16 %v6196, %v6195
    %s6215 = scalar_lea.vmem [#allocation20], 8
    %v6216 = vld [vmem:[%s6215] sm:$0x3]
    %v6218 = vperm.slane %v6216, 0
    %v6219 = vperm.slane %v6216, 1
    %v6238 = vunpack.c.l.b16 %v6198
    %v6239 = vunpack.c.h.b16 %v6198
    %v6240 = vunpack.c.l.b16 %v6199
    %v6241 = vunpack.c.h.b16 %v6199
    %v6242 = vunpack.c.l.b16 %v6200
    %v6243 = vunpack.c.h.b16 %v6200
    %v6244 = vunpack.c.l.b16 %v6201
    %v6245 = vunpack.c.h.b16 %v6201
    %v6246 = vunpack.c.l.b16 %v6202
    %v6247 = vunpack.c.h.b16 %v6202
    %v6248 = vunpack.c.l.b16 %v6203
    %v6249 = vunpack.c.h.b16 %v6203
    %v6250 = vunpack.c.l.b16 %v6204
    %v6251 = vunpack.c.h.b16 %v6204
    %v6252 = vunpack.c.l.b16 %v6205
    %v6253 = vunpack.c.h.b16 %v6205
    %v6254 = vunpack.c.l.b16 %v6206
    %v6255 = vunpack.c.h.b16 %v6206
    %v6256 = vunpack.c.l.b16 %v6207
    %v6257 = vunpack.c.h.b16 %v6207
    %v6258 = vunpack.c.l.b16 %v6208
    %v6259 = vunpack.c.h.b16 %v6208
    %v6260 = vunpack.c.l.b16 %v6209
    %v6261 = vunpack.c.h.b16 %v6209
    %v6262 = vunpack.c.l.b16 %v6210
    %v6263 = vunpack.c.h.b16 %v6210
    %v6264 = vunpack.c.l.b16 %v6211
    %v6265 = vunpack.c.h.b16 %v6211
    %v6266 = vunpack.c.l.b16 %v6212
    %v6267 = vunpack.c.h.b16 %v6212
    %v6268 = vunpack.c.l.b16 %v6213
    %v6269 = vunpack.c.h.b16 %v6213
    %v6270 = vpack.c.b16 %v6240, %v6238
    %v6271 = vpack.c.b16 %v6241, %v6239
    %v6272 = vpack.c.b16 %v6244, %v6242
    %v6273 = vpack.c.b16 %v6245, %v6243
    %v6274 = vpack.c.b16 %v6248, %v6246
    %v6275 = vpack.c.b16 %v6249, %v6247
    %v6276 = vpack.c.b16 %v6252, %v6250
    %v6277 = vpack.c.b16 %v6253, %v6251
    %v6278 = vpack.c.b16 %v6256, %v6254
    %v6279 = vpack.c.b16 %v6257, %v6255
    %v6280 = vpack.c.b16 %v6260, %v6258
    %v6281 = vpack.c.b16 %v6261, %v6259
    %v6282 = vpack.c.b16 %v6264, %v6262
    %v6283 = vpack.c.b16 %v6265, %v6263
    %v6284 = vpack.c.b16 %v6268, %v6266
    %v6285 = vpack.c.b16 %v6269, %v6267
    %6302 = vmatpush.bf16.msra.mxu0 %v6284
    %6303 = vmatpush.bf16.msra.mxu0 %v6282
    %6304 = vmatpush.bf16.msra.mxu0 %v6280
    %6305 = vmatpush.bf16.msra.mxu0 %v6278
    %6306 = vmatpush.bf16.msra.mxu0 %v6276
    %6307 = vmatpush.bf16.msra.mxu0 %v6274
    %6308 = vmatpush.bf16.msra.mxu0 %v6272
    %6309 = vmatpush.bf16.msra.mxu0 %v6270
    %6310 = vmatmul.bf16.gmra.mxu0 %v6214
    %v6311 = vpop.f32.mrf.mxu0
    %v6312 = vadd.f32 %v6218, %v6311
    %v6313 = vpop.f32.mrf.mxu0
    %v6314 = vadd.f32 %v6218, %v6313
    %6315 = vdwg.mxu0
    %6316 = vmatpush.bf16.msra.mxu0 %v6285
    %6317 = vmatpush.bf16.msra.mxu0 %v6283
    %6318 = vmatpush.bf16.msra.mxu0 %v6281
    %6319 = vmatpush.bf16.msra.mxu0 %v6279
    %6320 = vmatpush.bf16.msra.mxu0 %v6277
    %6321 = vmatpush.bf16.msra.mxu0 %v6275
    %6322 = vmatpush.bf16.msra.mxu0 %v6273
    %6323 = vmatpush.bf16.msra.mxu0 %v6271
    %6324 = vmatmul.bf16.gmra.mxu0 %v6214
    %v6325 = vpop.f32.mrf.mxu0
    %v6326 = vadd.f32 %v6219, %v6325
    %v6327 = vpop.f32.mrf.mxu0
    %v6328 = vadd.f32 %v6219, %v6327
    %6329 = vdwg.mxu0
    %v6332 = vrot.slane %v5226, 2
    %v6333 = vrot.slane %v5227, 2
    %v6334 = vsel %vm1585, %v6332, %v6333
    %v6337 = vadd.f32 %v6312, %v6334
    %v6338 = vadd.f32 %v6314, %v6333
    %v6341 = vrot.slane %v5238, 2
    %v6342 = vrot.slane %v5239, 2
    %v6343 = vsel %vm1585, %v6341, %v6342
    %v6346 = vadd.f32 %v6326, %v6343
    %v6347 = vadd.f32 %v6328, %v6342
    %v6348 = vsel %vm301, %v6338, 0.0
    %v6349 = vadd.f32 %v6337, %v6348
    %v6350 = vrot.slane %v6349, 4
    %v6351 = vadd.f32 %v6349, %v6350
    %v6352 = vrot.slane %v6351, 2
    %v6353 = vadd.f32 %v6351, %v6352
    %v6354 = vrot.slane %v6353, 1
    %v6355 = vadd.f32 %v6353, %v6354
    %v6356 = vrcp.pop 12.0
    %v6357 = vmul.f32 12.0, %v6356
    %v6358 = vsub.f32 1.0, %v6357
    %v6359 = vmul.f32 %v6356, %v6358
    %v6360 = vadd.f32 %v6356, %v6359
    %vm6361 = vweird.f32 %v6356
    %v6362 = vsel %vm6361, %v6356, %v6360
    %v6363 = vmul.f32 %v6355, %v6362
    %v6364 = vsub.f32 %v6337, %v6363
    %v6365 = vsub.f32 %v6338, %v6363
    %v6366 = vmul.f32 %v6364, %v6364
    %v6367 = vmul.f32 %v6365, %v6365
    %v6368 = vsel %vm301, %v6367, 0.0
    %v6369 = vadd.f32 %v6366, %v6368
    %v6370 = vrot.slane %v6369, 4
    %v6371 = vadd.f32 %v6369, %v6370
    %v6372 = vrot.slane %v6371, 2
    %v6373 = vadd.f32 %v6371, %v6372
    %v6374 = vrot.slane %v6373, 1
    %v6375 = vadd.f32 %v6373, %v6374
    %v6376 = vmul.f32 %v6375, %v6362
    %v6377 = vadd.f32 %v6376, 1e-05
    %v6378 = vrsqrt.pop %v6377
    %v6379 = vmul.f32 %v6378, %v6377
    %v6380 = vmul.f32 %v6379, %v6378
    %v6381 = vmul.f32 0.5, %v6380
    %v6382 = vsub.f32 1.5, %v6381
    %v6383 = vmul.f32 %v6378, %v6382
    %vm6384 = vweird.f32 %v6377
    %vm6385 = vweird.f32 %v6378
    %vm6386 = vmor %vm6384, %vm6385
    %v6387 = vsel %vm6386, %v6378, %v6383
    %v6388 = vmul.f32 %v6364, %v6387
    %v6389 = vmul.f32 %v6365, %v6387
    %s6390 = scalar_lea.vmem [#allocation8], 5
    %v6391 = vld [vmem:[%s6390] sm:$0x1]
    %v6393 = vperm.slane %v6391, 0
    %v6395 = vmul.f32 %v6388, %v6393
    %v6396 = vmul.f32 %v6389, %v6393
    %s6397 = scalar_lea.vmem [#allocation10], 5
    %v6398 = vld [vmem:[%s6397] sm:$0x1]
    %v6400 = vperm.slane %v6398, 0
    %v6402 = vadd.f32 %v6395, %v6400
    %v6403 = vadd.f32 %v6396, %v6400
    %6404 = vmatpush.msra.mxu0 %v339
    %6405 = vmatpush.msra.mxu0 %v338
    %6406 = vmatpush.msra.mxu0 %v337
    %6407 = vmatpush.msra.mxu0 %v336
    %6408 = vmatpush.msra.mxu0 %v335
    %6409 = vmatpush.msra.mxu0 %v334
    %6410 = vmatpush.msra.mxu0 %v333
    %6411 = vmatpush.msra.mxu0 %v332
    %6412 = vmatpush.msra.mxu0 %v331
    %6413 = vmatpush.msra.mxu0 %v330
    %6414 = vmatpush.msra.mxu0 %v329
    %6415 = vmatpush.msra.mxu0 %v328
    %6416 = vmatpush.msra.mxu0 %v327
    %6417 = vmatpush.msra.mxu0 %v326
    %6418 = vmatpush.msra.mxu0 %v325
    %6419 = vmatpush.msra.mxu0 %v324
    %6420 = vmatmul.f32.gmra.mxu0 %v6337
    %v6421 = vpop.f32.mrf.mxu0
    %v6422 = vadd.f32 0.0, %v6421
    %6423 = vmatmul.f32.gmra.mxu0 %v6338
    %v6424 = vpop.f32.mrf.mxu0
    %v6425 = vadd.f32 0.0, %v6424
    %6426 = vdwg.mxu0
    %v6427 = vsub.f32 %v6337, %v6422
    %v6428 = vsub.f32 %v6338, %v6425
    %v6429 = vmul.f32 %v6427, %v6427
    %v6430 = vmul.f32 %v6428, %v6428
    %6431 = vmatpush.msra.mxu0 %v339
    %6432 = vmatpush.msra.mxu0 %v338
    %6433 = vmatpush.msra.mxu0 %v337
    %6434 = vmatpush.msra.mxu0 %v336
    %6435 = vmatpush.msra.mxu0 %v335
    %6436 = vmatpush.msra.mxu0 %v334
    %6437 = vmatpush.msra.mxu0 %v333
    %6438 = vmatpush.msra.mxu0 %v332
    %6439 = vmatpush.msra.mxu0 %v331
    %6440 = vmatpush.msra.mxu0 %v330
    %6441 = vmatpush.msra.mxu0 %v329
    %6442 = vmatpush.msra.mxu0 %v328
    %6443 = vmatpush.msra.mxu0 %v327
    %6444 = vmatpush.msra.mxu0 %v326
    %6445 = vmatpush.msra.mxu0 %v325
    %6446 = vmatpush.msra.mxu0 %v324
    %6447 = vmatmul.f32.gmra.mxu0 %v6429
    %v6448 = vpop.f32.mrf.mxu0
    %v6449 = vadd.f32 0.0, %v6448
    %6450 = vmatmul.f32.gmra.mxu0 %v6430
    %v6451 = vpop.f32.mrf.mxu0
    %v6452 = vadd.f32 0.0, %v6451
    %6453 = vdwg.mxu0
    %v6454 = vmul.f32 %v6449, 1.1428572
    %v6455 = vmul.f32 %v6452, 1.1428572
    %v6456 = vadd.f32 %v6454, 1e-05
    %v6457 = vadd.f32 %v6455, 1e-05
    %v6458 = vrsqrt.pop %v6456
    %v6459 = vmul.f32 %v6458, %v6456
    %v6460 = vmul.f32 %v6459, %v6458
    %v6461 = vmul.f32 0.5, %v6460
    %v6462 = vsub.f32 1.5, %v6461
    %v6463 = vmul.f32 %v6458, %v6462
    %vm6464 = vweird.f32 %v6456
    %vm6465 = vweird.f32 %v6458
    %vm6466 = vmor %vm6464, %vm6465
    %v6467 = vsel %vm6466, %v6458, %v6463
    %v6468 = vrsqrt.pop %v6457
    %v6469 = vmul.f32 %v6468, %v6457
    %v6470 = vmul.f32 %v6469, %v6468
    %v6471 = vmul.f32 0.5, %v6470
    %v6472 = vsub.f32 1.5, %v6471
    %v6473 = vmul.f32 %v6468, %v6472
    %vm6474 = vweird.f32 %v6457
    %vm6475 = vweird.f32 %v6468
    %vm6476 = vmor %vm6474, %vm6475
    %v6477 = vsel %vm6476, %v6468, %v6473
    %v6478 = vmul.f32 %v6427, %v6467
    %v6479 = vmul.f32 %v6428, %v6477
    %s6480 = scalar_lea.vmem [#allocation11], 5
    %v6481 = vld [vmem:[%s6480] sm:$0x1]
    %v6483 = vperm.slane %v6481, 0
    %v6485 = vmul.f32 %v6478, %v6483
    %v6486 = vmul.f32 %v6479, %v6483
    %s6487 = scalar_lea.vmem [#allocation13], 5
    %v6488 = vld [vmem:[%s6487] sm:$0x1]
    %v6490 = vperm.slane %v6488, 0
    %v6492 = vadd.f32 %v6485, %v6490
    %v6493 = vadd.f32 %v6486, %v6490
    %s6494 = scalar_lea.vmem [#allocation14], 1920
    %v6495 = vld [vmem:[%s6494] sm:$0xff]
    %v6496 = vld [vmem:[%s6494 + $0x8] sm:$0xff]
    %v6497 = vld [vmem:[%s6494 + $0x10] sm:$0xff]
    %v6498 = vld [vmem:[%s6494 + $0x18] sm:$0xff]
    %v6499 = vld [vmem:[%s6494 + $0x20] sm:$0xff]
    %v6500 = vld [vmem:[%s6494 + $0x28] sm:$0xff]
    %v6501 = vld [vmem:[%s6494 + $0x30] sm:$0xff]
    %v6502 = vld [vmem:[%s6494 + $0x38] sm:$0xff]
    %v6503 = vld [vmem:[%s6494 + $0x40] sm:$0xff]
    %v6504 = vld [vmem:[%s6494 + $0x48] sm:$0xff]
    %v6505 = vld [vmem:[%s6494 + $0x50] sm:$0xff]
    %v6506 = vld [vmem:[%s6494 + $0x58] sm:$0xff]
    %v6507 = vld [vmem:[%s6494 + $0x60] sm:$0xff]
    %v6508 = vld [vmem:[%s6494 + $0x68] sm:$0xff]
    %v6509 = vld [vmem:[%s6494 + $0x70] sm:$0xff]
    %v6510 = vld [vmem:[%s6494 + $0x78] sm:$0xff]
    %v6511 = vld [vmem:[%s6494 + $0x80] sm:$0xff]
    %v6512 = vld [vmem:[%s6494 + $0x88] sm:$0xff]
    %v6513 = vld [vmem:[%s6494 + $0x90] sm:$0xff]
    %v6514 = vld [vmem:[%s6494 + $0x98] sm:$0xff]
    %v6515 = vld [vmem:[%s6494 + $0xa0] sm:$0xff]
    %v6516 = vld [vmem:[%s6494 + $0xa8] sm:$0xff]
    %v6517 = vld [vmem:[%s6494 + $0xb0] sm:$0xff]
    %v6518 = vld [vmem:[%s6494 + $0xb8] sm:$0xff]
    %v6519 = vld [vmem:[%s6494 + $0xc0] sm:$0xff]
    %v6520 = vld [vmem:[%s6494 + $0xc8] sm:$0xff]
    %v6521 = vld [vmem:[%s6494 + $0xd0] sm:$0xff]
    %v6522 = vld [vmem:[%s6494 + $0xd8] sm:$0xff]
    %v6523 = vld [vmem:[%s6494 + $0xe0] sm:$0xff]
    %v6524 = vld [vmem:[%s6494 + $0xe8] sm:$0xff]
    %v6525 = vld [vmem:[%s6494 + $0xf0] sm:$0xff]
    %v6526 = vld [vmem:[%s6494 + $0xf8] sm:$0xff]
    %v6527 = vld [vmem:[%s6494 + $0x100] sm:$0xff]
    %v6528 = vld [vmem:[%s6494 + $0x108] sm:$0xff]
    %v6529 = vld [vmem:[%s6494 + $0x110] sm:$0xff]
    %v6530 = vld [vmem:[%s6494 + $0x118] sm:$0xff]
    %v6531 = vld [vmem:[%s6494 + $0x120] sm:$0xff]
    %v6532 = vld [vmem:[%s6494 + $0x128] sm:$0xff]
    %v6533 = vld [vmem:[%s6494 + $0x130] sm:$0xff]
    %v6534 = vld [vmem:[%s6494 + $0x138] sm:$0xff]
    %v6535 = vld [vmem:[%s6494 + $0x140] sm:$0xff]
    %v6536 = vld [vmem:[%s6494 + $0x148] sm:$0xff]
    %v6537 = vld [vmem:[%s6494 + $0x150] sm:$0xff]
    %v6538 = vld [vmem:[%s6494 + $0x158] sm:$0xff]
    %v6539 = vld [vmem:[%s6494 + $0x160] sm:$0xff]
    %v6540 = vld [vmem:[%s6494 + $0x168] sm:$0xff]
    %v6541 = vld [vmem:[%s6494 + $0x170] sm:$0xff]
    %v6542 = vld [vmem:[%s6494 + $0x178] sm:$0xff]
    %v6543 = vpack.c.bf16 %v6337, %v6337
    %v6544 = vpack.c.bf16 %v6402, %v6402
    %v6545 = vpack.c.bf16 %v6492, %v6492
    %s6546 = scalar_lea.vmem [#allocation16], 1920
    %v6547 = vld [vmem:[%s6546] sm:$0xff]
    %v6548 = vld [vmem:[%s6546 + $0x8] sm:$0xff]
    %v6549 = vld [vmem:[%s6546 + $0x10] sm:$0xff]
    %v6550 = vld [vmem:[%s6546 + $0x18] sm:$0xff]
    %v6551 = vld [vmem:[%s6546 + $0x20] sm:$0xff]
    %v6552 = vld [vmem:[%s6546 + $0x28] sm:$0xff]
    %v6553 = vld [vmem:[%s6546 + $0x30] sm:$0xff]
    %v6554 = vld [vmem:[%s6546 + $0x38] sm:$0xff]
    %v6555 = vld [vmem:[%s6546 + $0x40] sm:$0xff]
    %v6556 = vld [vmem:[%s6546 + $0x48] sm:$0xff]
    %v6557 = vld [vmem:[%s6546 + $0x50] sm:$0xff]
    %v6558 = vld [vmem:[%s6546 + $0x58] sm:$0xff]
    %v6559 = vld [vmem:[%s6546 + $0x60] sm:$0xff]
    %v6560 = vld [vmem:[%s6546 + $0x68] sm:$0xff]
    %v6561 = vld [vmem:[%s6546 + $0x70] sm:$0xff]
    %v6562 = vld [vmem:[%s6546 + $0x78] sm:$0xff]
    %v6563 = vld [vmem:[%s6546 + $0x80] sm:$0xff]
    %v6564 = vld [vmem:[%s6546 + $0x88] sm:$0xff]
    %v6565 = vld [vmem:[%s6546 + $0x90] sm:$0xff]
    %v6566 = vld [vmem:[%s6546 + $0x98] sm:$0xff]
    %v6567 = vld [vmem:[%s6546 + $0xa0] sm:$0xff]
    %v6568 = vld [vmem:[%s6546 + $0xa8] sm:$0xff]
    %v6569 = vld [vmem:[%s6546 + $0xb0] sm:$0xff]
    %v6570 = vld [vmem:[%s6546 + $0xb8] sm:$0xff]
    %v6571 = vld [vmem:[%s6546 + $0xc0] sm:$0xff]
    %v6572 = vld [vmem:[%s6546 + $0xc8] sm:$0xff]
    %v6573 = vld [vmem:[%s6546 + $0xd0] sm:$0xff]
    %v6574 = vld [vmem:[%s6546 + $0xd8] sm:$0xff]
    %v6575 = vld [vmem:[%s6546 + $0xe0] sm:$0xff]
    %v6576 = vld [vmem:[%s6546 + $0xe8] sm:$0xff]
    %v6577 = vld [vmem:[%s6546 + $0xf0] sm:$0xff]
    %v6578 = vld [vmem:[%s6546 + $0xf8] sm:$0xff]
    %v6579 = vld [vmem:[%s6546 + $0x100] sm:$0xff]
    %v6580 = vld [vmem:[%s6546 + $0x108] sm:$0xff]
    %v6581 = vld [vmem:[%s6546 + $0x110] sm:$0xff]
    %v6582 = vld [vmem:[%s6546 + $0x118] sm:$0xff]
    %v6583 = vld [vmem:[%s6546 + $0x120] sm:$0xff]
    %v6584 = vld [vmem:[%s6546 + $0x128] sm:$0xff]
    %v6585 = vld [vmem:[%s6546 + $0x130] sm:$0xff]
    %v6586 = vld [vmem:[%s6546 + $0x138] sm:$0xff]
    %v6587 = vld [vmem:[%s6546 + $0x140] sm:$0xff]
    %v6588 = vld [vmem:[%s6546 + $0x148] sm:$0xff]
    %v6589 = vld [vmem:[%s6546 + $0x150] sm:$0xff]
    %v6590 = vld [vmem:[%s6546 + $0x158] sm:$0xff]
    %v6591 = vld [vmem:[%s6546 + $0x160] sm:$0xff]
    %v6592 = vld [vmem:[%s6546 + $0x168] sm:$0xff]
    %v6593 = vld [vmem:[%s6546 + $0x170] sm:$0xff]
    %v6594 = vld [vmem:[%s6546 + $0x178] sm:$0xff]
    %v6595 = vpack.c.bf16 %v6338, %v6337
    %v6596 = vpack.c.bf16 %v6403, %v6402
    %v6597 = vpack.c.bf16 %v6493, %v6492
    %v6601 = vrot.slane %v6595, 2
    %v6602 = vrot.slane %v6596, 2
    %v6603 = vrot.slane %v6597, 2
    %v6655 = vunpack.c.l.b16 %v6547
    %v6656 = vunpack.c.h.b16 %v6547
    %v6657 = vunpack.c.l.b16 %v6548
    %v6658 = vunpack.c.h.b16 %v6548
    %v6659 = vunpack.c.l.b16 %v6549
    %v6660 = vunpack.c.h.b16 %v6549
    %v6661 = vunpack.c.l.b16 %v6550
    %v6662 = vunpack.c.h.b16 %v6550
    %v6663 = vunpack.c.l.b16 %v6551
    %v6664 = vunpack.c.h.b16 %v6551
    %v6665 = vunpack.c.l.b16 %v6552
    %v6666 = vunpack.c.h.b16 %v6552
    %v6667 = vunpack.c.l.b16 %v6553
    %v6668 = vunpack.c.h.b16 %v6553
    %v6669 = vunpack.c.l.b16 %v6554
    %v6670 = vunpack.c.h.b16 %v6554
    %v6671 = vunpack.c.l.b16 %v6555
    %v6672 = vunpack.c.h.b16 %v6555
    %v6673 = vunpack.c.l.b16 %v6556
    %v6674 = vunpack.c.h.b16 %v6556
    %v6675 = vunpack.c.l.b16 %v6557
    %v6676 = vunpack.c.h.b16 %v6557
    %v6677 = vunpack.c.l.b16 %v6558
    %v6678 = vunpack.c.h.b16 %v6558
    %v6679 = vunpack.c.l.b16 %v6559
    %v6680 = vunpack.c.h.b16 %v6559
    %v6681 = vunpack.c.l.b16 %v6560
    %v6682 = vunpack.c.h.b16 %v6560
    %v6683 = vunpack.c.l.b16 %v6561
    %v6684 = vunpack.c.h.b16 %v6561
    %v6685 = vunpack.c.l.b16 %v6562
    %v6686 = vunpack.c.h.b16 %v6562
    %v6687 = vunpack.c.l.b16 %v6563
    %v6688 = vunpack.c.h.b16 %v6563
    %v6689 = vunpack.c.l.b16 %v6564
    %v6690 = vunpack.c.h.b16 %v6564
    %v6691 = vunpack.c.l.b16 %v6565
    %v6692 = vunpack.c.h.b16 %v6565
    %v6693 = vunpack.c.l.b16 %v6566
    %v6694 = vunpack.c.h.b16 %v6566
    %v6695 = vunpack.c.l.b16 %v6567
    %v6696 = vunpack.c.h.b16 %v6567
    %v6697 = vunpack.c.l.b16 %v6568
    %v6698 = vunpack.c.h.b16 %v6568
    %v6699 = vunpack.c.l.b16 %v6569
    %v6700 = vunpack.c.h.b16 %v6569
    %v6701 = vunpack.c.l.b16 %v6570
    %v6702 = vunpack.c.h.b16 %v6570
    %v6703 = vunpack.c.l.b16 %v6571
    %v6704 = vunpack.c.h.b16 %v6571
    %v6705 = vunpack.c.l.b16 %v6572
    %v6706 = vunpack.c.h.b16 %v6572
    %v6707 = vunpack.c.l.b16 %v6573
    %v6708 = vunpack.c.h.b16 %v6573
    %v6709 = vunpack.c.l.b16 %v6574
    %v6710 = vunpack.c.h.b16 %v6574
    %v6711 = vunpack.c.l.b16 %v6575
    %v6712 = vunpack.c.h.b16 %v6575
    %v6713 = vunpack.c.l.b16 %v6576
    %v6714 = vunpack.c.h.b16 %v6576
    %v6715 = vunpack.c.l.b16 %v6577
    %v6716 = vunpack.c.h.b16 %v6577
    %v6717 = vunpack.c.l.b16 %v6578
    %v6718 = vunpack.c.h.b16 %v6578
    %v6719 = vunpack.c.l.b16 %v6579
    %v6720 = vunpack.c.h.b16 %v6579
    %v6721 = vunpack.c.l.b16 %v6580
    %v6722 = vunpack.c.h.b16 %v6580
    %v6723 = vunpack.c.l.b16 %v6581
    %v6724 = vunpack.c.h.b16 %v6581
    %v6725 = vunpack.c.l.b16 %v6582
    %v6726 = vunpack.c.h.b16 %v6582
    %v6727 = vunpack.c.l.b16 %v6583
    %v6728 = vunpack.c.h.b16 %v6583
    %v6729 = vunpack.c.l.b16 %v6584
    %v6730 = vunpack.c.h.b16 %v6584
    %v6731 = vunpack.c.l.b16 %v6585
    %v6732 = vunpack.c.h.b16 %v6585
    %v6733 = vunpack.c.l.b16 %v6586
    %v6734 = vunpack.c.h.b16 %v6586
    %v6735 = vunpack.c.l.b16 %v6587
    %v6736 = vunpack.c.h.b16 %v6587
    %v6737 = vunpack.c.l.b16 %v6588
    %v6738 = vunpack.c.h.b16 %v6588
    %v6739 = vunpack.c.l.b16 %v6589
    %v6740 = vunpack.c.h.b16 %v6589
    %v6741 = vunpack.c.l.b16 %v6590
    %v6742 = vunpack.c.h.b16 %v6590
    %v6743 = vunpack.c.l.b16 %v6591
    %v6744 = vunpack.c.h.b16 %v6591
    %v6745 = vunpack.c.l.b16 %v6592
    %v6746 = vunpack.c.h.b16 %v6592
    %v6747 = vunpack.c.l.b16 %v6593
    %v6748 = vunpack.c.h.b16 %v6593
    %v6749 = vunpack.c.l.b16 %v6594
    %v6750 = vunpack.c.h.b16 %v6594
    %v6751 = vpack.c.b16 %v6657, %v6655
    %v6752 = vpack.c.b16 %v6658, %v6656
    %v6753 = vpack.c.b16 %v6661, %v6659
    %v6754 = vpack.c.b16 %v6662, %v6660
    %v6755 = vpack.c.b16 %v6665, %v6663
    %v6756 = vpack.c.b16 %v6666, %v6664
    %v6757 = vpack.c.b16 %v6669, %v6667
    %v6758 = vpack.c.b16 %v6670, %v6668
    %v6759 = vpack.c.b16 %v6673, %v6671
    %v6760 = vpack.c.b16 %v6674, %v6672
    %v6761 = vpack.c.b16 %v6677, %v6675
    %v6762 = vpack.c.b16 %v6678, %v6676
    %v6763 = vpack.c.b16 %v6681, %v6679
    %v6764 = vpack.c.b16 %v6682, %v6680
    %v6765 = vpack.c.b16 %v6685, %v6683
    %v6766 = vpack.c.b16 %v6686, %v6684
    %v6767 = vpack.c.b16 %v6689, %v6687
    %v6768 = vpack.c.b16 %v6690, %v6688
    %v6769 = vpack.c.b16 %v6693, %v6691
    %v6770 = vpack.c.b16 %v6694, %v6692
    %v6771 = vpack.c.b16 %v6697, %v6695
    %v6772 = vpack.c.b16 %v6698, %v6696
    %v6773 = vpack.c.b16 %v6701, %v6699
    %v6774 = vpack.c.b16 %v6702, %v6700
    %v6775 = vpack.c.b16 %v6705, %v6703
    %v6776 = vpack.c.b16 %v6706, %v6704
    %v6777 = vpack.c.b16 %v6709, %v6707
    %v6778 = vpack.c.b16 %v6710, %v6708
    %v6779 = vpack.c.b16 %v6713, %v6711
    %v6780 = vpack.c.b16 %v6714, %v6712
    %v6781 = vpack.c.b16 %v6717, %v6715
    %v6782 = vpack.c.b16 %v6718, %v6716
    %v6783 = vpack.c.b16 %v6721, %v6719
    %v6784 = vpack.c.b16 %v6722, %v6720
    %v6785 = vpack.c.b16 %v6725, %v6723
    %v6786 = vpack.c.b16 %v6726, %v6724
    %v6787 = vpack.c.b16 %v6729, %v6727
    %v6788 = vpack.c.b16 %v6730, %v6728
    %v6789 = vpack.c.b16 %v6733, %v6731
    %v6790 = vpack.c.b16 %v6734, %v6732
    %v6791 = vpack.c.b16 %v6737, %v6735
    %v6792 = vpack.c.b16 %v6738, %v6736
    %v6793 = vpack.c.b16 %v6741, %v6739
    %v6794 = vpack.c.b16 %v6742, %v6740
    %v6795 = vpack.c.b16 %v6745, %v6743
    %v6796 = vpack.c.b16 %v6746, %v6744
    %v6797 = vpack.c.b16 %v6749, %v6747
    %v6798 = vpack.c.b16 %v6750, %v6748
    %6847 = vmatpush.bf16.msra.mxu0 %v6765
    %6848 = vmatpush.bf16.msra.mxu0 %v6763
    %6849 = vmatpush.bf16.msra.mxu0 %v6761
    %6850 = vmatpush.bf16.msra.mxu0 %v6759
    %6851 = vmatpush.bf16.msra.mxu0 %v6757
    %6852 = vmatpush.bf16.msra.mxu0 %v6755
    %6853 = vmatpush.bf16.msra.mxu0 %v6753
    %6854 = vmatpush.bf16.msra.mxu0 %v6751
    %6855 = vmatmul.bf16.gmra.mxu0 %v6601
    %v6856 = vpop.f32.mrf.mxu0
    %v6857 = vadd.f32 0.0, %v6856
    %v6858 = vpop.f32.mrf.mxu0
    %6859 = vdwg.mxu0
    %6860 = vmatpush.bf16.msra.mxu0 %v6781
    %6861 = vmatpush.bf16.msra.mxu0 %v6779
    %6862 = vmatpush.bf16.msra.mxu0 %v6777
    %6863 = vmatpush.bf16.msra.mxu0 %v6775
    %6864 = vmatpush.bf16.msra.mxu0 %v6773
    %6865 = vmatpush.bf16.msra.mxu0 %v6771
    %6866 = vmatpush.bf16.msra.mxu0 %v6769
    %6867 = vmatpush.bf16.msra.mxu0 %v6767
    %6868 = vmatmul.bf16.gmra.mxu0 %v6602
    %v6869 = vpop.f32.mrf.mxu0
    %v6870 = vadd.f32 %v6857, %v6869
    %v6871 = vpop.f32.mrf.mxu0
    %6872 = vdwg.mxu0
    %6873 = vmatpush.bf16.msra.mxu0 %v6797
    %6874 = vmatpush.bf16.msra.mxu0 %v6795
    %6875 = vmatpush.bf16.msra.mxu0 %v6793
    %6876 = vmatpush.bf16.msra.mxu0 %v6791
    %6877 = vmatpush.bf16.msra.mxu0 %v6789
    %6878 = vmatpush.bf16.msra.mxu0 %v6787
    %6879 = vmatpush.bf16.msra.mxu0 %v6785
    %6880 = vmatpush.bf16.msra.mxu0 %v6783
    %6881 = vmatmul.bf16.gmra.mxu0 %v6603
    %v6882 = vpop.f32.mrf.mxu0
    %v6883 = vadd.f32 %v6870, %v6882
    %v6884 = vpop.f32.mrf.mxu0
    %6885 = vdwg.mxu0
    %6886 = vmatpush.bf16.msra.mxu0 %v6766
    %6887 = vmatpush.bf16.msra.mxu0 %v6764
    %6888 = vmatpush.bf16.msra.mxu0 %v6762
    %6889 = vmatpush.bf16.msra.mxu0 %v6760
    %6890 = vmatpush.bf16.msra.mxu0 %v6758
    %6891 = vmatpush.bf16.msra.mxu0 %v6756
    %6892 = vmatpush.bf16.msra.mxu0 %v6754
    %6893 = vmatpush.bf16.msra.mxu0 %v6752
    %6894 = vmatmul.bf16.gmra.mxu0 %v6601
    %v6895 = vpop.f32.mrf.mxu0
    %v6896 = vadd.f32 0.0, %v6895
    %v6897 = vpop.f32.mrf.mxu0
    %6898 = vdwg.mxu0
    %6899 = vmatpush.bf16.msra.mxu0 %v6782
    %6900 = vmatpush.bf16.msra.mxu0 %v6780
    %6901 = vmatpush.bf16.msra.mxu0 %v6778
    %6902 = vmatpush.bf16.msra.mxu0 %v6776
    %6903 = vmatpush.bf16.msra.mxu0 %v6774
    %6904 = vmatpush.bf16.msra.mxu0 %v6772
    %6905 = vmatpush.bf16.msra.mxu0 %v6770
    %6906 = vmatpush.bf16.msra.mxu0 %v6768
    %6907 = vmatmul.bf16.gmra.mxu0 %v6602
    %v6908 = vpop.f32.mrf.mxu0
    %v6909 = vadd.f32 %v6896, %v6908
    %v6910 = vpop.f32.mrf.mxu0
    %6911 = vdwg.mxu0
    %6912 = vmatpush.bf16.msra.mxu0 %v6798
    %6913 = vmatpush.bf16.msra.mxu0 %v6796
    %6914 = vmatpush.bf16.msra.mxu0 %v6794
    %6915 = vmatpush.bf16.msra.mxu0 %v6792
    %6916 = vmatpush.bf16.msra.mxu0 %v6790
    %6917 = vmatpush.bf16.msra.mxu0 %v6788
    %6918 = vmatpush.bf16.msra.mxu0 %v6786
    %6919 = vmatpush.bf16.msra.mxu0 %v6784
    %6920 = vmatmul.bf16.gmra.mxu0 %v6603
    %v6921 = vpop.f32.mrf.mxu0
    %v6922 = vadd.f32 %v6909, %v6921
    %v6923 = vpop.f32.mrf.mxu0
    %6924 = vdwg.mxu0
    %v6973 = vunpack.c.l.b16 %v6495
    %v6974 = vunpack.c.h.b16 %v6495
    %v6975 = vunpack.c.l.b16 %v6496
    %v6976 = vunpack.c.h.b16 %v6496
    %v6977 = vunpack.c.l.b16 %v6497
    %v6978 = vunpack.c.h.b16 %v6497
    %v6979 = vunpack.c.l.b16 %v6498
    %v6980 = vunpack.c.h.b16 %v6498
    %v6981 = vunpack.c.l.b16 %v6499
    %v6982 = vunpack.c.h.b16 %v6499
    %v6983 = vunpack.c.l.b16 %v6500
    %v6984 = vunpack.c.h.b16 %v6500
    %v6985 = vunpack.c.l.b16 %v6501
    %v6986 = vunpack.c.h.b16 %v6501
    %v6987 = vunpack.c.l.b16 %v6502
    %v6988 = vunpack.c.h.b16 %v6502
    %v6989 = vunpack.c.l.b16 %v6503
    %v6990 = vunpack.c.h.b16 %v6503
    %v6991 = vunpack.c.l.b16 %v6504
    %v6992 = vunpack.c.h.b16 %v6504
    %v6993 = vunpack.c.l.b16 %v6505
    %v6994 = vunpack.c.h.b16 %v6505
    %v6995 = vunpack.c.l.b16 %v6506
    %v6996 = vunpack.c.h.b16 %v6506
    %v6997 = vunpack.c.l.b16 %v6507
    %v6998 = vunpack.c.h.b16 %v6507
    %v6999 = vunpack.c.l.b16 %v6508
    %v7000 = vunpack.c.h.b16 %v6508
    %v7001 = vunpack.c.l.b16 %v6509
    %v7002 = vunpack.c.h.b16 %v6509
    %v7003 = vunpack.c.l.b16 %v6510
    %v7004 = vunpack.c.h.b16 %v6510
    %v7005 = vunpack.c.l.b16 %v6511
    %v7006 = vunpack.c.h.b16 %v6511
    %v7007 = vunpack.c.l.b16 %v6512
    %v7008 = vunpack.c.h.b16 %v6512
    %v7009 = vunpack.c.l.b16 %v6513
    %v7010 = vunpack.c.h.b16 %v6513
    %v7011 = vunpack.c.l.b16 %v6514
    %v7012 = vunpack.c.h.b16 %v6514
    %v7013 = vunpack.c.l.b16 %v6515
    %v7014 = vunpack.c.h.b16 %v6515
    %v7015 = vunpack.c.l.b16 %v6516
    %v7016 = vunpack.c.h.b16 %v6516
    %v7017 = vunpack.c.l.b16 %v6517
    %v7018 = vunpack.c.h.b16 %v6517
    %v7019 = vunpack.c.l.b16 %v6518
    %v7020 = vunpack.c.h.b16 %v6518
    %v7021 = vunpack.c.l.b16 %v6519
    %v7022 = vunpack.c.h.b16 %v6519
    %v7023 = vunpack.c.l.b16 %v6520
    %v7024 = vunpack.c.h.b16 %v6520
    %v7025 = vunpack.c.l.b16 %v6521
    %v7026 = vunpack.c.h.b16 %v6521
    %v7027 = vunpack.c.l.b16 %v6522
    %v7028 = vunpack.c.h.b16 %v6522
    %v7029 = vunpack.c.l.b16 %v6523
    %v7030 = vunpack.c.h.b16 %v6523
    %v7031 = vunpack.c.l.b16 %v6524
    %v7032 = vunpack.c.h.b16 %v6524
    %v7033 = vunpack.c.l.b16 %v6525
    %v7034 = vunpack.c.h.b16 %v6525
    %v7035 = vunpack.c.l.b16 %v6526
    %v7036 = vunpack.c.h.b16 %v6526
    %v7037 = vunpack.c.l.b16 %v6527
    %v7038 = vunpack.c.h.b16 %v6527
    %v7039 = vunpack.c.l.b16 %v6528
    %v7040 = vunpack.c.h.b16 %v6528
    %v7041 = vunpack.c.l.b16 %v6529
    %v7042 = vunpack.c.h.b16 %v6529
    %v7043 = vunpack.c.l.b16 %v6530
    %v7044 = vunpack.c.h.b16 %v6530
    %v7045 = vunpack.c.l.b16 %v6531
    %v7046 = vunpack.c.h.b16 %v6531
    %v7047 = vunpack.c.l.b16 %v6532
    %v7048 = vunpack.c.h.b16 %v6532
    %v7049 = vunpack.c.l.b16 %v6533
    %v7050 = vunpack.c.h.b16 %v6533
    %v7051 = vunpack.c.l.b16 %v6534
    %v7052 = vunpack.c.h.b16 %v6534
    %v7053 = vunpack.c.l.b16 %v6535
    %v7054 = vunpack.c.h.b16 %v6535
    %v7055 = vunpack.c.l.b16 %v6536
    %v7056 = vunpack.c.h.b16 %v6536
    %v7057 = vunpack.c.l.b16 %v6537
    %v7058 = vunpack.c.h.b16 %v6537
    %v7059 = vunpack.c.l.b16 %v6538
    %v7060 = vunpack.c.h.b16 %v6538
    %v7061 = vunpack.c.l.b16 %v6539
    %v7062 = vunpack.c.h.b16 %v6539
    %v7063 = vunpack.c.l.b16 %v6540
    %v7064 = vunpack.c.h.b16 %v6540
    %v7065 = vunpack.c.l.b16 %v6541
    %v7066 = vunpack.c.h.b16 %v6541
    %v7067 = vunpack.c.l.b16 %v6542
    %v7068 = vunpack.c.h.b16 %v6542
    %v7069 = vpack.c.b16 %v6975, %v6973
    %v7070 = vpack.c.b16 %v6976, %v6974
    %v7071 = vpack.c.b16 %v6979, %v6977
    %v7072 = vpack.c.b16 %v6980, %v6978
    %v7073 = vpack.c.b16 %v6983, %v6981
    %v7074 = vpack.c.b16 %v6984, %v6982
    %v7075 = vpack.c.b16 %v6987, %v6985
    %v7076 = vpack.c.b16 %v6988, %v6986
    %v7077 = vpack.c.b16 %v6991, %v6989
    %v7078 = vpack.c.b16 %v6992, %v6990
    %v7079 = vpack.c.b16 %v6995, %v6993
    %v7080 = vpack.c.b16 %v6996, %v6994
    %v7081 = vpack.c.b16 %v6999, %v6997
    %v7082 = vpack.c.b16 %v7000, %v6998
    %v7083 = vpack.c.b16 %v7003, %v7001
    %v7084 = vpack.c.b16 %v7004, %v7002
    %v7085 = vpack.c.b16 %v7007, %v7005
    %v7086 = vpack.c.b16 %v7008, %v7006
    %v7087 = vpack.c.b16 %v7011, %v7009
    %v7088 = vpack.c.b16 %v7012, %v7010
    %v7089 = vpack.c.b16 %v7015, %v7013
    %v7090 = vpack.c.b16 %v7016, %v7014
    %v7091 = vpack.c.b16 %v7019, %v7017
    %v7092 = vpack.c.b16 %v7020, %v7018
    %v7093 = vpack.c.b16 %v7023, %v7021
    %v7094 = vpack.c.b16 %v7024, %v7022
    %v7095 = vpack.c.b16 %v7027, %v7025
    %v7096 = vpack.c.b16 %v7028, %v7026
    %v7097 = vpack.c.b16 %v7031, %v7029
    %v7098 = vpack.c.b16 %v7032, %v7030
    %v7099 = vpack.c.b16 %v7035, %v7033
    %v7100 = vpack.c.b16 %v7036, %v7034
    %v7101 = vpack.c.b16 %v7039, %v7037
    %v7102 = vpack.c.b16 %v7040, %v7038
    %v7103 = vpack.c.b16 %v7043, %v7041
    %v7104 = vpack.c.b16 %v7044, %v7042
    %v7105 = vpack.c.b16 %v7047, %v7045
    %v7106 = vpack.c.b16 %v7048, %v7046
    %v7107 = vpack.c.b16 %v7051, %v7049
    %v7108 = vpack.c.b16 %v7052, %v7050
    %v7109 = vpack.c.b16 %v7055, %v7053
    %v7110 = vpack.c.b16 %v7056, %v7054
    %v7111 = vpack.c.b16 %v7059, %v7057
    %v7112 = vpack.c.b16 %v7060, %v7058
    %v7113 = vpack.c.b16 %v7063, %v7061
    %v7114 = vpack.c.b16 %v7064, %v7062
    %v7115 = vpack.c.b16 %v7067, %v7065
    %v7116 = vpack.c.b16 %v7068, %v7066
    %7165 = vmatpush.bf16.msra.mxu0 %v7083
    %7166 = vmatpush.bf16.msra.mxu0 %v7081
    %7167 = vmatpush.bf16.msra.mxu0 %v7079
    %7168 = vmatpush.bf16.msra.mxu0 %v7077
    %7169 = vmatpush.bf16.msra.mxu0 %v7075
    %7170 = vmatpush.bf16.msra.mxu0 %v7073
    %7171 = vmatpush.bf16.msra.mxu0 %v7071
    %7172 = vmatpush.bf16.msra.mxu0 %v7069
    %7173 = vmatmul.bf16.gmra.mxu0 %v6543
    %v7174 = vpop.f32.mrf.mxu0
    %v7175 = vadd.f32 %v6883, %v7174
    %v7176 = vpop.f32.mrf.mxu0
    %7177 = vdwg.mxu0
    %7178 = vmatpush.bf16.msra.mxu0 %v7099
    %7179 = vmatpush.bf16.msra.mxu0 %v7097
    %7180 = vmatpush.bf16.msra.mxu0 %v7095
    %7181 = vmatpush.bf16.msra.mxu0 %v7093
    %7182 = vmatpush.bf16.msra.mxu0 %v7091
    %7183 = vmatpush.bf16.msra.mxu0 %v7089
    %7184 = vmatpush.bf16.msra.mxu0 %v7087
    %7185 = vmatpush.bf16.msra.mxu0 %v7085
    %7186 = vmatmul.bf16.gmra.mxu0 %v6544
    %v7187 = vpop.f32.mrf.mxu0
    %v7188 = vadd.f32 %v7175, %v7187
    %v7189 = vpop.f32.mrf.mxu0
    %7190 = vdwg.mxu0
    %7191 = vmatpush.bf16.msra.mxu0 %v7115
    %7192 = vmatpush.bf16.msra.mxu0 %v7113
    %7193 = vmatpush.bf16.msra.mxu0 %v7111
    %7194 = vmatpush.bf16.msra.mxu0 %v7109
    %7195 = vmatpush.bf16.msra.mxu0 %v7107
    %7196 = vmatpush.bf16.msra.mxu0 %v7105
    %7197 = vmatpush.bf16.msra.mxu0 %v7103
    %7198 = vmatpush.bf16.msra.mxu0 %v7101
    %7199 = vmatmul.bf16.gmra.mxu0 %v6545
    %v7200 = vpop.f32.mrf.mxu0
    %v7201 = vadd.f32 %v7188, %v7200
    %v7202 = vpop.f32.mrf.mxu0
    %7203 = vdwg.mxu0
    %7204 = vmatpush.bf16.msra.mxu0 %v7084
    %7205 = vmatpush.bf16.msra.mxu0 %v7082
    %7206 = vmatpush.bf16.msra.mxu0 %v7080
    %7207 = vmatpush.bf16.msra.mxu0 %v7078
    %7208 = vmatpush.bf16.msra.mxu0 %v7076
    %7209 = vmatpush.bf16.msra.mxu0 %v7074
    %7210 = vmatpush.bf16.msra.mxu0 %v7072
    %7211 = vmatpush.bf16.msra.mxu0 %v7070
    %7212 = vmatmul.bf16.gmra.mxu0 %v6543
    %v7213 = vpop.f32.mrf.mxu0
    %v7214 = vadd.f32 %v6922, %v7213
    %v7215 = vpop.f32.mrf.mxu0
    %7216 = vdwg.mxu0
    %7217 = vmatpush.bf16.msra.mxu0 %v7100
    %7218 = vmatpush.bf16.msra.mxu0 %v7098
    %7219 = vmatpush.bf16.msra.mxu0 %v7096
    %7220 = vmatpush.bf16.msra.mxu0 %v7094
    %7221 = vmatpush.bf16.msra.mxu0 %v7092
    %7222 = vmatpush.bf16.msra.mxu0 %v7090
    %7223 = vmatpush.bf16.msra.mxu0 %v7088
    %7224 = vmatpush.bf16.msra.mxu0 %v7086
    %7225 = vmatmul.bf16.gmra.mxu0 %v6544
    %v7226 = vpop.f32.mrf.mxu0
    %v7227 = vadd.f32 %v7214, %v7226
    %v7228 = vpop.f32.mrf.mxu0
    %7229 = vdwg.mxu0
    %7230 = vmatpush.bf16.msra.mxu0 %v7116
    %7231 = vmatpush.bf16.msra.mxu0 %v7114
    %7232 = vmatpush.bf16.msra.mxu0 %v7112
    %7233 = vmatpush.bf16.msra.mxu0 %v7110
    %7234 = vmatpush.bf16.msra.mxu0 %v7108
    %7235 = vmatpush.bf16.msra.mxu0 %v7106
    %7236 = vmatpush.bf16.msra.mxu0 %v7104
    %7237 = vmatpush.bf16.msra.mxu0 %v7102
    %7238 = vmatmul.bf16.gmra.mxu0 %v6545
    %v7239 = vpop.f32.mrf.mxu0
    %v7240 = vadd.f32 %v7227, %v7239
    %v7241 = vpop.f32.mrf.mxu0
    %7242 = vdwg.mxu0
    %s7243 = scalar_lea.vmem [#allocation17], 10
    %v7244 = vld [vmem:[%s7243] sm:$0x3]
    %v7246 = vperm.slane %v7244, 0
    %v7247 = vperm.slane %v7244, 1
    %v7250 = vadd.f32 %v7201, %v7246
    %v7251 = vadd.f32 %v7240, %v7247
    %v7252 = vtanh.pop %v7250
    %v7253 = vxor.u32 %v7251, 2147483648
    %v7254 = vmul.f32 %v7253, 1.442695
    %v7255 = vpow.pop %v7254
    %v7256 = vadd.f32 %v7255, 1.0
    %v7257 = vrcp.pop %v7256
    %v7258 = vmul.f32 %v7256, %v7257
    %v7259 = vsub.f32 1.0, %v7258
    %v7260 = vmul.f32 %v7257, %v7259
    %v7261 = vadd.f32 %v7257, %v7260
    %vm7262 = vweird.f32 %v7256
    %vm7263 = vweird.f32 %v7257
    %vm7264 = vmor %vm7262, %vm7263
    %v7265 = vsel %vm7264, %v7257, %v7261
    %v7266 = vand.u32 2147483647, %v7256
    %vm7267 = vcmp.eq.f32.partialorder %v7266, 8.507059e+37
    %v7268 = vand.u32 %v7256, 2147483648
    %v7269 = vor.u32 1.1754944e-38, %v7268
    %v7270 = vsel %vm7267, %v7269, %v7265
    %v7271 = vmul.f32 1.0, %v7270
    %v7272 = vmul.f32 %v7252, %v7271
    %s7273 = scalar_lea.vmem [#allocation19], 640
    %v7274 = vld [vmem:[%s7273] sm:$0xff]
    %v7275 = vld [vmem:[%s7273 + $0x8] sm:$0xff]
    %v7276 = vld [vmem:[%s7273 + $0x10] sm:$0xff]
    %v7277 = vld [vmem:[%s7273 + $0x18] sm:$0xff]
    %v7278 = vld [vmem:[%s7273 + $0x20] sm:$0xff]
    %v7279 = vld [vmem:[%s7273 + $0x28] sm:$0xff]
    %v7280 = vld [vmem:[%s7273 + $0x30] sm:$0xff]
    %v7281 = vld [vmem:[%s7273 + $0x38] sm:$0xff]
    %v7282 = vld [vmem:[%s7273 + $0x40] sm:$0xff]
    %v7283 = vld [vmem:[%s7273 + $0x48] sm:$0xff]
    %v7284 = vld [vmem:[%s7273 + $0x50] sm:$0xff]
    %v7285 = vld [vmem:[%s7273 + $0x58] sm:$0xff]
    %v7286 = vld [vmem:[%s7273 + $0x60] sm:$0xff]
    %v7287 = vld [vmem:[%s7273 + $0x68] sm:$0xff]
    %v7288 = vld [vmem:[%s7273 + $0x70] sm:$0xff]
    %v7289 = vld [vmem:[%s7273 + $0x78] sm:$0xff]
    %v7290 = vpack.c.bf16 %v7272, %v7272
    %s7291 = scalar_lea.vmem [#allocation20], 10
    %v7292 = vld [vmem:[%s7291] sm:$0x3]
    %v7294 = vperm.slane %v7292, 0
    %v7295 = vperm.slane %v7292, 1
    %v7314 = vunpack.c.l.b16 %v7274
    %v7315 = vunpack.c.h.b16 %v7274
    %v7316 = vunpack.c.l.b16 %v7275
    %v7317 = vunpack.c.h.b16 %v7275
    %v7318 = vunpack.c.l.b16 %v7276
    %v7319 = vunpack.c.h.b16 %v7276
    %v7320 = vunpack.c.l.b16 %v7277
    %v7321 = vunpack.c.h.b16 %v7277
    %v7322 = vunpack.c.l.b16 %v7278
    %v7323 = vunpack.c.h.b16 %v7278
    %v7324 = vunpack.c.l.b16 %v7279
    %v7325 = vunpack.c.h.b16 %v7279
    %v7326 = vunpack.c.l.b16 %v7280
    %v7327 = vunpack.c.h.b16 %v7280
    %v7328 = vunpack.c.l.b16 %v7281
    %v7329 = vunpack.c.h.b16 %v7281
    %v7330 = vunpack.c.l.b16 %v7282
    %v7331 = vunpack.c.h.b16 %v7282
    %v7332 = vunpack.c.l.b16 %v7283
    %v7333 = vunpack.c.h.b16 %v7283
    %v7334 = vunpack.c.l.b16 %v7284
    %v7335 = vunpack.c.h.b16 %v7284
    %v7336 = vunpack.c.l.b16 %v7285
    %v7337 = vunpack.c.h.b16 %v7285
    %v7338 = vunpack.c.l.b16 %v7286
    %v7339 = vunpack.c.h.b16 %v7286
    %v7340 = vunpack.c.l.b16 %v7287
    %v7341 = vunpack.c.h.b16 %v7287
    %v7342 = vunpack.c.l.b16 %v7288
    %v7343 = vunpack.c.h.b16 %v7288
    %v7344 = vunpack.c.l.b16 %v7289
    %v7345 = vunpack.c.h.b16 %v7289
    %v7346 = vpack.c.b16 %v7316, %v7314
    %v7347 = vpack.c.b16 %v7317, %v7315
    %v7348 = vpack.c.b16 %v7320, %v7318
    %v7349 = vpack.c.b16 %v7321, %v7319
    %v7350 = vpack.c.b16 %v7324, %v7322
    %v7351 = vpack.c.b16 %v7325, %v7323
    %v7352 = vpack.c.b16 %v7328, %v7326
    %v7353 = vpack.c.b16 %v7329, %v7327
    %v7354 = vpack.c.b16 %v7332, %v7330
    %v7355 = vpack.c.b16 %v7333, %v7331
    %v7356 = vpack.c.b16 %v7336, %v7334
    %v7357 = vpack.c.b16 %v7337, %v7335
    %v7358 = vpack.c.b16 %v7340, %v7338
    %v7359 = vpack.c.b16 %v7341, %v7339
    %v7360 = vpack.c.b16 %v7344, %v7342
    %v7361 = vpack.c.b16 %v7345, %v7343
    %7378 = vmatpush.bf16.msra.mxu0 %v7360
    %7379 = vmatpush.bf16.msra.mxu0 %v7358
    %7380 = vmatpush.bf16.msra.mxu0 %v7356
    %7381 = vmatpush.bf16.msra.mxu0 %v7354
    %7382 = vmatpush.bf16.msra.mxu0 %v7352
    %7383 = vmatpush.bf16.msra.mxu0 %v7350
    %7384 = vmatpush.bf16.msra.mxu0 %v7348
    %7385 = vmatpush.bf16.msra.mxu0 %v7346
    %7386 = vmatmul.bf16.gmra.mxu0 %v7290
    %v7387 = vpop.f32.mrf.mxu0
    %v7388 = vadd.f32 %v7294, %v7387
    %v7389 = vpop.f32.mrf.mxu0
    %7390 = vdwg.mxu0
    %7391 = vmatpush.bf16.msra.mxu0 %v7361
    %7392 = vmatpush.bf16.msra.mxu0 %v7359
    %7393 = vmatpush.bf16.msra.mxu0 %v7357
    %7394 = vmatpush.bf16.msra.mxu0 %v7355
    %7395 = vmatpush.bf16.msra.mxu0 %v7353
    %7396 = vmatpush.bf16.msra.mxu0 %v7351
    %7397 = vmatpush.bf16.msra.mxu0 %v7349
    %7398 = vmatpush.bf16.msra.mxu0 %v7347
    %7399 = vmatmul.bf16.gmra.mxu0 %v7290
    %v7400 = vpop.f32.mrf.mxu0
    %v7401 = vadd.f32 %v7295, %v7400
    %v7402 = vpop.f32.mrf.mxu0
    %7403 = vdwg.mxu0
    %v7406 = vrot.slane %v6337, 4
    %v7407 = vrot.slane %v6338, 4
    %v7408 = vsel %vm301, %v7406, %v7407
    %v7410 = vadd.f32 %v7388, %v7408
    %v7413 = vrot.slane %v6346, 4
    %v7414 = vrot.slane %v6347, 4
    %v7415 = vsel %vm301, %v7413, %v7414
    %v7417 = vadd.f32 %v7401, %v7415
    %v7418 = vrot.slane %v7410, 4
    %v7419 = vadd.f32 %v7410, %v7418
    %v7420 = vrot.slane %v7419, 2
    %v7421 = vadd.f32 %v7419, %v7420
    %v7422 = vrot.slane %v7421, 1
    %v7423 = vadd.f32 %v7421, %v7422
    %v7424 = vrcp.pop 8.0
    %v7425 = vmul.f32 8.0, %v7424
    %v7426 = vsub.f32 1.0, %v7425
    %v7427 = vmul.f32 %v7424, %v7426
    %v7428 = vadd.f32 %v7424, %v7427
    %vm7429 = vweird.f32 %v7424
    %v7430 = vsel %vm7429, %v7424, %v7428
    %v7431 = vmul.f32 %v7423, %v7430
    %v7432 = vsub.f32 %v7410, %v7431
    %v7433 = vmul.f32 %v7432, %v7432
    %v7434 = vrot.slane %v7433, 4
    %v7435 = vadd.f32 %v7433, %v7434
    %v7436 = vrot.slane %v7435, 2
    %v7437 = vadd.f32 %v7435, %v7436
    %v7438 = vrot.slane %v7437, 1
    %v7439 = vadd.f32 %v7437, %v7438
    %v7440 = vmul.f32 %v7439, %v7430
    %v7441 = vadd.f32 %v7440, 1e-05
    %v7442 = vrsqrt.pop %v7441
    %v7443 = vmul.f32 %v7442, %v7441
    %v7444 = vmul.f32 %v7443, %v7442
    %v7445 = vmul.f32 0.5, %v7444
    %v7446 = vsub.f32 1.5, %v7445
    %v7447 = vmul.f32 %v7442, %v7446
    %vm7448 = vweird.f32 %v7441
    %vm7449 = vweird.f32 %v7442
    %vm7450 = vmor %vm7448, %vm7449
    %v7451 = vsel %vm7450, %v7442, %v7447
    %v7452 = vmul.f32 %v7432, %v7451
    %s7453 = scalar_lea.vmem [#allocation8], 6
    %v7454 = vld [vmem:[%s7453] sm:$0x1]
    %v7456 = vperm.slane %v7454, 0
    %v7458 = vmul.f32 %v7452, %v7456
    %s7459 = scalar_lea.vmem [#allocation10], 6
    %v7460 = vld [vmem:[%s7459] sm:$0x1]
    %v7462 = vperm.slane %v7460, 0
    %v7464 = vadd.f32 %v7458, %v7462
    %7465 = vmatpush.msra.mxu0 %v339
    %7466 = vmatpush.msra.mxu0 %v338
    %7467 = vmatpush.msra.mxu0 %v337
    %7468 = vmatpush.msra.mxu0 %v336
    %7469 = vmatpush.msra.mxu0 %v335
    %7470 = vmatpush.msra.mxu0 %v334
    %7471 = vmatpush.msra.mxu0 %v333
    %7472 = vmatpush.msra.mxu0 %v332
    %7473 = vmatpush.msra.mxu0 %v331
    %7474 = vmatpush.msra.mxu0 %v330
    %7475 = vmatpush.msra.mxu0 %v329
    %7476 = vmatpush.msra.mxu0 %v328
    %7477 = vmatpush.msra.mxu0 %v327
    %7478 = vmatpush.msra.mxu0 %v326
    %7479 = vmatpush.msra.mxu0 %v325
    %7480 = vmatpush.msra.mxu0 %v324
    %7481 = vmatmul.f32.gmra.mxu0 %v7410
    %v7482 = vpop.f32.mrf.mxu0
    %v7483 = vadd.f32 0.0, %v7482
    %7484 = vdwg.mxu0
    %v7485 = vsub.f32 %v7410, %v7483
    %v7486 = vmul.f32 %v7485, %v7485
    %7487 = vmatpush.msra.mxu0 %v339
    %7488 = vmatpush.msra.mxu0 %v338
    %7489 = vmatpush.msra.mxu0 %v337
    %7490 = vmatpush.msra.mxu0 %v336
    %7491 = vmatpush.msra.mxu0 %v335
    %7492 = vmatpush.msra.mxu0 %v334
    %7493 = vmatpush.msra.mxu0 %v333
    %7494 = vmatpush.msra.mxu0 %v332
    %7495 = vmatpush.msra.mxu0 %v331
    %7496 = vmatpush.msra.mxu0 %v330
    %7497 = vmatpush.msra.mxu0 %v329
    %7498 = vmatpush.msra.mxu0 %v328
    %7499 = vmatpush.msra.mxu0 %v327
    %7500 = vmatpush.msra.mxu0 %v326
    %7501 = vmatpush.msra.mxu0 %v325
    %7502 = vmatpush.msra.mxu0 %v324
    %7503 = vmatmul.f32.gmra.mxu0 %v7486
    %v7504 = vpop.f32.mrf.mxu0
    %v7505 = vadd.f32 0.0, %v7504
    %7506 = vdwg.mxu0
    %v7507 = vmul.f32 %v7505, 1.1428572
    %v7508 = vadd.f32 %v7507, 1e-05
    %v7509 = vrsqrt.pop %v7508
    %v7510 = vmul.f32 %v7509, %v7508
    %v7511 = vmul.f32 %v7510, %v7509
    %v7512 = vmul.f32 0.5, %v7511
    %v7513 = vsub.f32 1.5, %v7512
    %v7514 = vmul.f32 %v7509, %v7513
    %vm7515 = vweird.f32 %v7508
    %vm7516 = vweird.f32 %v7509
    %vm7517 = vmor %vm7515, %vm7516
    %v7518 = vsel %vm7517, %v7509, %v7514
    %v7519 = vmul.f32 %v7485, %v7518
    %s7520 = scalar_lea.vmem [#allocation11], 6
    %v7521 = vld [vmem:[%s7520] sm:$0x1]
    %v7523 = vperm.slane %v7521, 0
    %v7525 = vmul.f32 %v7519, %v7523
    %s7526 = scalar_lea.vmem [#allocation13], 6
    %v7527 = vld [vmem:[%s7526] sm:$0x1]
    %v7529 = vperm.slane %v7527, 0
    %v7531 = vadd.f32 %v7525, %v7529
    %s7532 = scalar_lea.vmem [#allocation14], 2304
    %v7533 = vld [vmem:[%s7532] sm:$0xff]
    %v7534 = vld [vmem:[%s7532 + $0x8] sm:$0xff]
    %v7535 = vld [vmem:[%s7532 + $0x10] sm:$0xff]
    %v7536 = vld [vmem:[%s7532 + $0x18] sm:$0xff]
    %v7537 = vld [vmem:[%s7532 + $0x20] sm:$0xff]
    %v7538 = vld [vmem:[%s7532 + $0x28] sm:$0xff]
    %v7539 = vld [vmem:[%s7532 + $0x30] sm:$0xff]
    %v7540 = vld [vmem:[%s7532 + $0x38] sm:$0xff]
    %v7541 = vld [vmem:[%s7532 + $0x40] sm:$0xff]
    %v7542 = vld [vmem:[%s7532 + $0x48] sm:$0xff]
    %v7543 = vld [vmem:[%s7532 + $0x50] sm:$0xff]
    %v7544 = vld [vmem:[%s7532 + $0x58] sm:$0xff]
    %v7545 = vld [vmem:[%s7532 + $0x60] sm:$0xff]
    %v7546 = vld [vmem:[%s7532 + $0x68] sm:$0xff]
    %v7547 = vld [vmem:[%s7532 + $0x70] sm:$0xff]
    %v7548 = vld [vmem:[%s7532 + $0x78] sm:$0xff]
    %v7549 = vld [vmem:[%s7532 + $0x80] sm:$0xff]
    %v7550 = vld [vmem:[%s7532 + $0x88] sm:$0xff]
    %v7551 = vld [vmem:[%s7532 + $0x90] sm:$0xff]
    %v7552 = vld [vmem:[%s7532 + $0x98] sm:$0xff]
    %v7553 = vld [vmem:[%s7532 + $0xa0] sm:$0xff]
    %v7554 = vld [vmem:[%s7532 + $0xa8] sm:$0xff]
    %v7555 = vld [vmem:[%s7532 + $0xb0] sm:$0xff]
    %v7556 = vld [vmem:[%s7532 + $0xb8] sm:$0xff]
    %v7557 = vld [vmem:[%s7532 + $0xc0] sm:$0xff]
    %v7558 = vld [vmem:[%s7532 + $0xc8] sm:$0xff]
    %v7559 = vld [vmem:[%s7532 + $0xd0] sm:$0xff]
    %v7560 = vld [vmem:[%s7532 + $0xd8] sm:$0xff]
    %v7561 = vld [vmem:[%s7532 + $0xe0] sm:$0xff]
    %v7562 = vld [vmem:[%s7532 + $0xe8] sm:$0xff]
    %v7563 = vld [vmem:[%s7532 + $0xf0] sm:$0xff]
    %v7564 = vld [vmem:[%s7532 + $0xf8] sm:$0xff]
    %v7565 = vld [vmem:[%s7532 + $0x100] sm:$0xff]
    %v7566 = vld [vmem:[%s7532 + $0x108] sm:$0xff]
    %v7567 = vld [vmem:[%s7532 + $0x110] sm:$0xff]
    %v7568 = vld [vmem:[%s7532 + $0x118] sm:$0xff]
    %v7569 = vld [vmem:[%s7532 + $0x120] sm:$0xff]
    %v7570 = vld [vmem:[%s7532 + $0x128] sm:$0xff]
    %v7571 = vld [vmem:[%s7532 + $0x130] sm:$0xff]
    %v7572 = vld [vmem:[%s7532 + $0x138] sm:$0xff]
    %v7573 = vld [vmem:[%s7532 + $0x140] sm:$0xff]
    %v7574 = vld [vmem:[%s7532 + $0x148] sm:$0xff]
    %v7575 = vld [vmem:[%s7532 + $0x150] sm:$0xff]
    %v7576 = vld [vmem:[%s7532 + $0x158] sm:$0xff]
    %v7577 = vld [vmem:[%s7532 + $0x160] sm:$0xff]
    %v7578 = vld [vmem:[%s7532 + $0x168] sm:$0xff]
    %v7579 = vld [vmem:[%s7532 + $0x170] sm:$0xff]
    %v7580 = vld [vmem:[%s7532 + $0x178] sm:$0xff]
    %v7581 = vpack.c.bf16 %v7410, %v7410
    %v7582 = vpack.c.bf16 %v7464, %v7464
    %v7583 = vpack.c.bf16 %v7531, %v7531
    %s7584 = scalar_lea.vmem [#allocation16], 2304
    %v7585 = vld [vmem:[%s7584] sm:$0xff]
    %v7586 = vld [vmem:[%s7584 + $0x8] sm:$0xff]
    %v7587 = vld [vmem:[%s7584 + $0x10] sm:$0xff]
    %v7588 = vld [vmem:[%s7584 + $0x18] sm:$0xff]
    %v7589 = vld [vmem:[%s7584 + $0x20] sm:$0xff]
    %v7590 = vld [vmem:[%s7584 + $0x28] sm:$0xff]
    %v7591 = vld [vmem:[%s7584 + $0x30] sm:$0xff]
    %v7592 = vld [vmem:[%s7584 + $0x38] sm:$0xff]
    %v7593 = vld [vmem:[%s7584 + $0x40] sm:$0xff]
    %v7594 = vld [vmem:[%s7584 + $0x48] sm:$0xff]
    %v7595 = vld [vmem:[%s7584 + $0x50] sm:$0xff]
    %v7596 = vld [vmem:[%s7584 + $0x58] sm:$0xff]
    %v7597 = vld [vmem:[%s7584 + $0x60] sm:$0xff]
    %v7598 = vld [vmem:[%s7584 + $0x68] sm:$0xff]
    %v7599 = vld [vmem:[%s7584 + $0x70] sm:$0xff]
    %v7600 = vld [vmem:[%s7584 + $0x78] sm:$0xff]
    %v7601 = vld [vmem:[%s7584 + $0x80] sm:$0xff]
    %v7602 = vld [vmem:[%s7584 + $0x88] sm:$0xff]
    %v7603 = vld [vmem:[%s7584 + $0x90] sm:$0xff]
    %v7604 = vld [vmem:[%s7584 + $0x98] sm:$0xff]
    %v7605 = vld [vmem:[%s7584 + $0xa0] sm:$0xff]
    %v7606 = vld [vmem:[%s7584 + $0xa8] sm:$0xff]
    %v7607 = vld [vmem:[%s7584 + $0xb0] sm:$0xff]
    %v7608 = vld [vmem:[%s7584 + $0xb8] sm:$0xff]
    %v7609 = vld [vmem:[%s7584 + $0xc0] sm:$0xff]
    %v7610 = vld [vmem:[%s7584 + $0xc8] sm:$0xff]
    %v7611 = vld [vmem:[%s7584 + $0xd0] sm:$0xff]
    %v7612 = vld [vmem:[%s7584 + $0xd8] sm:$0xff]
    %v7613 = vld [vmem:[%s7584 + $0xe0] sm:$0xff]
    %v7614 = vld [vmem:[%s7584 + $0xe8] sm:$0xff]
    %v7615 = vld [vmem:[%s7584 + $0xf0] sm:$0xff]
    %v7616 = vld [vmem:[%s7584 + $0xf8] sm:$0xff]
    %v7617 = vld [vmem:[%s7584 + $0x100] sm:$0xff]
    %v7618 = vld [vmem:[%s7584 + $0x108] sm:$0xff]
    %v7619 = vld [vmem:[%s7584 + $0x110] sm:$0xff]
    %v7620 = vld [vmem:[%s7584 + $0x118] sm:$0xff]
    %v7621 = vld [vmem:[%s7584 + $0x120] sm:$0xff]
    %v7622 = vld [vmem:[%s7584 + $0x128] sm:$0xff]
    %v7623 = vld [vmem:[%s7584 + $0x130] sm:$0xff]
    %v7624 = vld [vmem:[%s7584 + $0x138] sm:$0xff]
    %v7625 = vld [vmem:[%s7584 + $0x140] sm:$0xff]
    %v7626 = vld [vmem:[%s7584 + $0x148] sm:$0xff]
    %v7627 = vld [vmem:[%s7584 + $0x150] sm:$0xff]
    %v7628 = vld [vmem:[%s7584 + $0x158] sm:$0xff]
    %v7629 = vld [vmem:[%s7584 + $0x160] sm:$0xff]
    %v7630 = vld [vmem:[%s7584 + $0x168] sm:$0xff]
    %v7631 = vld [vmem:[%s7584 + $0x170] sm:$0xff]
    %v7632 = vld [vmem:[%s7584 + $0x178] sm:$0xff]
    %v7636 = vrot.slane %v7581, 1
    %v7637 = vrot.slane %v7582, 1
    %v7638 = vrot.slane %v7583, 1
    %v7690 = vunpack.c.l.b16 %v7585
    %v7691 = vunpack.c.h.b16 %v7585
    %v7692 = vunpack.c.l.b16 %v7586
    %v7693 = vunpack.c.h.b16 %v7586
    %v7694 = vunpack.c.l.b16 %v7587
    %v7695 = vunpack.c.h.b16 %v7587
    %v7696 = vunpack.c.l.b16 %v7588
    %v7697 = vunpack.c.h.b16 %v7588
    %v7698 = vunpack.c.l.b16 %v7589
    %v7699 = vunpack.c.h.b16 %v7589
    %v7700 = vunpack.c.l.b16 %v7590
    %v7701 = vunpack.c.h.b16 %v7590
    %v7702 = vunpack.c.l.b16 %v7591
    %v7703 = vunpack.c.h.b16 %v7591
    %v7704 = vunpack.c.l.b16 %v7592
    %v7705 = vunpack.c.h.b16 %v7592
    %v7706 = vunpack.c.l.b16 %v7593
    %v7707 = vunpack.c.h.b16 %v7593
    %v7708 = vunpack.c.l.b16 %v7594
    %v7709 = vunpack.c.h.b16 %v7594
    %v7710 = vunpack.c.l.b16 %v7595
    %v7711 = vunpack.c.h.b16 %v7595
    %v7712 = vunpack.c.l.b16 %v7596
    %v7713 = vunpack.c.h.b16 %v7596
    %v7714 = vunpack.c.l.b16 %v7597
    %v7715 = vunpack.c.h.b16 %v7597
    %v7716 = vunpack.c.l.b16 %v7598
    %v7717 = vunpack.c.h.b16 %v7598
    %v7718 = vunpack.c.l.b16 %v7599
    %v7719 = vunpack.c.h.b16 %v7599
    %v7720 = vunpack.c.l.b16 %v7600
    %v7721 = vunpack.c.h.b16 %v7600
    %v7722 = vunpack.c.l.b16 %v7601
    %v7723 = vunpack.c.h.b16 %v7601
    %v7724 = vunpack.c.l.b16 %v7602
    %v7725 = vunpack.c.h.b16 %v7602
    %v7726 = vunpack.c.l.b16 %v7603
    %v7727 = vunpack.c.h.b16 %v7603
    %v7728 = vunpack.c.l.b16 %v7604
    %v7729 = vunpack.c.h.b16 %v7604
    %v7730 = vunpack.c.l.b16 %v7605
    %v7731 = vunpack.c.h.b16 %v7605
    %v7732 = vunpack.c.l.b16 %v7606
    %v7733 = vunpack.c.h.b16 %v7606
    %v7734 = vunpack.c.l.b16 %v7607
    %v7735 = vunpack.c.h.b16 %v7607
    %v7736 = vunpack.c.l.b16 %v7608
    %v7737 = vunpack.c.h.b16 %v7608
    %v7738 = vunpack.c.l.b16 %v7609
    %v7739 = vunpack.c.h.b16 %v7609
    %v7740 = vunpack.c.l.b16 %v7610
    %v7741 = vunpack.c.h.b16 %v7610
    %v7742 = vunpack.c.l.b16 %v7611
    %v7743 = vunpack.c.h.b16 %v7611
    %v7744 = vunpack.c.l.b16 %v7612
    %v7745 = vunpack.c.h.b16 %v7612
    %v7746 = vunpack.c.l.b16 %v7613
    %v7747 = vunpack.c.h.b16 %v7613
    %v7748 = vunpack.c.l.b16 %v7614
    %v7749 = vunpack.c.h.b16 %v7614
    %v7750 = vunpack.c.l.b16 %v7615
    %v7751 = vunpack.c.h.b16 %v7615
    %v7752 = vunpack.c.l.b16 %v7616
    %v7753 = vunpack.c.h.b16 %v7616
    %v7754 = vunpack.c.l.b16 %v7617
    %v7755 = vunpack.c.h.b16 %v7617
    %v7756 = vunpack.c.l.b16 %v7618
    %v7757 = vunpack.c.h.b16 %v7618
    %v7758 = vunpack.c.l.b16 %v7619
    %v7759 = vunpack.c.h.b16 %v7619
    %v7760 = vunpack.c.l.b16 %v7620
    %v7761 = vunpack.c.h.b16 %v7620
    %v7762 = vunpack.c.l.b16 %v7621
    %v7763 = vunpack.c.h.b16 %v7621
    %v7764 = vunpack.c.l.b16 %v7622
    %v7765 = vunpack.c.h.b16 %v7622
    %v7766 = vunpack.c.l.b16 %v7623
    %v7767 = vunpack.c.h.b16 %v7623
    %v7768 = vunpack.c.l.b16 %v7624
    %v7769 = vunpack.c.h.b16 %v7624
    %v7770 = vunpack.c.l.b16 %v7625
    %v7771 = vunpack.c.h.b16 %v7625
    %v7772 = vunpack.c.l.b16 %v7626
    %v7773 = vunpack.c.h.b16 %v7626
    %v7774 = vunpack.c.l.b16 %v7627
    %v7775 = vunpack.c.h.b16 %v7627
    %v7776 = vunpack.c.l.b16 %v7628
    %v7777 = vunpack.c.h.b16 %v7628
    %v7778 = vunpack.c.l.b16 %v7629
    %v7779 = vunpack.c.h.b16 %v7629
    %v7780 = vunpack.c.l.b16 %v7630
    %v7781 = vunpack.c.h.b16 %v7630
    %v7782 = vunpack.c.l.b16 %v7631
    %v7783 = vunpack.c.h.b16 %v7631
    %v7784 = vunpack.c.l.b16 %v7632
    %v7785 = vunpack.c.h.b16 %v7632
    %v7786 = vpack.c.b16 %v7692, %v7690
    %v7787 = vpack.c.b16 %v7693, %v7691
    %v7788 = vpack.c.b16 %v7696, %v7694
    %v7789 = vpack.c.b16 %v7697, %v7695
    %v7790 = vpack.c.b16 %v7700, %v7698
    %v7791 = vpack.c.b16 %v7701, %v7699
    %v7792 = vpack.c.b16 %v7704, %v7702
    %v7793 = vpack.c.b16 %v7705, %v7703
    %v7794 = vpack.c.b16 %v7708, %v7706
    %v7795 = vpack.c.b16 %v7709, %v7707
    %v7796 = vpack.c.b16 %v7712, %v7710
    %v7797 = vpack.c.b16 %v7713, %v7711
    %v7798 = vpack.c.b16 %v7716, %v7714
    %v7799 = vpack.c.b16 %v7717, %v7715
    %v7800 = vpack.c.b16 %v7720, %v7718
    %v7801 = vpack.c.b16 %v7721, %v7719
    %v7802 = vpack.c.b16 %v7724, %v7722
    %v7803 = vpack.c.b16 %v7725, %v7723
    %v7804 = vpack.c.b16 %v7728, %v7726
    %v7805 = vpack.c.b16 %v7729, %v7727
    %v7806 = vpack.c.b16 %v7732, %v7730
    %v7807 = vpack.c.b16 %v7733, %v7731
    %v7808 = vpack.c.b16 %v7736, %v7734
    %v7809 = vpack.c.b16 %v7737, %v7735
    %v7810 = vpack.c.b16 %v7740, %v7738
    %v7811 = vpack.c.b16 %v7741, %v7739
    %v7812 = vpack.c.b16 %v7744, %v7742
    %v7813 = vpack.c.b16 %v7745, %v7743
    %v7814 = vpack.c.b16 %v7748, %v7746
    %v7815 = vpack.c.b16 %v7749, %v7747
    %v7816 = vpack.c.b16 %v7752, %v7750
    %v7817 = vpack.c.b16 %v7753, %v7751
    %v7818 = vpack.c.b16 %v7756, %v7754
    %v7819 = vpack.c.b16 %v7757, %v7755
    %v7820 = vpack.c.b16 %v7760, %v7758
    %v7821 = vpack.c.b16 %v7761, %v7759
    %v7822 = vpack.c.b16 %v7764, %v7762
    %v7823 = vpack.c.b16 %v7765, %v7763
    %v7824 = vpack.c.b16 %v7768, %v7766
    %v7825 = vpack.c.b16 %v7769, %v7767
    %v7826 = vpack.c.b16 %v7772, %v7770
    %v7827 = vpack.c.b16 %v7773, %v7771
    %v7828 = vpack.c.b16 %v7776, %v7774
    %v7829 = vpack.c.b16 %v7777, %v7775
    %v7830 = vpack.c.b16 %v7780, %v7778
    %v7831 = vpack.c.b16 %v7781, %v7779
    %v7832 = vpack.c.b16 %v7784, %v7782
    %v7833 = vpack.c.b16 %v7785, %v7783
    %7882 = vmatpush.bf16.msra.mxu0 %v7800
    %7883 = vmatpush.bf16.msra.mxu0 %v7798
    %7884 = vmatpush.bf16.msra.mxu0 %v7796
    %7885 = vmatpush.bf16.msra.mxu0 %v7794
    %7886 = vmatpush.bf16.msra.mxu0 %v7792
    %7887 = vmatpush.bf16.msra.mxu0 %v7790
    %7888 = vmatpush.bf16.msra.mxu0 %v7788
    %7889 = vmatpush.bf16.msra.mxu0 %v7786
    %7890 = vmatmul.bf16.gmra.mxu0 %v7636
    %v7891 = vpop.f32.mrf.mxu0
    %v7892 = vadd.f32 0.0, %v7891
    %v7893 = vpop.f32.mrf.mxu0
    %7894 = vdwg.mxu0
    %7895 = vmatpush.bf16.msra.mxu0 %v7816
    %7896 = vmatpush.bf16.msra.mxu0 %v7814
    %7897 = vmatpush.bf16.msra.mxu0 %v7812
    %7898 = vmatpush.bf16.msra.mxu0 %v7810
    %7899 = vmatpush.bf16.msra.mxu0 %v7808
    %7900 = vmatpush.bf16.msra.mxu0 %v7806
    %7901 = vmatpush.bf16.msra.mxu0 %v7804
    %7902 = vmatpush.bf16.msra.mxu0 %v7802
    %7903 = vmatmul.bf16.gmra.mxu0 %v7637
    %v7904 = vpop.f32.mrf.mxu0
    %v7905 = vadd.f32 %v7892, %v7904
    %v7906 = vpop.f32.mrf.mxu0
    %7907 = vdwg.mxu0
    %7908 = vmatpush.bf16.msra.mxu0 %v7832
    %7909 = vmatpush.bf16.msra.mxu0 %v7830
    %7910 = vmatpush.bf16.msra.mxu0 %v7828
    %7911 = vmatpush.bf16.msra.mxu0 %v7826
    %7912 = vmatpush.bf16.msra.mxu0 %v7824
    %7913 = vmatpush.bf16.msra.mxu0 %v7822
    %7914 = vmatpush.bf16.msra.mxu0 %v7820
    %7915 = vmatpush.bf16.msra.mxu0 %v7818
    %7916 = vmatmul.bf16.gmra.mxu0 %v7638
    %v7917 = vpop.f32.mrf.mxu0
    %v7918 = vadd.f32 %v7905, %v7917
    %v7919 = vpop.f32.mrf.mxu0
    %7920 = vdwg.mxu0
    %7921 = vmatpush.bf16.msra.mxu0 %v7801
    %7922 = vmatpush.bf16.msra.mxu0 %v7799
    %7923 = vmatpush.bf16.msra.mxu0 %v7797
    %7924 = vmatpush.bf16.msra.mxu0 %v7795
    %7925 = vmatpush.bf16.msra.mxu0 %v7793
    %7926 = vmatpush.bf16.msra.mxu0 %v7791
    %7927 = vmatpush.bf16.msra.mxu0 %v7789
    %7928 = vmatpush.bf16.msra.mxu0 %v7787
    %7929 = vmatmul.bf16.gmra.mxu0 %v7636
    %v7930 = vpop.f32.mrf.mxu0
    %v7931 = vadd.f32 0.0, %v7930
    %v7932 = vpop.f32.mrf.mxu0
    %7933 = vdwg.mxu0
    %7934 = vmatpush.bf16.msra.mxu0 %v7817
    %7935 = vmatpush.bf16.msra.mxu0 %v7815
    %7936 = vmatpush.bf16.msra.mxu0 %v7813
    %7937 = vmatpush.bf16.msra.mxu0 %v7811
    %7938 = vmatpush.bf16.msra.mxu0 %v7809
    %7939 = vmatpush.bf16.msra.mxu0 %v7807
    %7940 = vmatpush.bf16.msra.mxu0 %v7805
    %7941 = vmatpush.bf16.msra.mxu0 %v7803
    %7942 = vmatmul.bf16.gmra.mxu0 %v7637
    %v7943 = vpop.f32.mrf.mxu0
    %v7944 = vadd.f32 %v7931, %v7943
    %v7945 = vpop.f32.mrf.mxu0
    %7946 = vdwg.mxu0
    %7947 = vmatpush.bf16.msra.mxu0 %v7833
    %7948 = vmatpush.bf16.msra.mxu0 %v7831
    %7949 = vmatpush.bf16.msra.mxu0 %v7829
    %7950 = vmatpush.bf16.msra.mxu0 %v7827
    %7951 = vmatpush.bf16.msra.mxu0 %v7825
    %7952 = vmatpush.bf16.msra.mxu0 %v7823
    %7953 = vmatpush.bf16.msra.mxu0 %v7821
    %7954 = vmatpush.bf16.msra.mxu0 %v7819
    %7955 = vmatmul.bf16.gmra.mxu0 %v7638
    %v7956 = vpop.f32.mrf.mxu0
    %v7957 = vadd.f32 %v7944, %v7956
    %v7958 = vpop.f32.mrf.mxu0
    %7959 = vdwg.mxu0
    %v8008 = vunpack.c.l.b16 %v7533
    %v8009 = vunpack.c.h.b16 %v7533
    %v8010 = vunpack.c.l.b16 %v7534
    %v8011 = vunpack.c.h.b16 %v7534
    %v8012 = vunpack.c.l.b16 %v7535
    %v8013 = vunpack.c.h.b16 %v7535
    %v8014 = vunpack.c.l.b16 %v7536
    %v8015 = vunpack.c.h.b16 %v7536
    %v8016 = vunpack.c.l.b16 %v7537
    %v8017 = vunpack.c.h.b16 %v7537
    %v8018 = vunpack.c.l.b16 %v7538
    %v8019 = vunpack.c.h.b16 %v7538
    %v8020 = vunpack.c.l.b16 %v7539
    %v8021 = vunpack.c.h.b16 %v7539
    %v8022 = vunpack.c.l.b16 %v7540
    %v8023 = vunpack.c.h.b16 %v7540
    %v8024 = vunpack.c.l.b16 %v7541
    %v8025 = vunpack.c.h.b16 %v7541
    %v8026 = vunpack.c.l.b16 %v7542
    %v8027 = vunpack.c.h.b16 %v7542
    %v8028 = vunpack.c.l.b16 %v7543
    %v8029 = vunpack.c.h.b16 %v7543
    %v8030 = vunpack.c.l.b16 %v7544
    %v8031 = vunpack.c.h.b16 %v7544
    %v8032 = vunpack.c.l.b16 %v7545
    %v8033 = vunpack.c.h.b16 %v7545
    %v8034 = vunpack.c.l.b16 %v7546
    %v8035 = vunpack.c.h.b16 %v7546
    %v8036 = vunpack.c.l.b16 %v7547
    %v8037 = vunpack.c.h.b16 %v7547
    %v8038 = vunpack.c.l.b16 %v7548
    %v8039 = vunpack.c.h.b16 %v7548
    %v8040 = vunpack.c.l.b16 %v7549
    %v8041 = vunpack.c.h.b16 %v7549
    %v8042 = vunpack.c.l.b16 %v7550
    %v8043 = vunpack.c.h.b16 %v7550
    %v8044 = vunpack.c.l.b16 %v7551
    %v8045 = vunpack.c.h.b16 %v7551
    %v8046 = vunpack.c.l.b16 %v7552
    %v8047 = vunpack.c.h.b16 %v7552
    %v8048 = vunpack.c.l.b16 %v7553
    %v8049 = vunpack.c.h.b16 %v7553
    %v8050 = vunpack.c.l.b16 %v7554
    %v8051 = vunpack.c.h.b16 %v7554
    %v8052 = vunpack.c.l.b16 %v7555
    %v8053 = vunpack.c.h.b16 %v7555
    %v8054 = vunpack.c.l.b16 %v7556
    %v8055 = vunpack.c.h.b16 %v7556
    %v8056 = vunpack.c.l.b16 %v7557
    %v8057 = vunpack.c.h.b16 %v7557
    %v8058 = vunpack.c.l.b16 %v7558
    %v8059 = vunpack.c.h.b16 %v7558
    %v8060 = vunpack.c.l.b16 %v7559
    %v8061 = vunpack.c.h.b16 %v7559
    %v8062 = vunpack.c.l.b16 %v7560
    %v8063 = vunpack.c.h.b16 %v7560
    %v8064 = vunpack.c.l.b16 %v7561
    %v8065 = vunpack.c.h.b16 %v7561
    %v8066 = vunpack.c.l.b16 %v7562
    %v8067 = vunpack.c.h.b16 %v7562
    %v8068 = vunpack.c.l.b16 %v7563
    %v8069 = vunpack.c.h.b16 %v7563
    %v8070 = vunpack.c.l.b16 %v7564
    %v8071 = vunpack.c.h.b16 %v7564
    %v8072 = vunpack.c.l.b16 %v7565
    %v8073 = vunpack.c.h.b16 %v7565
    %v8074 = vunpack.c.l.b16 %v7566
    %v8075 = vunpack.c.h.b16 %v7566
    %v8076 = vunpack.c.l.b16 %v7567
    %v8077 = vunpack.c.h.b16 %v7567
    %v8078 = vunpack.c.l.b16 %v7568
    %v8079 = vunpack.c.h.b16 %v7568
    %v8080 = vunpack.c.l.b16 %v7569
    %v8081 = vunpack.c.h.b16 %v7569
    %v8082 = vunpack.c.l.b16 %v7570
    %v8083 = vunpack.c.h.b16 %v7570
    %v8084 = vunpack.c.l.b16 %v7571
    %v8085 = vunpack.c.h.b16 %v7571
    %v8086 = vunpack.c.l.b16 %v7572
    %v8087 = vunpack.c.h.b16 %v7572
    %v8088 = vunpack.c.l.b16 %v7573
    %v8089 = vunpack.c.h.b16 %v7573
    %v8090 = vunpack.c.l.b16 %v7574
    %v8091 = vunpack.c.h.b16 %v7574
    %v8092 = vunpack.c.l.b16 %v7575
    %v8093 = vunpack.c.h.b16 %v7575
    %v8094 = vunpack.c.l.b16 %v7576
    %v8095 = vunpack.c.h.b16 %v7576
    %v8096 = vunpack.c.l.b16 %v7577
    %v8097 = vunpack.c.h.b16 %v7577
    %v8098 = vunpack.c.l.b16 %v7578
    %v8099 = vunpack.c.h.b16 %v7578
    %v8100 = vunpack.c.l.b16 %v7579
    %v8101 = vunpack.c.h.b16 %v7579
    %v8102 = vunpack.c.l.b16 %v7580
    %v8103 = vunpack.c.h.b16 %v7580
    %v8104 = vpack.c.b16 %v8010, %v8008
    %v8105 = vpack.c.b16 %v8011, %v8009
    %v8106 = vpack.c.b16 %v8014, %v8012
    %v8107 = vpack.c.b16 %v8015, %v8013
    %v8108 = vpack.c.b16 %v8018, %v8016
    %v8109 = vpack.c.b16 %v8019, %v8017
    %v8110 = vpack.c.b16 %v8022, %v8020
    %v8111 = vpack.c.b16 %v8023, %v8021
    %v8112 = vpack.c.b16 %v8026, %v8024
    %v8113 = vpack.c.b16 %v8027, %v8025
    %v8114 = vpack.c.b16 %v8030, %v8028
    %v8115 = vpack.c.b16 %v8031, %v8029
    %v8116 = vpack.c.b16 %v8034, %v8032
    %v8117 = vpack.c.b16 %v8035, %v8033
    %v8118 = vpack.c.b16 %v8038, %v8036
    %v8119 = vpack.c.b16 %v8039, %v8037
    %v8120 = vpack.c.b16 %v8042, %v8040
    %v8121 = vpack.c.b16 %v8043, %v8041
    %v8122 = vpack.c.b16 %v8046, %v8044
    %v8123 = vpack.c.b16 %v8047, %v8045
    %v8124 = vpack.c.b16 %v8050, %v8048
    %v8125 = vpack.c.b16 %v8051, %v8049
    %v8126 = vpack.c.b16 %v8054, %v8052
    %v8127 = vpack.c.b16 %v8055, %v8053
    %v8128 = vpack.c.b16 %v8058, %v8056
    %v8129 = vpack.c.b16 %v8059, %v8057
    %v8130 = vpack.c.b16 %v8062, %v8060
    %v8131 = vpack.c.b16 %v8063, %v8061
    %v8132 = vpack.c.b16 %v8066, %v8064
    %v8133 = vpack.c.b16 %v8067, %v8065
    %v8134 = vpack.c.b16 %v8070, %v8068
    %v8135 = vpack.c.b16 %v8071, %v8069
    %v8136 = vpack.c.b16 %v8074, %v8072
    %v8137 = vpack.c.b16 %v8075, %v8073
    %v8138 = vpack.c.b16 %v8078, %v8076
    %v8139 = vpack.c.b16 %v8079, %v8077
    %v8140 = vpack.c.b16 %v8082, %v8080
    %v8141 = vpack.c.b16 %v8083, %v8081
    %v8142 = vpack.c.b16 %v8086, %v8084
    %v8143 = vpack.c.b16 %v8087, %v8085
    %v8144 = vpack.c.b16 %v8090, %v8088
    %v8145 = vpack.c.b16 %v8091, %v8089
    %v8146 = vpack.c.b16 %v8094, %v8092
    %v8147 = vpack.c.b16 %v8095, %v8093
    %v8148 = vpack.c.b16 %v8098, %v8096
    %v8149 = vpack.c.b16 %v8099, %v8097
    %v8150 = vpack.c.b16 %v8102, %v8100
    %v8151 = vpack.c.b16 %v8103, %v8101
    %8200 = vmatpush.bf16.msra.mxu0 %v8118
    %8201 = vmatpush.bf16.msra.mxu0 %v8116
    %8202 = vmatpush.bf16.msra.mxu0 %v8114
    %8203 = vmatpush.bf16.msra.mxu0 %v8112
    %8204 = vmatpush.bf16.msra.mxu0 %v8110
    %8205 = vmatpush.bf16.msra.mxu0 %v8108
    %8206 = vmatpush.bf16.msra.mxu0 %v8106
    %8207 = vmatpush.bf16.msra.mxu0 %v8104
    %8208 = vmatmul.bf16.gmra.mxu0 %v7581
    %v8209 = vpop.f32.mrf.mxu0
    %v8210 = vadd.f32 %v7918, %v8209
    %v8211 = vpop.f32.mrf.mxu0
    %8212 = vdwg.mxu0
    %8213 = vmatpush.bf16.msra.mxu0 %v8134
    %8214 = vmatpush.bf16.msra.mxu0 %v8132
    %8215 = vmatpush.bf16.msra.mxu0 %v8130
    %8216 = vmatpush.bf16.msra.mxu0 %v8128
    %8217 = vmatpush.bf16.msra.mxu0 %v8126
    %8218 = vmatpush.bf16.msra.mxu0 %v8124
    %8219 = vmatpush.bf16.msra.mxu0 %v8122
    %8220 = vmatpush.bf16.msra.mxu0 %v8120
    %8221 = vmatmul.bf16.gmra.mxu0 %v7582
    %v8222 = vpop.f32.mrf.mxu0
    %v8223 = vadd.f32 %v8210, %v8222
    %v8224 = vpop.f32.mrf.mxu0
    %8225 = vdwg.mxu0
    %8226 = vmatpush.bf16.msra.mxu0 %v8150
    %8227 = vmatpush.bf16.msra.mxu0 %v8148
    %8228 = vmatpush.bf16.msra.mxu0 %v8146
    %8229 = vmatpush.bf16.msra.mxu0 %v8144
    %8230 = vmatpush.bf16.msra.mxu0 %v8142
    %8231 = vmatpush.bf16.msra.mxu0 %v8140
    %8232 = vmatpush.bf16.msra.mxu0 %v8138
    %8233 = vmatpush.bf16.msra.mxu0 %v8136
    %8234 = vmatmul.bf16.gmra.mxu0 %v7583
    %v8235 = vpop.f32.mrf.mxu0
    %v8236 = vadd.f32 %v8223, %v8235
    %v8237 = vpop.f32.mrf.mxu0
    %8238 = vdwg.mxu0
    %8239 = vmatpush.bf16.msra.mxu0 %v8119
    %8240 = vmatpush.bf16.msra.mxu0 %v8117
    %8241 = vmatpush.bf16.msra.mxu0 %v8115
    %8242 = vmatpush.bf16.msra.mxu0 %v8113
    %8243 = vmatpush.bf16.msra.mxu0 %v8111
    %8244 = vmatpush.bf16.msra.mxu0 %v8109
    %8245 = vmatpush.bf16.msra.mxu0 %v8107
    %8246 = vmatpush.bf16.msra.mxu0 %v8105
    %8247 = vmatmul.bf16.gmra.mxu0 %v7581
    %v8248 = vpop.f32.mrf.mxu0
    %v8249 = vadd.f32 %v7957, %v8248
    %v8250 = vpop.f32.mrf.mxu0
    %8251 = vdwg.mxu0
    %8252 = vmatpush.bf16.msra.mxu0 %v8135
    %8253 = vmatpush.bf16.msra.mxu0 %v8133
    %8254 = vmatpush.bf16.msra.mxu0 %v8131
    %8255 = vmatpush.bf16.msra.mxu0 %v8129
    %8256 = vmatpush.bf16.msra.mxu0 %v8127
    %8257 = vmatpush.bf16.msra.mxu0 %v8125
    %8258 = vmatpush.bf16.msra.mxu0 %v8123
    %8259 = vmatpush.bf16.msra.mxu0 %v8121
    %8260 = vmatmul.bf16.gmra.mxu0 %v7582
    %v8261 = vpop.f32.mrf.mxu0
    %v8262 = vadd.f32 %v8249, %v8261
    %v8263 = vpop.f32.mrf.mxu0
    %8264 = vdwg.mxu0
    %8265 = vmatpush.bf16.msra.mxu0 %v8151
    %8266 = vmatpush.bf16.msra.mxu0 %v8149
    %8267 = vmatpush.bf16.msra.mxu0 %v8147
    %8268 = vmatpush.bf16.msra.mxu0 %v8145
    %8269 = vmatpush.bf16.msra.mxu0 %v8143
    %8270 = vmatpush.bf16.msra.mxu0 %v8141
    %8271 = vmatpush.bf16.msra.mxu0 %v8139
    %8272 = vmatpush.bf16.msra.mxu0 %v8137
    %8273 = vmatmul.bf16.gmra.mxu0 %v7583
    %v8274 = vpop.f32.mrf.mxu0
    %v8275 = vadd.f32 %v8262, %v8274
    %v8276 = vpop.f32.mrf.mxu0
    %8277 = vdwg.mxu0
    %s8278 = scalar_lea.vmem [#allocation17], 12
    %v8279 = vld [vmem:[%s8278] sm:$0x3]
    %v8281 = vperm.slane %v8279, 0
    %v8282 = vperm.slane %v8279, 1
    %v8285 = vadd.f32 %v8236, %v8281
    %v8286 = vadd.f32 %v8275, %v8282
    %v8287 = vtanh.pop %v8285
    %v8288 = vxor.u32 %v8286, 2147483648
    %v8289 = vmul.f32 %v8288, 1.442695
    %v8290 = vpow.pop %v8289
    %v8291 = vadd.f32 %v8290, 1.0
    %v8292 = vrcp.pop %v8291
    %v8293 = vmul.f32 %v8291, %v8292
    %v8294 = vsub.f32 1.0, %v8293
    %v8295 = vmul.f32 %v8292, %v8294
    %v8296 = vadd.f32 %v8292, %v8295
    %vm8297 = vweird.f32 %v8291
    %vm8298 = vweird.f32 %v8292
    %vm8299 = vmor %vm8297, %vm8298
    %v8300 = vsel %vm8299, %v8292, %v8296
    %v8301 = vand.u32 2147483647, %v8291
    %vm8302 = vcmp.eq.f32.partialorder %v8301, 8.507059e+37
    %v8303 = vand.u32 %v8291, 2147483648
    %v8304 = vor.u32 1.1754944e-38, %v8303
    %v8305 = vsel %vm8302, %v8304, %v8300
    %v8306 = vmul.f32 1.0, %v8305
    %v8307 = vmul.f32 %v8287, %v8306
    %s8308 = scalar_lea.vmem [#allocation19], 768
    %v8309 = vld [vmem:[%s8308] sm:$0xff]
    %v8310 = vld [vmem:[%s8308 + $0x8] sm:$0xff]
    %v8311 = vld [vmem:[%s8308 + $0x10] sm:$0xff]
    %v8312 = vld [vmem:[%s8308 + $0x18] sm:$0xff]
    %v8313 = vld [vmem:[%s8308 + $0x20] sm:$0xff]
    %v8314 = vld [vmem:[%s8308 + $0x28] sm:$0xff]
    %v8315 = vld [vmem:[%s8308 + $0x30] sm:$0xff]
    %v8316 = vld [vmem:[%s8308 + $0x38] sm:$0xff]
    %v8317 = vld [vmem:[%s8308 + $0x40] sm:$0xff]
    %v8318 = vld [vmem:[%s8308 + $0x48] sm:$0xff]
    %v8319 = vld [vmem:[%s8308 + $0x50] sm:$0xff]
    %v8320 = vld [vmem:[%s8308 + $0x58] sm:$0xff]
    %v8321 = vld [vmem:[%s8308 + $0x60] sm:$0xff]
    %v8322 = vld [vmem:[%s8308 + $0x68] sm:$0xff]
    %v8323 = vld [vmem:[%s8308 + $0x70] sm:$0xff]
    %v8324 = vld [vmem:[%s8308 + $0x78] sm:$0xff]
    %v8325 = vpack.c.bf16 %v8307, %v8307
    %s8326 = scalar_lea.vmem [#allocation20], 12
    %v8327 = vld [vmem:[%s8326] sm:$0x3]
    %v8329 = vperm.slane %v8327, 0
    %v8330 = vperm.slane %v8327, 1
    %v8349 = vunpack.c.l.b16 %v8309
    %v8350 = vunpack.c.h.b16 %v8309
    %v8351 = vunpack.c.l.b16 %v8310
    %v8352 = vunpack.c.h.b16 %v8310
    %v8353 = vunpack.c.l.b16 %v8311
    %v8354 = vunpack.c.h.b16 %v8311
    %v8355 = vunpack.c.l.b16 %v8312
    %v8356 = vunpack.c.h.b16 %v8312
    %v8357 = vunpack.c.l.b16 %v8313
    %v8358 = vunpack.c.h.b16 %v8313
    %v8359 = vunpack.c.l.b16 %v8314
    %v8360 = vunpack.c.h.b16 %v8314
    %v8361 = vunpack.c.l.b16 %v8315
    %v8362 = vunpack.c.h.b16 %v8315
    %v8363 = vunpack.c.l.b16 %v8316
    %v8364 = vunpack.c.h.b16 %v8316
    %v8365 = vunpack.c.l.b16 %v8317
    %v8366 = vunpack.c.h.b16 %v8317
    %v8367 = vunpack.c.l.b16 %v8318
    %v8368 = vunpack.c.h.b16 %v8318
    %v8369 = vunpack.c.l.b16 %v8319
    %v8370 = vunpack.c.h.b16 %v8319
    %v8371 = vunpack.c.l.b16 %v8320
    %v8372 = vunpack.c.h.b16 %v8320
    %v8373 = vunpack.c.l.b16 %v8321
    %v8374 = vunpack.c.h.b16 %v8321
    %v8375 = vunpack.c.l.b16 %v8322
    %v8376 = vunpack.c.h.b16 %v8322
    %v8377 = vunpack.c.l.b16 %v8323
    %v8378 = vunpack.c.h.b16 %v8323
    %v8379 = vunpack.c.l.b16 %v8324
    %v8380 = vunpack.c.h.b16 %v8324
    %v8381 = vpack.c.b16 %v8351, %v8349
    %v8382 = vpack.c.b16 %v8352, %v8350
    %v8383 = vpack.c.b16 %v8355, %v8353
    %v8384 = vpack.c.b16 %v8356, %v8354
    %v8385 = vpack.c.b16 %v8359, %v8357
    %v8386 = vpack.c.b16 %v8360, %v8358
    %v8387 = vpack.c.b16 %v8363, %v8361
    %v8388 = vpack.c.b16 %v8364, %v8362
    %v8389 = vpack.c.b16 %v8367, %v8365
    %v8390 = vpack.c.b16 %v8368, %v8366
    %v8391 = vpack.c.b16 %v8371, %v8369
    %v8392 = vpack.c.b16 %v8372, %v8370
    %v8393 = vpack.c.b16 %v8375, %v8373
    %v8394 = vpack.c.b16 %v8376, %v8374
    %v8395 = vpack.c.b16 %v8379, %v8377
    %v8396 = vpack.c.b16 %v8380, %v8378
    %8413 = vmatpush.bf16.msra.mxu0 %v8395
    %8414 = vmatpush.bf16.msra.mxu0 %v8393
    %8415 = vmatpush.bf16.msra.mxu0 %v8391
    %8416 = vmatpush.bf16.msra.mxu0 %v8389
    %8417 = vmatpush.bf16.msra.mxu0 %v8387
    %8418 = vmatpush.bf16.msra.mxu0 %v8385
    %8419 = vmatpush.bf16.msra.mxu0 %v8383
    %8420 = vmatpush.bf16.msra.mxu0 %v8381
    %8421 = vmatmul.bf16.gmra.mxu0 %v8325
    %v8422 = vpop.f32.mrf.mxu0
    %v8423 = vadd.f32 %v8329, %v8422
    %v8424 = vpop.f32.mrf.mxu0
    %8425 = vdwg.mxu0
    %8426 = vmatpush.bf16.msra.mxu0 %v8396
    %8427 = vmatpush.bf16.msra.mxu0 %v8394
    %8428 = vmatpush.bf16.msra.mxu0 %v8392
    %8429 = vmatpush.bf16.msra.mxu0 %v8390
    %8430 = vmatpush.bf16.msra.mxu0 %v8388
    %8431 = vmatpush.bf16.msra.mxu0 %v8386
    %8432 = vmatpush.bf16.msra.mxu0 %v8384
    %8433 = vmatpush.bf16.msra.mxu0 %v8382
    %8434 = vmatmul.bf16.gmra.mxu0 %v8325
    %v8435 = vpop.f32.mrf.mxu0
    %v8436 = vadd.f32 %v8330, %v8435
    %v8437 = vpop.f32.mrf.mxu0
    %8438 = vdwg.mxu0
    %v8440 = vrot.slane %v7410, 2
    %v8442 = vadd.f32 %v8423, %v8440
    %v8444 = vrot.slane %v7417, 2
    %v8446 = vadd.f32 %v8436, %v8444
    %v8447 = vsel %vm1585, %v8442, 0.0
    %v8448 = vrot.slane %v8447, 4
    %v8449 = vadd.f32 %v8447, %v8448
    %v8450 = vrot.slane %v8449, 2
    %v8451 = vadd.f32 %v8449, %v8450
    %v8452 = vrot.slane %v8451, 1
    %v8453 = vadd.f32 %v8451, %v8452
    %v8454 = vrcp.pop 6.0
    %v8455 = vmul.f32 6.0, %v8454
    %v8456 = vsub.f32 1.0, %v8455
    %v8457 = vmul.f32 %v8454, %v8456
    %v8458 = vadd.f32 %v8454, %v8457
    %vm8459 = vweird.f32 %v8454
    %v8460 = vsel %vm8459, %v8454, %v8458
    %v8461 = vmul.f32 %v8453, %v8460
    %v8462 = vsub.f32 %v8442, %v8461
    %v8463 = vmul.f32 %v8462, %v8462
    %v8464 = vsel %vm1585, %v8463, 0.0
    %v8465 = vrot.slane %v8464, 4
    %v8466 = vadd.f32 %v8464, %v8465
    %v8467 = vrot.slane %v8466, 2
    %v8468 = vadd.f32 %v8466, %v8467
    %v8469 = vrot.slane %v8468, 1
    %v8470 = vadd.f32 %v8468, %v8469
    %v8471 = vmul.f32 %v8470, %v8460
    %v8472 = vadd.f32 %v8471, 1e-05
    %v8473 = vrsqrt.pop %v8472
    %v8474 = vmul.f32 %v8473, %v8472
    %v8475 = vmul.f32 %v8474, %v8473
    %v8476 = vmul.f32 0.5, %v8475
    %v8477 = vsub.f32 1.5, %v8476
    %v8478 = vmul.f32 %v8473, %v8477
    %vm8479 = vweird.f32 %v8472
    %vm8480 = vweird.f32 %v8473
    %vm8481 = vmor %vm8479, %vm8480
    %v8482 = vsel %vm8481, %v8473, %v8478
    %v8483 = vmul.f32 %v8462, %v8482
    %s8484 = scalar_lea.vmem [#allocation8], 7
    %v8485 = vld [vmem:[%s8484] sm:$0x1]
    %v8487 = vperm.slane %v8485, 0
    %v8489 = vmul.f32 %v8483, %v8487
    %s8490 = scalar_lea.vmem [#allocation10], 7
    %v8491 = vld [vmem:[%s8490] sm:$0x1]
    %v8493 = vperm.slane %v8491, 0
    %v8495 = vadd.f32 %v8489, %v8493
    %8496 = vmatpush.msra.mxu0 %v339
    %8497 = vmatpush.msra.mxu0 %v338
    %8498 = vmatpush.msra.mxu0 %v337
    %8499 = vmatpush.msra.mxu0 %v336
    %8500 = vmatpush.msra.mxu0 %v335
    %8501 = vmatpush.msra.mxu0 %v334
    %8502 = vmatpush.msra.mxu0 %v333
    %8503 = vmatpush.msra.mxu0 %v332
    %8504 = vmatpush.msra.mxu0 %v331
    %8505 = vmatpush.msra.mxu0 %v330
    %8506 = vmatpush.msra.mxu0 %v329
    %8507 = vmatpush.msra.mxu0 %v328
    %8508 = vmatpush.msra.mxu0 %v327
    %8509 = vmatpush.msra.mxu0 %v326
    %8510 = vmatpush.msra.mxu0 %v325
    %8511 = vmatpush.msra.mxu0 %v324
    %8512 = vmatmul.f32.gmra.mxu0 %v8442
    %v8513 = vpop.f32.mrf.mxu0
    %v8514 = vadd.f32 0.0, %v8513
    %8515 = vdwg.mxu0
    %v8516 = vsub.f32 %v8442, %v8514
    %v8517 = vmul.f32 %v8516, %v8516
    %8518 = vmatpush.msra.mxu0 %v339
    %8519 = vmatpush.msra.mxu0 %v338
    %8520 = vmatpush.msra.mxu0 %v337
    %8521 = vmatpush.msra.mxu0 %v336
    %8522 = vmatpush.msra.mxu0 %v335
    %8523 = vmatpush.msra.mxu0 %v334
    %8524 = vmatpush.msra.mxu0 %v333
    %8525 = vmatpush.msra.mxu0 %v332
    %8526 = vmatpush.msra.mxu0 %v331
    %8527 = vmatpush.msra.mxu0 %v330
    %8528 = vmatpush.msra.mxu0 %v329
    %8529 = vmatpush.msra.mxu0 %v328
    %8530 = vmatpush.msra.mxu0 %v327
    %8531 = vmatpush.msra.mxu0 %v326
    %8532 = vmatpush.msra.mxu0 %v325
    %8533 = vmatpush.msra.mxu0 %v324
    %8534 = vmatmul.f32.gmra.mxu0 %v8517
    %v8535 = vpop.f32.mrf.mxu0
    %v8536 = vadd.f32 0.0, %v8535
    %8537 = vdwg.mxu0
    %v8538 = vmul.f32 %v8536, 1.1428572
    %v8539 = vadd.f32 %v8538, 1e-05
    %v8540 = vrsqrt.pop %v8539
    %v8541 = vmul.f32 %v8540, %v8539
    %v8542 = vmul.f32 %v8541, %v8540
    %v8543 = vmul.f32 0.5, %v8542
    %v8544 = vsub.f32 1.5, %v8543
    %v8545 = vmul.f32 %v8540, %v8544
    %vm8546 = vweird.f32 %v8539
    %vm8547 = vweird.f32 %v8540
    %vm8548 = vmor %vm8546, %vm8547
    %v8549 = vsel %vm8548, %v8540, %v8545
    %v8550 = vmul.f32 %v8516, %v8549
    %s8551 = scalar_lea.vmem [#allocation11], 7
    %v8552 = vld [vmem:[%s8551] sm:$0x1]
    %v8554 = vperm.slane %v8552, 0
    %v8556 = vmul.f32 %v8550, %v8554
    %s8557 = scalar_lea.vmem [#allocation13], 7
    %v8558 = vld [vmem:[%s8557] sm:$0x1]
    %v8560 = vperm.slane %v8558, 0
    %v8562 = vadd.f32 %v8556, %v8560
    %s8563 = scalar_lea.vmem [#allocation14], 2688
    %v8564 = vld [vmem:[%s8563] sm:$0xff]
    %v8565 = vld [vmem:[%s8563 + $0x8] sm:$0xff]
    %v8566 = vld [vmem:[%s8563 + $0x10] sm:$0xff]
    %v8567 = vld [vmem:[%s8563 + $0x18] sm:$0xff]
    %v8568 = vld [vmem:[%s8563 + $0x20] sm:$0xff]
    %v8569 = vld [vmem:[%s8563 + $0x28] sm:$0xff]
    %v8570 = vld [vmem:[%s8563 + $0x30] sm:$0xff]
    %v8571 = vld [vmem:[%s8563 + $0x38] sm:$0xff]
    %v8572 = vld [vmem:[%s8563 + $0x40] sm:$0xff]
    %v8573 = vld [vmem:[%s8563 + $0x48] sm:$0xff]
    %v8574 = vld [vmem:[%s8563 + $0x50] sm:$0xff]
    %v8575 = vld [vmem:[%s8563 + $0x58] sm:$0xff]
    %v8576 = vld [vmem:[%s8563 + $0x60] sm:$0xff]
    %v8577 = vld [vmem:[%s8563 + $0x68] sm:$0xff]
    %v8578 = vld [vmem:[%s8563 + $0x70] sm:$0xff]
    %v8579 = vld [vmem:[%s8563 + $0x78] sm:$0xff]
    %v8580 = vld [vmem:[%s8563 + $0x80] sm:$0xff]
    %v8581 = vld [vmem:[%s8563 + $0x88] sm:$0xff]
    %v8582 = vld [vmem:[%s8563 + $0x90] sm:$0xff]
    %v8583 = vld [vmem:[%s8563 + $0x98] sm:$0xff]
    %v8584 = vld [vmem:[%s8563 + $0xa0] sm:$0xff]
    %v8585 = vld [vmem:[%s8563 + $0xa8] sm:$0xff]
    %v8586 = vld [vmem:[%s8563 + $0xb0] sm:$0xff]
    %v8587 = vld [vmem:[%s8563 + $0xb8] sm:$0xff]
    %v8588 = vld [vmem:[%s8563 + $0xc0] sm:$0xff]
    %v8589 = vld [vmem:[%s8563 + $0xc8] sm:$0xff]
    %v8590 = vld [vmem:[%s8563 + $0xd0] sm:$0xff]
    %v8591 = vld [vmem:[%s8563 + $0xd8] sm:$0xff]
    %v8592 = vld [vmem:[%s8563 + $0xe0] sm:$0xff]
    %v8593 = vld [vmem:[%s8563 + $0xe8] sm:$0xff]
    %v8594 = vld [vmem:[%s8563 + $0xf0] sm:$0xff]
    %v8595 = vld [vmem:[%s8563 + $0xf8] sm:$0xff]
    %v8596 = vld [vmem:[%s8563 + $0x100] sm:$0xff]
    %v8597 = vld [vmem:[%s8563 + $0x108] sm:$0xff]
    %v8598 = vld [vmem:[%s8563 + $0x110] sm:$0xff]
    %v8599 = vld [vmem:[%s8563 + $0x118] sm:$0xff]
    %v8600 = vld [vmem:[%s8563 + $0x120] sm:$0xff]
    %v8601 = vld [vmem:[%s8563 + $0x128] sm:$0xff]
    %v8602 = vld [vmem:[%s8563 + $0x130] sm:$0xff]
    %v8603 = vld [vmem:[%s8563 + $0x138] sm:$0xff]
    %v8604 = vld [vmem:[%s8563 + $0x140] sm:$0xff]
    %v8605 = vld [vmem:[%s8563 + $0x148] sm:$0xff]
    %v8606 = vld [vmem:[%s8563 + $0x150] sm:$0xff]
    %v8607 = vld [vmem:[%s8563 + $0x158] sm:$0xff]
    %v8608 = vld [vmem:[%s8563 + $0x160] sm:$0xff]
    %v8609 = vld [vmem:[%s8563 + $0x168] sm:$0xff]
    %v8610 = vld [vmem:[%s8563 + $0x170] sm:$0xff]
    %v8611 = vld [vmem:[%s8563 + $0x178] sm:$0xff]
    %v8612 = vpack.c.bf16 %v8442, %v8442
    %v8613 = vpack.c.bf16 %v8495, %v8495
    %v8614 = vpack.c.bf16 %v8562, %v8562
    %s8615 = scalar_lea.vmem [#allocation16], 2688
    %v8616 = vld [vmem:[%s8615] sm:$0xff]
    %v8617 = vld [vmem:[%s8615 + $0x8] sm:$0xff]
    %v8618 = vld [vmem:[%s8615 + $0x10] sm:$0xff]
    %v8619 = vld [vmem:[%s8615 + $0x18] sm:$0xff]
    %v8620 = vld [vmem:[%s8615 + $0x20] sm:$0xff]
    %v8621 = vld [vmem:[%s8615 + $0x28] sm:$0xff]
    %v8622 = vld [vmem:[%s8615 + $0x30] sm:$0xff]
    %v8623 = vld [vmem:[%s8615 + $0x38] sm:$0xff]
    %v8624 = vld [vmem:[%s8615 + $0x40] sm:$0xff]
    %v8625 = vld [vmem:[%s8615 + $0x48] sm:$0xff]
    %v8626 = vld [vmem:[%s8615 + $0x50] sm:$0xff]
    %v8627 = vld [vmem:[%s8615 + $0x58] sm:$0xff]
    %v8628 = vld [vmem:[%s8615 + $0x60] sm:$0xff]
    %v8629 = vld [vmem:[%s8615 + $0x68] sm:$0xff]
    %v8630 = vld [vmem:[%s8615 + $0x70] sm:$0xff]
    %v8631 = vld [vmem:[%s8615 + $0x78] sm:$0xff]
    %v8632 = vld [vmem:[%s8615 + $0x80] sm:$0xff]
    %v8633 = vld [vmem:[%s8615 + $0x88] sm:$0xff]
    %v8634 = vld [vmem:[%s8615 + $0x90] sm:$0xff]
    %v8635 = vld [vmem:[%s8615 + $0x98] sm:$0xff]
    %v8636 = vld [vmem:[%s8615 + $0xa0] sm:$0xff]
    %v8637 = vld [vmem:[%s8615 + $0xa8] sm:$0xff]
    %v8638 = vld [vmem:[%s8615 + $0xb0] sm:$0xff]
    %v8639 = vld [vmem:[%s8615 + $0xb8] sm:$0xff]
    %v8640 = vld [vmem:[%s8615 + $0xc0] sm:$0xff]
    %v8641 = vld [vmem:[%s8615 + $0xc8] sm:$0xff]
    %v8642 = vld [vmem:[%s8615 + $0xd0] sm:$0xff]
    %v8643 = vld [vmem:[%s8615 + $0xd8] sm:$0xff]
    %v8644 = vld [vmem:[%s8615 + $0xe0] sm:$0xff]
    %v8645 = vld [vmem:[%s8615 + $0xe8] sm:$0xff]
    %v8646 = vld [vmem:[%s8615 + $0xf0] sm:$0xff]
    %v8647 = vld [vmem:[%s8615 + $0xf8] sm:$0xff]
    %v8648 = vld [vmem:[%s8615 + $0x100] sm:$0xff]
    %v8649 = vld [vmem:[%s8615 + $0x108] sm:$0xff]
    %v8650 = vld [vmem:[%s8615 + $0x110] sm:$0xff]
    %v8651 = vld [vmem:[%s8615 + $0x118] sm:$0xff]
    %v8652 = vld [vmem:[%s8615 + $0x120] sm:$0xff]
    %v8653 = vld [vmem:[%s8615 + $0x128] sm:$0xff]
    %v8654 = vld [vmem:[%s8615 + $0x130] sm:$0xff]
    %v8655 = vld [vmem:[%s8615 + $0x138] sm:$0xff]
    %v8656 = vld [vmem:[%s8615 + $0x140] sm:$0xff]
    %v8657 = vld [vmem:[%s8615 + $0x148] sm:$0xff]
    %v8658 = vld [vmem:[%s8615 + $0x150] sm:$0xff]
    %v8659 = vld [vmem:[%s8615 + $0x158] sm:$0xff]
    %v8660 = vld [vmem:[%s8615 + $0x160] sm:$0xff]
    %v8661 = vld [vmem:[%s8615 + $0x168] sm:$0xff]
    %v8662 = vld [vmem:[%s8615 + $0x170] sm:$0xff]
    %v8663 = vld [vmem:[%s8615 + $0x178] sm:$0xff]
    %v8667 = vrot.slane %v8612, 2
    %v8668 = vrot.slane %v8613, 2
    %v8669 = vrot.slane %v8614, 2
    %v8721 = vunpack.c.l.b16 %v8616
    %v8722 = vunpack.c.h.b16 %v8616
    %v8723 = vunpack.c.l.b16 %v8617
    %v8724 = vunpack.c.h.b16 %v8617
    %v8725 = vunpack.c.l.b16 %v8618
    %v8726 = vunpack.c.h.b16 %v8618
    %v8727 = vunpack.c.l.b16 %v8619
    %v8728 = vunpack.c.h.b16 %v8619
    %v8729 = vunpack.c.l.b16 %v8620
    %v8730 = vunpack.c.h.b16 %v8620
    %v8731 = vunpack.c.l.b16 %v8621
    %v8732 = vunpack.c.h.b16 %v8621
    %v8733 = vunpack.c.l.b16 %v8622
    %v8734 = vunpack.c.h.b16 %v8622
    %v8735 = vunpack.c.l.b16 %v8623
    %v8736 = vunpack.c.h.b16 %v8623
    %v8737 = vunpack.c.l.b16 %v8624
    %v8738 = vunpack.c.h.b16 %v8624
    %v8739 = vunpack.c.l.b16 %v8625
    %v8740 = vunpack.c.h.b16 %v8625
    %v8741 = vunpack.c.l.b16 %v8626
    %v8742 = vunpack.c.h.b16 %v8626
    %v8743 = vunpack.c.l.b16 %v8627
    %v8744 = vunpack.c.h.b16 %v8627
    %v8745 = vunpack.c.l.b16 %v8628
    %v8746 = vunpack.c.h.b16 %v8628
    %v8747 = vunpack.c.l.b16 %v8629
    %v8748 = vunpack.c.h.b16 %v8629
    %v8749 = vunpack.c.l.b16 %v8630
    %v8750 = vunpack.c.h.b16 %v8630
    %v8751 = vunpack.c.l.b16 %v8631
    %v8752 = vunpack.c.h.b16 %v8631
    %v8753 = vunpack.c.l.b16 %v8632
    %v8754 = vunpack.c.h.b16 %v8632
    %v8755 = vunpack.c.l.b16 %v8633
    %v8756 = vunpack.c.h.b16 %v8633
    %v8757 = vunpack.c.l.b16 %v8634
    %v8758 = vunpack.c.h.b16 %v8634
    %v8759 = vunpack.c.l.b16 %v8635
    %v8760 = vunpack.c.h.b16 %v8635
    %v8761 = vunpack.c.l.b16 %v8636
    %v8762 = vunpack.c.h.b16 %v8636
    %v8763 = vunpack.c.l.b16 %v8637
    %v8764 = vunpack.c.h.b16 %v8637
    %v8765 = vunpack.c.l.b16 %v8638
    %v8766 = vunpack.c.h.b16 %v8638
    %v8767 = vunpack.c.l.b16 %v8639
    %v8768 = vunpack.c.h.b16 %v8639
    %v8769 = vunpack.c.l.b16 %v8640
    %v8770 = vunpack.c.h.b16 %v8640
    %v8771 = vunpack.c.l.b16 %v8641
    %v8772 = vunpack.c.h.b16 %v8641
    %v8773 = vunpack.c.l.b16 %v8642
    %v8774 = vunpack.c.h.b16 %v8642
    %v8775 = vunpack.c.l.b16 %v8643
    %v8776 = vunpack.c.h.b16 %v8643
    %v8777 = vunpack.c.l.b16 %v8644
    %v8778 = vunpack.c.h.b16 %v8644
    %v8779 = vunpack.c.l.b16 %v8645
    %v8780 = vunpack.c.h.b16 %v8645
    %v8781 = vunpack.c.l.b16 %v8646
    %v8782 = vunpack.c.h.b16 %v8646
    %v8783 = vunpack.c.l.b16 %v8647
    %v8784 = vunpack.c.h.b16 %v8647
    %v8785 = vunpack.c.l.b16 %v8648
    %v8786 = vunpack.c.h.b16 %v8648
    %v8787 = vunpack.c.l.b16 %v8649
    %v8788 = vunpack.c.h.b16 %v8649
    %v8789 = vunpack.c.l.b16 %v8650
    %v8790 = vunpack.c.h.b16 %v8650
    %v8791 = vunpack.c.l.b16 %v8651
    %v8792 = vunpack.c.h.b16 %v8651
    %v8793 = vunpack.c.l.b16 %v8652
    %v8794 = vunpack.c.h.b16 %v8652
    %v8795 = vunpack.c.l.b16 %v8653
    %v8796 = vunpack.c.h.b16 %v8653
    %v8797 = vunpack.c.l.b16 %v8654
    %v8798 = vunpack.c.h.b16 %v8654
    %v8799 = vunpack.c.l.b16 %v8655
    %v8800 = vunpack.c.h.b16 %v8655
    %v8801 = vunpack.c.l.b16 %v8656
    %v8802 = vunpack.c.h.b16 %v8656
    %v8803 = vunpack.c.l.b16 %v8657
    %v8804 = vunpack.c.h.b16 %v8657
    %v8805 = vunpack.c.l.b16 %v8658
    %v8806 = vunpack.c.h.b16 %v8658
    %v8807 = vunpack.c.l.b16 %v8659
    %v8808 = vunpack.c.h.b16 %v8659
    %v8809 = vunpack.c.l.b16 %v8660
    %v8810 = vunpack.c.h.b16 %v8660
    %v8811 = vunpack.c.l.b16 %v8661
    %v8812 = vunpack.c.h.b16 %v8661
    %v8813 = vunpack.c.l.b16 %v8662
    %v8814 = vunpack.c.h.b16 %v8662
    %v8815 = vunpack.c.l.b16 %v8663
    %v8816 = vunpack.c.h.b16 %v8663
    %v8817 = vpack.c.b16 %v8723, %v8721
    %v8818 = vpack.c.b16 %v8724, %v8722
    %v8819 = vpack.c.b16 %v8727, %v8725
    %v8820 = vpack.c.b16 %v8728, %v8726
    %v8821 = vpack.c.b16 %v8731, %v8729
    %v8822 = vpack.c.b16 %v8732, %v8730
    %v8823 = vpack.c.b16 %v8735, %v8733
    %v8824 = vpack.c.b16 %v8736, %v8734
    %v8825 = vpack.c.b16 %v8739, %v8737
    %v8826 = vpack.c.b16 %v8740, %v8738
    %v8827 = vpack.c.b16 %v8743, %v8741
    %v8828 = vpack.c.b16 %v8744, %v8742
    %v8829 = vpack.c.b16 %v8747, %v8745
    %v8830 = vpack.c.b16 %v8748, %v8746
    %v8831 = vpack.c.b16 %v8751, %v8749
    %v8832 = vpack.c.b16 %v8752, %v8750
    %v8833 = vpack.c.b16 %v8755, %v8753
    %v8834 = vpack.c.b16 %v8756, %v8754
    %v8835 = vpack.c.b16 %v8759, %v8757
    %v8836 = vpack.c.b16 %v8760, %v8758
    %v8837 = vpack.c.b16 %v8763, %v8761
    %v8838 = vpack.c.b16 %v8764, %v8762
    %v8839 = vpack.c.b16 %v8767, %v8765
    %v8840 = vpack.c.b16 %v8768, %v8766
    %v8841 = vpack.c.b16 %v8771, %v8769
    %v8842 = vpack.c.b16 %v8772, %v8770
    %v8843 = vpack.c.b16 %v8775, %v8773
    %v8844 = vpack.c.b16 %v8776, %v8774
    %v8845 = vpack.c.b16 %v8779, %v8777
    %v8846 = vpack.c.b16 %v8780, %v8778
    %v8847 = vpack.c.b16 %v8783, %v8781
    %v8848 = vpack.c.b16 %v8784, %v8782
    %v8849 = vpack.c.b16 %v8787, %v8785
    %v8850 = vpack.c.b16 %v8788, %v8786
    %v8851 = vpack.c.b16 %v8791, %v8789
    %v8852 = vpack.c.b16 %v8792, %v8790
    %v8853 = vpack.c.b16 %v8795, %v8793
    %v8854 = vpack.c.b16 %v8796, %v8794
    %v8855 = vpack.c.b16 %v8799, %v8797
    %v8856 = vpack.c.b16 %v8800, %v8798
    %v8857 = vpack.c.b16 %v8803, %v8801
    %v8858 = vpack.c.b16 %v8804, %v8802
    %v8859 = vpack.c.b16 %v8807, %v8805
    %v8860 = vpack.c.b16 %v8808, %v8806
    %v8861 = vpack.c.b16 %v8811, %v8809
    %v8862 = vpack.c.b16 %v8812, %v8810
    %v8863 = vpack.c.b16 %v8815, %v8813
    %v8864 = vpack.c.b16 %v8816, %v8814
    %8913 = vmatpush.bf16.msra.mxu0 %v8831
    %8914 = vmatpush.bf16.msra.mxu0 %v8829
    %8915 = vmatpush.bf16.msra.mxu0 %v8827
    %8916 = vmatpush.bf16.msra.mxu0 %v8825
    %8917 = vmatpush.bf16.msra.mxu0 %v8823
    %8918 = vmatpush.bf16.msra.mxu0 %v8821
    %8919 = vmatpush.bf16.msra.mxu0 %v8819
    %8920 = vmatpush.bf16.msra.mxu0 %v8817
    %8921 = vmatmul.bf16.gmra.mxu0 %v8667
    %v8922 = vpop.f32.mrf.mxu0
    %v8923 = vadd.f32 0.0, %v8922
    %v8924 = vpop.f32.mrf.mxu0
    %8925 = vdwg.mxu0
    %8926 = vmatpush.bf16.msra.mxu0 %v8847
    %8927 = vmatpush.bf16.msra.mxu0 %v8845
    %8928 = vmatpush.bf16.msra.mxu0 %v8843
    %8929 = vmatpush.bf16.msra.mxu0 %v8841
    %8930 = vmatpush.bf16.msra.mxu0 %v8839
    %8931 = vmatpush.bf16.msra.mxu0 %v8837
    %8932 = vmatpush.bf16.msra.mxu0 %v8835
    %8933 = vmatpush.bf16.msra.mxu0 %v8833
    %8934 = vmatmul.bf16.gmra.mxu0 %v8668
    %v8935 = vpop.f32.mrf.mxu0
    %v8936 = vadd.f32 %v8923, %v8935
    %v8937 = vpop.f32.mrf.mxu0
    %8938 = vdwg.mxu0
    %8939 = vmatpush.bf16.msra.mxu0 %v8863
    %8940 = vmatpush.bf16.msra.mxu0 %v8861
    %8941 = vmatpush.bf16.msra.mxu0 %v8859
    %8942 = vmatpush.bf16.msra.mxu0 %v8857
    %8943 = vmatpush.bf16.msra.mxu0 %v8855
    %8944 = vmatpush.bf16.msra.mxu0 %v8853
    %8945 = vmatpush.bf16.msra.mxu0 %v8851
    %8946 = vmatpush.bf16.msra.mxu0 %v8849
    %8947 = vmatmul.bf16.gmra.mxu0 %v8669
    %v8948 = vpop.f32.mrf.mxu0
    %v8949 = vadd.f32 %v8936, %v8948
    %v8950 = vpop.f32.mrf.mxu0
    %8951 = vdwg.mxu0
    %8952 = vmatpush.bf16.msra.mxu0 %v8832
    %8953 = vmatpush.bf16.msra.mxu0 %v8830
    %8954 = vmatpush.bf16.msra.mxu0 %v8828
    %8955 = vmatpush.bf16.msra.mxu0 %v8826
    %8956 = vmatpush.bf16.msra.mxu0 %v8824
    %8957 = vmatpush.bf16.msra.mxu0 %v8822
    %8958 = vmatpush.bf16.msra.mxu0 %v8820
    %8959 = vmatpush.bf16.msra.mxu0 %v8818
    %8960 = vmatmul.bf16.gmra.mxu0 %v8667
    %v8961 = vpop.f32.mrf.mxu0
    %v8962 = vadd.f32 0.0, %v8961
    %v8963 = vpop.f32.mrf.mxu0
    %8964 = vdwg.mxu0
    %8965 = vmatpush.bf16.msra.mxu0 %v8848
    %8966 = vmatpush.bf16.msra.mxu0 %v8846
    %8967 = vmatpush.bf16.msra.mxu0 %v8844
    %8968 = vmatpush.bf16.msra.mxu0 %v8842
    %8969 = vmatpush.bf16.msra.mxu0 %v8840
    %8970 = vmatpush.bf16.msra.mxu0 %v8838
    %8971 = vmatpush.bf16.msra.mxu0 %v8836
    %8972 = vmatpush.bf16.msra.mxu0 %v8834
    %8973 = vmatmul.bf16.gmra.mxu0 %v8668
    %v8974 = vpop.f32.mrf.mxu0
    %v8975 = vadd.f32 %v8962, %v8974
    %v8976 = vpop.f32.mrf.mxu0
    %8977 = vdwg.mxu0
    %8978 = vmatpush.bf16.msra.mxu0 %v8864
    %8979 = vmatpush.bf16.msra.mxu0 %v8862
    %8980 = vmatpush.bf16.msra.mxu0 %v8860
    %8981 = vmatpush.bf16.msra.mxu0 %v8858
    %8982 = vmatpush.bf16.msra.mxu0 %v8856
    %8983 = vmatpush.bf16.msra.mxu0 %v8854
    %8984 = vmatpush.bf16.msra.mxu0 %v8852
    %8985 = vmatpush.bf16.msra.mxu0 %v8850
    %8986 = vmatmul.bf16.gmra.mxu0 %v8669
    %v8987 = vpop.f32.mrf.mxu0
    %v8988 = vadd.f32 %v8975, %v8987
    %v8989 = vpop.f32.mrf.mxu0
    %8990 = vdwg.mxu0
    %v9039 = vunpack.c.l.b16 %v8564
    %v9040 = vunpack.c.h.b16 %v8564
    %v9041 = vunpack.c.l.b16 %v8565
    %v9042 = vunpack.c.h.b16 %v8565
    %v9043 = vunpack.c.l.b16 %v8566
    %v9044 = vunpack.c.h.b16 %v8566
    %v9045 = vunpack.c.l.b16 %v8567
    %v9046 = vunpack.c.h.b16 %v8567
    %v9047 = vunpack.c.l.b16 %v8568
    %v9048 = vunpack.c.h.b16 %v8568
    %v9049 = vunpack.c.l.b16 %v8569
    %v9050 = vunpack.c.h.b16 %v8569
    %v9051 = vunpack.c.l.b16 %v8570
    %v9052 = vunpack.c.h.b16 %v8570
    %v9053 = vunpack.c.l.b16 %v8571
    %v9054 = vunpack.c.h.b16 %v8571
    %v9055 = vunpack.c.l.b16 %v8572
    %v9056 = vunpack.c.h.b16 %v8572
    %v9057 = vunpack.c.l.b16 %v8573
    %v9058 = vunpack.c.h.b16 %v8573
    %v9059 = vunpack.c.l.b16 %v8574
    %v9060 = vunpack.c.h.b16 %v8574
    %v9061 = vunpack.c.l.b16 %v8575
    %v9062 = vunpack.c.h.b16 %v8575
    %v9063 = vunpack.c.l.b16 %v8576
    %v9064 = vunpack.c.h.b16 %v8576
    %v9065 = vunpack.c.l.b16 %v8577
    %v9066 = vunpack.c.h.b16 %v8577
    %v9067 = vunpack.c.l.b16 %v8578
    %v9068 = vunpack.c.h.b16 %v8578
    %v9069 = vunpack.c.l.b16 %v8579
    %v9070 = vunpack.c.h.b16 %v8579
    %v9071 = vunpack.c.l.b16 %v8580
    %v9072 = vunpack.c.h.b16 %v8580
    %v9073 = vunpack.c.l.b16 %v8581
    %v9074 = vunpack.c.h.b16 %v8581
    %v9075 = vunpack.c.l.b16 %v8582
    %v9076 = vunpack.c.h.b16 %v8582
    %v9077 = vunpack.c.l.b16 %v8583
    %v9078 = vunpack.c.h.b16 %v8583
    %v9079 = vunpack.c.l.b16 %v8584
    %v9080 = vunpack.c.h.b16 %v8584
    %v9081 = vunpack.c.l.b16 %v8585
    %v9082 = vunpack.c.h.b16 %v8585
    %v9083 = vunpack.c.l.b16 %v8586
    %v9084 = vunpack.c.h.b16 %v8586
    %v9085 = vunpack.c.l.b16 %v8587
    %v9086 = vunpack.c.h.b16 %v8587
    %v9087 = vunpack.c.l.b16 %v8588
    %v9088 = vunpack.c.h.b16 %v8588
    %v9089 = vunpack.c.l.b16 %v8589
    %v9090 = vunpack.c.h.b16 %v8589
    %v9091 = vunpack.c.l.b16 %v8590
    %v9092 = vunpack.c.h.b16 %v8590
    %v9093 = vunpack.c.l.b16 %v8591
    %v9094 = vunpack.c.h.b16 %v8591
    %v9095 = vunpack.c.l.b16 %v8592
    %v9096 = vunpack.c.h.b16 %v8592
    %v9097 = vunpack.c.l.b16 %v8593
    %v9098 = vunpack.c.h.b16 %v8593
    %v9099 = vunpack.c.l.b16 %v8594
    %v9100 = vunpack.c.h.b16 %v8594
    %v9101 = vunpack.c.l.b16 %v8595
    %v9102 = vunpack.c.h.b16 %v8595
    %v9103 = vunpack.c.l.b16 %v8596
    %v9104 = vunpack.c.h.b16 %v8596
    %v9105 = vunpack.c.l.b16 %v8597
    %v9106 = vunpack.c.h.b16 %v8597
    %v9107 = vunpack.c.l.b16 %v8598
    %v9108 = vunpack.c.h.b16 %v8598
    %v9109 = vunpack.c.l.b16 %v8599
    %v9110 = vunpack.c.h.b16 %v8599
    %v9111 = vunpack.c.l.b16 %v8600
    %v9112 = vunpack.c.h.b16 %v8600
    %v9113 = vunpack.c.l.b16 %v8601
    %v9114 = vunpack.c.h.b16 %v8601
    %v9115 = vunpack.c.l.b16 %v8602
    %v9116 = vunpack.c.h.b16 %v8602
    %v9117 = vunpack.c.l.b16 %v8603
    %v9118 = vunpack.c.h.b16 %v8603
    %v9119 = vunpack.c.l.b16 %v8604
    %v9120 = vunpack.c.h.b16 %v8604
    %v9121 = vunpack.c.l.b16 %v8605
    %v9122 = vunpack.c.h.b16 %v8605
    %v9123 = vunpack.c.l.b16 %v8606
    %v9124 = vunpack.c.h.b16 %v8606
    %v9125 = vunpack.c.l.b16 %v8607
    %v9126 = vunpack.c.h.b16 %v8607
    %v9127 = vunpack.c.l.b16 %v8608
    %v9128 = vunpack.c.h.b16 %v8608
    %v9129 = vunpack.c.l.b16 %v8609
    %v9130 = vunpack.c.h.b16 %v8609
    %v9131 = vunpack.c.l.b16 %v8610
    %v9132 = vunpack.c.h.b16 %v8610
    %v9133 = vunpack.c.l.b16 %v8611
    %v9134 = vunpack.c.h.b16 %v8611
    %v9135 = vpack.c.b16 %v9041, %v9039
    %v9136 = vpack.c.b16 %v9042, %v9040
    %v9137 = vpack.c.b16 %v9045, %v9043
    %v9138 = vpack.c.b16 %v9046, %v9044
    %v9139 = vpack.c.b16 %v9049, %v9047
    %v9140 = vpack.c.b16 %v9050, %v9048
    %v9141 = vpack.c.b16 %v9053, %v9051
    %v9142 = vpack.c.b16 %v9054, %v9052
    %v9143 = vpack.c.b16 %v9057, %v9055
    %v9144 = vpack.c.b16 %v9058, %v9056
    %v9145 = vpack.c.b16 %v9061, %v9059
    %v9146 = vpack.c.b16 %v9062, %v9060
    %v9147 = vpack.c.b16 %v9065, %v9063
    %v9148 = vpack.c.b16 %v9066, %v9064
    %v9149 = vpack.c.b16 %v9069, %v9067
    %v9150 = vpack.c.b16 %v9070, %v9068
    %v9151 = vpack.c.b16 %v9073, %v9071
    %v9152 = vpack.c.b16 %v9074, %v9072
    %v9153 = vpack.c.b16 %v9077, %v9075
    %v9154 = vpack.c.b16 %v9078, %v9076
    %v9155 = vpack.c.b16 %v9081, %v9079
    %v9156 = vpack.c.b16 %v9082, %v9080
    %v9157 = vpack.c.b16 %v9085, %v9083
    %v9158 = vpack.c.b16 %v9086, %v9084
    %v9159 = vpack.c.b16 %v9089, %v9087
    %v9160 = vpack.c.b16 %v9090, %v9088
    %v9161 = vpack.c.b16 %v9093, %v9091
    %v9162 = vpack.c.b16 %v9094, %v9092
    %v9163 = vpack.c.b16 %v9097, %v9095
    %v9164 = vpack.c.b16 %v9098, %v9096
    %v9165 = vpack.c.b16 %v9101, %v9099
    %v9166 = vpack.c.b16 %v9102, %v9100
    %v9167 = vpack.c.b16 %v9105, %v9103
    %v9168 = vpack.c.b16 %v9106, %v9104
    %v9169 = vpack.c.b16 %v9109, %v9107
    %v9170 = vpack.c.b16 %v9110, %v9108
    %v9171 = vpack.c.b16 %v9113, %v9111
    %v9172 = vpack.c.b16 %v9114, %v9112
    %v9173 = vpack.c.b16 %v9117, %v9115
    %v9174 = vpack.c.b16 %v9118, %v9116
    %v9175 = vpack.c.b16 %v9121, %v9119
    %v9176 = vpack.c.b16 %v9122, %v9120
    %v9177 = vpack.c.b16 %v9125, %v9123
    %v9178 = vpack.c.b16 %v9126, %v9124
    %v9179 = vpack.c.b16 %v9129, %v9127
    %v9180 = vpack.c.b16 %v9130, %v9128
    %v9181 = vpack.c.b16 %v9133, %v9131
    %v9182 = vpack.c.b16 %v9134, %v9132
    %9231 = vmatpush.bf16.msra.mxu0 %v9149
    %9232 = vmatpush.bf16.msra.mxu0 %v9147
    %9233 = vmatpush.bf16.msra.mxu0 %v9145
    %9234 = vmatpush.bf16.msra.mxu0 %v9143
    %9235 = vmatpush.bf16.msra.mxu0 %v9141
    %9236 = vmatpush.bf16.msra.mxu0 %v9139
    %9237 = vmatpush.bf16.msra.mxu0 %v9137
    %9238 = vmatpush.bf16.msra.mxu0 %v9135
    %9239 = vmatmul.bf16.gmra.mxu0 %v8612
    %v9240 = vpop.f32.mrf.mxu0
    %v9241 = vadd.f32 %v8949, %v9240
    %v9242 = vpop.f32.mrf.mxu0
    %9243 = vdwg.mxu0
    %9244 = vmatpush.bf16.msra.mxu0 %v9165
    %9245 = vmatpush.bf16.msra.mxu0 %v9163
    %9246 = vmatpush.bf16.msra.mxu0 %v9161
    %9247 = vmatpush.bf16.msra.mxu0 %v9159
    %9248 = vmatpush.bf16.msra.mxu0 %v9157
    %9249 = vmatpush.bf16.msra.mxu0 %v9155
    %9250 = vmatpush.bf16.msra.mxu0 %v9153
    %9251 = vmatpush.bf16.msra.mxu0 %v9151
    %9252 = vmatmul.bf16.gmra.mxu0 %v8613
    %v9253 = vpop.f32.mrf.mxu0
    %v9254 = vadd.f32 %v9241, %v9253
    %v9255 = vpop.f32.mrf.mxu0
    %9256 = vdwg.mxu0
    %9257 = vmatpush.bf16.msra.mxu0 %v9181
    %9258 = vmatpush.bf16.msra.mxu0 %v9179
    %9259 = vmatpush.bf16.msra.mxu0 %v9177
    %9260 = vmatpush.bf16.msra.mxu0 %v9175
    %9261 = vmatpush.bf16.msra.mxu0 %v9173
    %9262 = vmatpush.bf16.msra.mxu0 %v9171
    %9263 = vmatpush.bf16.msra.mxu0 %v9169
    %9264 = vmatpush.bf16.msra.mxu0 %v9167
    %9265 = vmatmul.bf16.gmra.mxu0 %v8614
    %v9266 = vpop.f32.mrf.mxu0
    %v9267 = vadd.f32 %v9254, %v9266
    %v9268 = vpop.f32.mrf.mxu0
    %9269 = vdwg.mxu0
    %9270 = vmatpush.bf16.msra.mxu0 %v9150
    %9271 = vmatpush.bf16.msra.mxu0 %v9148
    %9272 = vmatpush.bf16.msra.mxu0 %v9146
    %9273 = vmatpush.bf16.msra.mxu0 %v9144
    %9274 = vmatpush.bf16.msra.mxu0 %v9142
    %9275 = vmatpush.bf16.msra.mxu0 %v9140
    %9276 = vmatpush.bf16.msra.mxu0 %v9138
    %9277 = vmatpush.bf16.msra.mxu0 %v9136
    %9278 = vmatmul.bf16.gmra.mxu0 %v8612
    %v9279 = vpop.f32.mrf.mxu0
    %v9280 = vadd.f32 %v8988, %v9279
    %v9281 = vpop.f32.mrf.mxu0
    %9282 = vdwg.mxu0
    %9283 = vmatpush.bf16.msra.mxu0 %v9166
    %9284 = vmatpush.bf16.msra.mxu0 %v9164
    %9285 = vmatpush.bf16.msra.mxu0 %v9162
    %9286 = vmatpush.bf16.msra.mxu0 %v9160
    %9287 = vmatpush.bf16.msra.mxu0 %v9158
    %9288 = vmatpush.bf16.msra.mxu0 %v9156
    %9289 = vmatpush.bf16.msra.mxu0 %v9154
    %9290 = vmatpush.bf16.msra.mxu0 %v9152
    %9291 = vmatmul.bf16.gmra.mxu0 %v8613
    %v9292 = vpop.f32.mrf.mxu0
    %v9293 = vadd.f32 %v9280, %v9292
    %v9294 = vpop.f32.mrf.mxu0
    %9295 = vdwg.mxu0
    %9296 = vmatpush.bf16.msra.mxu0 %v9182
    %9297 = vmatpush.bf16.msra.mxu0 %v9180
    %9298 = vmatpush.bf16.msra.mxu0 %v9178
    %9299 = vmatpush.bf16.msra.mxu0 %v9176
    %9300 = vmatpush.bf16.msra.mxu0 %v9174
    %9301 = vmatpush.bf16.msra.mxu0 %v9172
    %9302 = vmatpush.bf16.msra.mxu0 %v9170
    %9303 = vmatpush.bf16.msra.mxu0 %v9168
    %9304 = vmatmul.bf16.gmra.mxu0 %v8614
    %v9305 = vpop.f32.mrf.mxu0
    %v9306 = vadd.f32 %v9293, %v9305
    %v9307 = vpop.f32.mrf.mxu0
    %9308 = vdwg.mxu0
    %s9309 = scalar_lea.vmem [#allocation17], 14
    %v9310 = vld [vmem:[%s9309] sm:$0x3]
    %v9312 = vperm.slane %v9310, 0
    %v9313 = vperm.slane %v9310, 1
    %v9316 = vadd.f32 %v9267, %v9312
    %v9317 = vadd.f32 %v9306, %v9313
    %v9318 = vtanh.pop %v9316
    %v9319 = vxor.u32 %v9317, 2147483648
    %v9320 = vmul.f32 %v9319, 1.442695
    %v9321 = vpow.pop %v9320
    %v9322 = vadd.f32 %v9321, 1.0
    %v9323 = vrcp.pop %v9322
    %v9324 = vmul.f32 %v9322, %v9323
    %v9325 = vsub.f32 1.0, %v9324
    %v9326 = vmul.f32 %v9323, %v9325
    %v9327 = vadd.f32 %v9323, %v9326
    %vm9328 = vweird.f32 %v9322
    %vm9329 = vweird.f32 %v9323
    %vm9330 = vmor %vm9328, %vm9329
    %v9331 = vsel %vm9330, %v9323, %v9327
    %v9332 = vand.u32 2147483647, %v9322
    %vm9333 = vcmp.eq.f32.partialorder %v9332, 8.507059e+37
    %v9334 = vand.u32 %v9322, 2147483648
    %v9335 = vor.u32 1.1754944e-38, %v9334
    %v9336 = vsel %vm9333, %v9335, %v9331
    %v9337 = vmul.f32 1.0, %v9336
    %v9338 = vmul.f32 %v9318, %v9337
    %s9339 = scalar_lea.vmem [#allocation19], 896
    %v9340 = vld [vmem:[%s9339] sm:$0xff]
    %v9341 = vld [vmem:[%s9339 + $0x8] sm:$0xff]
    %v9342 = vld [vmem:[%s9339 + $0x10] sm:$0xff]
    %v9343 = vld [vmem:[%s9339 + $0x18] sm:$0xff]
    %v9344 = vld [vmem:[%s9339 + $0x20] sm:$0xff]
    %v9345 = vld [vmem:[%s9339 + $0x28] sm:$0xff]
    %v9346 = vld [vmem:[%s9339 + $0x30] sm:$0xff]
    %v9347 = vld [vmem:[%s9339 + $0x38] sm:$0xff]
    %v9348 = vld [vmem:[%s9339 + $0x40] sm:$0xff]
    %v9349 = vld [vmem:[%s9339 + $0x48] sm:$0xff]
    %v9350 = vld [vmem:[%s9339 + $0x50] sm:$0xff]
    %v9351 = vld [vmem:[%s9339 + $0x58] sm:$0xff]
    %v9352 = vld [vmem:[%s9339 + $0x60] sm:$0xff]
    %v9353 = vld [vmem:[%s9339 + $0x68] sm:$0xff]
    %v9354 = vld [vmem:[%s9339 + $0x70] sm:$0xff]
    %v9355 = vld [vmem:[%s9339 + $0x78] sm:$0xff]
    %v9356 = vpack.c.bf16 %v9338, %v9338
    %s9357 = scalar_lea.vmem [#allocation20], 14
    %v9358 = vld [vmem:[%s9357] sm:$0x3]
    %v9360 = vperm.slane %v9358, 1
    %v9378 = vunpack.c.h.b16 %v9340
    %v9379 = vunpack.c.h.b16 %v9341
    %v9380 = vunpack.c.h.b16 %v9342
    %v9381 = vunpack.c.h.b16 %v9343
    %v9382 = vunpack.c.h.b16 %v9344
    %v9383 = vunpack.c.h.b16 %v9345
    %v9384 = vunpack.c.h.b16 %v9346
    %v9385 = vunpack.c.h.b16 %v9347
    %v9386 = vunpack.c.h.b16 %v9348
    %v9387 = vunpack.c.h.b16 %v9349
    %v9388 = vunpack.c.h.b16 %v9350
    %v9389 = vunpack.c.h.b16 %v9351
    %v9390 = vunpack.c.h.b16 %v9352
    %v9391 = vunpack.c.h.b16 %v9353
    %v9392 = vunpack.c.h.b16 %v9354
    %v9393 = vunpack.c.h.b16 %v9355
    %v9394 = vpack.c.b16 %v9379, %v9378
    %v9395 = vpack.c.b16 %v9381, %v9380
    %v9396 = vpack.c.b16 %v9383, %v9382
    %v9397 = vpack.c.b16 %v9385, %v9384
    %v9398 = vpack.c.b16 %v9387, %v9386
    %v9399 = vpack.c.b16 %v9389, %v9388
    %v9400 = vpack.c.b16 %v9391, %v9390
    %v9401 = vpack.c.b16 %v9393, %v9392
    %9410 = vmatpush.bf16.msra.mxu0 %v9401
    %9411 = vmatpush.bf16.msra.mxu0 %v9400
    %9412 = vmatpush.bf16.msra.mxu0 %v9399
    %9413 = vmatpush.bf16.msra.mxu0 %v9398
    %9414 = vmatpush.bf16.msra.mxu0 %v9397
    %9415 = vmatpush.bf16.msra.mxu0 %v9396
    %9416 = vmatpush.bf16.msra.mxu0 %v9395
    %9417 = vmatpush.bf16.msra.mxu0 %v9394
    %9418 = vmatmul.bf16.gmra.mxu0 %v9356
    %v9419 = vpop.f32.mrf.mxu0
    %v9420 = vadd.f32 %v9360, %v9419
    %v9421 = vpop.f32.mrf.mxu0
    %9422 = vdwg.mxu0
    %v9424 = vrot.slane %v8446, 4
    %v9426 = vadd.f32 %v9420, %v9424
    %v9427 = vmax.f32 %v9426, 0.0
    %v9428 = vld [vmem:[#allocation22] sm:$0xf]
    %v9429 = vld [vmem:[#allocation22 + $0x4] sm:$0xf]
    %v9430 = vld [vmem:[#allocation22 + $0x8] sm:$0xf]
    %v9431 = vld [vmem:[#allocation22 + $0xc] sm:$0xf]
    %v9432 = vld [vmem:[#allocation22 + $0x10] sm:$0xf]
    %v9433 = vld [vmem:[#allocation22 + $0x14] sm:$0xf]
    %v9434 = vld [vmem:[#allocation22 + $0x18] sm:$0xf]
    %v9435 = vld [vmem:[#allocation22 + $0x1c] sm:$0xf]
    %v9436 = vld [vmem:[#allocation22 + $0x20] sm:$0xf]
    %v9437 = vld [vmem:[#allocation22 + $0x24] sm:$0xf]
    %v9438 = vld [vmem:[#allocation22 + $0x28] sm:$0xf]
    %v9439 = vld [vmem:[#allocation22 + $0x2c] sm:$0xf]
    %v9440 = vld [vmem:[#allocation22 + $0x30] sm:$0xf]
    %v9441 = vld [vmem:[#allocation22 + $0x34] sm:$0xf]
    %v9442 = vld [vmem:[#allocation22 + $0x38] sm:$0xf]
    %v9443 = vld [vmem:[#allocation22 + $0x3c] sm:$0xf]
    %v9444 = vpack.c.bf16 %v9427, %v9427
    %v9445 = vld [vmem:[#allocation23] sm:$0x1]
    %v9447 = vperm.slane %v9445, 0
    %v9465 = vunpack.c.l.b16 %v9428
    %v9466 = vunpack.c.l.b16 %v9429
    %v9467 = vunpack.c.l.b16 %v9430
    %v9468 = vunpack.c.l.b16 %v9431
    %v9469 = vunpack.c.l.b16 %v9432
    %v9470 = vunpack.c.l.b16 %v9433
    %v9471 = vunpack.c.l.b16 %v9434
    %v9472 = vunpack.c.l.b16 %v9435
    %v9473 = vunpack.c.l.b16 %v9436
    %v9474 = vunpack.c.l.b16 %v9437
    %v9475 = vunpack.c.l.b16 %v9438
    %v9476 = vunpack.c.l.b16 %v9439
    %v9477 = vunpack.c.l.b16 %v9440
    %v9478 = vunpack.c.l.b16 %v9441
    %v9479 = vunpack.c.l.b16 %v9442
    %v9480 = vunpack.c.l.b16 %v9443
    %v9481 = vpack.c.b16 %v9466, %v9465
    %v9482 = vpack.c.b16 %v9468, %v9467
    %v9483 = vpack.c.b16 %v9470, %v9469
    %v9484 = vpack.c.b16 %v9472, %v9471
    %v9485 = vpack.c.b16 %v9474, %v9473
    %v9486 = vpack.c.b16 %v9476, %v9475
    %v9487 = vpack.c.b16 %v9478, %v9477
    %v9488 = vpack.c.b16 %v9480, %v9479
    %9497 = vmatpush.bf16.msra.mxu0 %v9488
    %9498 = vmatpush.bf16.msra.mxu0 %v9487
    %9499 = vmatpush.bf16.msra.mxu0 %v9486
    %9500 = vmatpush.bf16.msra.mxu0 %v9485
    %9501 = vmatpush.bf16.msra.mxu0 %v9484
    %9502 = vmatpush.bf16.msra.mxu0 %v9483
    %9503 = vmatpush.bf16.msra.mxu0 %v9482
    %9504 = vmatpush.bf16.msra.mxu0 %v9481
    %9505 = vmatmul.bf16.gmra.mxu0 %v9444
    %v9506 = vpop.f32.mrf.mxu0
    %v9507 = vadd.f32 %v9447, %v9506
    %v9508 = vpop.f32.mrf.mxu0
    %9509 = vdwg.mxu0
    %v9510 = vmax.f32 %v9507, 0.0
    %v9511 = vld [vmem:[%s15] sm:$0xf]
    %v9512 = vld [vmem:[%s15 + $0x4] sm:$0xf]
    %v9513 = vld [vmem:[%s15 + $0x8] sm:$0xf]
    %v9514 = vld [vmem:[%s15 + $0xc] sm:$0xf]
    %v9515 = vld [vmem:[%s15 + $0x10] sm:$0xf]
    %v9516 = vld [vmem:[%s15 + $0x14] sm:$0xf]
    %v9517 = vld [vmem:[%s15 + $0x18] sm:$0xf]
    %v9518 = vld [vmem:[%s15 + $0x1c] sm:$0xf]
    %v9519 = vld [vmem:[%s15 + $0x20] sm:$0xf]
    %v9520 = vld [vmem:[%s15 + $0x24] sm:$0xf]
    %v9521 = vld [vmem:[%s15 + $0x28] sm:$0xf]
    %v9522 = vld [vmem:[%s15 + $0x2c] sm:$0xf]
    %v9523 = vld [vmem:[%s15 + $0x30] sm:$0xf]
    %v9524 = vld [vmem:[%s15 + $0x34] sm:$0xf]
    %v9525 = vld [vmem:[%s15 + $0x38] sm:$0xf]
    %v9526 = vld [vmem:[%s15 + $0x3c] sm:$0xf]
    %v9527 = vpack.c.bf16 %v9510, %v9510
    %v9528 = vld [vmem:[#allocation25] sm:$0x1]
    %v9530 = vperm.slane %v9528, 0
    %v9548 = vunpack.c.l.b16 %v9511
    %v9549 = vunpack.c.l.b16 %v9512
    %v9550 = vunpack.c.l.b16 %v9513
    %v9551 = vunpack.c.l.b16 %v9514
    %v9552 = vunpack.c.l.b16 %v9515
    %v9553 = vunpack.c.l.b16 %v9516
    %v9554 = vunpack.c.l.b16 %v9517
    %v9555 = vunpack.c.l.b16 %v9518
    %v9556 = vunpack.c.l.b16 %v9519
    %v9557 = vunpack.c.l.b16 %v9520
    %v9558 = vunpack.c.l.b16 %v9521
    %v9559 = vunpack.c.l.b16 %v9522
    %v9560 = vunpack.c.l.b16 %v9523
    %v9561 = vunpack.c.l.b16 %v9524
    %v9562 = vunpack.c.l.b16 %v9525
    %v9563 = vunpack.c.l.b16 %v9526
    %v9564 = vpack.c.b16 %v9549, %v9548
    %v9565 = vpack.c.b16 %v9551, %v9550
    %v9566 = vpack.c.b16 %v9553, %v9552
    %v9567 = vpack.c.b16 %v9555, %v9554
    %v9568 = vpack.c.b16 %v9557, %v9556
    %v9569 = vpack.c.b16 %v9559, %v9558
    %v9570 = vpack.c.b16 %v9561, %v9560
    %v9571 = vpack.c.b16 %v9563, %v9562
    %9580 = vmatpush.bf16.msra.mxu0 %v9571
    %9581 = vmatpush.bf16.msra.mxu0 %v9570
    %9582 = vmatpush.bf16.msra.mxu0 %v9569
    %9583 = vmatpush.bf16.msra.mxu0 %v9568
    %9584 = vmatpush.bf16.msra.mxu0 %v9567
    %9585 = vmatpush.bf16.msra.mxu0 %v9566
    %9586 = vmatpush.bf16.msra.mxu0 %v9565
    %9587 = vmatpush.bf16.msra.mxu0 %v9564
    %9588 = vmatmul.bf16.gmra.mxu0 %v9527
    %v9589 = vpop.f32.mrf.mxu0
    %v9590 = vadd.f32 %v9530, %v9589
    %v9591 = vpop.f32.mrf.mxu0
    %9592 = vdwg.mxu0
    %vm9593 = vcmask 779264
    %9594 = vst.msk [vmem:[#allocation26] sm:$0x3] %vm9593, %v9590
    // Predicated region
    $region130: #{tpu_custom_call.1} parent=1 // pred_check
      _
    $region131: #{tpu_custom_call.1} parent=1 // pred_check_branch
      %9596 = sbr.rel (0) target = $region133
    $region132: #{tpu_custom_call.1} parent=1 // pred_region
      %9598 = vsyncadd [#allocation4], 0
      %s9600 = sshll.u32 [#allocation26], 4
      %s9601 = int_to_ptr.vmem [resolvable:$true] %s9600
      %s9602 = sshll.u32 %s17, 4
      %s9603 = int_to_ptr.hbm [resolvable:$true] %s9602
      %9605 = dma.vmem_to_hbm [thread:$0]  %s9601, 32, %s9603, [#allocation4]
    $region133: #{tpu_custom_call.1} parent=1 // pred_fallthru
      _
    // Predicated region
    $region134: #{tpu_custom_call.1} parent=1 // pred_check
      _
    $region135: #{tpu_custom_call.1} parent=1 // pred_check_branch
      %9607 = sbr.rel (0) target = $region137
    $region136: #{tpu_custom_call.1} parent=1 // pred_region
      %9609 = dma.done [#allocation4], 32
    $region137: #{tpu_custom_call.1} parent=1 // pred_fallthru
      _
    %9610 = vsyncpa [#allocation3], 1
    %9611 = vsyncpa [#allocation6], 1
    %9612 = vsyncpa [#allocation9], 1
    %9613 = vsyncpa [#allocation12], 1
    %9614 = vsyncpa [#allocation15], 1
    %9615 = vsyncpa [#allocation18], 1
    %9616 = vsyncpa [#allocation21], 1
    %9617 = vsyncpa [#allocation24], 1
    %9618 = vsyncpa [#allocation4], 1

</llo_original>
